<compile_context>
chip_gen: v7x
topology: tpu7x:2x2x1
jax: 0.10.0
libtpu: 0.0.40
codegen_flags: <defaults>
</compile_context>

<pallas_src>
import jax
import jax.numpy as jnp
from jax.experimental import pallas as pl
from jax.experimental.pallas import tpu as pltpu

# ----------------------------- problem sizes --------------------------------
B = 2        # real batch
B_PAD = 8    # padded batch (sublane grain)
S_LEN = 8    # source sequence length
T_LEN = 8    # target sequence length
EMB = 32     # embedding dim
HID = 32     # GRU hidden dim
VOCAB = 32   # vocabulary size


# ------------------------------ Pallas kernel --------------------------------
def seq2seq_kernel(emb_enc_ref, mask_ref, xemb_ref,
                   wxe_ref, whe_ref, be_ref,
                   wxd_ref, whd_ref, bd_ref,
                   woh_ref, woc_ref, bo_ref,
                   logp_ref, hdec_out_ref,
                   enc_scr):
    """Fused encoder + decoder. Single invocation (no grid); time recurrences
    are statically unrolled in-kernel; encoder outputs live in VMEM scratch."""
    H = HID

    def gru_step(x, h, wx_ref, wh_ref, b_ref):
        # g columns: [Wir x + Whr h | Wiz x + Whz h | Win x | Whn h] + fused bias
        g = (jnp.dot(x, wx_ref[...], preferred_element_type=jnp.float32)
             + jnp.dot(h, wh_ref[...], preferred_element_type=jnp.float32)
             + b_ref[...])
        r = jax.nn.sigmoid(g[:, 0:H])
        z = jax.nn.sigmoid(g[:, H:2 * H])
        n = jnp.tanh(g[:, 2 * H:3 * H] + r * g[:, 3 * H:4 * H])
        return (1.0 - z) * n + z * h

    # ------------------------------ encoder ----------------------------------
    # TODO(synk): pack_padded_sequence/pad_packed_sequence have no Pallas
    # equivalent; emulated by freezing the hidden state past each sequence's
    # length and zeroing padded encoder outputs.
    h = jnp.zeros((B_PAD, HID), jnp.float32)
    for s in range(S_LEN):
        x = emb_enc_ref[s]                      # (B_PAD, EMB)
        h_new = gru_step(x, h, wxe_ref, whe_ref, be_ref)
        valid = mask_ref[s]                     # (B_PAD, 1), 1.0 where s < length
        h = valid * h_new + (1.0 - valid) * h   # freeze past length
        enc_scr[s] = h * valid                  # zero padded encoder outputs

    # ------------------------------ decoder ----------------------------------
    enc_t = enc_scr[...]                        # (S, B_PAD, H), VMEM-resident
    mask3 = mask_ref[...]                       # (S, B_PAD, 1)
    hd = h                                      # init with encoder final hidden
    for t in range(T_LEN):
        x = xemb_ref[t]                         # (B_PAD, EMB) teacher-forced
        hd = gru_step(x, hd, wxd_ref, whd_ref, bd_ref)

        # masked dot-product attention over encoder outputs (time-major)
        scores = jnp.sum(enc_t * hd[None, :, :], axis=-1, keepdims=True)  # (S,B,1)
        scores = jnp.where(mask3 > 0.5, scores, jnp.float32(-1e30))
        m = jnp.max(scores, axis=0, keepdims=True)
        e = jnp.exp(scores - m)
        w = e / jnp.sum(e, axis=0, keepdims=True)
        ctx = jnp.sum(w * enc_t, axis=0)                                   # (B_PAD, H)

        # output projection + log-softmax
        logits = (jnp.dot(hd, woh_ref[...], preferred_element_type=jnp.float32)
                  + jnp.dot(ctx, woc_ref[...], preferred_element_type=jnp.float32)
                  + bo_ref[...])
        mm = jnp.max(logits, axis=-1, keepdims=True)
        lse = jnp.log(jnp.sum(jnp.exp(logits - mm), axis=-1, keepdims=True)) + mm
        # lane-dense slab: step t occupies columns [t*V, (t+1)*V)
        logp_ref[:, t * VOCAB:(t + 1) * VOCAB] = logits - lse

    hdec_out_ref[...] = hd


# ------------------------------ parameter prep --------------------------------
def init_params(key):
    ks = jax.random.split(key, 12)
    s = 0.1

    def rnd(k, shape):
        return (s * jax.random.normal(k, shape)).astype(jnp.float32)

    return {
        # encoder
        "enc_embed": rnd(ks[0], (VOCAB, EMB)),
        "enc_wih":   rnd(ks[1], (EMB, 3 * HID)),
        "enc_whh":   rnd(ks[2], (HID, 3 * HID)),
        "enc_bih":   rnd(ks[3], (1, 3 * HID)),
        "enc_bhh":   rnd(ks[4], (1, 3 * HID)),
        # decoder GRU
        "dec_wih":   rnd(ks[5], (EMB, 3 * HID)),
        "dec_whh":   rnd(ks[6], (HID, 3 * HID)),
        "dec_bih":   rnd(ks[7], (1, 3 * HID)),
        "dec_bhh":   rnd(ks[8], (1, 3 * HID)),
        # decoder output projection: [hidden ; context] -> vocab
        "out_wh":    rnd(ks[9], (HID, VOCAB)),
        "out_wc":    rnd(ks[10], (HID, VOCAB)),
        "out_b":     rnd(ks[11], (1, VOCAB)),
    }


# ------------------------------ model forward ---------------------------------
@jax.jit
def seq2seq_forward(inputs, targets, index2vec, params):
    input_vars, input_lengths = inputs
    b = input_vars.shape[0]
    pad_b = B_PAD - b
    H = HID

    # ---- weight prep (done once, outside the in-kernel time loops) ----------
    def split_x(wih):   # (EMB,3H) -> (EMB,4H) = [Wir | Wiz | Win | 0]
        return jnp.concatenate([wih, jnp.zeros((wih.shape[0], H), jnp.float32)], axis=1)

    def split_h(whh):   # (HID,3H) -> (HID,4H) = [Whr | Whz | 0 | Whn]
        return jnp.concatenate(
            [whh[:, :2 * H], jnp.zeros((H, H), jnp.float32), whh[:, 2 * H:]], axis=1)

    def fuse_bias(bih, bhh):  # -> (B_PAD,4H) = [bir+bhr | biz+bhz | bin | bhn]
        b4 = jnp.concatenate(
            [bih[:, :2 * H] + bhh[:, :2 * H], bih[:, 2 * H:], bhh[:, 2 * H:]], axis=1)
        return jnp.broadcast_to(b4, (B_PAD, 4 * H))

    wxe = split_x(params["enc_wih"])
    whe = split_h(params["enc_whh"])
    be = fuse_bias(params["enc_bih"], params["enc_bhh"])
    wxd = split_x(params["dec_wih"])
    whd = split_h(params["dec_whh"])
    bd = fuse_bias(params["dec_bih"], params["dec_bhh"])
    woh = params["out_wh"]
    woc = params["out_wc"]
    bo = jnp.broadcast_to(params["out_b"], (B_PAD, VOCAB))

    # ---- inputs: embed (JAX gather glue), time-major, batch padded to 8 -----
    # TODO(synk): nn.Embedding gather stays in JAX; a Pallas row-gather is not
    # worth it at (2,8) tokens.
    lengths = jnp.pad(input_lengths, (0, pad_b))
    embT = jnp.pad(params["enc_embed"][input_vars.T], ((0, 0), (0, pad_b), (0, 0)))   # (S,B_PAD,E)
    xembT = jnp.pad(index2vec[targets.T], ((0, 0), (0, pad_b), (0, 0)))               # (T,B_PAD,E)
    maskT = (jnp.arange(S_LEN)[:, None] < lengths[None, :]).astype(jnp.float32)[:, :, None]  # (S,B_PAD,1)

    # ---- ONE fused pallas_call: encoder + attention decoder ------------------
    logp_flat, dec_h = pl.pallas_call(
        seq2seq_kernel,
        out_shape=(
            jax.ShapeDtypeStruct((B_PAD, T_LEN * VOCAB), jnp.float32),   # lane-dense log-probs
            jax.ShapeDtypeStruct((B_PAD, HID), jnp.float32),             # final decoder hidden
        ),
        scratch_shapes=[pltpu.VMEM((S_LEN, B_PAD, HID), jnp.float32)],   # encoder outputs (VMEM only)
    )(embT, maskT, xembT, wxe, whe, be, wxd, whd, bd, woh, woc, bo)

    decoder_outputs = logp_flat.reshape(B_PAD, T_LEN, VOCAB)[:b]          # (B, T, V)
    decoder_hidden = dec_h[:b]                                            # (B, H)
    return decoder_outputs, decoder_hidden


# ----------------------------------- main --------------------------------------
if __name__ == "__main__":
    key = jax.random.PRNGKey(0)
    kp, ki, kt, kv = jax.random.split(key, 4)

    params = init_params(kp)

    input_vars = jax.random.randint(ki, (B, S_LEN), 0, VOCAB, dtype=jnp.int32)
    input_lengths = jnp.array([S_LEN, S_LEN - 2], dtype=jnp.int32)
    targets = jax.random.randint(kt, (B, T_LEN), 0, VOCAB, dtype=jnp.int32)
    index2vec = (0.1 * jax.random.normal(kv, (VOCAB, EMB))).astype(jnp.float32)

    decoder_outputs, decoder_hidden = seq2seq_forward(
        (input_vars, input_lengths), targets, index2vec, params)

    jax.block_until_ready(decoder_outputs)
    jax.block_until_ready(decoder_hidden)

    assert decoder_outputs.shape == (B, T_LEN, VOCAB)
    assert decoder_hidden.shape == (B, HID)
    assert bool(jnp.all(jnp.isfinite(decoder_outputs)))
    print("KERNEL_OK")
</pallas_src>

<mosaic_0001>
module attributes {stable_mosaic.version = 11 : i64} {
  func.func @seq2seq_kernel(%arg0: memref<8x8x32xf32, #tpu.memory_space<vmem>>, %arg1: memref<8x8x1xf32, #tpu.memory_space<vmem>>, %arg2: memref<8x8x32xf32, #tpu.memory_space<vmem>>, %arg3: memref<32x128xf32, #tpu.memory_space<vmem>>, %arg4: memref<32x128xf32, #tpu.memory_space<vmem>>, %arg5: memref<8x128xf32, #tpu.memory_space<vmem>>, %arg6: memref<32x128xf32, #tpu.memory_space<vmem>>, %arg7: memref<32x128xf32, #tpu.memory_space<vmem>>, %arg8: memref<8x128xf32, #tpu.memory_space<vmem>>, %arg9: memref<32x32xf32, #tpu.memory_space<vmem>>, %arg10: memref<32x32xf32, #tpu.memory_space<vmem>>, %arg11: memref<8x32xf32, #tpu.memory_space<vmem>>, %arg12: memref<8x256xf32, #tpu.memory_space<vmem>>, %arg13: memref<8x32xf32, #tpu.memory_space<vmem>>, %arg14: memref<8x8x32xf32, #tpu.memory_space<vmem>>) attributes {dimension_semantics = [], scalar_prefetch = 0 : i64, scratch_operands = 1 : i64, tpu.core_type = #tpu.core_type<tc>} {
    %cst = arith.constant 0.000000e+00 : f32
    %0 = vector.broadcast %cst : f32 to vector<8x32xf32>
    %c0 = arith.constant 0 : index
    %c0_0 = arith.constant 0 : index
    %c0_1 = arith.constant 0 : index
    %1 = vector.load %arg0[%c0, %c0_0, %c0_1] : memref<8x8x32xf32, #tpu.memory_space<vmem>>, vector<1x8x32xf32>
    %2 = vector.shape_cast %1 : vector<1x8x32xf32> to vector<8x32xf32>
    %c0_2 = arith.constant 0 : index
    %c0_3 = arith.constant 0 : index
    %3 = vector.load %arg3[%c0_2, %c0_3] : memref<32x128xf32, #tpu.memory_space<vmem>>, vector<32x128xf32>
    %cst_4 = arith.constant dense<0.000000e+00> : vector<8x128xf32>
    %4 = tpu.matmul %2, %3, %cst_4 {dimension_numbers = #tpu.dot_dimension_numbers<[1], [0], [0], [1], [0, 0, 1, 1], [], []>} : vector<8x32xf32>, vector<32x128xf32>, vector<8x128xf32> -> vector<8x128xf32>
    %c0_5 = arith.constant 0 : index
    %c0_6 = arith.constant 0 : index
    %5 = vector.load %arg4[%c0_5, %c0_6] : memref<32x128xf32, #tpu.memory_space<vmem>>, vector<32x128xf32>
    %cst_7 = arith.constant dense<0.000000e+00> : vector<8x128xf32>
    %6 = tpu.matmul %0, %5, %cst_7 {dimension_numbers = #tpu.dot_dimension_numbers<[1], [0], [0], [1], [0, 0, 1, 1], [], []>} : vector<8x32xf32>, vector<32x128xf32>, vector<8x128xf32> -> vector<8x128xf32>
    %7 = arith.addf %4, %6 : vector<8x128xf32>
    %c0_8 = arith.constant 0 : index
    %c0_9 = arith.constant 0 : index
    %8 = vector.load %arg5[%c0_8, %c0_9] : memref<8x128xf32, #tpu.memory_space<vmem>>, vector<8x128xf32>
    %9 = arith.addf %7, %8 : vector<8x128xf32>
    %10 = vector.extract_strided_slice %9 {offsets = [0, 0], sizes = [8, 32], strides = [1, 1]} : vector<8x128xf32> to vector<8x32xf32>
    %11 = arith.negf %10 : vector<8x32xf32>
    %12 = math.exp %11 : vector<8x32xf32>
    %cst_10 = arith.constant 1.000000e+00 : f32
    %13 = vector.broadcast %cst_10 : f32 to vector<8x32xf32>
    %14 = arith.addf %13, %12 : vector<8x32xf32>
    %15 = arith.divf %13, %14 : vector<8x32xf32>
    %16 = vector.extract_strided_slice %9 {offsets = [0, 32], sizes = [8, 32], strides = [1, 1]} : vector<8x128xf32> to vector<8x32xf32>
    %17 = arith.negf %16 : vector<8x32xf32>
    %18 = math.exp %17 : vector<8x32xf32>
    %cst_11 = arith.constant 1.000000e+00 : f32
    %19 = vector.broadcast %cst_11 : f32 to vector<8x32xf32>
    %20 = arith.addf %19, %18 : vector<8x32xf32>
    %21 = arith.divf %19, %20 : vector<8x32xf32>
    %22 = vector.extract_strided_slice %9 {offsets = [0, 64], sizes = [8, 32], strides = [1, 1]} : vector<8x128xf32> to vector<8x32xf32>
    %23 = vector.extract_strided_slice %9 {offsets = [0, 96], sizes = [8, 32], strides = [1, 1]} : vector<8x128xf32> to vector<8x32xf32>
    %24 = arith.mulf %15, %23 : vector<8x32xf32>
    %25 = arith.addf %22, %24 : vector<8x32xf32>
    %26 = math.tanh %25 : vector<8x32xf32>
    %cst_12 = arith.constant 1.000000e+00 : f32
    %27 = vector.broadcast %cst_12 : f32 to vector<8x32xf32>
    %28 = arith.subf %27, %21 : vector<8x32xf32>
    %29 = arith.mulf %28, %26 : vector<8x32xf32>
    %30 = arith.mulf %21, %0 : vector<8x32xf32>
    %31 = arith.addf %29, %30 : vector<8x32xf32>
    %c0_13 = arith.constant 0 : index
    %c0_14 = arith.constant 0 : index
    %c0_15 = arith.constant 0 : index
    %32 = vector.load %arg1[%c0_13, %c0_14, %c0_15] : memref<8x8x1xf32, #tpu.memory_space<vmem>>, vector<1x8x1xf32>
    %33 = vector.shape_cast %32 : vector<1x8x1xf32> to vector<8x1xf32>
    %34 = vector.broadcast %33 : vector<8x1xf32> to vector<8x32xf32>
    %35 = arith.mulf %34, %31 : vector<8x32xf32>
    %cst_16 = arith.constant 1.000000e+00 : f32
    %36 = vector.broadcast %cst_16 : f32 to vector<8x1xf32>
    %37 = arith.subf %36, %33 : vector<8x1xf32>
    %38 = vector.broadcast %37 : vector<8x1xf32> to vector<8x32xf32>
    %39 = arith.mulf %38, %0 : vector<8x32xf32>
    %40 = arith.addf %35, %39 : vector<8x32xf32>
    %41 = vector.broadcast %33 : vector<8x1xf32> to vector<8x32xf32>
    %42 = arith.mulf %40, %41 : vector<8x32xf32>
    %c0_17 = arith.constant 0 : index
    %c0_18 = arith.constant 0 : index
    %c0_19 = arith.constant 0 : index
    %43 = vector.load %arg14[%c0_17, %c0_18, %c0_19] : memref<8x8x32xf32, #tpu.memory_space<vmem>>, vector<1x8x32xf32>
    %44 = vector.shape_cast %43 : vector<1x8x32xf32> to vector<8x32xf32>
    %45 = vector.shape_cast %42 : vector<8x32xf32> to vector<1x8x32xf32>
    tpu.vector_store %arg14[%c0_17, %c0_18, %c0_19], %45 {strides = array<i32>} : memref<8x8x32xf32, #tpu.memory_space<vmem>>, vector<1x8x32xf32>,
    %c1 = arith.constant 1 : index
    %c0_20 = arith.constant 0 : index
    %c0_21 = arith.constant 0 : index
    %46 = vector.load %arg0[%c1, %c0_20, %c0_21] : memref<8x8x32xf32, #tpu.memory_space<vmem>>, vector<1x8x32xf32>
    %47 = vector.shape_cast %46 : vector<1x8x32xf32> to vector<8x32xf32>
    %c0_22 = arith.constant 0 : index
    %c0_23 = arith.constant 0 : index
    %48 = vector.load %arg3[%c0_22, %c0_23] : memref<32x128xf32, #tpu.memory_space<vmem>>, vector<32x128xf32>
    %cst_24 = arith.constant dense<0.000000e+00> : vector<8x128xf32>
    %49 = tpu.matmul %47, %48, %cst_24 {dimension_numbers = #tpu.dot_dimension_numbers<[1], [0], [0], [1], [0, 0, 1, 1], [], []>} : vector<8x32xf32>, vector<32x128xf32>, vector<8x128xf32> -> vector<8x128xf32>
    %c0_25 = arith.constant 0 : index
    %c0_26 = arith.constant 0 : index
    %50 = vector.load %arg4[%c0_25, %c0_26] : memref<32x128xf32, #tpu.memory_space<vmem>>, vector<32x128xf32>
    %cst_27 = arith.constant dense<0.000000e+00> : vector<8x128xf32>
    %51 = tpu.matmul %40, %50, %cst_27 {dimension_numbers = #tpu.dot_dimension_numbers<[1], [0], [0], [1], [0, 0, 1, 1], [], []>} : vector<8x32xf32>, vector<32x128xf32>, vector<8x128xf32> -> vector<8x128xf32>
    %52 = arith.addf %49, %51 : vector<8x128xf32>
    %c0_28 = arith.constant 0 : index
    %c0_29 = arith.constant 0 : index
    %53 = vector.load %arg5[%c0_28, %c0_29] : memref<8x128xf32, #tpu.memory_space<vmem>>, vector<8x128xf32>
    %54 = arith.addf %52, %53 : vector<8x128xf32>
    %55 = vector.extract_strided_slice %54 {offsets = [0, 0], sizes = [8, 32], strides = [1, 1]} : vector<8x128xf32> to vector<8x32xf32>
    %56 = arith.negf %55 : vector<8x32xf32>
    %57 = math.exp %56 : vector<8x32xf32>
    %cst_30 = arith.constant 1.000000e+00 : f32
    %58 = vector.broadcast %cst_30 : f32 to vector<8x32xf32>
    %59 = arith.addf %58, %57 : vector<8x32xf32>
    %60 = arith.divf %58, %59 : vector<8x32xf32>
    %61 = vector.extract_strided_slice %54 {offsets = [0, 32], sizes = [8, 32], strides = [1, 1]} : vector<8x128xf32> to vector<8x32xf32>
    %62 = arith.negf %61 : vector<8x32xf32>
    %63 = math.exp %62 : vector<8x32xf32>
    %cst_31 = arith.constant 1.000000e+00 : f32
    %64 = vector.broadcast %cst_31 : f32 to vector<8x32xf32>
    %65 = arith.addf %64, %63 : vector<8x32xf32>
    %66 = arith.divf %64, %65 : vector<8x32xf32>
    %67 = vector.extract_strided_slice %54 {offsets = [0, 64], sizes = [8, 32], strides = [1, 1]} : vector<8x128xf32> to vector<8x32xf32>
    %68 = vector.extract_strided_slice %54 {offsets = [0, 96], sizes = [8, 32], strides = [1, 1]} : vector<8x128xf32> to vector<8x32xf32>
    %69 = arith.mulf %60, %68 : vector<8x32xf32>
    %70 = arith.addf %67, %69 : vector<8x32xf32>
    %71 = math.tanh %70 : vector<8x32xf32>
    %cst_32 = arith.constant 1.000000e+00 : f32
    %72 = vector.broadcast %cst_32 : f32 to vector<8x32xf32>
    %73 = arith.subf %72, %66 : vector<8x32xf32>
    %74 = arith.mulf %73, %71 : vector<8x32xf32>
    %75 = arith.mulf %66, %40 : vector<8x32xf32>
    %76 = arith.addf %74, %75 : vector<8x32xf32>
    %c1_33 = arith.constant 1 : index
    %c0_34 = arith.constant 0 : index
    %c0_35 = arith.constant 0 : index
    %77 = vector.load %arg1[%c1_33, %c0_34, %c0_35] : memref<8x8x1xf32, #tpu.memory_space<vmem>>, vector<1x8x1xf32>
    %78 = vector.shape_cast %77 : vector<1x8x1xf32> to vector<8x1xf32>
    %79 = vector.broadcast %78 : vector<8x1xf32> to vector<8x32xf32>
    %80 = arith.mulf %79, %76 : vector<8x32xf32>
    %cst_36 = arith.constant 1.000000e+00 : f32
    %81 = vector.broadcast %cst_36 : f32 to vector<8x1xf32>
    %82 = arith.subf %81, %78 : vector<8x1xf32>
    %83 = vector.broadcast %82 : vector<8x1xf32> to vector<8x32xf32>
    %84 = arith.mulf %83, %40 : vector<8x32xf32>
    %85 = arith.addf %80, %84 : vector<8x32xf32>
    %86 = vector.broadcast %78 : vector<8x1xf32> to vector<8x32xf32>
    %87 = arith.mulf %85, %86 : vector<8x32xf32>
    %c1_37 = arith.constant 1 : index
    %c0_38 = arith.constant 0 : index
    %c0_39 = arith.constant 0 : index
    %88 = vector.load %arg14[%c1_37, %c0_38, %c0_39] : memref<8x8x32xf32, #tpu.memory_space<vmem>>, vector<1x8x32xf32>
    %89 = vector.shape_cast %88 : vector<1x8x32xf32> to vector<8x32xf32>
    %90 = vector.shape_cast %87 : vector<8x32xf32> to vector<1x8x32xf32>
    tpu.vector_store %arg14[%c1_37, %c0_38, %c0_39], %90 {strides = array<i32>} : memref<8x8x32xf32, #tpu.memory_space<vmem>>, vector<1x8x32xf32>,
    %c2 = arith.constant 2 : index
    %c0_40 = arith.constant 0 : index
    %c0_41 = arith.constant 0 : index
    %91 = vector.load %arg0[%c2, %c0_40, %c0_41] : memref<8x8x32xf32, #tpu.memory_space<vmem>>, vector<1x8x32xf32>
    %92 = vector.shape_cast %91 : vector<1x8x32xf32> to vector<8x32xf32>
    %c0_42 = arith.constant 0 : index
    %c0_43 = arith.constant 0 : index
    %93 = vector.load %arg3[%c0_42, %c0_43] : memref<32x128xf32, #tpu.memory_space<vmem>>, vector<32x128xf32>
    %cst_44 = arith.constant dense<0.000000e+00> : vector<8x128xf32>
    %94 = tpu.matmul %92, %93, %cst_44 {dimension_numbers = #tpu.dot_dimension_numbers<[1], [0], [0], [1], [0, 0, 1, 1], [], []>} : vector<8x32xf32>, vector<32x128xf32>, vector<8x128xf32> -> vector<8x128xf32>
    %c0_45 = arith.constant 0 : index
    %c0_46 = arith.constant 0 : index
    %95 = vector.load %arg4[%c0_45, %c0_46] : memref<32x128xf32, #tpu.memory_space<vmem>>, vector<32x128xf32>
    %cst_47 = arith.constant dense<0.000000e+00> : vector<8x128xf32>
    %96 = tpu.matmul %85, %95, %cst_47 {dimension_numbers = #tpu.dot_dimension_numbers<[1], [0], [0], [1], [0, 0, 1, 1], [], []>} : vector<8x32xf32>, vector<32x128xf32>, vector<8x128xf32> -> vector<8x128xf32>
    %97 = arith.addf %94, %96 : vector<8x128xf32>
    %c0_48 = arith.constant 0 : index
    %c0_49 = arith.constant 0 : index
    %98 = vector.load %arg5[%c0_48, %c0_49] : memref<8x128xf32, #tpu.memory_space<vmem>>, vector<8x128xf32>
    %99 = arith.addf %97, %98 : vector<8x128xf32>
    %100 = vector.extract_strided_slice %99 {offsets = [0, 0], sizes = [8, 32], strides = [1, 1]} : vector<8x128xf32> to vector<8x32xf32>
    %101 = arith.negf %100 : vector<8x32xf32>
    %102 = math.exp %101 : vector<8x32xf32>
    %cst_50 = arith.constant 1.000000e+00 : f32
    %103 = vector.broadcast %cst_50 : f32 to vector<8x32xf32>
    %104 = arith.addf %103, %102 : vector<8x32xf32>
    %105 = arith.divf %103, %104 : vector<8x32xf32>
    %106 = vector.extract_strided_slice %99 {offsets = [0, 32], sizes = [8, 32], strides = [1, 1]} : vector<8x128xf32> to vector<8x32xf32>
    %107 = arith.negf %106 : vector<8x32xf32>
    %108 = math.exp %107 : vector<8x32xf32>
    %cst_51 = arith.constant 1.000000e+00 : f32
    %109 = vector.broadcast %cst_51 : f32 to vector<8x32xf32>
    %110 = arith.addf %109, %108 : vector<8x32xf32>
    %111 = arith.divf %109, %110 : vector<8x32xf32>
    %112 = vector.extract_strided_slice %99 {offsets = [0, 64], sizes = [8, 32], strides = [1, 1]} : vector<8x128xf32> to vector<8x32xf32>
    %113 = vector.extract_strided_slice %99 {offsets = [0, 96], sizes = [8, 32], strides = [1, 1]} : vector<8x128xf32> to vector<8x32xf32>
    %114 = arith.mulf %105, %113 : vector<8x32xf32>
    %115 = arith.addf %112, %114 : vector<8x32xf32>
    %116 = math.tanh %115 : vector<8x32xf32>
    %cst_52 = arith.constant 1.000000e+00 : f32
    %117 = vector.broadcast %cst_52 : f32 to vector<8x32xf32>
    %118 = arith.subf %117, %111 : vector<8x32xf32>
    %119 = arith.mulf %118, %116 : vector<8x32xf32>
    %120 = arith.mulf %111, %85 : vector<8x32xf32>
    %121 = arith.addf %119, %120 : vector<8x32xf32>
    %c2_53 = arith.constant 2 : index
    %c0_54 = arith.constant 0 : index
    %c0_55 = arith.constant 0 : index
    %122 = vector.load %arg1[%c2_53, %c0_54, %c0_55] : memref<8x8x1xf32, #tpu.memory_space<vmem>>, vector<1x8x1xf32>
    %123 = vector.shape_cast %122 : vector<1x8x1xf32> to vector<8x1xf32>
    %124 = vector.broadcast %123 : vector<8x1xf32> to vector<8x32xf32>
    %125 = arith.mulf %124, %121 : vector<8x32xf32>
    %cst_56 = arith.constant 1.000000e+00 : f32
    %126 = vector.broadcast %cst_56 : f32 to vector<8x1xf32>
    %127 = arith.subf %126, %123 : vector<8x1xf32>
    %128 = vector.broadcast %127 : vector<8x1xf32> to vector<8x32xf32>
    %129 = arith.mulf %128, %85 : vector<8x32xf32>
    %130 = arith.addf %125, %129 : vector<8x32xf32>
    %131 = vector.broadcast %123 : vector<8x1xf32> to vector<8x32xf32>
    %132 = arith.mulf %130, %131 : vector<8x32xf32>
    %c2_57 = arith.constant 2 : index
    %c0_58 = arith.constant 0 : index
    %c0_59 = arith.constant 0 : index
    %133 = vector.load %arg14[%c2_57, %c0_58, %c0_59] : memref<8x8x32xf32, #tpu.memory_space<vmem>>, vector<1x8x32xf32>
    %134 = vector.shape_cast %133 : vector<1x8x32xf32> to vector<8x32xf32>
    %135 = vector.shape_cast %132 : vector<8x32xf32> to vector<1x8x32xf32>
    tpu.vector_store %arg14[%c2_57, %c0_58, %c0_59], %135 {strides = array<i32>} : memref<8x8x32xf32, #tpu.memory_space<vmem>>, vector<1x8x32xf32>,
    %c3 = arith.constant 3 : index
    %c0_60 = arith.constant 0 : index
    %c0_61 = arith.constant 0 : index
    %136 = vector.load %arg0[%c3, %c0_60, %c0_61] : memref<8x8x32xf32, #tpu.memory_space<vmem>>, vector<1x8x32xf32>
    %137 = vector.shape_cast %136 : vector<1x8x32xf32> to vector<8x32xf32>
    %c0_62 = arith.constant 0 : index
    %c0_63 = arith.constant 0 : index
    %138 = vector.load %arg3[%c0_62, %c0_63] : memref<32x128xf32, #tpu.memory_space<vmem>>, vector<32x128xf32>
    %cst_64 = arith.constant dense<0.000000e+00> : vector<8x128xf32>
    %139 = tpu.matmul %137, %138, %cst_64 {dimension_numbers = #tpu.dot_dimension_numbers<[1], [0], [0], [1], [0, 0, 1, 1], [], []>} : vector<8x32xf32>, vector<32x128xf32>, vector<8x128xf32> -> vector<8x128xf32>
    %c0_65 = arith.constant 0 : index
    %c0_66 = arith.constant 0 : index
    %140 = vector.load %arg4[%c0_65, %c0_66] : memref<32x128xf32, #tpu.memory_space<vmem>>, vector<32x128xf32>
    %cst_67 = arith.constant dense<0.000000e+00> : vector<8x128xf32>
    %141 = tpu.matmul %130, %140, %cst_67 {dimension_numbers = #tpu.dot_dimension_numbers<[1], [0], [0], [1], [0, 0, 1, 1], [], []>} : vector<8x32xf32>, vector<32x128xf32>, vector<8x128xf32> -> vector<8x128xf32>
    %142 = arith.addf %139, %141 : vector<8x128xf32>
    %c0_68 = arith.constant 0 : index
    %c0_69 = arith.constant 0 : index
    %143 = vector.load %arg5[%c0_68, %c0_69] : memref<8x128xf32, #tpu.memory_space<vmem>>, vector<8x128xf32>
    %144 = arith.addf %142, %143 : vector<8x128xf32>
    %145 = vector.extract_strided_slice %144 {offsets = [0, 0], sizes = [8, 32], strides = [1, 1]} : vector<8x128xf32> to vector<8x32xf32>
    %146 = arith.negf %145 : vector<8x32xf32>
    %147 = math.exp %146 : vector<8x32xf32>
    %cst_70 = arith.constant 1.000000e+00 : f32
    %148 = vector.broadcast %cst_70 : f32 to vector<8x32xf32>
    %149 = arith.addf %148, %147 : vector<8x32xf32>
    %150 = arith.divf %148, %149 : vector<8x32xf32>
    %151 = vector.extract_strided_slice %144 {offsets = [0, 32], sizes = [8, 32], strides = [1, 1]} : vector<8x128xf32> to vector<8x32xf32>
    %152 = arith.negf %151 : vector<8x32xf32>
    %153 = math.exp %152 : vector<8x32xf32>
    %cst_71 = arith.constant 1.000000e+00 : f32
    %154 = vector.broadcast %cst_71 : f32 to vector<8x32xf32>
    %155 = arith.addf %154, %153 : vector<8x32xf32>
    %156 = arith.divf %154, %155 : vector<8x32xf32>
    %157 = vector.extract_strided_slice %144 {offsets = [0, 64], sizes = [8, 32], strides = [1, 1]} : vector<8x128xf32> to vector<8x32xf32>
    %158 = vector.extract_strided_slice %144 {offsets = [0, 96], sizes = [8, 32], strides = [1, 1]} : vector<8x128xf32> to vector<8x32xf32>
    %159 = arith.mulf %150, %158 : vector<8x32xf32>
    %160 = arith.addf %157, %159 : vector<8x32xf32>
    %161 = math.tanh %160 : vector<8x32xf32>
    %cst_72 = arith.constant 1.000000e+00 : f32
    %162 = vector.broadcast %cst_72 : f32 to vector<8x32xf32>
    %163 = arith.subf %162, %156 : vector<8x32xf32>
    %164 = arith.mulf %163, %161 : vector<8x32xf32>
    %165 = arith.mulf %156, %130 : vector<8x32xf32>
    %166 = arith.addf %164, %165 : vector<8x32xf32>
    %c3_73 = arith.constant 3 : index
    %c0_74 = arith.constant 0 : index
    %c0_75 = arith.constant 0 : index
    %167 = vector.load %arg1[%c3_73, %c0_74, %c0_75] : memref<8x8x1xf32, #tpu.memory_space<vmem>>, vector<1x8x1xf32>
    %168 = vector.shape_cast %167 : vector<1x8x1xf32> to vector<8x1xf32>
    %169 = vector.broadcast %168 : vector<8x1xf32> to vector<8x32xf32>
    %170 = arith.mulf %169, %166 : vector<8x32xf32>
    %cst_76 = arith.constant 1.000000e+00 : f32
    %171 = vector.broadcast %cst_76 : f32 to vector<8x1xf32>
    %172 = arith.subf %171, %168 : vector<8x1xf32>
    %173 = vector.broadcast %172 : vector<8x1xf32> to vector<8x32xf32>
    %174 = arith.mulf %173, %130 : vector<8x32xf32>
    %175 = arith.addf %170, %174 : vector<8x32xf32>
    %176 = vector.broadcast %168 : vector<8x1xf32> to vector<8x32xf32>
    %177 = arith.mulf %175, %176 : vector<8x32xf32>
    %c3_77 = arith.constant 3 : index
    %c0_78 = arith.constant 0 : index
    %c0_79 = arith.constant 0 : index
    %178 = vector.load %arg14[%c3_77, %c0_78, %c0_79] : memref<8x8x32xf32, #tpu.memory_space<vmem>>, vector<1x8x32xf32>
    %179 = vector.shape_cast %178 : vector<1x8x32xf32> to vector<8x32xf32>
    %180 = vector.shape_cast %177 : vector<8x32xf32> to vector<1x8x32xf32>
    tpu.vector_store %arg14[%c3_77, %c0_78, %c0_79], %180 {strides = array<i32>} : memref<8x8x32xf32, #tpu.memory_space<vmem>>, vector<1x8x32xf32>,
    %c4 = arith.constant 4 : index
    %c0_80 = arith.constant 0 : index
    %c0_81 = arith.constant 0 : index
    %181 = vector.load %arg0[%c4, %c0_80, %c0_81] : memref<8x8x32xf32, #tpu.memory_space<vmem>>, vector<1x8x32xf32>
    %182 = vector.shape_cast %181 : vector<1x8x32xf32> to vector<8x32xf32>
    %c0_82 = arith.constant 0 : index
    %c0_83 = arith.constant 0 : index
    %183 = vector.load %arg3[%c0_82, %c0_83] : memref<32x128xf32, #tpu.memory_space<vmem>>, vector<32x128xf32>
    %cst_84 = arith.constant dense<0.000000e+00> : vector<8x128xf32>
    %184 = tpu.matmul %182, %183, %cst_84 {dimension_numbers = #tpu.dot_dimension_numbers<[1], [0], [0], [1], [0, 0, 1, 1], [], []>} : vector<8x32xf32>, vector<32x128xf32>, vector<8x128xf32> -> vector<8x128xf32>
    %c0_85 = arith.constant 0 : index
    %c0_86 = arith.constant 0 : index
    %185 = vector.load %arg4[%c0_85, %c0_86] : memref<32x128xf32, #tpu.memory_space<vmem>>, vector<32x128xf32>
    %cst_87 = arith.constant dense<0.000000e+00> : vector<8x128xf32>
    %186 = tpu.matmul %175, %185, %cst_87 {dimension_numbers = #tpu.dot_dimension_numbers<[1], [0], [0], [1], [0, 0, 1, 1], [], []>} : vector<8x32xf32>, vector<32x128xf32>, vector<8x128xf32> -> vector<8x128xf32>
    %187 = arith.addf %184, %186 : vector<8x128xf32>
    %c0_88 = arith.constant 0 : index
    %c0_89 = arith.constant 0 : index
    %188 = vector.load %arg5[%c0_88, %c0_89] : memref<8x128xf32, #tpu.memory_space<vmem>>, vector<8x128xf32>
    %189 = arith.addf %187, %188 : vector<8x128xf32>
    %190 = vector.extract_strided_slice %189 {offsets = [0, 0], sizes = [8, 32], strides = [1, 1]} : vector<8x128xf32> to vector<8x32xf32>
    %191 = arith.negf %190 : vector<8x32xf32>
    %192 = math.exp %191 : vector<8x32xf32>
    %cst_90 = arith.constant 1.000000e+00 : f32
    %193 = vector.broadcast %cst_90 : f32 to vector<8x32xf32>
    %194 = arith.addf %193, %192 : vector<8x32xf32>
    %195 = arith.divf %193, %194 : vector<8x32xf32>
    %196 = vector.extract_strided_slice %189 {offsets = [0, 32], sizes = [8, 32], strides = [1, 1]} : vector<8x128xf32> to vector<8x32xf32>
    %197 = arith.negf %196 : vector<8x32xf32>
    %198 = math.exp %197 : vector<8x32xf32>
    %cst_91 = arith.constant 1.000000e+00 : f32
    %199 = vector.broadcast %cst_91 : f32 to vector<8x32xf32>
    %200 = arith.addf %199, %198 : vector<8x32xf32>
    %201 = arith.divf %199, %200 : vector<8x32xf32>
    %202 = vector.extract_strided_slice %189 {offsets = [0, 64], sizes = [8, 32], strides = [1, 1]} : vector<8x128xf32> to vector<8x32xf32>
    %203 = vector.extract_strided_slice %189 {offsets = [0, 96], sizes = [8, 32], strides = [1, 1]} : vector<8x128xf32> to vector<8x32xf32>
    %204 = arith.mulf %195, %203 : vector<8x32xf32>
    %205 = arith.addf %202, %204 : vector<8x32xf32>
    %206 = math.tanh %205 : vector<8x32xf32>
    %cst_92 = arith.constant 1.000000e+00 : f32
    %207 = vector.broadcast %cst_92 : f32 to vector<8x32xf32>
    %208 = arith.subf %207, %201 : vector<8x32xf32>
    %209 = arith.mulf %208, %206 : vector<8x32xf32>
    %210 = arith.mulf %201, %175 : vector<8x32xf32>
    %211 = arith.addf %209, %210 : vector<8x32xf32>
    %c4_93 = arith.constant 4 : index
    %c0_94 = arith.constant 0 : index
    %c0_95 = arith.constant 0 : index
    %212 = vector.load %arg1[%c4_93, %c0_94, %c0_95] : memref<8x8x1xf32, #tpu.memory_space<vmem>>, vector<1x8x1xf32>
    %213 = vector.shape_cast %212 : vector<1x8x1xf32> to vector<8x1xf32>
    %214 = vector.broadcast %213 : vector<8x1xf32> to vector<8x32xf32>
    %215 = arith.mulf %214, %211 : vector<8x32xf32>
    %cst_96 = arith.constant 1.000000e+00 : f32
    %216 = vector.broadcast %cst_96 : f32 to vector<8x1xf32>
    %217 = arith.subf %216, %213 : vector<8x1xf32>
    %218 = vector.broadcast %217 : vector<8x1xf32> to vector<8x32xf32>
    %219 = arith.mulf %218, %175 : vector<8x32xf32>
    %220 = arith.addf %215, %219 : vector<8x32xf32>
    %221 = vector.broadcast %213 : vector<8x1xf32> to vector<8x32xf32>
    %222 = arith.mulf %220, %221 : vector<8x32xf32>
    %c4_97 = arith.constant 4 : index
    %c0_98 = arith.constant 0 : index
    %c0_99 = arith.constant 0 : index
    %223 = vector.load %arg14[%c4_97, %c0_98, %c0_99] : memref<8x8x32xf32, #tpu.memory_space<vmem>>, vector<1x8x32xf32>
    %224 = vector.shape_cast %223 : vector<1x8x32xf32> to vector<8x32xf32>
    %225 = vector.shape_cast %222 : vector<8x32xf32> to vector<1x8x32xf32>
    tpu.vector_store %arg14[%c4_97, %c0_98, %c0_99], %225 {strides = array<i32>} : memref<8x8x32xf32, #tpu.memory_space<vmem>>, vector<1x8x32xf32>,
    %c5 = arith.constant 5 : index
    %c0_100 = arith.constant 0 : index
    %c0_101 = arith.constant 0 : index
    %226 = vector.load %arg0[%c5, %c0_100, %c0_101] : memref<8x8x32xf32, #tpu.memory_space<vmem>>, vector<1x8x32xf32>
    %227 = vector.shape_cast %226 : vector<1x8x32xf32> to vector<8x32xf32>
    %c0_102 = arith.constant 0 : index
    %c0_103 = arith.constant 0 : index
    %228 = vector.load %arg3[%c0_102, %c0_103] : memref<32x128xf32, #tpu.memory_space<vmem>>, vector<32x128xf32>
    %cst_104 = arith.constant dense<0.000000e+00> : vector<8x128xf32>
    %229 = tpu.matmul %227, %228, %cst_104 {dimension_numbers = #tpu.dot_dimension_numbers<[1], [0], [0], [1], [0, 0, 1, 1], [], []>} : vector<8x32xf32>, vector<32x128xf32>, vector<8x128xf32> -> vector<8x128xf32>
    %c0_105 = arith.constant 0 : index
    %c0_106 = arith.constant 0 : index
    %230 = vector.load %arg4[%c0_105, %c0_106] : memref<32x128xf32, #tpu.memory_space<vmem>>, vector<32x128xf32>
    %cst_107 = arith.constant dense<0.000000e+00> : vector<8x128xf32>
    %231 = tpu.matmul %220, %230, %cst_107 {dimension_numbers = #tpu.dot_dimension_numbers<[1], [0], [0], [1], [0, 0, 1, 1], [], []>} : vector<8x32xf32>, vector<32x128xf32>, vector<8x128xf32> -> vector<8x128xf32>
    %232 = arith.addf %229, %231 : vector<8x128xf32>
    %c0_108 = arith.constant 0 : index
    %c0_109 = arith.constant 0 : index
    %233 = vector.load %arg5[%c0_108, %c0_109] : memref<8x128xf32, #tpu.memory_space<vmem>>, vector<8x128xf32>
    %234 = arith.addf %232, %233 : vector<8x128xf32>
    %235 = vector.extract_strided_slice %234 {offsets = [0, 0], sizes = [8, 32], strides = [1, 1]} : vector<8x128xf32> to vector<8x32xf32>
    %236 = arith.negf %235 : vector<8x32xf32>
    %237 = math.exp %236 : vector<8x32xf32>
    %cst_110 = arith.constant 1.000000e+00 : f32
    %238 = vector.broadcast %cst_110 : f32 to vector<8x32xf32>
    %239 = arith.addf %238, %237 : vector<8x32xf32>
    %240 = arith.divf %238, %239 : vector<8x32xf32>
    %241 = vector.extract_strided_slice %234 {offsets = [0, 32], sizes = [8, 32], strides = [1, 1]} : vector<8x128xf32> to vector<8x32xf32>
    %242 = arith.negf %241 : vector<8x32xf32>
    %243 = math.exp %242 : vector<8x32xf32>
    %cst_111 = arith.constant 1.000000e+00 : f32
    %244 = vector.broadcast %cst_111 : f32 to vector<8x32xf32>
    %245 = arith.addf %244, %243 : vector<8x32xf32>
    %246 = arith.divf %244, %245 : vector<8x32xf32>
    %247 = vector.extract_strided_slice %234 {offsets = [0, 64], sizes = [8, 32], strides = [1, 1]} : vector<8x128xf32> to vector<8x32xf32>
    %248 = vector.extract_strided_slice %234 {offsets = [0, 96], sizes = [8, 32], strides = [1, 1]} : vector<8x128xf32> to vector<8x32xf32>
    %249 = arith.mulf %240, %248 : vector<8x32xf32>
    %250 = arith.addf %247, %249 : vector<8x32xf32>
    %251 = math.tanh %250 : vector<8x32xf32>
    %cst_112 = arith.constant 1.000000e+00 : f32
    %252 = vector.broadcast %cst_112 : f32 to vector<8x32xf32>
    %253 = arith.subf %252, %246 : vector<8x32xf32>
    %254 = arith.mulf %253, %251 : vector<8x32xf32>
    %255 = arith.mulf %246, %220 : vector<8x32xf32>
    %256 = arith.addf %254, %255 : vector<8x32xf32>
    %c5_113 = arith.constant 5 : index
    %c0_114 = arith.constant 0 : index
    %c0_115 = arith.constant 0 : index
    %257 = vector.load %arg1[%c5_113, %c0_114, %c0_115] : memref<8x8x1xf32, #tpu.memory_space<vmem>>, vector<1x8x1xf32>
    %258 = vector.shape_cast %257 : vector<1x8x1xf32> to vector<8x1xf32>
    %259 = vector.broadcast %258 : vector<8x1xf32> to vector<8x32xf32>
    %260 = arith.mulf %259, %256 : vector<8x32xf32>
    %cst_116 = arith.constant 1.000000e+00 : f32
    %261 = vector.broadcast %cst_116 : f32 to vector<8x1xf32>
    %262 = arith.subf %261, %258 : vector<8x1xf32>
    %263 = vector.broadcast %262 : vector<8x1xf32> to vector<8x32xf32>
    %264 = arith.mulf %263, %220 : vector<8x32xf32>
    %265 = arith.addf %260, %264 : vector<8x32xf32>
    %266 = vector.broadcast %258 : vector<8x1xf32> to vector<8x32xf32>
    %267 = arith.mulf %265, %266 : vector<8x32xf32>
    %c5_117 = arith.constant 5 : index
    %c0_118 = arith.constant 0 : index
    %c0_119 = arith.constant 0 : index
    %268 = vector.load %arg14[%c5_117, %c0_118, %c0_119] : memref<8x8x32xf32, #tpu.memory_space<vmem>>, vector<1x8x32xf32>
    %269 = vector.shape_cast %268 : vector<1x8x32xf32> to vector<8x32xf32>
    %270 = vector.shape_cast %267 : vector<8x32xf32> to vector<1x8x32xf32>
    tpu.vector_store %arg14[%c5_117, %c0_118, %c0_119], %270 {strides = array<i32>} : memref<8x8x32xf32, #tpu.memory_space<vmem>>, vector<1x8x32xf32>,
    %c6 = arith.constant 6 : index
    %c0_120 = arith.constant 0 : index
    %c0_121 = arith.constant 0 : index
    %271 = vector.load %arg0[%c6, %c0_120, %c0_121] : memref<8x8x32xf32, #tpu.memory_space<vmem>>, vector<1x8x32xf32>
    %272 = vector.shape_cast %271 : vector<1x8x32xf32> to vector<8x32xf32>
    %c0_122 = arith.constant 0 : index
    %c0_123 = arith.constant 0 : index
    %273 = vector.load %arg3[%c0_122, %c0_123] : memref<32x128xf32, #tpu.memory_space<vmem>>, vector<32x128xf32>
    %cst_124 = arith.constant dense<0.000000e+00> : vector<8x128xf32>
    %274 = tpu.matmul %272, %273, %cst_124 {dimension_numbers = #tpu.dot_dimension_numbers<[1], [0], [0], [1], [0, 0, 1, 1], [], []>} : vector<8x32xf32>, vector<32x128xf32>, vector<8x128xf32> -> vector<8x128xf32>
    %c0_125 = arith.constant 0 : index
    %c0_126 = arith.constant 0 : index
    %275 = vector.load %arg4[%c0_125, %c0_126] : memref<32x128xf32, #tpu.memory_space<vmem>>, vector<32x128xf32>
    %cst_127 = arith.constant dense<0.000000e+00> : vector<8x128xf32>
    %276 = tpu.matmul %265, %275, %cst_127 {dimension_numbers = #tpu.dot_dimension_numbers<[1], [0], [0], [1], [0, 0, 1, 1], [], []>} : vector<8x32xf32>, vector<32x128xf32>, vector<8x128xf32> -> vector<8x128xf32>
    %277 = arith.addf %274, %276 : vector<8x128xf32>
    %c0_128 = arith.constant 0 : index
    %c0_129 = arith.constant 0 : index
    %278 = vector.load %arg5[%c0_128, %c0_129] : memref<8x128xf32, #tpu.memory_space<vmem>>, vector<8x128xf32>
    %279 = arith.addf %277, %278 : vector<8x128xf32>
    %280 = vector.extract_strided_slice %279 {offsets = [0, 0], sizes = [8, 32], strides = [1, 1]} : vector<8x128xf32> to vector<8x32xf32>
    %281 = arith.negf %280 : vector<8x32xf32>
    %282 = math.exp %281 : vector<8x32xf32>
    %cst_130 = arith.constant 1.000000e+00 : f32
    %283 = vector.broadcast %cst_130 : f32 to vector<8x32xf32>
    %284 = arith.addf %283, %282 : vector<8x32xf32>
    %285 = arith.divf %283, %284 : vector<8x32xf32>
    %286 = vector.extract_strided_slice %279 {offsets = [0, 32], sizes = [8, 32], strides = [1, 1]} : vector<8x128xf32> to vector<8x32xf32>
    %287 = arith.negf %286 : vector<8x32xf32>
    %288 = math.exp %287 : vector<8x32xf32>
    %cst_131 = arith.constant 1.000000e+00 : f32
    %289 = vector.broadcast %cst_131 : f32 to vector<8x32xf32>
    %290 = arith.addf %289, %288 : vector<8x32xf32>
    %291 = arith.divf %289, %290 : vector<8x32xf32>
    %292 = vector.extract_strided_slice %279 {offsets = [0, 64], sizes = [8, 32], strides = [1, 1]} : vector<8x128xf32> to vector<8x32xf32>
    %293 = vector.extract_strided_slice %279 {offsets = [0, 96], sizes = [8, 32], strides = [1, 1]} : vector<8x128xf32> to vector<8x32xf32>
    %294 = arith.mulf %285, %293 : vector<8x32xf32>
    %295 = arith.addf %292, %294 : vector<8x32xf32>
    %296 = math.tanh %295 : vector<8x32xf32>
    %cst_132 = arith.constant 1.000000e+00 : f32
    %297 = vector.broadcast %cst_132 : f32 to vector<8x32xf32>
    %298 = arith.subf %297, %291 : vector<8x32xf32>
    %299 = arith.mulf %298, %296 : vector<8x32xf32>
    %300 = arith.mulf %291, %265 : vector<8x32xf32>
    %301 = arith.addf %299, %300 : vector<8x32xf32>
    %c6_133 = arith.constant 6 : index
    %c0_134 = arith.constant 0 : index
    %c0_135 = arith.constant 0 : index
    %302 = vector.load %arg1[%c6_133, %c0_134, %c0_135] : memref<8x8x1xf32, #tpu.memory_space<vmem>>, vector<1x8x1xf32>
    %303 = vector.shape_cast %302 : vector<1x8x1xf32> to vector<8x1xf32>
    %304 = vector.broadcast %303 : vector<8x1xf32> to vector<8x32xf32>
    %305 = arith.mulf %304, %301 : vector<8x32xf32>
    %cst_136 = arith.constant 1.000000e+00 : f32
    %306 = vector.broadcast %cst_136 : f32 to vector<8x1xf32>
    %307 = arith.subf %306, %303 : vector<8x1xf32>
    %308 = vector.broadcast %307 : vector<8x1xf32> to vector<8x32xf32>
    %309 = arith.mulf %308, %265 : vector<8x32xf32>
    %310 = arith.addf %305, %309 : vector<8x32xf32>
    %311 = vector.broadcast %303 : vector<8x1xf32> to vector<8x32xf32>
    %312 = arith.mulf %310, %311 : vector<8x32xf32>
    %c6_137 = arith.constant 6 : index
    %c0_138 = arith.constant 0 : index
    %c0_139 = arith.constant 0 : index
    %313 = vector.load %arg14[%c6_137, %c0_138, %c0_139] : memref<8x8x32xf32, #tpu.memory_space<vmem>>, vector<1x8x32xf32>
    %314 = vector.shape_cast %313 : vector<1x8x32xf32> to vector<8x32xf32>
    %315 = vector.shape_cast %312 : vector<8x32xf32> to vector<1x8x32xf32>
    tpu.vector_store %arg14[%c6_137, %c0_138, %c0_139], %315 {strides = array<i32>} : memref<8x8x32xf32, #tpu.memory_space<vmem>>, vector<1x8x32xf32>,
    %c7 = arith.constant 7 : index
    %c0_140 = arith.constant 0 : index
    %c0_141 = arith.constant 0 : index
    %316 = vector.load %arg0[%c7, %c0_140, %c0_141] : memref<8x8x32xf32, #tpu.memory_space<vmem>>, vector<1x8x32xf32>
    %317 = vector.shape_cast %316 : vector<1x8x32xf32> to vector<8x32xf32>
    %c0_142 = arith.constant 0 : index
    %c0_143 = arith.constant 0 : index
    %318 = vector.load %arg3[%c0_142, %c0_143] : memref<32x128xf32, #tpu.memory_space<vmem>>, vector<32x128xf32>
    %cst_144 = arith.constant dense<0.000000e+00> : vector<8x128xf32>
    %319 = tpu.matmul %317, %318, %cst_144 {dimension_numbers = #tpu.dot_dimension_numbers<[1], [0], [0], [1], [0, 0, 1, 1], [], []>} : vector<8x32xf32>, vector<32x128xf32>, vector<8x128xf32> -> vector<8x128xf32>
    %c0_145 = arith.constant 0 : index
    %c0_146 = arith.constant 0 : index
    %320 = vector.load %arg4[%c0_145, %c0_146] : memref<32x128xf32, #tpu.memory_space<vmem>>, vector<32x128xf32>
    %cst_147 = arith.constant dense<0.000000e+00> : vector<8x128xf32>
    %321 = tpu.matmul %310, %320, %cst_147 {dimension_numbers = #tpu.dot_dimension_numbers<[1], [0], [0], [1], [0, 0, 1, 1], [], []>} : vector<8x32xf32>, vector<32x128xf32>, vector<8x128xf32> -> vector<8x128xf32>
    %322 = arith.addf %319, %321 : vector<8x128xf32>
    %c0_148 = arith.constant 0 : index
    %c0_149 = arith.constant 0 : index
    %323 = vector.load %arg5[%c0_148, %c0_149] : memref<8x128xf32, #tpu.memory_space<vmem>>, vector<8x128xf32>
    %324 = arith.addf %322, %323 : vector<8x128xf32>
    %325 = vector.extract_strided_slice %324 {offsets = [0, 0], sizes = [8, 32], strides = [1, 1]} : vector<8x128xf32> to vector<8x32xf32>
    %326 = arith.negf %325 : vector<8x32xf32>
    %327 = math.exp %326 : vector<8x32xf32>
    %cst_150 = arith.constant 1.000000e+00 : f32
    %328 = vector.broadcast %cst_150 : f32 to vector<8x32xf32>
    %329 = arith.addf %328, %327 : vector<8x32xf32>
    %330 = arith.divf %328, %329 : vector<8x32xf32>
    %331 = vector.extract_strided_slice %324 {offsets = [0, 32], sizes = [8, 32], strides = [1, 1]} : vector<8x128xf32> to vector<8x32xf32>
    %332 = arith.negf %331 : vector<8x32xf32>
    %333 = math.exp %332 : vector<8x32xf32>
    %cst_151 = arith.constant 1.000000e+00 : f32
    %334 = vector.broadcast %cst_151 : f32 to vector<8x32xf32>
    %335 = arith.addf %334, %333 : vector<8x32xf32>
    %336 = arith.divf %334, %335 : vector<8x32xf32>
    %337 = vector.extract_strided_slice %324 {offsets = [0, 64], sizes = [8, 32], strides = [1, 1]} : vector<8x128xf32> to vector<8x32xf32>
    %338 = vector.extract_strided_slice %324 {offsets = [0, 96], sizes = [8, 32], strides = [1, 1]} : vector<8x128xf32> to vector<8x32xf32>
    %339 = arith.mulf %330, %338 : vector<8x32xf32>
    %340 = arith.addf %337, %339 : vector<8x32xf32>
    %341 = math.tanh %340 : vector<8x32xf32>
    %cst_152 = arith.constant 1.000000e+00 : f32
    %342 = vector.broadcast %cst_152 : f32 to vector<8x32xf32>
    %343 = arith.subf %342, %336 : vector<8x32xf32>
    %344 = arith.mulf %343, %341 : vector<8x32xf32>
    %345 = arith.mulf %336, %310 : vector<8x32xf32>
    %346 = arith.addf %344, %345 : vector<8x32xf32>
    %c7_153 = arith.constant 7 : index
    %c0_154 = arith.constant 0 : index
    %c0_155 = arith.constant 0 : index
    %347 = vector.load %arg1[%c7_153, %c0_154, %c0_155] : memref<8x8x1xf32, #tpu.memory_space<vmem>>, vector<1x8x1xf32>
    %348 = vector.shape_cast %347 : vector<1x8x1xf32> to vector<8x1xf32>
    %349 = vector.broadcast %348 : vector<8x1xf32> to vector<8x32xf32>
    %350 = arith.mulf %349, %346 : vector<8x32xf32>
    %cst_156 = arith.constant 1.000000e+00 : f32
    %351 = vector.broadcast %cst_156 : f32 to vector<8x1xf32>
    %352 = arith.subf %351, %348 : vector<8x1xf32>
    %353 = vector.broadcast %352 : vector<8x1xf32> to vector<8x32xf32>
    %354 = arith.mulf %353, %310 : vector<8x32xf32>
    %355 = arith.addf %350, %354 : vector<8x32xf32>
    %356 = vector.broadcast %348 : vector<8x1xf32> to vector<8x32xf32>
    %357 = arith.mulf %355, %356 : vector<8x32xf32>
    %c7_157 = arith.constant 7 : index
    %c0_158 = arith.constant 0 : index
    %c0_159 = arith.constant 0 : index
    %358 = vector.load %arg14[%c7_157, %c0_158, %c0_159] : memref<8x8x32xf32, #tpu.memory_space<vmem>>, vector<1x8x32xf32>
    %359 = vector.shape_cast %358 : vector<1x8x32xf32> to vector<8x32xf32>
    %360 = vector.shape_cast %357 : vector<8x32xf32> to vector<1x8x32xf32>
    tpu.vector_store %arg14[%c7_157, %c0_158, %c0_159], %360 {strides = array<i32>} : memref<8x8x32xf32, #tpu.memory_space<vmem>>, vector<1x8x32xf32>,
    %c0_160 = arith.constant 0 : index
    %c0_161 = arith.constant 0 : index
    %c0_162 = arith.constant 0 : index
    %361 = vector.load %arg14[%c0_160, %c0_161, %c0_162] : memref<8x8x32xf32, #tpu.memory_space<vmem>>, vector<8x8x32xf32>
    %c0_163 = arith.constant 0 : index
    %c0_164 = arith.constant 0 : index
    %c0_165 = arith.constant 0 : index
    %362 = vector.load %arg1[%c0_163, %c0_164, %c0_165] : memref<8x8x1xf32, #tpu.memory_space<vmem>>, vector<8x8x1xf32>
    %c0_166 = arith.constant 0 : index
    %c0_167 = arith.constant 0 : index
    %c0_168 = arith.constant 0 : index
    %363 = vector.load %arg2[%c0_166, %c0_167, %c0_168] : memref<8x8x32xf32, #tpu.memory_space<vmem>>, vector<1x8x32xf32>
    %364 = vector.shape_cast %363 : vector<1x8x32xf32> to vector<8x32xf32>
    %c0_169 = arith.constant 0 : index
    %c0_170 = arith.constant 0 : index
    %365 = vector.load %arg6[%c0_169, %c0_170] : memref<32x128xf32, #tpu.memory_space<vmem>>, vector<32x128xf32>
    %cst_171 = arith.constant dense<0.000000e+00> : vector<8x128xf32>
    %366 = tpu.matmul %364, %365, %cst_171 {dimension_numbers = #tpu.dot_dimension_numbers<[1], [0], [0], [1], [0, 0, 1, 1], [], []>} : vector<8x32xf32>, vector<32x128xf32>, vector<8x128xf32> -> vector<8x128xf32>
    %c0_172 = arith.constant 0 : index
    %c0_173 = arith.constant 0 : index
    %367 = vector.load %arg7[%c0_172, %c0_173] : memref<32x128xf32, #tpu.memory_space<vmem>>, vector<32x128xf32>
    %cst_174 = arith.constant dense<0.000000e+00> : vector<8x128xf32>
    %368 = tpu.matmul %355, %367, %cst_174 {dimension_numbers = #tpu.dot_dimension_numbers<[1], [0], [0], [1], [0, 0, 1, 1], [], []>} : vector<8x32xf32>, vector<32x128xf32>, vector<8x128xf32> -> vector<8x128xf32>
    %369 = arith.addf %366, %368 : vector<8x128xf32>
    %c0_175 = arith.constant 0 : index
    %c0_176 = arith.constant 0 : index
    %370 = vector.load %arg8[%c0_175, %c0_176] : memref<8x128xf32, #tpu.memory_space<vmem>>, vector<8x128xf32>
    %371 = arith.addf %369, %370 : vector<8x128xf32>
    %372 = vector.extract_strided_slice %371 {offsets = [0, 0], sizes = [8, 32], strides = [1, 1]} : vector<8x128xf32> to vector<8x32xf32>
    %373 = arith.negf %372 : vector<8x32xf32>
    %374 = math.exp %373 : vector<8x32xf32>
    %cst_177 = arith.constant 1.000000e+00 : f32
    %375 = vector.broadcast %cst_177 : f32 to vector<8x32xf32>
    %376 = arith.addf %375, %374 : vector<8x32xf32>
    %377 = arith.divf %375, %376 : vector<8x32xf32>
    %378 = vector.extract_strided_slice %371 {offsets = [0, 32], sizes = [8, 32], strides = [1, 1]} : vector<8x128xf32> to vector<8x32xf32>
    %379 = arith.negf %378 : vector<8x32xf32>
    %380 = math.exp %379 : vector<8x32xf32>
    %cst_178 = arith.constant 1.000000e+00 : f32
    %381 = vector.broadcast %cst_178 : f32 to vector<8x32xf32>
    %382 = arith.addf %381, %380 : vector<8x32xf32>
    %383 = arith.divf %381, %382 : vector<8x32xf32>
    %384 = vector.extract_strided_slice %371 {offsets = [0, 64], sizes = [8, 32], strides = [1, 1]} : vector<8x128xf32> to vector<8x32xf32>
    %385 = vector.extract_strided_slice %371 {offsets = [0, 96], sizes = [8, 32], strides = [1, 1]} : vector<8x128xf32> to vector<8x32xf32>
    %386 = arith.mulf %377, %385 : vector<8x32xf32>
    %387 = arith.addf %384, %386 : vector<8x32xf32>
    %388 = math.tanh %387 : vector<8x32xf32>
    %cst_179 = arith.constant 1.000000e+00 : f32
    %389 = vector.broadcast %cst_179 : f32 to vector<8x32xf32>
    %390 = arith.subf %389, %383 : vector<8x32xf32>
    %391 = arith.mulf %390, %388 : vector<8x32xf32>
    %392 = arith.mulf %383, %355 : vector<8x32xf32>
    %393 = arith.addf %391, %392 : vector<8x32xf32>
    %394 = vector.shape_cast %393 : vector<8x32xf32> to vector<1x8x32xf32>
    %395 = vector.broadcast %394 : vector<1x8x32xf32> to vector<8x8x32xf32>
    %396 = arith.mulf %361, %395 : vector<8x8x32xf32>
    %cst_180 = arith.constant dense<0.000000e+00> : vector<8x8xf32>
    %397 = vector.multi_reduction <add>, %396, %cst_180 [2] : vector<8x8x32xf32> to vector<8x8xf32>
    %398 = vector.shape_cast %397 : vector<8x8xf32> to vector<8x8x1xf32>
    %cst_181 = arith.constant 5.000000e-01 : f32
    %399 = vector.broadcast %cst_181 : f32 to vector<8x8x1xf32>
    %400 = arith.cmpf ogt, %362, %399 : vector<8x8x1xf32>
    %cst_182 = arith.constant -1.000000e+30 : f32
    %401 = vector.broadcast %cst_182 : f32 to vector<8x8x1xf32>
    %402 = arith.select %400, %398, %401 : vector<8x8x1xi1>, vector<8x8x1xf32>
    %cst_183 = arith.constant dense<0xFF800000> : vector<8x1xf32>
    %403 = vector.multi_reduction <maximumf>, %402, %cst_183 [0] : vector<8x8x1xf32> to vector<8x1xf32>
    %404 = vector.shape_cast %403 : vector<8x1xf32> to vector<1x8x1xf32>
    %405 = vector.broadcast %404 : vector<1x8x1xf32> to vector<8x8x1xf32>
    %406 = arith.subf %402, %405 : vector<8x8x1xf32>
    %407 = math.exp %406 : vector<8x8x1xf32>
    %cst_184 = arith.constant dense<0.000000e+00> : vector<8x1xf32>
    %408 = vector.multi_reduction <add>, %407, %cst_184 [0] : vector<8x8x1xf32> to vector<8x1xf32>
    %409 = vector.shape_cast %408 : vector<8x1xf32> to vector<1x8x1xf32>
    %410 = vector.broadcast %409 : vector<1x8x1xf32> to vector<8x8x1xf32>
    %411 = arith.divf %407, %410 : vector<8x8x1xf32>
    %412 = vector.broadcast %411 : vector<8x8x1xf32> to vector<8x8x32xf32>
    %413 = arith.mulf %412, %361 : vector<8x8x32xf32>
    %cst_185 = arith.constant dense<0.000000e+00> : vector<8x32xf32>
    %414 = vector.multi_reduction <add>, %413, %cst_185 [0] : vector<8x8x32xf32> to vector<8x32xf32>
    %c0_186 = arith.constant 0 : index
    %c0_187 = arith.constant 0 : index
    %415 = vector.load %arg9[%c0_186, %c0_187] : memref<32x32xf32, #tpu.memory_space<vmem>>, vector<32x32xf32>
    %cst_188 = arith.constant dense<0.000000e+00> : vector<8x32xf32>
    %416 = tpu.matmul %393, %415, %cst_188 {dimension_numbers = #tpu.dot_dimension_numbers<[1], [0], [0], [1], [0, 0, 1, 1], [], []>} : vector<8x32xf32>, vector<32x32xf32>, vector<8x32xf32> -> vector<8x32xf32>
    %c0_189 = arith.constant 0 : index
    %c0_190 = arith.constant 0 : index
    %417 = vector.load %arg10[%c0_189, %c0_190] : memref<32x32xf32, #tpu.memory_space<vmem>>, vector<32x32xf32>
    %cst_191 = arith.constant dense<0.000000e+00> : vector<8x32xf32>
    %418 = tpu.matmul %414, %417, %cst_191 {dimension_numbers = #tpu.dot_dimension_numbers<[1], [0], [0], [1], [0, 0, 1, 1], [], []>} : vector<8x32xf32>, vector<32x32xf32>, vector<8x32xf32> -> vector<8x32xf32>
    %419 = arith.addf %416, %418 : vector<8x32xf32>
    %c0_192 = arith.constant 0 : index
    %c0_193 = arith.constant 0 : index
    %420 = vector.load %arg11[%c0_192, %c0_193] : memref<8x32xf32, #tpu.memory_space<vmem>>, vector<8x32xf32>
    %421 = arith.addf %419, %420 : vector<8x32xf32>
    %cst_194 = arith.constant dense<0xFF800000> : vector<8xf32>
    %422 = vector.multi_reduction <maximumf>, %421, %cst_194 [1] : vector<8x32xf32> to vector<8xf32>
    %423 = vector.shape_cast %422 : vector<8xf32> to vector<8x1xf32>
    %424 = vector.broadcast %423 : vector<8x1xf32> to vector<8x32xf32>
    %425 = arith.subf %421, %424 : vector<8x32xf32>
    %426 = math.exp %425 : vector<8x32xf32>
    %cst_195 = arith.constant dense<0.000000e+00> : vector<8xf32>
    %427 = vector.multi_reduction <add>, %426, %cst_195 [1] : vector<8x32xf32> to vector<8xf32>
    %428 = vector.shape_cast %427 : vector<8xf32> to vector<8x1xf32>
    %429 = math.log %428 : vector<8x1xf32>
    %430 = arith.addf %429, %423 : vector<8x1xf32>
    %431 = vector.broadcast %430 : vector<8x1xf32> to vector<8x32xf32>
    %432 = arith.subf %421, %431 : vector<8x32xf32>
    %c0_196 = arith.constant 0 : index
    %c0_197 = arith.constant 0 : index
    %433 = vector.load %arg12[%c0_196, %c0_197] : memref<8x256xf32, #tpu.memory_space<vmem>>, vector<8x32xf32>
    tpu.vector_store %arg12[%c0_196, %c0_197], %432 {strides = array<i32>} : memref<8x256xf32, #tpu.memory_space<vmem>>, vector<8x32xf32>,
    %c1_198 = arith.constant 1 : index
    %c0_199 = arith.constant 0 : index
    %c0_200 = arith.constant 0 : index
    %434 = vector.load %arg2[%c1_198, %c0_199, %c0_200] : memref<8x8x32xf32, #tpu.memory_space<vmem>>, vector<1x8x32xf32>
    %435 = vector.shape_cast %434 : vector<1x8x32xf32> to vector<8x32xf32>
    %c0_201 = arith.constant 0 : index
    %c0_202 = arith.constant 0 : index
    %436 = vector.load %arg6[%c0_201, %c0_202] : memref<32x128xf32, #tpu.memory_space<vmem>>, vector<32x128xf32>
    %cst_203 = arith.constant dense<0.000000e+00> : vector<8x128xf32>
    %437 = tpu.matmul %435, %436, %cst_203 {dimension_numbers = #tpu.dot_dimension_numbers<[1], [0], [0], [1], [0, 0, 1, 1], [], []>} : vector<8x32xf32>, vector<32x128xf32>, vector<8x128xf32> -> vector<8x128xf32>
    %c0_204 = arith.constant 0 : index
    %c0_205 = arith.constant 0 : index
    %438 = vector.load %arg7[%c0_204, %c0_205] : memref<32x128xf32, #tpu.memory_space<vmem>>, vector<32x128xf32>
    %cst_206 = arith.constant dense<0.000000e+00> : vector<8x128xf32>
    %439 = tpu.matmul %393, %438, %cst_206 {dimension_numbers = #tpu.dot_dimension_numbers<[1], [0], [0], [1], [0, 0, 1, 1], [], []>} : vector<8x32xf32>, vector<32x128xf32>, vector<8x128xf32> -> vector<8x128xf32>
    %440 = arith.addf %437, %439 : vector<8x128xf32>
    %c0_207 = arith.constant 0 : index
    %c0_208 = arith.constant 0 : index
    %441 = vector.load %arg8[%c0_207, %c0_208] : memref<8x128xf32, #tpu.memory_space<vmem>>, vector<8x128xf32>
    %442 = arith.addf %440, %441 : vector<8x128xf32>
    %443 = vector.extract_strided_slice %442 {offsets = [0, 0], sizes = [8, 32], strides = [1, 1]} : vector<8x128xf32> to vector<8x32xf32>
    %444 = arith.negf %443 : vector<8x32xf32>
    %445 = math.exp %444 : vector<8x32xf32>
    %cst_209 = arith.constant 1.000000e+00 : f32
    %446 = vector.broadcast %cst_209 : f32 to vector<8x32xf32>
    %447 = arith.addf %446, %445 : vector<8x32xf32>
    %448 = arith.divf %446, %447 : vector<8x32xf32>
    %449 = vector.extract_strided_slice %442 {offsets = [0, 32], sizes = [8, 32], strides = [1, 1]} : vector<8x128xf32> to vector<8x32xf32>
    %450 = arith.negf %449 : vector<8x32xf32>
    %451 = math.exp %450 : vector<8x32xf32>
    %cst_210 = arith.constant 1.000000e+00 : f32
    %452 = vector.broadcast %cst_210 : f32 to vector<8x32xf32>
    %453 = arith.addf %452, %451 : vector<8x32xf32>
    %454 = arith.divf %452, %453 : vector<8x32xf32>
    %455 = vector.extract_strided_slice %442 {offsets = [0, 64], sizes = [8, 32], strides = [1, 1]} : vector<8x128xf32> to vector<8x32xf32>
    %456 = vector.extract_strided_slice %442 {offsets = [0, 96], sizes = [8, 32], strides = [1, 1]} : vector<8x128xf32> to vector<8x32xf32>
    %457 = arith.mulf %448, %456 : vector<8x32xf32>
    %458 = arith.addf %455, %457 : vector<8x32xf32>
    %459 = math.tanh %458 : vector<8x32xf32>
    %cst_211 = arith.constant 1.000000e+00 : f32
    %460 = vector.broadcast %cst_211 : f32 to vector<8x32xf32>
    %461 = arith.subf %460, %454 : vector<8x32xf32>
    %462 = arith.mulf %461, %459 : vector<8x32xf32>
    %463 = arith.mulf %454, %393 : vector<8x32xf32>
    %464 = arith.addf %462, %463 : vector<8x32xf32>
    %465 = vector.shape_cast %464 : vector<8x32xf32> to vector<1x8x32xf32>
    %466 = vector.broadcast %465 : vector<1x8x32xf32> to vector<8x8x32xf32>
    %467 = arith.mulf %361, %466 : vector<8x8x32xf32>
    %cst_212 = arith.constant dense<0.000000e+00> : vector<8x8xf32>
    %468 = vector.multi_reduction <add>, %467, %cst_212 [2] : vector<8x8x32xf32> to vector<8x8xf32>
    %469 = vector.shape_cast %468 : vector<8x8xf32> to vector<8x8x1xf32>
    %cst_213 = arith.constant 5.000000e-01 : f32
    %470 = vector.broadcast %cst_213 : f32 to vector<8x8x1xf32>
    %471 = arith.cmpf ogt, %362, %470 : vector<8x8x1xf32>
    %cst_214 = arith.constant -1.000000e+30 : f32
    %472 = vector.broadcast %cst_214 : f32 to vector<8x8x1xf32>
    %473 = arith.select %471, %469, %472 : vector<8x8x1xi1>, vector<8x8x1xf32>
    %cst_215 = arith.constant dense<0xFF800000> : vector<8x1xf32>
    %474 = vector.multi_reduction <maximumf>, %473, %cst_215 [0] : vector<8x8x1xf32> to vector<8x1xf32>
    %475 = vector.shape_cast %474 : vector<8x1xf32> to vector<1x8x1xf32>
    %476 = vector.broadcast %475 : vector<1x8x1xf32> to vector<8x8x1xf32>
    %477 = arith.subf %473, %476 : vector<8x8x1xf32>
    %478 = math.exp %477 : vector<8x8x1xf32>
    %cst_216 = arith.constant dense<0.000000e+00> : vector<8x1xf32>
    %479 = vector.multi_reduction <add>, %478, %cst_216 [0] : vector<8x8x1xf32> to vector<8x1xf32>
    %480 = vector.shape_cast %479 : vector<8x1xf32> to vector<1x8x1xf32>
    %481 = vector.broadcast %480 : vector<1x8x1xf32> to vector<8x8x1xf32>
    %482 = arith.divf %478, %481 : vector<8x8x1xf32>
    %483 = vector.broadcast %482 : vector<8x8x1xf32> to vector<8x8x32xf32>
    %484 = arith.mulf %483, %361 : vector<8x8x32xf32>
    %cst_217 = arith.constant dense<0.000000e+00> : vector<8x32xf32>
    %485 = vector.multi_reduction <add>, %484, %cst_217 [0] : vector<8x8x32xf32> to vector<8x32xf32>
    %c0_218 = arith.constant 0 : index
    %c0_219 = arith.constant 0 : index
    %486 = vector.load %arg9[%c0_218, %c0_219] : memref<32x32xf32, #tpu.memory_space<vmem>>, vector<32x32xf32>
    %cst_220 = arith.constant dense<0.000000e+00> : vector<8x32xf32>
    %487 = tpu.matmul %464, %486, %cst_220 {dimension_numbers = #tpu.dot_dimension_numbers<[1], [0], [0], [1], [0, 0, 1, 1], [], []>} : vector<8x32xf32>, vector<32x32xf32>, vector<8x32xf32> -> vector<8x32xf32>
    %c0_221 = arith.constant 0 : index
    %c0_222 = arith.constant 0 : index
    %488 = vector.load %arg10[%c0_221, %c0_222] : memref<32x32xf32, #tpu.memory_space<vmem>>, vector<32x32xf32>
    %cst_223 = arith.constant dense<0.000000e+00> : vector<8x32xf32>
    %489 = tpu.matmul %485, %488, %cst_223 {dimension_numbers = #tpu.dot_dimension_numbers<[1], [0], [0], [1], [0, 0, 1, 1], [], []>} : vector<8x32xf32>, vector<32x32xf32>, vector<8x32xf32> -> vector<8x32xf32>
    %490 = arith.addf %487, %489 : vector<8x32xf32>
    %c0_224 = arith.constant 0 : index
    %c0_225 = arith.constant 0 : index
    %491 = vector.load %arg11[%c0_224, %c0_225] : memref<8x32xf32, #tpu.memory_space<vmem>>, vector<8x32xf32>
    %492 = arith.addf %490, %491 : vector<8x32xf32>
    %cst_226 = arith.constant dense<0xFF800000> : vector<8xf32>
    %493 = vector.multi_reduction <maximumf>, %492, %cst_226 [1] : vector<8x32xf32> to vector<8xf32>
    %494 = vector.shape_cast %493 : vector<8xf32> to vector<8x1xf32>
    %495 = vector.broadcast %494 : vector<8x1xf32> to vector<8x32xf32>
    %496 = arith.subf %492, %495 : vector<8x32xf32>
    %497 = math.exp %496 : vector<8x32xf32>
    %cst_227 = arith.constant dense<0.000000e+00> : vector<8xf32>
    %498 = vector.multi_reduction <add>, %497, %cst_227 [1] : vector<8x32xf32> to vector<8xf32>
    %499 = vector.shape_cast %498 : vector<8xf32> to vector<8x1xf32>
    %500 = math.log %499 : vector<8x1xf32>
    %501 = arith.addf %500, %494 : vector<8x1xf32>
    %502 = vector.broadcast %501 : vector<8x1xf32> to vector<8x32xf32>
    %503 = arith.subf %492, %502 : vector<8x32xf32>
    %c0_228 = arith.constant 0 : index
    %c32 = arith.constant 32 : index
    %504 = vector.load %arg12[%c0_228, %c32] : memref<8x256xf32, #tpu.memory_space<vmem>>, vector<8x32xf32>
    tpu.vector_store %arg12[%c0_228, %c32], %503 {strides = array<i32>} : memref<8x256xf32, #tpu.memory_space<vmem>>, vector<8x32xf32>,
    %c2_229 = arith.constant 2 : index
    %c0_230 = arith.constant 0 : index
    %c0_231 = arith.constant 0 : index
    %505 = vector.load %arg2[%c2_229, %c0_230, %c0_231] : memref<8x8x32xf32, #tpu.memory_space<vmem>>, vector<1x8x32xf32>
    %506 = vector.shape_cast %505 : vector<1x8x32xf32> to vector<8x32xf32>
    %c0_232 = arith.constant 0 : index
    %c0_233 = arith.constant 0 : index
    %507 = vector.load %arg6[%c0_232, %c0_233] : memref<32x128xf32, #tpu.memory_space<vmem>>, vector<32x128xf32>
    %cst_234 = arith.constant dense<0.000000e+00> : vector<8x128xf32>
    %508 = tpu.matmul %506, %507, %cst_234 {dimension_numbers = #tpu.dot_dimension_numbers<[1], [0], [0], [1], [0, 0, 1, 1], [], []>} : vector<8x32xf32>, vector<32x128xf32>, vector<8x128xf32> -> vector<8x128xf32>
    %c0_235 = arith.constant 0 : index
    %c0_236 = arith.constant 0 : index
    %509 = vector.load %arg7[%c0_235, %c0_236] : memref<32x128xf32, #tpu.memory_space<vmem>>, vector<32x128xf32>
    %cst_237 = arith.constant dense<0.000000e+00> : vector<8x128xf32>
    %510 = tpu.matmul %464, %509, %cst_237 {dimension_numbers = #tpu.dot_dimension_numbers<[1], [0], [0], [1], [0, 0, 1, 1], [], []>} : vector<8x32xf32>, vector<32x128xf32>, vector<8x128xf32> -> vector<8x128xf32>
    %511 = arith.addf %508, %510 : vector<8x128xf32>
    %c0_238 = arith.constant 0 : index
    %c0_239 = arith.constant 0 : index
    %512 = vector.load %arg8[%c0_238, %c0_239] : memref<8x128xf32, #tpu.memory_space<vmem>>, vector<8x128xf32>
    %513 = arith.addf %511, %512 : vector<8x128xf32>
    %514 = vector.extract_strided_slice %513 {offsets = [0, 0], sizes = [8, 32], strides = [1, 1]} : vector<8x128xf32> to vector<8x32xf32>
    %515 = arith.negf %514 : vector<8x32xf32>
    %516 = math.exp %515 : vector<8x32xf32>
    %cst_240 = arith.constant 1.000000e+00 : f32
    %517 = vector.broadcast %cst_240 : f32 to vector<8x32xf32>
    %518 = arith.addf %517, %516 : vector<8x32xf32>
    %519 = arith.divf %517, %518 : vector<8x32xf32>
    %520 = vector.extract_strided_slice %513 {offsets = [0, 32], sizes = [8, 32], strides = [1, 1]} : vector<8x128xf32> to vector<8x32xf32>
    %521 = arith.negf %520 : vector<8x32xf32>
    %522 = math.exp %521 : vector<8x32xf32>
    %cst_241 = arith.constant 1.000000e+00 : f32
    %523 = vector.broadcast %cst_241 : f32 to vector<8x32xf32>
    %524 = arith.addf %523, %522 : vector<8x32xf32>
    %525 = arith.divf %523, %524 : vector<8x32xf32>
    %526 = vector.extract_strided_slice %513 {offsets = [0, 64], sizes = [8, 32], strides = [1, 1]} : vector<8x128xf32> to vector<8x32xf32>
    %527 = vector.extract_strided_slice %513 {offsets = [0, 96], sizes = [8, 32], strides = [1, 1]} : vector<8x128xf32> to vector<8x32xf32>
    %528 = arith.mulf %519, %527 : vector<8x32xf32>
    %529 = arith.addf %526, %528 : vector<8x32xf32>
    %530 = math.tanh %529 : vector<8x32xf32>
    %cst_242 = arith.constant 1.000000e+00 : f32
    %531 = vector.broadcast %cst_242 : f32 to vector<8x32xf32>
    %532 = arith.subf %531, %525 : vector<8x32xf32>
    %533 = arith.mulf %532, %530 : vector<8x32xf32>
    %534 = arith.mulf %525, %464 : vector<8x32xf32>
    %535 = arith.addf %533, %534 : vector<8x32xf32>
    %536 = vector.shape_cast %535 : vector<8x32xf32> to vector<1x8x32xf32>
    %537 = vector.broadcast %536 : vector<1x8x32xf32> to vector<8x8x32xf32>
    %538 = arith.mulf %361, %537 : vector<8x8x32xf32>
    %cst_243 = arith.constant dense<0.000000e+00> : vector<8x8xf32>
    %539 = vector.multi_reduction <add>, %538, %cst_243 [2] : vector<8x8x32xf32> to vector<8x8xf32>
    %540 = vector.shape_cast %539 : vector<8x8xf32> to vector<8x8x1xf32>
    %cst_244 = arith.constant 5.000000e-01 : f32
    %541 = vector.broadcast %cst_244 : f32 to vector<8x8x1xf32>
    %542 = arith.cmpf ogt, %362, %541 : vector<8x8x1xf32>
    %cst_245 = arith.constant -1.000000e+30 : f32
    %543 = vector.broadcast %cst_245 : f32 to vector<8x8x1xf32>
    %544 = arith.select %542, %540, %543 : vector<8x8x1xi1>, vector<8x8x1xf32>
    %cst_246 = arith.constant dense<0xFF800000> : vector<8x1xf32>
    %545 = vector.multi_reduction <maximumf>, %544, %cst_246 [0] : vector<8x8x1xf32> to vector<8x1xf32>
    %546 = vector.shape_cast %545 : vector<8x1xf32> to vector<1x8x1xf32>
    %547 = vector.broadcast %546 : vector<1x8x1xf32> to vector<8x8x1xf32>
    %548 = arith.subf %544, %547 : vector<8x8x1xf32>
    %549 = math.exp %548 : vector<8x8x1xf32>
    %cst_247 = arith.constant dense<0.000000e+00> : vector<8x1xf32>
    %550 = vector.multi_reduction <add>, %549, %cst_247 [0] : vector<8x8x1xf32> to vector<8x1xf32>
    %551 = vector.shape_cast %550 : vector<8x1xf32> to vector<1x8x1xf32>
    %552 = vector.broadcast %551 : vector<1x8x1xf32> to vector<8x8x1xf32>
    %553 = arith.divf %549, %552 : vector<8x8x1xf32>
    %554 = vector.broadcast %553 : vector<8x8x1xf32> to vector<8x8x32xf32>
    %555 = arith.mulf %554, %361 : vector<8x8x32xf32>
    %cst_248 = arith.constant dense<0.000000e+00> : vector<8x32xf32>
    %556 = vector.multi_reduction <add>, %555, %cst_248 [0] : vector<8x8x32xf32> to vector<8x32xf32>
    %c0_249 = arith.constant 0 : index
    %c0_250 = arith.constant 0 : index
    %557 = vector.load %arg9[%c0_249, %c0_250] : memref<32x32xf32, #tpu.memory_space<vmem>>, vector<32x32xf32>
    %cst_251 = arith.constant dense<0.000000e+00> : vector<8x32xf32>
    %558 = tpu.matmul %535, %557, %cst_251 {dimension_numbers = #tpu.dot_dimension_numbers<[1], [0], [0], [1], [0, 0, 1, 1], [], []>} : vector<8x32xf32>, vector<32x32xf32>, vector<8x32xf32> -> vector<8x32xf32>
    %c0_252 = arith.constant 0 : index
    %c0_253 = arith.constant 0 : index
    %559 = vector.load %arg10[%c0_252, %c0_253] : memref<32x32xf32, #tpu.memory_space<vmem>>, vector<32x32xf32>
    %cst_254 = arith.constant dense<0.000000e+00> : vector<8x32xf32>
    %560 = tpu.matmul %556, %559, %cst_254 {dimension_numbers = #tpu.dot_dimension_numbers<[1], [0], [0], [1], [0, 0, 1, 1], [], []>} : vector<8x32xf32>, vector<32x32xf32>, vector<8x32xf32> -> vector<8x32xf32>
    %561 = arith.addf %558, %560 : vector<8x32xf32>
    %c0_255 = arith.constant 0 : index
    %c0_256 = arith.constant 0 : index
    %562 = vector.load %arg11[%c0_255, %c0_256] : memref<8x32xf32, #tpu.memory_space<vmem>>, vector<8x32xf32>
    %563 = arith.addf %561, %562 : vector<8x32xf32>
    %cst_257 = arith.constant dense<0xFF800000> : vector<8xf32>
    %564 = vector.multi_reduction <maximumf>, %563, %cst_257 [1] : vector<8x32xf32> to vector<8xf32>
    %565 = vector.shape_cast %564 : vector<8xf32> to vector<8x1xf32>
    %566 = vector.broadcast %565 : vector<8x1xf32> to vector<8x32xf32>
    %567 = arith.subf %563, %566 : vector<8x32xf32>
    %568 = math.exp %567 : vector<8x32xf32>
    %cst_258 = arith.constant dense<0.000000e+00> : vector<8xf32>
    %569 = vector.multi_reduction <add>, %568, %cst_258 [1] : vector<8x32xf32> to vector<8xf32>
    %570 = vector.shape_cast %569 : vector<8xf32> to vector<8x1xf32>
    %571 = math.log %570 : vector<8x1xf32>
    %572 = arith.addf %571, %565 : vector<8x1xf32>
    %573 = vector.broadcast %572 : vector<8x1xf32> to vector<8x32xf32>
    %574 = arith.subf %563, %573 : vector<8x32xf32>
    %c0_259 = arith.constant 0 : index
    %c64 = arith.constant 64 : index
    %575 = vector.load %arg12[%c0_259, %c64] : memref<8x256xf32, #tpu.memory_space<vmem>>, vector<8x32xf32>
    tpu.vector_store %arg12[%c0_259, %c64], %574 {strides = array<i32>} : memref<8x256xf32, #tpu.memory_space<vmem>>, vector<8x32xf32>,
    %c3_260 = arith.constant 3 : index
    %c0_261 = arith.constant 0 : index
    %c0_262 = arith.constant 0 : index
    %576 = vector.load %arg2[%c3_260, %c0_261, %c0_262] : memref<8x8x32xf32, #tpu.memory_space<vmem>>, vector<1x8x32xf32>
    %577 = vector.shape_cast %576 : vector<1x8x32xf32> to vector<8x32xf32>
    %c0_263 = arith.constant 0 : index
    %c0_264 = arith.constant 0 : index
    %578 = vector.load %arg6[%c0_263, %c0_264] : memref<32x128xf32, #tpu.memory_space<vmem>>, vector<32x128xf32>
    %cst_265 = arith.constant dense<0.000000e+00> : vector<8x128xf32>
    %579 = tpu.matmul %577, %578, %cst_265 {dimension_numbers = #tpu.dot_dimension_numbers<[1], [0], [0], [1], [0, 0, 1, 1], [], []>} : vector<8x32xf32>, vector<32x128xf32>, vector<8x128xf32> -> vector<8x128xf32>
    %c0_266 = arith.constant 0 : index
    %c0_267 = arith.constant 0 : index
    %580 = vector.load %arg7[%c0_266, %c0_267] : memref<32x128xf32, #tpu.memory_space<vmem>>, vector<32x128xf32>
    %cst_268 = arith.constant dense<0.000000e+00> : vector<8x128xf32>
    %581 = tpu.matmul %535, %580, %cst_268 {dimension_numbers = #tpu.dot_dimension_numbers<[1], [0], [0], [1], [0, 0, 1, 1], [], []>} : vector<8x32xf32>, vector<32x128xf32>, vector<8x128xf32> -> vector<8x128xf32>
    %582 = arith.addf %579, %581 : vector<8x128xf32>
    %c0_269 = arith.constant 0 : index
    %c0_270 = arith.constant 0 : index
    %583 = vector.load %arg8[%c0_269, %c0_270] : memref<8x128xf32, #tpu.memory_space<vmem>>, vector<8x128xf32>
    %584 = arith.addf %582, %583 : vector<8x128xf32>
    %585 = vector.extract_strided_slice %584 {offsets = [0, 0], sizes = [8, 32], strides = [1, 1]} : vector<8x128xf32> to vector<8x32xf32>
    %586 = arith.negf %585 : vector<8x32xf32>
    %587 = math.exp %586 : vector<8x32xf32>
    %cst_271 = arith.constant 1.000000e+00 : f32
    %588 = vector.broadcast %cst_271 : f32 to vector<8x32xf32>
    %589 = arith.addf %588, %587 : vector<8x32xf32>
    %590 = arith.divf %588, %589 : vector<8x32xf32>
    %591 = vector.extract_strided_slice %584 {offsets = [0, 32], sizes = [8, 32], strides = [1, 1]} : vector<8x128xf32> to vector<8x32xf32>
    %592 = arith.negf %591 : vector<8x32xf32>
    %593 = math.exp %592 : vector<8x32xf32>
    %cst_272 = arith.constant 1.000000e+00 : f32
    %594 = vector.broadcast %cst_272 : f32 to vector<8x32xf32>
    %595 = arith.addf %594, %593 : vector<8x32xf32>
    %596 = arith.divf %594, %595 : vector<8x32xf32>
    %597 = vector.extract_strided_slice %584 {offsets = [0, 64], sizes = [8, 32], strides = [1, 1]} : vector<8x128xf32> to vector<8x32xf32>
    %598 = vector.extract_strided_slice %584 {offsets = [0, 96], sizes = [8, 32], strides = [1, 1]} : vector<8x128xf32> to vector<8x32xf32>
    %599 = arith.mulf %590, %598 : vector<8x32xf32>
    %600 = arith.addf %597, %599 : vector<8x32xf32>
    %601 = math.tanh %600 : vector<8x32xf32>
    %cst_273 = arith.constant 1.000000e+00 : f32
    %602 = vector.broadcast %cst_273 : f32 to vector<8x32xf32>
    %603 = arith.subf %602, %596 : vector<8x32xf32>
    %604 = arith.mulf %603, %601 : vector<8x32xf32>
    %605 = arith.mulf %596, %535 : vector<8x32xf32>
    %606 = arith.addf %604, %605 : vector<8x32xf32>
    %607 = vector.shape_cast %606 : vector<8x32xf32> to vector<1x8x32xf32>
    %608 = vector.broadcast %607 : vector<1x8x32xf32> to vector<8x8x32xf32>
    %609 = arith.mulf %361, %608 : vector<8x8x32xf32>
    %cst_274 = arith.constant dense<0.000000e+00> : vector<8x8xf32>
    %610 = vector.multi_reduction <add>, %609, %cst_274 [2] : vector<8x8x32xf32> to vector<8x8xf32>
    %611 = vector.shape_cast %610 : vector<8x8xf32> to vector<8x8x1xf32>
    %cst_275 = arith.constant 5.000000e-01 : f32
    %612 = vector.broadcast %cst_275 : f32 to vector<8x8x1xf32>
    %613 = arith.cmpf ogt, %362, %612 : vector<8x8x1xf32>
    %cst_276 = arith.constant -1.000000e+30 : f32
    %614 = vector.broadcast %cst_276 : f32 to vector<8x8x1xf32>
    %615 = arith.select %613, %611, %614 : vector<8x8x1xi1>, vector<8x8x1xf32>
    %cst_277 = arith.constant dense<0xFF800000> : vector<8x1xf32>
    %616 = vector.multi_reduction <maximumf>, %615, %cst_277 [0] : vector<8x8x1xf32> to vector<8x1xf32>
    %617 = vector.shape_cast %616 : vector<8x1xf32> to vector<1x8x1xf32>
    %618 = vector.broadcast %617 : vector<1x8x1xf32> to vector<8x8x1xf32>
    %619 = arith.subf %615, %618 : vector<8x8x1xf32>
    %620 = math.exp %619 : vector<8x8x1xf32>
    %cst_278 = arith.constant dense<0.000000e+00> : vector<8x1xf32>
    %621 = vector.multi_reduction <add>, %620, %cst_278 [0] : vector<8x8x1xf32> to vector<8x1xf32>
    %622 = vector.shape_cast %621 : vector<8x1xf32> to vector<1x8x1xf32>
    %623 = vector.broadcast %622 : vector<1x8x1xf32> to vector<8x8x1xf32>
    %624 = arith.divf %620, %623 : vector<8x8x1xf32>
    %625 = vector.broadcast %624 : vector<8x8x1xf32> to vector<8x8x32xf32>
    %626 = arith.mulf %625, %361 : vector<8x8x32xf32>
    %cst_279 = arith.constant dense<0.000000e+00> : vector<8x32xf32>
    %627 = vector.multi_reduction <add>, %626, %cst_279 [0] : vector<8x8x32xf32> to vector<8x32xf32>
    %c0_280 = arith.constant 0 : index
    %c0_281 = arith.constant 0 : index
    %628 = vector.load %arg9[%c0_280, %c0_281] : memref<32x32xf32, #tpu.memory_space<vmem>>, vector<32x32xf32>
    %cst_282 = arith.constant dense<0.000000e+00> : vector<8x32xf32>
    %629 = tpu.matmul %606, %628, %cst_282 {dimension_numbers = #tpu.dot_dimension_numbers<[1], [0], [0], [1], [0, 0, 1, 1], [], []>} : vector<8x32xf32>, vector<32x32xf32>, vector<8x32xf32> -> vector<8x32xf32>
    %c0_283 = arith.constant 0 : index
    %c0_284 = arith.constant 0 : index
    %630 = vector.load %arg10[%c0_283, %c0_284] : memref<32x32xf32, #tpu.memory_space<vmem>>, vector<32x32xf32>
    %cst_285 = arith.constant dense<0.000000e+00> : vector<8x32xf32>
    %631 = tpu.matmul %627, %630, %cst_285 {dimension_numbers = #tpu.dot_dimension_numbers<[1], [0], [0], [1], [0, 0, 1, 1], [], []>} : vector<8x32xf32>, vector<32x32xf32>, vector<8x32xf32> -> vector<8x32xf32>
    %632 = arith.addf %629, %631 : vector<8x32xf32>
    %c0_286 = arith.constant 0 : index
    %c0_287 = arith.constant 0 : index
    %633 = vector.load %arg11[%c0_286, %c0_287] : memref<8x32xf32, #tpu.memory_space<vmem>>, vector<8x32xf32>
    %634 = arith.addf %632, %633 : vector<8x32xf32>
    %cst_288 = arith.constant dense<0xFF800000> : vector<8xf32>
    %635 = vector.multi_reduction <maximumf>, %634, %cst_288 [1] : vector<8x32xf32> to vector<8xf32>
    %636 = vector.shape_cast %635 : vector<8xf32> to vector<8x1xf32>
    %637 = vector.broadcast %636 : vector<8x1xf32> to vector<8x32xf32>
    %638 = arith.subf %634, %637 : vector<8x32xf32>
    %639 = math.exp %638 : vector<8x32xf32>
    %cst_289 = arith.constant dense<0.000000e+00> : vector<8xf32>
    %640 = vector.multi_reduction <add>, %639, %cst_289 [1] : vector<8x32xf32> to vector<8xf32>
    %641 = vector.shape_cast %640 : vector<8xf32> to vector<8x1xf32>
    %642 = math.log %641 : vector<8x1xf32>
    %643 = arith.addf %642, %636 : vector<8x1xf32>
    %644 = vector.broadcast %643 : vector<8x1xf32> to vector<8x32xf32>
    %645 = arith.subf %634, %644 : vector<8x32xf32>
    %c0_290 = arith.constant 0 : index
    %c96 = arith.constant 96 : index
    %646 = vector.load %arg12[%c0_290, %c96] : memref<8x256xf32, #tpu.memory_space<vmem>>, vector<8x32xf32>
    tpu.vector_store %arg12[%c0_290, %c96], %645 {strides = array<i32>} : memref<8x256xf32, #tpu.memory_space<vmem>>, vector<8x32xf32>,
    %c4_291 = arith.constant 4 : index
    %c0_292 = arith.constant 0 : index
    %c0_293 = arith.constant 0 : index
    %647 = vector.load %arg2[%c4_291, %c0_292, %c0_293] : memref<8x8x32xf32, #tpu.memory_space<vmem>>, vector<1x8x32xf32>
    %648 = vector.shape_cast %647 : vector<1x8x32xf32> to vector<8x32xf32>
    %c0_294 = arith.constant 0 : index
    %c0_295 = arith.constant 0 : index
    %649 = vector.load %arg6[%c0_294, %c0_295] : memref<32x128xf32, #tpu.memory_space<vmem>>, vector<32x128xf32>
    %cst_296 = arith.constant dense<0.000000e+00> : vector<8x128xf32>
    %650 = tpu.matmul %648, %649, %cst_296 {dimension_numbers = #tpu.dot_dimension_numbers<[1], [0], [0], [1], [0, 0, 1, 1], [], []>} : vector<8x32xf32>, vector<32x128xf32>, vector<8x128xf32> -> vector<8x128xf32>
    %c0_297 = arith.constant 0 : index
    %c0_298 = arith.constant 0 : index
    %651 = vector.load %arg7[%c0_297, %c0_298] : memref<32x128xf32, #tpu.memory_space<vmem>>, vector<32x128xf32>
    %cst_299 = arith.constant dense<0.000000e+00> : vector<8x128xf32>
    %652 = tpu.matmul %606, %651, %cst_299 {dimension_numbers = #tpu.dot_dimension_numbers<[1], [0], [0], [1], [0, 0, 1, 1], [], []>} : vector<8x32xf32>, vector<32x128xf32>, vector<8x128xf32> -> vector<8x128xf32>
    %653 = arith.addf %650, %652 : vector<8x128xf32>
    %c0_300 = arith.constant 0 : index
    %c0_301 = arith.constant 0 : index
    %654 = vector.load %arg8[%c0_300, %c0_301] : memref<8x128xf32, #tpu.memory_space<vmem>>, vector<8x128xf32>
    %655 = arith.addf %653, %654 : vector<8x128xf32>
    %656 = vector.extract_strided_slice %655 {offsets = [0, 0], sizes = [8, 32], strides = [1, 1]} : vector<8x128xf32> to vector<8x32xf32>
    %657 = arith.negf %656 : vector<8x32xf32>
    %658 = math.exp %657 : vector<8x32xf32>
    %cst_302 = arith.constant 1.000000e+00 : f32
    %659 = vector.broadcast %cst_302 : f32 to vector<8x32xf32>
    %660 = arith.addf %659, %658 : vector<8x32xf32>
    %661 = arith.divf %659, %660 : vector<8x32xf32>
    %662 = vector.extract_strided_slice %655 {offsets = [0, 32], sizes = [8, 32], strides = [1, 1]} : vector<8x128xf32> to vector<8x32xf32>
    %663 = arith.negf %662 : vector<8x32xf32>
    %664 = math.exp %663 : vector<8x32xf32>
    %cst_303 = arith.constant 1.000000e+00 : f32
    %665 = vector.broadcast %cst_303 : f32 to vector<8x32xf32>
    %666 = arith.addf %665, %664 : vector<8x32xf32>
    %667 = arith.divf %665, %666 : vector<8x32xf32>
    %668 = vector.extract_strided_slice %655 {offsets = [0, 64], sizes = [8, 32], strides = [1, 1]} : vector<8x128xf32> to vector<8x32xf32>
    %669 = vector.extract_strided_slice %655 {offsets = [0, 96], sizes = [8, 32], strides = [1, 1]} : vector<8x128xf32> to vector<8x32xf32>
    %670 = arith.mulf %661, %669 : vector<8x32xf32>
    %671 = arith.addf %668, %670 : vector<8x32xf32>
    %672 = math.tanh %671 : vector<8x32xf32>
    %cst_304 = arith.constant 1.000000e+00 : f32
    %673 = vector.broadcast %cst_304 : f32 to vector<8x32xf32>
    %674 = arith.subf %673, %667 : vector<8x32xf32>
    %675 = arith.mulf %674, %672 : vector<8x32xf32>
    %676 = arith.mulf %667, %606 : vector<8x32xf32>
    %677 = arith.addf %675, %676 : vector<8x32xf32>
    %678 = vector.shape_cast %677 : vector<8x32xf32> to vector<1x8x32xf32>
    %679 = vector.broadcast %678 : vector<1x8x32xf32> to vector<8x8x32xf32>
    %680 = arith.mulf %361, %679 : vector<8x8x32xf32>
    %cst_305 = arith.constant dense<0.000000e+00> : vector<8x8xf32>
    %681 = vector.multi_reduction <add>, %680, %cst_305 [2] : vector<8x8x32xf32> to vector<8x8xf32>
    %682 = vector.shape_cast %681 : vector<8x8xf32> to vector<8x8x1xf32>
    %cst_306 = arith.constant 5.000000e-01 : f32
    %683 = vector.broadcast %cst_306 : f32 to vector<8x8x1xf32>
    %684 = arith.cmpf ogt, %362, %683 : vector<8x8x1xf32>
    %cst_307 = arith.constant -1.000000e+30 : f32
    %685 = vector.broadcast %cst_307 : f32 to vector<8x8x1xf32>
    %686 = arith.select %684, %682, %685 : vector<8x8x1xi1>, vector<8x8x1xf32>
    %cst_308 = arith.constant dense<0xFF800000> : vector<8x1xf32>
    %687 = vector.multi_reduction <maximumf>, %686, %cst_308 [0] : vector<8x8x1xf32> to vector<8x1xf32>
    %688 = vector.shape_cast %687 : vector<8x1xf32> to vector<1x8x1xf32>
    %689 = vector.broadcast %688 : vector<1x8x1xf32> to vector<8x8x1xf32>
    %690 = arith.subf %686, %689 : vector<8x8x1xf32>
    %691 = math.exp %690 : vector<8x8x1xf32>
    %cst_309 = arith.constant dense<0.000000e+00> : vector<8x1xf32>
    %692 = vector.multi_reduction <add>, %691, %cst_309 [0] : vector<8x8x1xf32> to vector<8x1xf32>
    %693 = vector.shape_cast %692 : vector<8x1xf32> to vector<1x8x1xf32>
    %694 = vector.broadcast %693 : vector<1x8x1xf32> to vector<8x8x1xf32>
    %695 = arith.divf %691, %694 : vector<8x8x1xf32>
    %696 = vector.broadcast %695 : vector<8x8x1xf32> to vector<8x8x32xf32>
    %697 = arith.mulf %696, %361 : vector<8x8x32xf32>
    %cst_310 = arith.constant dense<0.000000e+00> : vector<8x32xf32>
    %698 = vector.multi_reduction <add>, %697, %cst_310 [0] : vector<8x8x32xf32> to vector<8x32xf32>
    %c0_311 = arith.constant 0 : index
    %c0_312 = arith.constant 0 : index
    %699 = vector.load %arg9[%c0_311, %c0_312] : memref<32x32xf32, #tpu.memory_space<vmem>>, vector<32x32xf32>
    %cst_313 = arith.constant dense<0.000000e+00> : vector<8x32xf32>
    %700 = tpu.matmul %677, %699, %cst_313 {dimension_numbers = #tpu.dot_dimension_numbers<[1], [0], [0], [1], [0, 0, 1, 1], [], []>} : vector<8x32xf32>, vector<32x32xf32>, vector<8x32xf32> -> vector<8x32xf32>
    %c0_314 = arith.constant 0 : index
    %c0_315 = arith.constant 0 : index
    %701 = vector.load %arg10[%c0_314, %c0_315] : memref<32x32xf32, #tpu.memory_space<vmem>>, vector<32x32xf32>
    %cst_316 = arith.constant dense<0.000000e+00> : vector<8x32xf32>
    %702 = tpu.matmul %698, %701, %cst_316 {dimension_numbers = #tpu.dot_dimension_numbers<[1], [0], [0], [1], [0, 0, 1, 1], [], []>} : vector<8x32xf32>, vector<32x32xf32>, vector<8x32xf32> -> vector<8x32xf32>
    %703 = arith.addf %700, %702 : vector<8x32xf32>
    %c0_317 = arith.constant 0 : index
    %c0_318 = arith.constant 0 : index
    %704 = vector.load %arg11[%c0_317, %c0_318] : memref<8x32xf32, #tpu.memory_space<vmem>>, vector<8x32xf32>
    %705 = arith.addf %703, %704 : vector<8x32xf32>
    %cst_319 = arith.constant dense<0xFF800000> : vector<8xf32>
    %706 = vector.multi_reduction <maximumf>, %705, %cst_319 [1] : vector<8x32xf32> to vector<8xf32>
    %707 = vector.shape_cast %706 : vector<8xf32> to vector<8x1xf32>
    %708 = vector.broadcast %707 : vector<8x1xf32> to vector<8x32xf32>
    %709 = arith.subf %705, %708 : vector<8x32xf32>
    %710 = math.exp %709 : vector<8x32xf32>
    %cst_320 = arith.constant dense<0.000000e+00> : vector<8xf32>
    %711 = vector.multi_reduction <add>, %710, %cst_320 [1] : vector<8x32xf32> to vector<8xf32>
    %712 = vector.shape_cast %711 : vector<8xf32> to vector<8x1xf32>
    %713 = math.log %712 : vector<8x1xf32>
    %714 = arith.addf %713, %707 : vector<8x1xf32>
    %715 = vector.broadcast %714 : vector<8x1xf32> to vector<8x32xf32>
    %716 = arith.subf %705, %715 : vector<8x32xf32>
    %c0_321 = arith.constant 0 : index
    %c128 = arith.constant 128 : index
    %717 = vector.load %arg12[%c0_321, %c128] : memref<8x256xf32, #tpu.memory_space<vmem>>, vector<8x32xf32>
    tpu.vector_store %arg12[%c0_321, %c128], %716 {strides = array<i32>} : memref<8x256xf32, #tpu.memory_space<vmem>>, vector<8x32xf32>,
    %c5_322 = arith.constant 5 : index
    %c0_323 = arith.constant 0 : index
    %c0_324 = arith.constant 0 : index
    %718 = vector.load %arg2[%c5_322, %c0_323, %c0_324] : memref<8x8x32xf32, #tpu.memory_space<vmem>>, vector<1x8x32xf32>
    %719 = vector.shape_cast %718 : vector<1x8x32xf32> to vector<8x32xf32>
    %c0_325 = arith.constant 0 : index
    %c0_326 = arith.constant 0 : index
    %720 = vector.load %arg6[%c0_325, %c0_326] : memref<32x128xf32, #tpu.memory_space<vmem>>, vector<32x128xf32>
    %cst_327 = arith.constant dense<0.000000e+00> : vector<8x128xf32>
    %721 = tpu.matmul %719, %720, %cst_327 {dimension_numbers = #tpu.dot_dimension_numbers<[1], [0], [0], [1], [0, 0, 1, 1], [], []>} : vector<8x32xf32>, vector<32x128xf32>, vector<8x128xf32> -> vector<8x128xf32>
    %c0_328 = arith.constant 0 : index
    %c0_329 = arith.constant 0 : index
    %722 = vector.load %arg7[%c0_328, %c0_329] : memref<32x128xf32, #tpu.memory_space<vmem>>, vector<32x128xf32>
    %cst_330 = arith.constant dense<0.000000e+00> : vector<8x128xf32>
    %723 = tpu.matmul %677, %722, %cst_330 {dimension_numbers = #tpu.dot_dimension_numbers<[1], [0], [0], [1], [0, 0, 1, 1], [], []>} : vector<8x32xf32>, vector<32x128xf32>, vector<8x128xf32> -> vector<8x128xf32>
    %724 = arith.addf %721, %723 : vector<8x128xf32>
    %c0_331 = arith.constant 0 : index
    %c0_332 = arith.constant 0 : index
    %725 = vector.load %arg8[%c0_331, %c0_332] : memref<8x128xf32, #tpu.memory_space<vmem>>, vector<8x128xf32>
    %726 = arith.addf %724, %725 : vector<8x128xf32>
    %727 = vector.extract_strided_slice %726 {offsets = [0, 0], sizes = [8, 32], strides = [1, 1]} : vector<8x128xf32> to vector<8x32xf32>
    %728 = arith.negf %727 : vector<8x32xf32>
    %729 = math.exp %728 : vector<8x32xf32>
    %cst_333 = arith.constant 1.000000e+00 : f32
    %730 = vector.broadcast %cst_333 : f32 to vector<8x32xf32>
    %731 = arith.addf %730, %729 : vector<8x32xf32>
    %732 = arith.divf %730, %731 : vector<8x32xf32>
    %733 = vector.extract_strided_slice %726 {offsets = [0, 32], sizes = [8, 32], strides = [1, 1]} : vector<8x128xf32> to vector<8x32xf32>
    %734 = arith.negf %733 : vector<8x32xf32>
    %735 = math.exp %734 : vector<8x32xf32>
    %cst_334 = arith.constant 1.000000e+00 : f32
    %736 = vector.broadcast %cst_334 : f32 to vector<8x32xf32>
    %737 = arith.addf %736, %735 : vector<8x32xf32>
    %738 = arith.divf %736, %737 : vector<8x32xf32>
    %739 = vector.extract_strided_slice %726 {offsets = [0, 64], sizes = [8, 32], strides = [1, 1]} : vector<8x128xf32> to vector<8x32xf32>
    %740 = vector.extract_strided_slice %726 {offsets = [0, 96], sizes = [8, 32], strides = [1, 1]} : vector<8x128xf32> to vector<8x32xf32>
    %741 = arith.mulf %732, %740 : vector<8x32xf32>
    %742 = arith.addf %739, %741 : vector<8x32xf32>
    %743 = math.tanh %742 : vector<8x32xf32>
    %cst_335 = arith.constant 1.000000e+00 : f32
    %744 = vector.broadcast %cst_335 : f32 to vector<8x32xf32>
    %745 = arith.subf %744, %738 : vector<8x32xf32>
    %746 = arith.mulf %745, %743 : vector<8x32xf32>
    %747 = arith.mulf %738, %677 : vector<8x32xf32>
    %748 = arith.addf %746, %747 : vector<8x32xf32>
    %749 = vector.shape_cast %748 : vector<8x32xf32> to vector<1x8x32xf32>
    %750 = vector.broadcast %749 : vector<1x8x32xf32> to vector<8x8x32xf32>
    %751 = arith.mulf %361, %750 : vector<8x8x32xf32>
    %cst_336 = arith.constant dense<0.000000e+00> : vector<8x8xf32>
    %752 = vector.multi_reduction <add>, %751, %cst_336 [2] : vector<8x8x32xf32> to vector<8x8xf32>
    %753 = vector.shape_cast %752 : vector<8x8xf32> to vector<8x8x1xf32>
    %cst_337 = arith.constant 5.000000e-01 : f32
    %754 = vector.broadcast %cst_337 : f32 to vector<8x8x1xf32>
    %755 = arith.cmpf ogt, %362, %754 : vector<8x8x1xf32>
    %cst_338 = arith.constant -1.000000e+30 : f32
    %756 = vector.broadcast %cst_338 : f32 to vector<8x8x1xf32>
    %757 = arith.select %755, %753, %756 : vector<8x8x1xi1>, vector<8x8x1xf32>
    %cst_339 = arith.constant dense<0xFF800000> : vector<8x1xf32>
    %758 = vector.multi_reduction <maximumf>, %757, %cst_339 [0] : vector<8x8x1xf32> to vector<8x1xf32>
    %759 = vector.shape_cast %758 : vector<8x1xf32> to vector<1x8x1xf32>
    %760 = vector.broadcast %759 : vector<1x8x1xf32> to vector<8x8x1xf32>
    %761 = arith.subf %757, %760 : vector<8x8x1xf32>
    %762 = math.exp %761 : vector<8x8x1xf32>
    %cst_340 = arith.constant dense<0.000000e+00> : vector<8x1xf32>
    %763 = vector.multi_reduction <add>, %762, %cst_340 [0] : vector<8x8x1xf32> to vector<8x1xf32>
    %764 = vector.shape_cast %763 : vector<8x1xf32> to vector<1x8x1xf32>
    %765 = vector.broadcast %764 : vector<1x8x1xf32> to vector<8x8x1xf32>
    %766 = arith.divf %762, %765 : vector<8x8x1xf32>
    %767 = vector.broadcast %766 : vector<8x8x1xf32> to vector<8x8x32xf32>
    %768 = arith.mulf %767, %361 : vector<8x8x32xf32>
    %cst_341 = arith.constant dense<0.000000e+00> : vector<8x32xf32>
    %769 = vector.multi_reduction <add>, %768, %cst_341 [0] : vector<8x8x32xf32> to vector<8x32xf32>
    %c0_342 = arith.constant 0 : index
    %c0_343 = arith.constant 0 : index
    %770 = vector.load %arg9[%c0_342, %c0_343] : memref<32x32xf32, #tpu.memory_space<vmem>>, vector<32x32xf32>
    %cst_344 = arith.constant dense<0.000000e+00> : vector<8x32xf32>
    %771 = tpu.matmul %748, %770, %cst_344 {dimension_numbers = #tpu.dot_dimension_numbers<[1], [0], [0], [1], [0, 0, 1, 1], [], []>} : vector<8x32xf32>, vector<32x32xf32>, vector<8x32xf32> -> vector<8x32xf32>
    %c0_345 = arith.constant 0 : index
    %c0_346 = arith.constant 0 : index
    %772 = vector.load %arg10[%c0_345, %c0_346] : memref<32x32xf32, #tpu.memory_space<vmem>>, vector<32x32xf32>
    %cst_347 = arith.constant dense<0.000000e+00> : vector<8x32xf32>
    %773 = tpu.matmul %769, %772, %cst_347 {dimension_numbers = #tpu.dot_dimension_numbers<[1], [0], [0], [1], [0, 0, 1, 1], [], []>} : vector<8x32xf32>, vector<32x32xf32>, vector<8x32xf32> -> vector<8x32xf32>
    %774 = arith.addf %771, %773 : vector<8x32xf32>
    %c0_348 = arith.constant 0 : index
    %c0_349 = arith.constant 0 : index
    %775 = vector.load %arg11[%c0_348, %c0_349] : memref<8x32xf32, #tpu.memory_space<vmem>>, vector<8x32xf32>
    %776 = arith.addf %774, %775 : vector<8x32xf32>
    %cst_350 = arith.constant dense<0xFF800000> : vector<8xf32>
    %777 = vector.multi_reduction <maximumf>, %776, %cst_350 [1] : vector<8x32xf32> to vector<8xf32>
    %778 = vector.shape_cast %777 : vector<8xf32> to vector<8x1xf32>
    %779 = vector.broadcast %778 : vector<8x1xf32> to vector<8x32xf32>
    %780 = arith.subf %776, %779 : vector<8x32xf32>
    %781 = math.exp %780 : vector<8x32xf32>
    %cst_351 = arith.constant dense<0.000000e+00> : vector<8xf32>
    %782 = vector.multi_reduction <add>, %781, %cst_351 [1] : vector<8x32xf32> to vector<8xf32>
    %783 = vector.shape_cast %782 : vector<8xf32> to vector<8x1xf32>
    %784 = math.log %783 : vector<8x1xf32>
    %785 = arith.addf %784, %778 : vector<8x1xf32>
    %786 = vector.broadcast %785 : vector<8x1xf32> to vector<8x32xf32>
    %787 = arith.subf %776, %786 : vector<8x32xf32>
    %c0_352 = arith.constant 0 : index
    %c160 = arith.constant 160 : index
    %788 = vector.load %arg12[%c0_352, %c160] : memref<8x256xf32, #tpu.memory_space<vmem>>, vector<8x32xf32>
    tpu.vector_store %arg12[%c0_352, %c160], %787 {strides = array<i32>} : memref<8x256xf32, #tpu.memory_space<vmem>>, vector<8x32xf32>,
    %c6_353 = arith.constant 6 : index
    %c0_354 = arith.constant 0 : index
    %c0_355 = arith.constant 0 : index
    %789 = vector.load %arg2[%c6_353, %c0_354, %c0_355] : memref<8x8x32xf32, #tpu.memory_space<vmem>>, vector<1x8x32xf32>
    %790 = vector.shape_cast %789 : vector<1x8x32xf32> to vector<8x32xf32>
    %c0_356 = arith.constant 0 : index
    %c0_357 = arith.constant 0 : index
    %791 = vector.load %arg6[%c0_356, %c0_357] : memref<32x128xf32, #tpu.memory_space<vmem>>, vector<32x128xf32>
    %cst_358 = arith.constant dense<0.000000e+00> : vector<8x128xf32>
    %792 = tpu.matmul %790, %791, %cst_358 {dimension_numbers = #tpu.dot_dimension_numbers<[1], [0], [0], [1], [0, 0, 1, 1], [], []>} : vector<8x32xf32>, vector<32x128xf32>, vector<8x128xf32> -> vector<8x128xf32>
    %c0_359 = arith.constant 0 : index
    %c0_360 = arith.constant 0 : index
    %793 = vector.load %arg7[%c0_359, %c0_360] : memref<32x128xf32, #tpu.memory_space<vmem>>, vector<32x128xf32>
    %cst_361 = arith.constant dense<0.000000e+00> : vector<8x128xf32>
    %794 = tpu.matmul %748, %793, %cst_361 {dimension_numbers = #tpu.dot_dimension_numbers<[1], [0], [0], [1], [0, 0, 1, 1], [], []>} : vector<8x32xf32>, vector<32x128xf32>, vector<8x128xf32> -> vector<8x128xf32>
    %795 = arith.addf %792, %794 : vector<8x128xf32>
    %c0_362 = arith.constant 0 : index
    %c0_363 = arith.constant 0 : index
    %796 = vector.load %arg8[%c0_362, %c0_363] : memref<8x128xf32, #tpu.memory_space<vmem>>, vector<8x128xf32>
    %797 = arith.addf %795, %796 : vector<8x128xf32>
    %798 = vector.extract_strided_slice %797 {offsets = [0, 0], sizes = [8, 32], strides = [1, 1]} : vector<8x128xf32> to vector<8x32xf32>
    %799 = arith.negf %798 : vector<8x32xf32>
    %800 = math.exp %799 : vector<8x32xf32>
    %cst_364 = arith.constant 1.000000e+00 : f32
    %801 = vector.broadcast %cst_364 : f32 to vector<8x32xf32>
    %802 = arith.addf %801, %800 : vector<8x32xf32>
    %803 = arith.divf %801, %802 : vector<8x32xf32>
    %804 = vector.extract_strided_slice %797 {offsets = [0, 32], sizes = [8, 32], strides = [1, 1]} : vector<8x128xf32> to vector<8x32xf32>
    %805 = arith.negf %804 : vector<8x32xf32>
    %806 = math.exp %805 : vector<8x32xf32>
    %cst_365 = arith.constant 1.000000e+00 : f32
    %807 = vector.broadcast %cst_365 : f32 to vector<8x32xf32>
    %808 = arith.addf %807, %806 : vector<8x32xf32>
    %809 = arith.divf %807, %808 : vector<8x32xf32>
    %810 = vector.extract_strided_slice %797 {offsets = [0, 64], sizes = [8, 32], strides = [1, 1]} : vector<8x128xf32> to vector<8x32xf32>
    %811 = vector.extract_strided_slice %797 {offsets = [0, 96], sizes = [8, 32], strides = [1, 1]} : vector<8x128xf32> to vector<8x32xf32>
    %812 = arith.mulf %803, %811 : vector<8x32xf32>
    %813 = arith.addf %810, %812 : vector<8x32xf32>
    %814 = math.tanh %813 : vector<8x32xf32>
    %cst_366 = arith.constant 1.000000e+00 : f32
    %815 = vector.broadcast %cst_366 : f32 to vector<8x32xf32>
    %816 = arith.subf %815, %809 : vector<8x32xf32>
    %817 = arith.mulf %816, %814 : vector<8x32xf32>
    %818 = arith.mulf %809, %748 : vector<8x32xf32>
    %819 = arith.addf %817, %818 : vector<8x32xf32>
    %820 = vector.shape_cast %819 : vector<8x32xf32> to vector<1x8x32xf32>
    %821 = vector.broadcast %820 : vector<1x8x32xf32> to vector<8x8x32xf32>
    %822 = arith.mulf %361, %821 : vector<8x8x32xf32>
    %cst_367 = arith.constant dense<0.000000e+00> : vector<8x8xf32>
    %823 = vector.multi_reduction <add>, %822, %cst_367 [2] : vector<8x8x32xf32> to vector<8x8xf32>
    %824 = vector.shape_cast %823 : vector<8x8xf32> to vector<8x8x1xf32>
    %cst_368 = arith.constant 5.000000e-01 : f32
    %825 = vector.broadcast %cst_368 : f32 to vector<8x8x1xf32>
    %826 = arith.cmpf ogt, %362, %825 : vector<8x8x1xf32>
    %cst_369 = arith.constant -1.000000e+30 : f32
    %827 = vector.broadcast %cst_369 : f32 to vector<8x8x1xf32>
    %828 = arith.select %826, %824, %827 : vector<8x8x1xi1>, vector<8x8x1xf32>
    %cst_370 = arith.constant dense<0xFF800000> : vector<8x1xf32>
    %829 = vector.multi_reduction <maximumf>, %828, %cst_370 [0] : vector<8x8x1xf32> to vector<8x1xf32>
    %830 = vector.shape_cast %829 : vector<8x1xf32> to vector<1x8x1xf32>
    %831 = vector.broadcast %830 : vector<1x8x1xf32> to vector<8x8x1xf32>
    %832 = arith.subf %828, %831 : vector<8x8x1xf32>
    %833 = math.exp %832 : vector<8x8x1xf32>
    %cst_371 = arith.constant dense<0.000000e+00> : vector<8x1xf32>
    %834 = vector.multi_reduction <add>, %833, %cst_371 [0] : vector<8x8x1xf32> to vector<8x1xf32>
    %835 = vector.shape_cast %834 : vector<8x1xf32> to vector<1x8x1xf32>
    %836 = vector.broadcast %835 : vector<1x8x1xf32> to vector<8x8x1xf32>
    %837 = arith.divf %833, %836 : vector<8x8x1xf32>
    %838 = vector.broadcast %837 : vector<8x8x1xf32> to vector<8x8x32xf32>
    %839 = arith.mulf %838, %361 : vector<8x8x32xf32>
    %cst_372 = arith.constant dense<0.000000e+00> : vector<8x32xf32>
    %840 = vector.multi_reduction <add>, %839, %cst_372 [0] : vector<8x8x32xf32> to vector<8x32xf32>
    %c0_373 = arith.constant 0 : index
    %c0_374 = arith.constant 0 : index
    %841 = vector.load %arg9[%c0_373, %c0_374] : memref<32x32xf32, #tpu.memory_space<vmem>>, vector<32x32xf32>
    %cst_375 = arith.constant dense<0.000000e+00> : vector<8x32xf32>
    %842 = tpu.matmul %819, %841, %cst_375 {dimension_numbers = #tpu.dot_dimension_numbers<[1], [0], [0], [1], [0, 0, 1, 1], [], []>} : vector<8x32xf32>, vector<32x32xf32>, vector<8x32xf32> -> vector<8x32xf32>
    %c0_376 = arith.constant 0 : index
    %c0_377 = arith.constant 0 : index
    %843 = vector.load %arg10[%c0_376, %c0_377] : memref<32x32xf32, #tpu.memory_space<vmem>>, vector<32x32xf32>
    %cst_378 = arith.constant dense<0.000000e+00> : vector<8x32xf32>
    %844 = tpu.matmul %840, %843, %cst_378 {dimension_numbers = #tpu.dot_dimension_numbers<[1], [0], [0], [1], [0, 0, 1, 1], [], []>} : vector<8x32xf32>, vector<32x32xf32>, vector<8x32xf32> -> vector<8x32xf32>
    %845 = arith.addf %842, %844 : vector<8x32xf32>
    %c0_379 = arith.constant 0 : index
    %c0_380 = arith.constant 0 : index
    %846 = vector.load %arg11[%c0_379, %c0_380] : memref<8x32xf32, #tpu.memory_space<vmem>>, vector<8x32xf32>
    %847 = arith.addf %845, %846 : vector<8x32xf32>
    %cst_381 = arith.constant dense<0xFF800000> : vector<8xf32>
    %848 = vector.multi_reduction <maximumf>, %847, %cst_381 [1] : vector<8x32xf32> to vector<8xf32>
    %849 = vector.shape_cast %848 : vector<8xf32> to vector<8x1xf32>
    %850 = vector.broadcast %849 : vector<8x1xf32> to vector<8x32xf32>
    %851 = arith.subf %847, %850 : vector<8x32xf32>
    %852 = math.exp %851 : vector<8x32xf32>
    %cst_382 = arith.constant dense<0.000000e+00> : vector<8xf32>
    %853 = vector.multi_reduction <add>, %852, %cst_382 [1] : vector<8x32xf32> to vector<8xf32>
    %854 = vector.shape_cast %853 : vector<8xf32> to vector<8x1xf32>
    %855 = math.log %854 : vector<8x1xf32>
    %856 = arith.addf %855, %849 : vector<8x1xf32>
    %857 = vector.broadcast %856 : vector<8x1xf32> to vector<8x32xf32>
    %858 = arith.subf %847, %857 : vector<8x32xf32>
    %c0_383 = arith.constant 0 : index
    %c192 = arith.constant 192 : index
    %859 = vector.load %arg12[%c0_383, %c192] : memref<8x256xf32, #tpu.memory_space<vmem>>, vector<8x32xf32>
    tpu.vector_store %arg12[%c0_383, %c192], %858 {strides = array<i32>} : memref<8x256xf32, #tpu.memory_space<vmem>>, vector<8x32xf32>,
    %c7_384 = arith.constant 7 : index
    %c0_385 = arith.constant 0 : index
    %c0_386 = arith.constant 0 : index
    %860 = vector.load %arg2[%c7_384, %c0_385, %c0_386] : memref<8x8x32xf32, #tpu.memory_space<vmem>>, vector<1x8x32xf32>
    %861 = vector.shape_cast %860 : vector<1x8x32xf32> to vector<8x32xf32>
    %c0_387 = arith.constant 0 : index
    %c0_388 = arith.constant 0 : index
    %862 = vector.load %arg6[%c0_387, %c0_388] : memref<32x128xf32, #tpu.memory_space<vmem>>, vector<32x128xf32>
    %cst_389 = arith.constant dense<0.000000e+00> : vector<8x128xf32>
    %863 = tpu.matmul %861, %862, %cst_389 {dimension_numbers = #tpu.dot_dimension_numbers<[1], [0], [0], [1], [0, 0, 1, 1], [], []>} : vector<8x32xf32>, vector<32x128xf32>, vector<8x128xf32> -> vector<8x128xf32>
    %c0_390 = arith.constant 0 : index
    %c0_391 = arith.constant 0 : index
    %864 = vector.load %arg7[%c0_390, %c0_391] : memref<32x128xf32, #tpu.memory_space<vmem>>, vector<32x128xf32>
    %cst_392 = arith.constant dense<0.000000e+00> : vector<8x128xf32>
    %865 = tpu.matmul %819, %864, %cst_392 {dimension_numbers = #tpu.dot_dimension_numbers<[1], [0], [0], [1], [0, 0, 1, 1], [], []>} : vector<8x32xf32>, vector<32x128xf32>, vector<8x128xf32> -> vector<8x128xf32>
    %866 = arith.addf %863, %865 : vector<8x128xf32>
    %c0_393 = arith.constant 0 : index
    %c0_394 = arith.constant 0 : index
    %867 = vector.load %arg8[%c0_393, %c0_394] : memref<8x128xf32, #tpu.memory_space<vmem>>, vector<8x128xf32>
    %868 = arith.addf %866, %867 : vector<8x128xf32>
    %869 = vector.extract_strided_slice %868 {offsets = [0, 0], sizes = [8, 32], strides = [1, 1]} : vector<8x128xf32> to vector<8x32xf32>
    %870 = arith.negf %869 : vector<8x32xf32>
    %871 = math.exp %870 : vector<8x32xf32>
    %cst_395 = arith.constant 1.000000e+00 : f32
    %872 = vector.broadcast %cst_395 : f32 to vector<8x32xf32>
    %873 = arith.addf %872, %871 : vector<8x32xf32>
    %874 = arith.divf %872, %873 : vector<8x32xf32>
    %875 = vector.extract_strided_slice %868 {offsets = [0, 32], sizes = [8, 32], strides = [1, 1]} : vector<8x128xf32> to vector<8x32xf32>
    %876 = arith.negf %875 : vector<8x32xf32>
    %877 = math.exp %876 : vector<8x32xf32>
    %cst_396 = arith.constant 1.000000e+00 : f32
    %878 = vector.broadcast %cst_396 : f32 to vector<8x32xf32>
    %879 = arith.addf %878, %877 : vector<8x32xf32>
    %880 = arith.divf %878, %879 : vector<8x32xf32>
    %881 = vector.extract_strided_slice %868 {offsets = [0, 64], sizes = [8, 32], strides = [1, 1]} : vector<8x128xf32> to vector<8x32xf32>
    %882 = vector.extract_strided_slice %868 {offsets = [0, 96], sizes = [8, 32], strides = [1, 1]} : vector<8x128xf32> to vector<8x32xf32>
    %883 = arith.mulf %874, %882 : vector<8x32xf32>
    %884 = arith.addf %881, %883 : vector<8x32xf32>
    %885 = math.tanh %884 : vector<8x32xf32>
    %cst_397 = arith.constant 1.000000e+00 : f32
    %886 = vector.broadcast %cst_397 : f32 to vector<8x32xf32>
    %887 = arith.subf %886, %880 : vector<8x32xf32>
    %888 = arith.mulf %887, %885 : vector<8x32xf32>
    %889 = arith.mulf %880, %819 : vector<8x32xf32>
    %890 = arith.addf %888, %889 : vector<8x32xf32>
    %891 = vector.shape_cast %890 : vector<8x32xf32> to vector<1x8x32xf32>
    %892 = vector.broadcast %891 : vector<1x8x32xf32> to vector<8x8x32xf32>
    %893 = arith.mulf %361, %892 : vector<8x8x32xf32>
    %cst_398 = arith.constant dense<0.000000e+00> : vector<8x8xf32>
    %894 = vector.multi_reduction <add>, %893, %cst_398 [2] : vector<8x8x32xf32> to vector<8x8xf32>
    %895 = vector.shape_cast %894 : vector<8x8xf32> to vector<8x8x1xf32>
    %cst_399 = arith.constant 5.000000e-01 : f32
    %896 = vector.broadcast %cst_399 : f32 to vector<8x8x1xf32>
    %897 = arith.cmpf ogt, %362, %896 : vector<8x8x1xf32>
    %cst_400 = arith.constant -1.000000e+30 : f32
    %898 = vector.broadcast %cst_400 : f32 to vector<8x8x1xf32>
    %899 = arith.select %897, %895, %898 : vector<8x8x1xi1>, vector<8x8x1xf32>
    %cst_401 = arith.constant dense<0xFF800000> : vector<8x1xf32>
    %900 = vector.multi_reduction <maximumf>, %899, %cst_401 [0] : vector<8x8x1xf32> to vector<8x1xf32>
    %901 = vector.shape_cast %900 : vector<8x1xf32> to vector<1x8x1xf32>
    %902 = vector.broadcast %901 : vector<1x8x1xf32> to vector<8x8x1xf32>
    %903 = arith.subf %899, %902 : vector<8x8x1xf32>
    %904 = math.exp %903 : vector<8x8x1xf32>
    %cst_402 = arith.constant dense<0.000000e+00> : vector<8x1xf32>
    %905 = vector.multi_reduction <add>, %904, %cst_402 [0] : vector<8x8x1xf32> to vector<8x1xf32>
    %906 = vector.shape_cast %905 : vector<8x1xf32> to vector<1x8x1xf32>
    %907 = vector.broadcast %906 : vector<1x8x1xf32> to vector<8x8x1xf32>
    %908 = arith.divf %904, %907 : vector<8x8x1xf32>
    %909 = vector.broadcast %908 : vector<8x8x1xf32> to vector<8x8x32xf32>
    %910 = arith.mulf %909, %361 : vector<8x8x32xf32>
    %cst_403 = arith.constant dense<0.000000e+00> : vector<8x32xf32>
    %911 = vector.multi_reduction <add>, %910, %cst_403 [0] : vector<8x8x32xf32> to vector<8x32xf32>
    %c0_404 = arith.constant 0 : index
    %c0_405 = arith.constant 0 : index
    %912 = vector.load %arg9[%c0_404, %c0_405] : memref<32x32xf32, #tpu.memory_space<vmem>>, vector<32x32xf32>
    %cst_406 = arith.constant dense<0.000000e+00> : vector<8x32xf32>
    %913 = tpu.matmul %890, %912, %cst_406 {dimension_numbers = #tpu.dot_dimension_numbers<[1], [0], [0], [1], [0, 0, 1, 1], [], []>} : vector<8x32xf32>, vector<32x32xf32>, vector<8x32xf32> -> vector<8x32xf32>
    %c0_407 = arith.constant 0 : index
    %c0_408 = arith.constant 0 : index
    %914 = vector.load %arg10[%c0_407, %c0_408] : memref<32x32xf32, #tpu.memory_space<vmem>>, vector<32x32xf32>
    %cst_409 = arith.constant dense<0.000000e+00> : vector<8x32xf32>
    %915 = tpu.matmul %911, %914, %cst_409 {dimension_numbers = #tpu.dot_dimension_numbers<[1], [0], [0], [1], [0, 0, 1, 1], [], []>} : vector<8x32xf32>, vector<32x32xf32>, vector<8x32xf32> -> vector<8x32xf32>
    %916 = arith.addf %913, %915 : vector<8x32xf32>
    %c0_410 = arith.constant 0 : index
    %c0_411 = arith.constant 0 : index
    %917 = vector.load %arg11[%c0_410, %c0_411] : memref<8x32xf32, #tpu.memory_space<vmem>>, vector<8x32xf32>
    %918 = arith.addf %916, %917 : vector<8x32xf32>
    %cst_412 = arith.constant dense<0xFF800000> : vector<8xf32>
    %919 = vector.multi_reduction <maximumf>, %918, %cst_412 [1] : vector<8x32xf32> to vector<8xf32>
    %920 = vector.shape_cast %919 : vector<8xf32> to vector<8x1xf32>
    %921 = vector.broadcast %920 : vector<8x1xf32> to vector<8x32xf32>
    %922 = arith.subf %918, %921 : vector<8x32xf32>
    %923 = math.exp %922 : vector<8x32xf32>
    %cst_413 = arith.constant dense<0.000000e+00> : vector<8xf32>
    %924 = vector.multi_reduction <add>, %923, %cst_413 [1] : vector<8x32xf32> to vector<8xf32>
    %925 = vector.shape_cast %924 : vector<8xf32> to vector<8x1xf32>
    %926 = math.log %925 : vector<8x1xf32>
    %927 = arith.addf %926, %920 : vector<8x1xf32>
    %928 = vector.broadcast %927 : vector<8x1xf32> to vector<8x32xf32>
    %929 = arith.subf %918, %928 : vector<8x32xf32>
    %c0_414 = arith.constant 0 : index
    %c224 = arith.constant 224 : index
    %930 = vector.load %arg12[%c0_414, %c224] : memref<8x256xf32, #tpu.memory_space<vmem>>, vector<8x32xf32>
    tpu.vector_store %arg12[%c0_414, %c224], %929 {strides = array<i32>} : memref<8x256xf32, #tpu.memory_space<vmem>>, vector<8x32xf32>,
    %c0_415 = arith.constant 0 : index
    %c0_416 = arith.constant 0 : index
    %931 = vector.load %arg13[%c0_415, %c0_416] : memref<8x32xf32, #tpu.memory_space<vmem>>, vector<8x32xf32>
    tpu.vector_store %arg13[%c0_415, %c0_416], %890 {strides = array<i32>} : memref<8x32xf32, #tpu.memory_space<vmem>>, vector<8x32xf32>,
    return
  }
}

</mosaic_0001>

<llo_original>
// kernel: seq2seq_forward.1
$region0: #{seq2seq_forward.1}
  #allocation0 [shape = 'u32[]', space=smem, size = 0x4, offset = 0x4, fixed_abs, tag = 'smem constant byte address 0x4 - core index']
  #allocation1 [shape = 'u32[144,128]{1,0:T(1,128)}', space=vmem, size = 0x12000, scoped, tag = 'internal scratch']
  #allocation2 [shape = 'f32[8,8,32]{2,1,0:T(8,128)}', space=vmem, size = 0x8000, scoped, tag = 'scratch operand']
  %s0 = inlined_call_operand.vmem [shape: f32[8,8,32], index: 0, kind: input, shape index: {}]
  %s1 = inlined_call_operand.vmem [shape: f32[8,8,1], index: 1, kind: input, shape index: {}]
  %s2 = inlined_call_operand.vmem [shape: f32[8,8,32], index: 2, kind: input, shape index: {}]
  %s3 = inlined_call_operand.vmem [shape: f32[32,128], index: 3, kind: input, shape index: {}]
  %s4 = inlined_call_operand.vmem [shape: f32[32,128], index: 4, kind: input, shape index: {}]
  %s5 = inlined_call_operand.vmem [shape: f32[8,128], index: 5, kind: input, shape index: {}]
  %s6 = inlined_call_operand.vmem [shape: f32[32,128], index: 6, kind: input, shape index: {}]
  %s7 = inlined_call_operand.vmem [shape: f32[32,128], index: 7, kind: input, shape index: {}]
  %s8 = inlined_call_operand.vmem [shape: f32[8,128], index: 8, kind: input, shape index: {}]
  %s9 = inlined_call_operand.vmem [shape: f32[32,32], index: 9, kind: input, shape index: {}]
  %s10 = inlined_call_operand.vmem [shape: f32[32,32], index: 10, kind: input, shape index: {}]
  %s11 = inlined_call_operand.vmem [shape: f32[8,32], index: 11, kind: input, shape index: {}]
  %s12 = inlined_call_operand.vmem [shape: f32[8,256], index: 12, kind: output, shape index: {0}]
  %s13 = inlined_call_operand.vmem [shape: f32[8,32], index: 13, kind: output, shape index: {1}]
  %14 = xla_tuple %s12, %s13
  %s15 = sld [smem:[#allocation0]]
  $region66: #{seq2seq_forward.1} parent=0
    _
  %s17 = ssub.s32 1, %s15
  %s18 = scalar_select 0, %s17, %s15
  // Predicated region
  $region2: #{seq2seq_forward.1} parent=0 // pred_check
    _
  $region3: #{seq2seq_forward.1} parent=0 // pred_check_branch
    %20 = sbr.rel (0) target = $region5
  $region4: #{seq2seq_forward.1} parent=0 // pred_region
    _
  $region5: #{seq2seq_forward.1} parent=0 // pred_fallthru
    _
  // Predicated region
  $region6: #{seq2seq_forward.1} parent=0 // pred_check
    _
  $region7: #{seq2seq_forward.1} parent=0 // pred_check_branch
    %22 = sbr.rel (0) target = $region9
  $region8: #{seq2seq_forward.1} parent=0 // pred_region
    _
  $region9: #{seq2seq_forward.1} parent=0 // pred_fallthru
    _
  // Predicated region
  $region10: #{seq2seq_forward.1} parent=0 // pred_check
    _
  $region11: #{seq2seq_forward.1} parent=0 // pred_check_branch
    %24 = sbr.rel (0) target = $region13
  $region12: #{seq2seq_forward.1} parent=0 // pred_region
    _
  $region13: #{seq2seq_forward.1} parent=0 // pred_fallthru
    _
  // Predicated region
  $region14: #{seq2seq_forward.1} parent=0 // pred_check
    _
  $region15: #{seq2seq_forward.1} parent=0 // pred_check_branch
    %26 = sbr.rel (0) target = $region17
  $region16: #{seq2seq_forward.1} parent=0 // pred_region
    _
  $region17: #{seq2seq_forward.1} parent=0 // pred_fallthru
    _
  // Predicated region
  $region18: #{seq2seq_forward.1} parent=0 // pred_check
    _
  $region19: #{seq2seq_forward.1} parent=0 // pred_check_branch
    %28 = sbr.rel (0) target = $region21
  $region20: #{seq2seq_forward.1} parent=0 // pred_region
    _
  $region21: #{seq2seq_forward.1} parent=0 // pred_fallthru
    _
  // Predicated region
  $region22: #{seq2seq_forward.1} parent=0 // pred_check
    _
  $region23: #{seq2seq_forward.1} parent=0 // pred_check_branch
    %30 = sbr.rel (0) target = $region25
  $region24: #{seq2seq_forward.1} parent=0 // pred_region
    _
  $region25: #{seq2seq_forward.1} parent=0 // pred_fallthru
    _
  // Predicated region
  $region26: #{seq2seq_forward.1} parent=0 // pred_check
    _
  $region27: #{seq2seq_forward.1} parent=0 // pred_check_branch
    %32 = sbr.rel (0) target = $region29
  $region28: #{seq2seq_forward.1} parent=0 // pred_region
    _
  $region29: #{seq2seq_forward.1} parent=0 // pred_fallthru
    _
  // Predicated region
  $region30: #{seq2seq_forward.1} parent=0 // pred_check
    _
  $region31: #{seq2seq_forward.1} parent=0 // pred_check_branch
    %34 = sbr.rel (0) target = $region33
  $region32: #{seq2seq_forward.1} parent=0 // pred_region
    _
  $region33: #{seq2seq_forward.1} parent=0 // pred_fallthru
    _
  // Predicated region
  $region34: #{seq2seq_forward.1} parent=0 // pred_check
    _
  $region35: #{seq2seq_forward.1} parent=0 // pred_check_branch
    %36 = sbr.rel (0) target = $region37
  $region36: #{seq2seq_forward.1} parent=0 // pred_region
    _
  $region37: #{seq2seq_forward.1} parent=0 // pred_fallthru
    _
  // Predicated region
  $region38: #{seq2seq_forward.1} parent=0 // pred_check
    _
  $region39: #{seq2seq_forward.1} parent=0 // pred_check_branch
    %38 = sbr.rel (0) target = $region41
  $region40: #{seq2seq_forward.1} parent=0 // pred_region
    _
  $region41: #{seq2seq_forward.1} parent=0 // pred_fallthru
    _
  // Predicated region
  $region42: #{seq2seq_forward.1} parent=0 // pred_check
    _
  $region43: #{seq2seq_forward.1} parent=0 // pred_check_branch
    %40 = sbr.rel (0) target = $region45
  $region44: #{seq2seq_forward.1} parent=0 // pred_region
    _
  $region45: #{seq2seq_forward.1} parent=0 // pred_fallthru
    _
  // Predicated region
  $region46: #{seq2seq_forward.1} parent=0 // pred_check
    _
  $region47: #{seq2seq_forward.1} parent=0 // pred_check_branch
    %42 = sbr.rel (0) target = $region49
  $region48: #{seq2seq_forward.1} parent=0 // pred_region
    _
  $region49: #{seq2seq_forward.1} parent=0 // pred_fallthru
    _
  %v43 = vld [vmem:[%s0] sm:$0xff]
  %v44 = vld [vmem:[%s3] sm:$0xff]
  %v45 = vld [vmem:[%s3 + $0x8] sm:$0xff]
  %v46 = vld [vmem:[%s3 + $0x10] sm:$0xff]
  %v47 = vld [vmem:[%s3 + $0x18] sm:$0xff]
  %v48 = vld [vmem:[%s4] sm:$0xff]
  %v49 = vld [vmem:[%s4 + $0x8] sm:$0xff]
  %v50 = vld [vmem:[%s4 + $0x10] sm:$0xff]
  %v51 = vld [vmem:[%s4 + $0x18] sm:$0xff]
  %vm52 = vcmask 261120
  %v54 = vsel %vm52, 0.0, 0
  %56 = vmatprep.subr.mxu0 0.0
  %57 = vmatpush1.msra.mxu0 %v48
  %58 = vmatprep.subr.mxu0 0.0
  %59 = vmatpush1.msra.mxu0 %v49
  %60 = vmatprep.subr.mxu0 0.0
  %61 = vmatpush1.msra.mxu0 %v50
  %62 = vmatprep.subr.mxu0 0.0
  %63 = vmatpush1.msra.mxu0 %v51
  %64 = vmatprep.subr.mxu0 0.0
  %65 = vmatpush1.msra.mxu0 0.0
  %66 = vmatprep.subr.mxu0 0.0
  %67 = vmatpush1.msra.mxu0 0.0
  %68 = vmatprep.subr.mxu0 0.0
  %69 = vmatpush1.msra.mxu0 0.0
  %70 = vmatprep.subr.mxu0 0.0
  %71 = vmatpush1.msra.mxu0 0.0
  %72 = vmatprep.subr.mxu0 0.0
  %73 = vmatpush1.msra.mxu0 0.0
  %74 = vmatprep.subr.mxu0 0.0
  %75 = vmatpush1.msra.mxu0 0.0
  %76 = vmatprep.subr.mxu0 0.0
  %77 = vmatpush1.msra.mxu0 0.0
  %78 = vmatprep.subr.mxu0 0.0
  %79 = vmatpush1.msra.mxu0 0.0
  %80 = vmatprep.subr.mxu0 0.0
  %81 = vmatpush1.msra.mxu0 0.0
  %82 = vmatprep.subr.mxu0 0.0
  %83 = vmatpush1.msra.mxu0 0.0
  %84 = vmatprep.subr.mxu0 0.0
  %85 = vmatpush1.msra.mxu0 0.0
  %86 = vmatprep.subr.mxu0 0.0
  %87 = vmatpush1.msra.mxu0 0.0
  %88 = vmatprep.subr.mxu0 0.0
  %89 = vmatpush1.msra.mxu0 0.0
  %90 = vmatprep.subr.mxu0 0.0
  %91 = vmatpush1.msra.mxu0 0.0
  %92 = vmatprep.subr.mxu0 0.0
  %93 = vmatpush1.msra.mxu0 0.0
  %94 = vmatprep.subr.mxu0 0.0
  %95 = vmatpush1.msra.mxu0 0.0
  %96 = vmatprep.subr.mxu0 0.0
  %97 = vmatpush1.msra.mxu0 0.0
  %98 = vmatprep.subr.mxu0 0.0
  %99 = vmatpush1.msra.mxu0 0.0
  %100 = vmatprep.subr.mxu0 0.0
  %101 = vmatpush1.msra.mxu0 0.0
  %102 = vmatprep.subr.mxu0 0.0
  %103 = vmatpush1.msra.mxu0 0.0
  %104 = vmatprep.subr.mxu0 0.0
  %105 = vmatpush1.msra.mxu0 0.0
  %106 = vmatprep.subr.mxu0 0.0
  %107 = vmatpush1.msra.mxu0 0.0
  %108 = vmatprep.subr.mxu0 0.0
  %109 = vmatpush1.msra.mxu0 0.0
  %110 = vmatprep.subr.mxu0 0.0
  %111 = vmatpush1.msra.mxu0 0.0
  %112 = vmatprep.subr.mxu0 0.0
  %113 = vmatpush1.msra.mxu0 0.0
  %114 = vmatprep.subr.mxu0 0.0
  %115 = vmatpush1.msra.mxu0 0.0
  %116 = vmatprep.subr.mxu0 0.0
  %117 = vmatpush1.msra.mxu0 0.0
  %118 = vmatprep.subr.mxu0 0.0
  %119 = vmatpush1.msra.mxu0 0.0
  %120 = vmatprep.mubr.f32.mxu0 0.0
  %121 = vmatmul.mubr.f32.gmra.mrb[0].mxu0 %v54
  %v122 = vpop.f32.mrb[0].mxu0
  %v123 = vadd.f32 0.0, %v122
  %v124 = vpop.f32.mrb[0].mxu0
  %125 = vdwg.mxu0
  %v127 = vsel %vm52, %v43, 0
  %129 = vmatprep.subr.mxu0 0.0
  %130 = vmatpush1.msra.mxu0 %v44
  %131 = vmatprep.subr.mxu0 0.0
  %132 = vmatpush1.msra.mxu0 %v45
  %133 = vmatprep.subr.mxu0 0.0
  %134 = vmatpush1.msra.mxu0 %v46
  %135 = vmatprep.subr.mxu0 0.0
  %136 = vmatpush1.msra.mxu0 %v47
  %137 = vmatprep.subr.mxu0 0.0
  %138 = vmatpush1.msra.mxu0 0.0
  %139 = vmatprep.subr.mxu0 0.0
  %140 = vmatpush1.msra.mxu0 0.0
  %141 = vmatprep.subr.mxu0 0.0
  %142 = vmatpush1.msra.mxu0 0.0
  %143 = vmatprep.subr.mxu0 0.0
  %144 = vmatpush1.msra.mxu0 0.0
  %145 = vmatprep.subr.mxu0 0.0
  %146 = vmatpush1.msra.mxu0 0.0
  %147 = vmatprep.subr.mxu0 0.0
  %148 = vmatpush1.msra.mxu0 0.0
  %149 = vmatprep.subr.mxu0 0.0
  %150 = vmatpush1.msra.mxu0 0.0
  %151 = vmatprep.subr.mxu0 0.0
  %152 = vmatpush1.msra.mxu0 0.0
  %153 = vmatprep.subr.mxu0 0.0
  %154 = vmatpush1.msra.mxu0 0.0
  %155 = vmatprep.subr.mxu0 0.0
  %156 = vmatpush1.msra.mxu0 0.0
  %157 = vmatprep.subr.mxu0 0.0
  %158 = vmatpush1.msra.mxu0 0.0
  %159 = vmatprep.subr.mxu0 0.0
  %160 = vmatpush1.msra.mxu0 0.0
  %161 = vmatprep.subr.mxu0 0.0
  %162 = vmatpush1.msra.mxu0 0.0
  %163 = vmatprep.subr.mxu0 0.0
  %164 = vmatpush1.msra.mxu0 0.0
  %165 = vmatprep.subr.mxu0 0.0
  %166 = vmatpush1.msra.mxu0 0.0
  %167 = vmatprep.subr.mxu0 0.0
  %168 = vmatpush1.msra.mxu0 0.0
  %169 = vmatprep.subr.mxu0 0.0
  %170 = vmatpush1.msra.mxu0 0.0
  %171 = vmatprep.subr.mxu0 0.0
  %172 = vmatpush1.msra.mxu0 0.0
  %173 = vmatprep.subr.mxu0 0.0
  %174 = vmatpush1.msra.mxu0 0.0
  %175 = vmatprep.subr.mxu0 0.0
  %176 = vmatpush1.msra.mxu0 0.0
  %177 = vmatprep.subr.mxu0 0.0
  %178 = vmatpush1.msra.mxu0 0.0
  %179 = vmatprep.subr.mxu0 0.0
  %180 = vmatpush1.msra.mxu0 0.0
  %181 = vmatprep.subr.mxu0 0.0
  %182 = vmatpush1.msra.mxu0 0.0
  %183 = vmatprep.subr.mxu0 0.0
  %184 = vmatpush1.msra.mxu0 0.0
  %185 = vmatprep.subr.mxu0 0.0
  %186 = vmatpush1.msra.mxu0 0.0
  %187 = vmatprep.subr.mxu0 0.0
  %188 = vmatpush1.msra.mxu0 0.0
  %189 = vmatprep.subr.mxu0 0.0
  %190 = vmatpush1.msra.mxu0 0.0
  %191 = vmatprep.subr.mxu0 0.0
  %192 = vmatpush1.msra.mxu0 0.0
  %193 = vmatprep.mubr.f32.mxu0 0.0
  %194 = vmatmul.mubr.f32.gmra.mrb[0].mxu0 %v127
  %v195 = vpop.f32.mrb[0].mxu0
  %v196 = vadd.f32 %v123, %v195
  %v197 = vpop.f32.mrb[0].mxu0
  %198 = vdwg.mxu0
  %v199 = vld [vmem:[%s5] sm:$0xff]
  %v200 = vadd.f32 %v196, %v199
  %v201 = vxor.u32 %v200, 2147483648
  %v202 = vmul.f32 %v201, 1.442695
  %v203 = vpow.pop %v202
  %v204 = vadd.f32 %v203, 1.0
  %v205 = vrcp.pop %v204
  %v206 = vmul.f32 1.0, %v205
  %208 = vrot.lane.b32.xlu0 %v200, 32
  %v209 = vpop.permute.xlu0 %208
  %v211 = vmul.f32 %v206, %v209
  %213 = vrot.lane.b32.xlu0 %v211, 64
  %v214 = vpop.permute.xlu0 %213
  %v216 = vadd.f32 %v200, %v214
  %v217 = vtanh.pop %v216
  %v218 = vsub.f32 1.0, %v206
  %220 = vrot.lane.b32.xlu0 %v217, 96
  %v221 = vpop.permute.xlu0 %220
  %v223 = vmul.f32 %v218, %v221
  %v224 = vmul.f32 %v206, 0.0
  %v225 = vadd.f32 %v223, %v224
  %v226 = vld [vmem:[%s1] sm:$0xff]
  %228 = vset.pattern.permute.xlu0 0
  %229 = vperm.xlu0 %228, %v226
  %v230 = vpop.permute.xlu0 %229
  %v232 = vmul.f32 %v230, %v225
  %v233 = vsub.f32 1.0, %v226
  %235 = vset.pattern.permute.xlu0 0
  %236 = vperm.xlu0 %235, %v233
  %v237 = vpop.permute.xlu0 %236
  %v239 = vmul.f32 %v237, 0.0
  %v240 = vadd.f32 %v232, %v239
  %v241 = vmul.f32 %v240, %v230
  %243 = vrot.lane.b32.xlu0 %v241, 96
  %v244 = vpop.permute.xlu0 %243
  %246 = vst.msk [vmem:[#allocation2] sm:$0xff] %vm52, %v244
  %s247 = scalar_lea.vmem %s0, 8
  %v248 = vld [vmem:[%s247] sm:$0xff]
  %v249 = vld [vmem:[%s3] sm:$0xff]
  %v250 = vld [vmem:[%s3 + $0x8] sm:$0xff]
  %v251 = vld [vmem:[%s3 + $0x10] sm:$0xff]
  %v252 = vld [vmem:[%s3 + $0x18] sm:$0xff]
  %v253 = vld [vmem:[%s4] sm:$0xff]
  %v254 = vld [vmem:[%s4 + $0x8] sm:$0xff]
  %v255 = vld [vmem:[%s4 + $0x10] sm:$0xff]
  %v256 = vld [vmem:[%s4 + $0x18] sm:$0xff]
  %258 = vrot.lane.b32.xlu0 %v240, 96
  %v259 = vpop.permute.xlu0 %258
  %v260 = vsel %vm52, %v259, 0
  %262 = vmatprep.subr.mxu0 0.0
  %263 = vmatpush1.msra.mxu0 %v253
  %264 = vmatprep.subr.mxu0 0.0
  %265 = vmatpush1.msra.mxu0 %v254
  %266 = vmatprep.subr.mxu0 0.0
  %267 = vmatpush1.msra.mxu0 %v255
  %268 = vmatprep.subr.mxu0 0.0
  %269 = vmatpush1.msra.mxu0 %v256
  %270 = vmatprep.subr.mxu0 0.0
  %271 = vmatpush1.msra.mxu0 0.0
  %272 = vmatprep.subr.mxu0 0.0
  %273 = vmatpush1.msra.mxu0 0.0
  %274 = vmatprep.subr.mxu0 0.0
  %275 = vmatpush1.msra.mxu0 0.0
  %276 = vmatprep.subr.mxu0 0.0
  %277 = vmatpush1.msra.mxu0 0.0
  %278 = vmatprep.subr.mxu0 0.0
  %279 = vmatpush1.msra.mxu0 0.0
  %280 = vmatprep.subr.mxu0 0.0
  %281 = vmatpush1.msra.mxu0 0.0
  %282 = vmatprep.subr.mxu0 0.0
  %283 = vmatpush1.msra.mxu0 0.0
  %284 = vmatprep.subr.mxu0 0.0
  %285 = vmatpush1.msra.mxu0 0.0
  %286 = vmatprep.subr.mxu0 0.0
  %287 = vmatpush1.msra.mxu0 0.0
  %288 = vmatprep.subr.mxu0 0.0
  %289 = vmatpush1.msra.mxu0 0.0
  %290 = vmatprep.subr.mxu0 0.0
  %291 = vmatpush1.msra.mxu0 0.0
  %292 = vmatprep.subr.mxu0 0.0
  %293 = vmatpush1.msra.mxu0 0.0
  %294 = vmatprep.subr.mxu0 0.0
  %295 = vmatpush1.msra.mxu0 0.0
  %296 = vmatprep.subr.mxu0 0.0
  %297 = vmatpush1.msra.mxu0 0.0
  %298 = vmatprep.subr.mxu0 0.0
  %299 = vmatpush1.msra.mxu0 0.0
  %300 = vmatprep.subr.mxu0 0.0
  %301 = vmatpush1.msra.mxu0 0.0
  %302 = vmatprep.subr.mxu0 0.0
  %303 = vmatpush1.msra.mxu0 0.0
  %304 = vmatprep.subr.mxu0 0.0
  %305 = vmatpush1.msra.mxu0 0.0
  %306 = vmatprep.subr.mxu0 0.0
  %307 = vmatpush1.msra.mxu0 0.0
  %308 = vmatprep.subr.mxu0 0.0
  %309 = vmatpush1.msra.mxu0 0.0
  %310 = vmatprep.subr.mxu0 0.0
  %311 = vmatpush1.msra.mxu0 0.0
  %312 = vmatprep.subr.mxu0 0.0
  %313 = vmatpush1.msra.mxu0 0.0
  %314 = vmatprep.subr.mxu0 0.0
  %315 = vmatpush1.msra.mxu0 0.0
  %316 = vmatprep.subr.mxu0 0.0
  %317 = vmatpush1.msra.mxu0 0.0
  %318 = vmatprep.subr.mxu0 0.0
  %319 = vmatpush1.msra.mxu0 0.0
  %320 = vmatprep.subr.mxu0 0.0
  %321 = vmatpush1.msra.mxu0 0.0
  %322 = vmatprep.subr.mxu0 0.0
  %323 = vmatpush1.msra.mxu0 0.0
  %324 = vmatprep.subr.mxu0 0.0
  %325 = vmatpush1.msra.mxu0 0.0
  %326 = vmatprep.mubr.f32.mxu0 0.0
  %327 = vmatmul.mubr.f32.gmra.mrb[0].mxu0 %v260
  %v328 = vpop.f32.mrb[0].mxu0
  %v329 = vadd.f32 0.0, %v328
  %v330 = vpop.f32.mrb[0].mxu0
  %331 = vdwg.mxu0
  %v333 = vsel %vm52, %v248, 0
  %335 = vmatprep.subr.mxu0 0.0
  %336 = vmatpush1.msra.mxu0 %v249
  %337 = vmatprep.subr.mxu0 0.0
  %338 = vmatpush1.msra.mxu0 %v250
  %339 = vmatprep.subr.mxu0 0.0
  %340 = vmatpush1.msra.mxu0 %v251
  %341 = vmatprep.subr.mxu0 0.0
  %342 = vmatpush1.msra.mxu0 %v252
  %343 = vmatprep.subr.mxu0 0.0
  %344 = vmatpush1.msra.mxu0 0.0
  %345 = vmatprep.subr.mxu0 0.0
  %346 = vmatpush1.msra.mxu0 0.0
  %347 = vmatprep.subr.mxu0 0.0
  %348 = vmatpush1.msra.mxu0 0.0
  %349 = vmatprep.subr.mxu0 0.0
  %350 = vmatpush1.msra.mxu0 0.0
  %351 = vmatprep.subr.mxu0 0.0
  %352 = vmatpush1.msra.mxu0 0.0
  %353 = vmatprep.subr.mxu0 0.0
  %354 = vmatpush1.msra.mxu0 0.0
  %355 = vmatprep.subr.mxu0 0.0
  %356 = vmatpush1.msra.mxu0 0.0
  %357 = vmatprep.subr.mxu0 0.0
  %358 = vmatpush1.msra.mxu0 0.0
  %359 = vmatprep.subr.mxu0 0.0
  %360 = vmatpush1.msra.mxu0 0.0
  %361 = vmatprep.subr.mxu0 0.0
  %362 = vmatpush1.msra.mxu0 0.0
  %363 = vmatprep.subr.mxu0 0.0
  %364 = vmatpush1.msra.mxu0 0.0
  %365 = vmatprep.subr.mxu0 0.0
  %366 = vmatpush1.msra.mxu0 0.0
  %367 = vmatprep.subr.mxu0 0.0
  %368 = vmatpush1.msra.mxu0 0.0
  %369 = vmatprep.subr.mxu0 0.0
  %370 = vmatpush1.msra.mxu0 0.0
  %371 = vmatprep.subr.mxu0 0.0
  %372 = vmatpush1.msra.mxu0 0.0
  %373 = vmatprep.subr.mxu0 0.0
  %374 = vmatpush1.msra.mxu0 0.0
  %375 = vmatprep.subr.mxu0 0.0
  %376 = vmatpush1.msra.mxu0 0.0
  %377 = vmatprep.subr.mxu0 0.0
  %378 = vmatpush1.msra.mxu0 0.0
  %379 = vmatprep.subr.mxu0 0.0
  %380 = vmatpush1.msra.mxu0 0.0
  %381 = vmatprep.subr.mxu0 0.0
  %382 = vmatpush1.msra.mxu0 0.0
  %383 = vmatprep.subr.mxu0 0.0
  %384 = vmatpush1.msra.mxu0 0.0
  %385 = vmatprep.subr.mxu0 0.0
  %386 = vmatpush1.msra.mxu0 0.0
  %387 = vmatprep.subr.mxu0 0.0
  %388 = vmatpush1.msra.mxu0 0.0
  %389 = vmatprep.subr.mxu0 0.0
  %390 = vmatpush1.msra.mxu0 0.0
  %391 = vmatprep.subr.mxu0 0.0
  %392 = vmatpush1.msra.mxu0 0.0
  %393 = vmatprep.subr.mxu0 0.0
  %394 = vmatpush1.msra.mxu0 0.0
  %395 = vmatprep.subr.mxu0 0.0
  %396 = vmatpush1.msra.mxu0 0.0
  %397 = vmatprep.subr.mxu0 0.0
  %398 = vmatpush1.msra.mxu0 0.0
  %399 = vmatprep.mubr.f32.mxu0 0.0
  %400 = vmatmul.mubr.f32.gmra.mrb[0].mxu0 %v333
  %v401 = vpop.f32.mrb[0].mxu0
  %v402 = vadd.f32 %v329, %v401
  %v403 = vpop.f32.mrb[0].mxu0
  %404 = vdwg.mxu0
  %v405 = vld [vmem:[%s5] sm:$0xff]
  %v406 = vadd.f32 %v402, %v405
  %v407 = vxor.u32 %v406, 2147483648
  %v408 = vmul.f32 %v407, 1.442695
  %v409 = vpow.pop %v408
  %v410 = vadd.f32 %v409, 1.0
  %v411 = vrcp.pop %v410
  %v412 = vmul.f32 1.0, %v411
  %414 = vrot.lane.b32.xlu0 %v406, 32
  %v415 = vpop.permute.xlu0 %414
  %v417 = vmul.f32 %v412, %v415
  %419 = vrot.lane.b32.xlu0 %v417, 64
  %v420 = vpop.permute.xlu0 %419
  %v422 = vadd.f32 %v406, %v420
  %v423 = vtanh.pop %v422
  %v424 = vsub.f32 1.0, %v412
  %426 = vrot.lane.b32.xlu0 %v423, 96
  %v427 = vpop.permute.xlu0 %426
  %v429 = vmul.f32 %v424, %v427
  %v430 = vmul.f32 %v412, %v240
  %v431 = vadd.f32 %v429, %v430
  %s432 = scalar_lea.vmem %s1, 8
  %v433 = vld [vmem:[%s432] sm:$0xff]
  %435 = vset.pattern.permute.xlu0 0
  %436 = vperm.xlu0 %435, %v433
  %v437 = vpop.permute.xlu0 %436
  %v439 = vmul.f32 %v437, %v431
  %v440 = vsub.f32 1.0, %v433
  %442 = vset.pattern.permute.xlu0 0
  %443 = vperm.xlu0 %442, %v440
  %v444 = vpop.permute.xlu0 %443
  %v446 = vmul.f32 %v444, %v240
  %v447 = vadd.f32 %v439, %v446
  %v448 = vmul.f32 %v447, %v437
  %450 = vrot.lane.b32.xlu0 %v448, 96
  %v451 = vpop.permute.xlu0 %450
  %s453 = scalar_lea.vmem [#allocation2], 8
  %454 = vst.msk [vmem:[%s453] sm:$0xff] %vm52, %v451
  %s455 = scalar_lea.vmem %s0, 16
  %v456 = vld [vmem:[%s455] sm:$0xff]
  %v457 = vld [vmem:[%s3] sm:$0xff]
  %v458 = vld [vmem:[%s3 + $0x8] sm:$0xff]
  %v459 = vld [vmem:[%s3 + $0x10] sm:$0xff]
  %v460 = vld [vmem:[%s3 + $0x18] sm:$0xff]
  %v461 = vld [vmem:[%s4] sm:$0xff]
  %v462 = vld [vmem:[%s4 + $0x8] sm:$0xff]
  %v463 = vld [vmem:[%s4 + $0x10] sm:$0xff]
  %v464 = vld [vmem:[%s4 + $0x18] sm:$0xff]
  %466 = vrot.lane.b32.xlu0 %v447, 96
  %v467 = vpop.permute.xlu0 %466
  %v468 = vsel %vm52, %v467, 0
  %470 = vmatprep.subr.mxu0 0.0
  %471 = vmatpush1.msra.mxu0 %v461
  %472 = vmatprep.subr.mxu0 0.0
  %473 = vmatpush1.msra.mxu0 %v462
  %474 = vmatprep.subr.mxu0 0.0
  %475 = vmatpush1.msra.mxu0 %v463
  %476 = vmatprep.subr.mxu0 0.0
  %477 = vmatpush1.msra.mxu0 %v464
  %478 = vmatprep.subr.mxu0 0.0
  %479 = vmatpush1.msra.mxu0 0.0
  %480 = vmatprep.subr.mxu0 0.0
  %481 = vmatpush1.msra.mxu0 0.0
  %482 = vmatprep.subr.mxu0 0.0
  %483 = vmatpush1.msra.mxu0 0.0
  %484 = vmatprep.subr.mxu0 0.0
  %485 = vmatpush1.msra.mxu0 0.0
  %486 = vmatprep.subr.mxu0 0.0
  %487 = vmatpush1.msra.mxu0 0.0
  %488 = vmatprep.subr.mxu0 0.0
  %489 = vmatpush1.msra.mxu0 0.0
  %490 = vmatprep.subr.mxu0 0.0
  %491 = vmatpush1.msra.mxu0 0.0
  %492 = vmatprep.subr.mxu0 0.0
  %493 = vmatpush1.msra.mxu0 0.0
  %494 = vmatprep.subr.mxu0 0.0
  %495 = vmatpush1.msra.mxu0 0.0
  %496 = vmatprep.subr.mxu0 0.0
  %497 = vmatpush1.msra.mxu0 0.0
  %498 = vmatprep.subr.mxu0 0.0
  %499 = vmatpush1.msra.mxu0 0.0
  %500 = vmatprep.subr.mxu0 0.0
  %501 = vmatpush1.msra.mxu0 0.0
  %502 = vmatprep.subr.mxu0 0.0
  %503 = vmatpush1.msra.mxu0 0.0
  %504 = vmatprep.subr.mxu0 0.0
  %505 = vmatpush1.msra.mxu0 0.0
  %506 = vmatprep.subr.mxu0 0.0
  %507 = vmatpush1.msra.mxu0 0.0
  %508 = vmatprep.subr.mxu0 0.0
  %509 = vmatpush1.msra.mxu0 0.0
  %510 = vmatprep.subr.mxu0 0.0
  %511 = vmatpush1.msra.mxu0 0.0
  %512 = vmatprep.subr.mxu0 0.0
  %513 = vmatpush1.msra.mxu0 0.0
  %514 = vmatprep.subr.mxu0 0.0
  %515 = vmatpush1.msra.mxu0 0.0
  %516 = vmatprep.subr.mxu0 0.0
  %517 = vmatpush1.msra.mxu0 0.0
  %518 = vmatprep.subr.mxu0 0.0
  %519 = vmatpush1.msra.mxu0 0.0
  %520 = vmatprep.subr.mxu0 0.0
  %521 = vmatpush1.msra.mxu0 0.0
  %522 = vmatprep.subr.mxu0 0.0
  %523 = vmatpush1.msra.mxu0 0.0
  %524 = vmatprep.subr.mxu0 0.0
  %525 = vmatpush1.msra.mxu0 0.0
  %526 = vmatprep.subr.mxu0 0.0
  %527 = vmatpush1.msra.mxu0 0.0
  %528 = vmatprep.subr.mxu0 0.0
  %529 = vmatpush1.msra.mxu0 0.0
  %530 = vmatprep.subr.mxu0 0.0
  %531 = vmatpush1.msra.mxu0 0.0
  %532 = vmatprep.subr.mxu0 0.0
  %533 = vmatpush1.msra.mxu0 0.0
  %534 = vmatprep.mubr.f32.mxu0 0.0
  %535 = vmatmul.mubr.f32.gmra.mrb[0].mxu0 %v468
  %v536 = vpop.f32.mrb[0].mxu0
  %v537 = vadd.f32 0.0, %v536
  %v538 = vpop.f32.mrb[0].mxu0
  %539 = vdwg.mxu0
  %v541 = vsel %vm52, %v456, 0
  %543 = vmatprep.subr.mxu0 0.0
  %544 = vmatpush1.msra.mxu0 %v457
  %545 = vmatprep.subr.mxu0 0.0
  %546 = vmatpush1.msra.mxu0 %v458
  %547 = vmatprep.subr.mxu0 0.0
  %548 = vmatpush1.msra.mxu0 %v459
  %549 = vmatprep.subr.mxu0 0.0
  %550 = vmatpush1.msra.mxu0 %v460
  %551 = vmatprep.subr.mxu0 0.0
  %552 = vmatpush1.msra.mxu0 0.0
  %553 = vmatprep.subr.mxu0 0.0
  %554 = vmatpush1.msra.mxu0 0.0
  %555 = vmatprep.subr.mxu0 0.0
  %556 = vmatpush1.msra.mxu0 0.0
  %557 = vmatprep.subr.mxu0 0.0
  %558 = vmatpush1.msra.mxu0 0.0
  %559 = vmatprep.subr.mxu0 0.0
  %560 = vmatpush1.msra.mxu0 0.0
  %561 = vmatprep.subr.mxu0 0.0
  %562 = vmatpush1.msra.mxu0 0.0
  %563 = vmatprep.subr.mxu0 0.0
  %564 = vmatpush1.msra.mxu0 0.0
  %565 = vmatprep.subr.mxu0 0.0
  %566 = vmatpush1.msra.mxu0 0.0
  %567 = vmatprep.subr.mxu0 0.0
  %568 = vmatpush1.msra.mxu0 0.0
  %569 = vmatprep.subr.mxu0 0.0
  %570 = vmatpush1.msra.mxu0 0.0
  %571 = vmatprep.subr.mxu0 0.0
  %572 = vmatpush1.msra.mxu0 0.0
  %573 = vmatprep.subr.mxu0 0.0
  %574 = vmatpush1.msra.mxu0 0.0
  %575 = vmatprep.subr.mxu0 0.0
  %576 = vmatpush1.msra.mxu0 0.0
  %577 = vmatprep.subr.mxu0 0.0
  %578 = vmatpush1.msra.mxu0 0.0
  %579 = vmatprep.subr.mxu0 0.0
  %580 = vmatpush1.msra.mxu0 0.0
  %581 = vmatprep.subr.mxu0 0.0
  %582 = vmatpush1.msra.mxu0 0.0
  %583 = vmatprep.subr.mxu0 0.0
  %584 = vmatpush1.msra.mxu0 0.0
  %585 = vmatprep.subr.mxu0 0.0
  %586 = vmatpush1.msra.mxu0 0.0
  %587 = vmatprep.subr.mxu0 0.0
  %588 = vmatpush1.msra.mxu0 0.0
  %589 = vmatprep.subr.mxu0 0.0
  %590 = vmatpush1.msra.mxu0 0.0
  %591 = vmatprep.subr.mxu0 0.0
  %592 = vmatpush1.msra.mxu0 0.0
  %593 = vmatprep.subr.mxu0 0.0
  %594 = vmatpush1.msra.mxu0 0.0
  %595 = vmatprep.subr.mxu0 0.0
  %596 = vmatpush1.msra.mxu0 0.0
  %597 = vmatprep.subr.mxu0 0.0
  %598 = vmatpush1.msra.mxu0 0.0
  %599 = vmatprep.subr.mxu0 0.0
  %600 = vmatpush1.msra.mxu0 0.0
  %601 = vmatprep.subr.mxu0 0.0
  %602 = vmatpush1.msra.mxu0 0.0
  %603 = vmatprep.subr.mxu0 0.0
  %604 = vmatpush1.msra.mxu0 0.0
  %605 = vmatprep.subr.mxu0 0.0
  %606 = vmatpush1.msra.mxu0 0.0
  %607 = vmatprep.mubr.f32.mxu0 0.0
  %608 = vmatmul.mubr.f32.gmra.mrb[0].mxu0 %v541
  %v609 = vpop.f32.mrb[0].mxu0
  %v610 = vadd.f32 %v537, %v609
  %v611 = vpop.f32.mrb[0].mxu0
  %612 = vdwg.mxu0
  %v613 = vld [vmem:[%s5] sm:$0xff]
  %v614 = vadd.f32 %v610, %v613
  %v615 = vxor.u32 %v614, 2147483648
  %v616 = vmul.f32 %v615, 1.442695
  %v617 = vpow.pop %v616
  %v618 = vadd.f32 %v617, 1.0
  %v619 = vrcp.pop %v618
  %v620 = vmul.f32 1.0, %v619
  %622 = vrot.lane.b32.xlu0 %v614, 32
  %v623 = vpop.permute.xlu0 %622
  %v625 = vmul.f32 %v620, %v623
  %627 = vrot.lane.b32.xlu0 %v625, 64
  %v628 = vpop.permute.xlu0 %627
  %v630 = vadd.f32 %v614, %v628
  %v631 = vtanh.pop %v630
  %v632 = vsub.f32 1.0, %v620
  %634 = vrot.lane.b32.xlu0 %v631, 96
  %v635 = vpop.permute.xlu0 %634
  %v637 = vmul.f32 %v632, %v635
  %v638 = vmul.f32 %v620, %v447
  %v639 = vadd.f32 %v637, %v638
  %s640 = scalar_lea.vmem %s1, 16
  %v641 = vld [vmem:[%s640] sm:$0xff]
  %643 = vset.pattern.permute.xlu0 0
  %644 = vperm.xlu0 %643, %v641
  %v645 = vpop.permute.xlu0 %644
  %v647 = vmul.f32 %v645, %v639
  %v648 = vsub.f32 1.0, %v641
  %650 = vset.pattern.permute.xlu0 0
  %651 = vperm.xlu0 %650, %v648
  %v652 = vpop.permute.xlu0 %651
  %v654 = vmul.f32 %v652, %v447
  %v655 = vadd.f32 %v647, %v654
  %v656 = vmul.f32 %v655, %v645
  %658 = vrot.lane.b32.xlu0 %v656, 96
  %v659 = vpop.permute.xlu0 %658
  %s661 = scalar_lea.vmem [#allocation2], 16
  %662 = vst.msk [vmem:[%s661] sm:$0xff] %vm52, %v659
  %s663 = scalar_lea.vmem %s0, 24
  %v664 = vld [vmem:[%s663] sm:$0xff]
  %v665 = vld [vmem:[%s3] sm:$0xff]
  %v666 = vld [vmem:[%s3 + $0x8] sm:$0xff]
  %v667 = vld [vmem:[%s3 + $0x10] sm:$0xff]
  %v668 = vld [vmem:[%s3 + $0x18] sm:$0xff]
  %v669 = vld [vmem:[%s4] sm:$0xff]
  %v670 = vld [vmem:[%s4 + $0x8] sm:$0xff]
  %v671 = vld [vmem:[%s4 + $0x10] sm:$0xff]
  %v672 = vld [vmem:[%s4 + $0x18] sm:$0xff]
  %674 = vrot.lane.b32.xlu0 %v655, 96
  %v675 = vpop.permute.xlu0 %674
  %v676 = vsel %vm52, %v675, 0
  %678 = vmatprep.subr.mxu0 0.0
  %679 = vmatpush1.msra.mxu0 %v669
  %680 = vmatprep.subr.mxu0 0.0
  %681 = vmatpush1.msra.mxu0 %v670
  %682 = vmatprep.subr.mxu0 0.0
  %683 = vmatpush1.msra.mxu0 %v671
  %684 = vmatprep.subr.mxu0 0.0
  %685 = vmatpush1.msra.mxu0 %v672
  %686 = vmatprep.subr.mxu0 0.0
  %687 = vmatpush1.msra.mxu0 0.0
  %688 = vmatprep.subr.mxu0 0.0
  %689 = vmatpush1.msra.mxu0 0.0
  %690 = vmatprep.subr.mxu0 0.0
  %691 = vmatpush1.msra.mxu0 0.0
  %692 = vmatprep.subr.mxu0 0.0
  %693 = vmatpush1.msra.mxu0 0.0
  %694 = vmatprep.subr.mxu0 0.0
  %695 = vmatpush1.msra.mxu0 0.0
  %696 = vmatprep.subr.mxu0 0.0
  %697 = vmatpush1.msra.mxu0 0.0
  %698 = vmatprep.subr.mxu0 0.0
  %699 = vmatpush1.msra.mxu0 0.0
  %700 = vmatprep.subr.mxu0 0.0
  %701 = vmatpush1.msra.mxu0 0.0
  %702 = vmatprep.subr.mxu0 0.0
  %703 = vmatpush1.msra.mxu0 0.0
  %704 = vmatprep.subr.mxu0 0.0
  %705 = vmatpush1.msra.mxu0 0.0
  %706 = vmatprep.subr.mxu0 0.0
  %707 = vmatpush1.msra.mxu0 0.0
  %708 = vmatprep.subr.mxu0 0.0
  %709 = vmatpush1.msra.mxu0 0.0
  %710 = vmatprep.subr.mxu0 0.0
  %711 = vmatpush1.msra.mxu0 0.0
  %712 = vmatprep.subr.mxu0 0.0
  %713 = vmatpush1.msra.mxu0 0.0
  %714 = vmatprep.subr.mxu0 0.0
  %715 = vmatpush1.msra.mxu0 0.0
  %716 = vmatprep.subr.mxu0 0.0
  %717 = vmatpush1.msra.mxu0 0.0
  %718 = vmatprep.subr.mxu0 0.0
  %719 = vmatpush1.msra.mxu0 0.0
  %720 = vmatprep.subr.mxu0 0.0
  %721 = vmatpush1.msra.mxu0 0.0
  %722 = vmatprep.subr.mxu0 0.0
  %723 = vmatpush1.msra.mxu0 0.0
  %724 = vmatprep.subr.mxu0 0.0
  %725 = vmatpush1.msra.mxu0 0.0
  %726 = vmatprep.subr.mxu0 0.0
  %727 = vmatpush1.msra.mxu0 0.0
  %728 = vmatprep.subr.mxu0 0.0
  %729 = vmatpush1.msra.mxu0 0.0
  %730 = vmatprep.subr.mxu0 0.0
  %731 = vmatpush1.msra.mxu0 0.0
  %732 = vmatprep.subr.mxu0 0.0
  %733 = vmatpush1.msra.mxu0 0.0
  %734 = vmatprep.subr.mxu0 0.0
  %735 = vmatpush1.msra.mxu0 0.0
  %736 = vmatprep.subr.mxu0 0.0
  %737 = vmatpush1.msra.mxu0 0.0
  %738 = vmatprep.subr.mxu0 0.0
  %739 = vmatpush1.msra.mxu0 0.0
  %740 = vmatprep.subr.mxu0 0.0
  %741 = vmatpush1.msra.mxu0 0.0
  %742 = vmatprep.mubr.f32.mxu0 0.0
  %743 = vmatmul.mubr.f32.gmra.mrb[0].mxu0 %v676
  %v744 = vpop.f32.mrb[0].mxu0
  %v745 = vadd.f32 0.0, %v744
  %v746 = vpop.f32.mrb[0].mxu0
  %747 = vdwg.mxu0
  %v749 = vsel %vm52, %v664, 0
  %751 = vmatprep.subr.mxu0 0.0
  %752 = vmatpush1.msra.mxu0 %v665
  %753 = vmatprep.subr.mxu0 0.0
  %754 = vmatpush1.msra.mxu0 %v666
  %755 = vmatprep.subr.mxu0 0.0
  %756 = vmatpush1.msra.mxu0 %v667
  %757 = vmatprep.subr.mxu0 0.0
  %758 = vmatpush1.msra.mxu0 %v668
  %759 = vmatprep.subr.mxu0 0.0
  %760 = vmatpush1.msra.mxu0 0.0
  %761 = vmatprep.subr.mxu0 0.0
  %762 = vmatpush1.msra.mxu0 0.0
  %763 = vmatprep.subr.mxu0 0.0
  %764 = vmatpush1.msra.mxu0 0.0
  %765 = vmatprep.subr.mxu0 0.0
  %766 = vmatpush1.msra.mxu0 0.0
  %767 = vmatprep.subr.mxu0 0.0
  %768 = vmatpush1.msra.mxu0 0.0
  %769 = vmatprep.subr.mxu0 0.0
  %770 = vmatpush1.msra.mxu0 0.0
  %771 = vmatprep.subr.mxu0 0.0
  %772 = vmatpush1.msra.mxu0 0.0
  %773 = vmatprep.subr.mxu0 0.0
  %774 = vmatpush1.msra.mxu0 0.0
  %775 = vmatprep.subr.mxu0 0.0
  %776 = vmatpush1.msra.mxu0 0.0
  %777 = vmatprep.subr.mxu0 0.0
  %778 = vmatpush1.msra.mxu0 0.0
  %779 = vmatprep.subr.mxu0 0.0
  %780 = vmatpush1.msra.mxu0 0.0
  %781 = vmatprep.subr.mxu0 0.0
  %782 = vmatpush1.msra.mxu0 0.0
  %783 = vmatprep.subr.mxu0 0.0
  %784 = vmatpush1.msra.mxu0 0.0
  %785 = vmatprep.subr.mxu0 0.0
  %786 = vmatpush1.msra.mxu0 0.0
  %787 = vmatprep.subr.mxu0 0.0
  %788 = vmatpush1.msra.mxu0 0.0
  %789 = vmatprep.subr.mxu0 0.0
  %790 = vmatpush1.msra.mxu0 0.0
  %791 = vmatprep.subr.mxu0 0.0
  %792 = vmatpush1.msra.mxu0 0.0
  %793 = vmatprep.subr.mxu0 0.0
  %794 = vmatpush1.msra.mxu0 0.0
  %795 = vmatprep.subr.mxu0 0.0
  %796 = vmatpush1.msra.mxu0 0.0
  %797 = vmatprep.subr.mxu0 0.0
  %798 = vmatpush1.msra.mxu0 0.0
  %799 = vmatprep.subr.mxu0 0.0
  %800 = vmatpush1.msra.mxu0 0.0
  %801 = vmatprep.subr.mxu0 0.0
  %802 = vmatpush1.msra.mxu0 0.0
  %803 = vmatprep.subr.mxu0 0.0
  %804 = vmatpush1.msra.mxu0 0.0
  %805 = vmatprep.subr.mxu0 0.0
  %806 = vmatpush1.msra.mxu0 0.0
  %807 = vmatprep.subr.mxu0 0.0
  %808 = vmatpush1.msra.mxu0 0.0
  %809 = vmatprep.subr.mxu0 0.0
  %810 = vmatpush1.msra.mxu0 0.0
  %811 = vmatprep.subr.mxu0 0.0
  %812 = vmatpush1.msra.mxu0 0.0
  %813 = vmatprep.subr.mxu0 0.0
  %814 = vmatpush1.msra.mxu0 0.0
  %815 = vmatprep.mubr.f32.mxu0 0.0
  %816 = vmatmul.mubr.f32.gmra.mrb[0].mxu0 %v749
  %v817 = vpop.f32.mrb[0].mxu0
  %v818 = vadd.f32 %v745, %v817
  %v819 = vpop.f32.mrb[0].mxu0
  %820 = vdwg.mxu0
  %v821 = vld [vmem:[%s5] sm:$0xff]
  %v822 = vadd.f32 %v818, %v821
  %v823 = vxor.u32 %v822, 2147483648
  %v824 = vmul.f32 %v823, 1.442695
  %v825 = vpow.pop %v824
  %v826 = vadd.f32 %v825, 1.0
  %v827 = vrcp.pop %v826
  %v828 = vmul.f32 1.0, %v827
  %830 = vrot.lane.b32.xlu0 %v822, 32
  %v831 = vpop.permute.xlu0 %830
  %v833 = vmul.f32 %v828, %v831
  %835 = vrot.lane.b32.xlu0 %v833, 64
  %v836 = vpop.permute.xlu0 %835
  %v838 = vadd.f32 %v822, %v836
  %v839 = vtanh.pop %v838
  %v840 = vsub.f32 1.0, %v828
  %842 = vrot.lane.b32.xlu0 %v839, 96
  %v843 = vpop.permute.xlu0 %842
  %v845 = vmul.f32 %v840, %v843
  %v846 = vmul.f32 %v828, %v655
  %v847 = vadd.f32 %v845, %v846
  %s848 = scalar_lea.vmem %s1, 24
  %v849 = vld [vmem:[%s848] sm:$0xff]
  %851 = vset.pattern.permute.xlu0 0
  %852 = vperm.xlu0 %851, %v849
  %v853 = vpop.permute.xlu0 %852
  %v855 = vmul.f32 %v853, %v847
  %v856 = vsub.f32 1.0, %v849
  %858 = vset.pattern.permute.xlu0 0
  %859 = vperm.xlu0 %858, %v856
  %v860 = vpop.permute.xlu0 %859
  %v862 = vmul.f32 %v860, %v655
  %v863 = vadd.f32 %v855, %v862
  %v864 = vmul.f32 %v863, %v853
  %866 = vrot.lane.b32.xlu0 %v864, 96
  %v867 = vpop.permute.xlu0 %866
  %s869 = scalar_lea.vmem [#allocation2], 24
  %870 = vst.msk [vmem:[%s869] sm:$0xff] %vm52, %v867
  %s871 = scalar_lea.vmem %s0, 32
  %v872 = vld [vmem:[%s871] sm:$0xff]
  %v873 = vld [vmem:[%s3] sm:$0xff]
  %v874 = vld [vmem:[%s3 + $0x8] sm:$0xff]
  %v875 = vld [vmem:[%s3 + $0x10] sm:$0xff]
  %v876 = vld [vmem:[%s3 + $0x18] sm:$0xff]
  %v877 = vld [vmem:[%s4] sm:$0xff]
  %v878 = vld [vmem:[%s4 + $0x8] sm:$0xff]
  %v879 = vld [vmem:[%s4 + $0x10] sm:$0xff]
  %v880 = vld [vmem:[%s4 + $0x18] sm:$0xff]
  %882 = vrot.lane.b32.xlu0 %v863, 96
  %v883 = vpop.permute.xlu0 %882
  %v884 = vsel %vm52, %v883, 0
  %886 = vmatprep.subr.mxu0 0.0
  %887 = vmatpush1.msra.mxu0 %v877
  %888 = vmatprep.subr.mxu0 0.0
  %889 = vmatpush1.msra.mxu0 %v878
  %890 = vmatprep.subr.mxu0 0.0
  %891 = vmatpush1.msra.mxu0 %v879
  %892 = vmatprep.subr.mxu0 0.0
  %893 = vmatpush1.msra.mxu0 %v880
  %894 = vmatprep.subr.mxu0 0.0
  %895 = vmatpush1.msra.mxu0 0.0
  %896 = vmatprep.subr.mxu0 0.0
  %897 = vmatpush1.msra.mxu0 0.0
  %898 = vmatprep.subr.mxu0 0.0
  %899 = vmatpush1.msra.mxu0 0.0
  %900 = vmatprep.subr.mxu0 0.0
  %901 = vmatpush1.msra.mxu0 0.0
  %902 = vmatprep.subr.mxu0 0.0
  %903 = vmatpush1.msra.mxu0 0.0
  %904 = vmatprep.subr.mxu0 0.0
  %905 = vmatpush1.msra.mxu0 0.0
  %906 = vmatprep.subr.mxu0 0.0
  %907 = vmatpush1.msra.mxu0 0.0
  %908 = vmatprep.subr.mxu0 0.0
  %909 = vmatpush1.msra.mxu0 0.0
  %910 = vmatprep.subr.mxu0 0.0
  %911 = vmatpush1.msra.mxu0 0.0
  %912 = vmatprep.subr.mxu0 0.0
  %913 = vmatpush1.msra.mxu0 0.0
  %914 = vmatprep.subr.mxu0 0.0
  %915 = vmatpush1.msra.mxu0 0.0
  %916 = vmatprep.subr.mxu0 0.0
  %917 = vmatpush1.msra.mxu0 0.0
  %918 = vmatprep.subr.mxu0 0.0
  %919 = vmatpush1.msra.mxu0 0.0
  %920 = vmatprep.subr.mxu0 0.0
  %921 = vmatpush1.msra.mxu0 0.0
  %922 = vmatprep.subr.mxu0 0.0
  %923 = vmatpush1.msra.mxu0 0.0
  %924 = vmatprep.subr.mxu0 0.0
  %925 = vmatpush1.msra.mxu0 0.0
  %926 = vmatprep.subr.mxu0 0.0
  %927 = vmatpush1.msra.mxu0 0.0
  %928 = vmatprep.subr.mxu0 0.0
  %929 = vmatpush1.msra.mxu0 0.0
  %930 = vmatprep.subr.mxu0 0.0
  %931 = vmatpush1.msra.mxu0 0.0
  %932 = vmatprep.subr.mxu0 0.0
  %933 = vmatpush1.msra.mxu0 0.0
  %934 = vmatprep.subr.mxu0 0.0
  %935 = vmatpush1.msra.mxu0 0.0
  %936 = vmatprep.subr.mxu0 0.0
  %937 = vmatpush1.msra.mxu0 0.0
  %938 = vmatprep.subr.mxu0 0.0
  %939 = vmatpush1.msra.mxu0 0.0
  %940 = vmatprep.subr.mxu0 0.0
  %941 = vmatpush1.msra.mxu0 0.0
  %942 = vmatprep.subr.mxu0 0.0
  %943 = vmatpush1.msra.mxu0 0.0
  %944 = vmatprep.subr.mxu0 0.0
  %945 = vmatpush1.msra.mxu0 0.0
  %946 = vmatprep.subr.mxu0 0.0
  %947 = vmatpush1.msra.mxu0 0.0
  %948 = vmatprep.subr.mxu0 0.0
  %949 = vmatpush1.msra.mxu0 0.0
  %950 = vmatprep.mubr.f32.mxu0 0.0
  %951 = vmatmul.mubr.f32.gmra.mrb[0].mxu0 %v884
  %v952 = vpop.f32.mrb[0].mxu0
  %v953 = vadd.f32 0.0, %v952
  %v954 = vpop.f32.mrb[0].mxu0
  %955 = vdwg.mxu0
  %v957 = vsel %vm52, %v872, 0
  %959 = vmatprep.subr.mxu0 0.0
  %960 = vmatpush1.msra.mxu0 %v873
  %961 = vmatprep.subr.mxu0 0.0
  %962 = vmatpush1.msra.mxu0 %v874
  %963 = vmatprep.subr.mxu0 0.0
  %964 = vmatpush1.msra.mxu0 %v875
  %965 = vmatprep.subr.mxu0 0.0
  %966 = vmatpush1.msra.mxu0 %v876
  %967 = vmatprep.subr.mxu0 0.0
  %968 = vmatpush1.msra.mxu0 0.0
  %969 = vmatprep.subr.mxu0 0.0
  %970 = vmatpush1.msra.mxu0 0.0
  %971 = vmatprep.subr.mxu0 0.0
  %972 = vmatpush1.msra.mxu0 0.0
  %973 = vmatprep.subr.mxu0 0.0
  %974 = vmatpush1.msra.mxu0 0.0
  %975 = vmatprep.subr.mxu0 0.0
  %976 = vmatpush1.msra.mxu0 0.0
  %977 = vmatprep.subr.mxu0 0.0
  %978 = vmatpush1.msra.mxu0 0.0
  %979 = vmatprep.subr.mxu0 0.0
  %980 = vmatpush1.msra.mxu0 0.0
  %981 = vmatprep.subr.mxu0 0.0
  %982 = vmatpush1.msra.mxu0 0.0
  %983 = vmatprep.subr.mxu0 0.0
  %984 = vmatpush1.msra.mxu0 0.0
  %985 = vmatprep.subr.mxu0 0.0
  %986 = vmatpush1.msra.mxu0 0.0
  %987 = vmatprep.subr.mxu0 0.0
  %988 = vmatpush1.msra.mxu0 0.0
  %989 = vmatprep.subr.mxu0 0.0
  %990 = vmatpush1.msra.mxu0 0.0
  %991 = vmatprep.subr.mxu0 0.0
  %992 = vmatpush1.msra.mxu0 0.0
  %993 = vmatprep.subr.mxu0 0.0
  %994 = vmatpush1.msra.mxu0 0.0
  %995 = vmatprep.subr.mxu0 0.0
  %996 = vmatpush1.msra.mxu0 0.0
  %997 = vmatprep.subr.mxu0 0.0
  %998 = vmatpush1.msra.mxu0 0.0
  %999 = vmatprep.subr.mxu0 0.0
  %1000 = vmatpush1.msra.mxu0 0.0
  %1001 = vmatprep.subr.mxu0 0.0
  %1002 = vmatpush1.msra.mxu0 0.0
  %1003 = vmatprep.subr.mxu0 0.0
  %1004 = vmatpush1.msra.mxu0 0.0
  %1005 = vmatprep.subr.mxu0 0.0
  %1006 = vmatpush1.msra.mxu0 0.0
  %1007 = vmatprep.subr.mxu0 0.0
  %1008 = vmatpush1.msra.mxu0 0.0
  %1009 = vmatprep.subr.mxu0 0.0
  %1010 = vmatpush1.msra.mxu0 0.0
  %1011 = vmatprep.subr.mxu0 0.0
  %1012 = vmatpush1.msra.mxu0 0.0
  %1013 = vmatprep.subr.mxu0 0.0
  %1014 = vmatpush1.msra.mxu0 0.0
  %1015 = vmatprep.subr.mxu0 0.0
  %1016 = vmatpush1.msra.mxu0 0.0
  %1017 = vmatprep.subr.mxu0 0.0
  %1018 = vmatpush1.msra.mxu0 0.0
  %1019 = vmatprep.subr.mxu0 0.0
  %1020 = vmatpush1.msra.mxu0 0.0
  %1021 = vmatprep.subr.mxu0 0.0
  %1022 = vmatpush1.msra.mxu0 0.0
  %1023 = vmatprep.mubr.f32.mxu0 0.0
  %1024 = vmatmul.mubr.f32.gmra.mrb[0].mxu0 %v957
  %v1025 = vpop.f32.mrb[0].mxu0
  %v1026 = vadd.f32 %v953, %v1025
  %v1027 = vpop.f32.mrb[0].mxu0
  %1028 = vdwg.mxu0
  %v1029 = vld [vmem:[%s5] sm:$0xff]
  %v1030 = vadd.f32 %v1026, %v1029
  %v1031 = vxor.u32 %v1030, 2147483648
  %v1032 = vmul.f32 %v1031, 1.442695
  %v1033 = vpow.pop %v1032
  %v1034 = vadd.f32 %v1033, 1.0
  %v1035 = vrcp.pop %v1034
  %v1036 = vmul.f32 1.0, %v1035
  %1038 = vrot.lane.b32.xlu0 %v1030, 32
  %v1039 = vpop.permute.xlu0 %1038
  %v1041 = vmul.f32 %v1036, %v1039
  %1043 = vrot.lane.b32.xlu0 %v1041, 64
  %v1044 = vpop.permute.xlu0 %1043
  %v1046 = vadd.f32 %v1030, %v1044
  %v1047 = vtanh.pop %v1046
  %v1048 = vsub.f32 1.0, %v1036
  %1050 = vrot.lane.b32.xlu0 %v1047, 96
  %v1051 = vpop.permute.xlu0 %1050
  %v1053 = vmul.f32 %v1048, %v1051
  %v1054 = vmul.f32 %v1036, %v863
  %v1055 = vadd.f32 %v1053, %v1054
  %s1056 = scalar_lea.vmem %s1, 32
  %v1057 = vld [vmem:[%s1056] sm:$0xff]
  %1059 = vset.pattern.permute.xlu0 0
  %1060 = vperm.xlu0 %1059, %v1057
  %v1061 = vpop.permute.xlu0 %1060
  %v1063 = vmul.f32 %v1061, %v1055
  %v1064 = vsub.f32 1.0, %v1057
  %1066 = vset.pattern.permute.xlu0 0
  %1067 = vperm.xlu0 %1066, %v1064
  %v1068 = vpop.permute.xlu0 %1067
  %v1070 = vmul.f32 %v1068, %v863
  %v1071 = vadd.f32 %v1063, %v1070
  %v1072 = vmul.f32 %v1071, %v1061
  %1074 = vrot.lane.b32.xlu0 %v1072, 96
  %v1075 = vpop.permute.xlu0 %1074
  %s1077 = scalar_lea.vmem [#allocation2], 32
  %1078 = vst.msk [vmem:[%s1077] sm:$0xff] %vm52, %v1075
  %s1079 = scalar_lea.vmem %s0, 40
  %v1080 = vld [vmem:[%s1079] sm:$0xff]
  %v1081 = vld [vmem:[%s3] sm:$0xff]
  %v1082 = vld [vmem:[%s3 + $0x8] sm:$0xff]
  %v1083 = vld [vmem:[%s3 + $0x10] sm:$0xff]
  %v1084 = vld [vmem:[%s3 + $0x18] sm:$0xff]
  %v1085 = vld [vmem:[%s4] sm:$0xff]
  %v1086 = vld [vmem:[%s4 + $0x8] sm:$0xff]
  %v1087 = vld [vmem:[%s4 + $0x10] sm:$0xff]
  %v1088 = vld [vmem:[%s4 + $0x18] sm:$0xff]
  %1090 = vrot.lane.b32.xlu0 %v1071, 96
  %v1091 = vpop.permute.xlu0 %1090
  %v1092 = vsel %vm52, %v1091, 0
  %1094 = vmatprep.subr.mxu0 0.0
  %1095 = vmatpush1.msra.mxu0 %v1085
  %1096 = vmatprep.subr.mxu0 0.0
  %1097 = vmatpush1.msra.mxu0 %v1086
  %1098 = vmatprep.subr.mxu0 0.0
  %1099 = vmatpush1.msra.mxu0 %v1087
  %1100 = vmatprep.subr.mxu0 0.0
  %1101 = vmatpush1.msra.mxu0 %v1088
  %1102 = vmatprep.subr.mxu0 0.0
  %1103 = vmatpush1.msra.mxu0 0.0
  %1104 = vmatprep.subr.mxu0 0.0
  %1105 = vmatpush1.msra.mxu0 0.0
  %1106 = vmatprep.subr.mxu0 0.0
  %1107 = vmatpush1.msra.mxu0 0.0
  %1108 = vmatprep.subr.mxu0 0.0
  %1109 = vmatpush1.msra.mxu0 0.0
  %1110 = vmatprep.subr.mxu0 0.0
  %1111 = vmatpush1.msra.mxu0 0.0
  %1112 = vmatprep.subr.mxu0 0.0
  %1113 = vmatpush1.msra.mxu0 0.0
  %1114 = vmatprep.subr.mxu0 0.0
  %1115 = vmatpush1.msra.mxu0 0.0
  %1116 = vmatprep.subr.mxu0 0.0
  %1117 = vmatpush1.msra.mxu0 0.0
  %1118 = vmatprep.subr.mxu0 0.0
  %1119 = vmatpush1.msra.mxu0 0.0
  %1120 = vmatprep.subr.mxu0 0.0
  %1121 = vmatpush1.msra.mxu0 0.0
  %1122 = vmatprep.subr.mxu0 0.0
  %1123 = vmatpush1.msra.mxu0 0.0
  %1124 = vmatprep.subr.mxu0 0.0
  %1125 = vmatpush1.msra.mxu0 0.0
  %1126 = vmatprep.subr.mxu0 0.0
  %1127 = vmatpush1.msra.mxu0 0.0
  %1128 = vmatprep.subr.mxu0 0.0
  %1129 = vmatpush1.msra.mxu0 0.0
  %1130 = vmatprep.subr.mxu0 0.0
  %1131 = vmatpush1.msra.mxu0 0.0
  %1132 = vmatprep.subr.mxu0 0.0
  %1133 = vmatpush1.msra.mxu0 0.0
  %1134 = vmatprep.subr.mxu0 0.0
  %1135 = vmatpush1.msra.mxu0 0.0
  %1136 = vmatprep.subr.mxu0 0.0
  %1137 = vmatpush1.msra.mxu0 0.0
  %1138 = vmatprep.subr.mxu0 0.0
  %1139 = vmatpush1.msra.mxu0 0.0
  %1140 = vmatprep.subr.mxu0 0.0
  %1141 = vmatpush1.msra.mxu0 0.0
  %1142 = vmatprep.subr.mxu0 0.0
  %1143 = vmatpush1.msra.mxu0 0.0
  %1144 = vmatprep.subr.mxu0 0.0
  %1145 = vmatpush1.msra.mxu0 0.0
  %1146 = vmatprep.subr.mxu0 0.0
  %1147 = vmatpush1.msra.mxu0 0.0
  %1148 = vmatprep.subr.mxu0 0.0
  %1149 = vmatpush1.msra.mxu0 0.0
  %1150 = vmatprep.subr.mxu0 0.0
  %1151 = vmatpush1.msra.mxu0 0.0
  %1152 = vmatprep.subr.mxu0 0.0
  %1153 = vmatpush1.msra.mxu0 0.0
  %1154 = vmatprep.subr.mxu0 0.0
  %1155 = vmatpush1.msra.mxu0 0.0
  %1156 = vmatprep.subr.mxu0 0.0
  %1157 = vmatpush1.msra.mxu0 0.0
  %1158 = vmatprep.mubr.f32.mxu0 0.0
  %1159 = vmatmul.mubr.f32.gmra.mrb[0].mxu0 %v1092
  %v1160 = vpop.f32.mrb[0].mxu0
  %v1161 = vadd.f32 0.0, %v1160
  %v1162 = vpop.f32.mrb[0].mxu0
  %1163 = vdwg.mxu0
  %v1165 = vsel %vm52, %v1080, 0
  %1167 = vmatprep.subr.mxu0 0.0
  %1168 = vmatpush1.msra.mxu0 %v1081
  %1169 = vmatprep.subr.mxu0 0.0
  %1170 = vmatpush1.msra.mxu0 %v1082
  %1171 = vmatprep.subr.mxu0 0.0
  %1172 = vmatpush1.msra.mxu0 %v1083
  %1173 = vmatprep.subr.mxu0 0.0
  %1174 = vmatpush1.msra.mxu0 %v1084
  %1175 = vmatprep.subr.mxu0 0.0
  %1176 = vmatpush1.msra.mxu0 0.0
  %1177 = vmatprep.subr.mxu0 0.0
  %1178 = vmatpush1.msra.mxu0 0.0
  %1179 = vmatprep.subr.mxu0 0.0
  %1180 = vmatpush1.msra.mxu0 0.0
  %1181 = vmatprep.subr.mxu0 0.0
  %1182 = vmatpush1.msra.mxu0 0.0
  %1183 = vmatprep.subr.mxu0 0.0
  %1184 = vmatpush1.msra.mxu0 0.0
  %1185 = vmatprep.subr.mxu0 0.0
  %1186 = vmatpush1.msra.mxu0 0.0
  %1187 = vmatprep.subr.mxu0 0.0
  %1188 = vmatpush1.msra.mxu0 0.0
  %1189 = vmatprep.subr.mxu0 0.0
  %1190 = vmatpush1.msra.mxu0 0.0
  %1191 = vmatprep.subr.mxu0 0.0
  %1192 = vmatpush1.msra.mxu0 0.0
  %1193 = vmatprep.subr.mxu0 0.0
  %1194 = vmatpush1.msra.mxu0 0.0
  %1195 = vmatprep.subr.mxu0 0.0
  %1196 = vmatpush1.msra.mxu0 0.0
  %1197 = vmatprep.subr.mxu0 0.0
  %1198 = vmatpush1.msra.mxu0 0.0
  %1199 = vmatprep.subr.mxu0 0.0
  %1200 = vmatpush1.msra.mxu0 0.0
  %1201 = vmatprep.subr.mxu0 0.0
  %1202 = vmatpush1.msra.mxu0 0.0
  %1203 = vmatprep.subr.mxu0 0.0
  %1204 = vmatpush1.msra.mxu0 0.0
  %1205 = vmatprep.subr.mxu0 0.0
  %1206 = vmatpush1.msra.mxu0 0.0
  %1207 = vmatprep.subr.mxu0 0.0
  %1208 = vmatpush1.msra.mxu0 0.0
  %1209 = vmatprep.subr.mxu0 0.0
  %1210 = vmatpush1.msra.mxu0 0.0
  %1211 = vmatprep.subr.mxu0 0.0
  %1212 = vmatpush1.msra.mxu0 0.0
  %1213 = vmatprep.subr.mxu0 0.0
  %1214 = vmatpush1.msra.mxu0 0.0
  %1215 = vmatprep.subr.mxu0 0.0
  %1216 = vmatpush1.msra.mxu0 0.0
  %1217 = vmatprep.subr.mxu0 0.0
  %1218 = vmatpush1.msra.mxu0 0.0
  %1219 = vmatprep.subr.mxu0 0.0
  %1220 = vmatpush1.msra.mxu0 0.0
  %1221 = vmatprep.subr.mxu0 0.0
  %1222 = vmatpush1.msra.mxu0 0.0
  %1223 = vmatprep.subr.mxu0 0.0
  %1224 = vmatpush1.msra.mxu0 0.0
  %1225 = vmatprep.subr.mxu0 0.0
  %1226 = vmatpush1.msra.mxu0 0.0
  %1227 = vmatprep.subr.mxu0 0.0
  %1228 = vmatpush1.msra.mxu0 0.0
  %1229 = vmatprep.subr.mxu0 0.0
  %1230 = vmatpush1.msra.mxu0 0.0
  %1231 = vmatprep.mubr.f32.mxu0 0.0
  %1232 = vmatmul.mubr.f32.gmra.mrb[0].mxu0 %v1165
  %v1233 = vpop.f32.mrb[0].mxu0
  %v1234 = vadd.f32 %v1161, %v1233
  %v1235 = vpop.f32.mrb[0].mxu0
  %1236 = vdwg.mxu0
  %v1237 = vld [vmem:[%s5] sm:$0xff]
  %v1238 = vadd.f32 %v1234, %v1237
  %v1239 = vxor.u32 %v1238, 2147483648
  %v1240 = vmul.f32 %v1239, 1.442695
  %v1241 = vpow.pop %v1240
  %v1242 = vadd.f32 %v1241, 1.0
  %v1243 = vrcp.pop %v1242
  %v1244 = vmul.f32 1.0, %v1243
  %1246 = vrot.lane.b32.xlu0 %v1238, 32
  %v1247 = vpop.permute.xlu0 %1246
  %v1249 = vmul.f32 %v1244, %v1247
  %1251 = vrot.lane.b32.xlu0 %v1249, 64
  %v1252 = vpop.permute.xlu0 %1251
  %v1254 = vadd.f32 %v1238, %v1252
  %v1255 = vtanh.pop %v1254
  %v1256 = vsub.f32 1.0, %v1244
  %1258 = vrot.lane.b32.xlu0 %v1255, 96
  %v1259 = vpop.permute.xlu0 %1258
  %v1261 = vmul.f32 %v1256, %v1259
  %v1262 = vmul.f32 %v1244, %v1071
  %v1263 = vadd.f32 %v1261, %v1262
  %s1264 = scalar_lea.vmem %s1, 40
  %v1265 = vld [vmem:[%s1264] sm:$0xff]
  %1267 = vset.pattern.permute.xlu0 0
  %1268 = vperm.xlu0 %1267, %v1265
  %v1269 = vpop.permute.xlu0 %1268
  %v1271 = vmul.f32 %v1269, %v1263
  %v1272 = vsub.f32 1.0, %v1265
  %1274 = vset.pattern.permute.xlu0 0
  %1275 = vperm.xlu0 %1274, %v1272
  %v1276 = vpop.permute.xlu0 %1275
  %v1278 = vmul.f32 %v1276, %v1071
  %v1279 = vadd.f32 %v1271, %v1278
  %v1280 = vmul.f32 %v1279, %v1269
  %1282 = vrot.lane.b32.xlu0 %v1280, 96
  %v1283 = vpop.permute.xlu0 %1282
  %s1285 = scalar_lea.vmem [#allocation2], 40
  %1286 = vst.msk [vmem:[%s1285] sm:$0xff] %vm52, %v1283
  %s1287 = scalar_lea.vmem %s0, 48
  %v1288 = vld [vmem:[%s1287] sm:$0xff]
  %v1289 = vld [vmem:[%s3] sm:$0xff]
  %v1290 = vld [vmem:[%s3 + $0x8] sm:$0xff]
  %v1291 = vld [vmem:[%s3 + $0x10] sm:$0xff]
  %v1292 = vld [vmem:[%s3 + $0x18] sm:$0xff]
  %v1293 = vld [vmem:[%s4] sm:$0xff]
  %v1294 = vld [vmem:[%s4 + $0x8] sm:$0xff]
  %v1295 = vld [vmem:[%s4 + $0x10] sm:$0xff]
  %v1296 = vld [vmem:[%s4 + $0x18] sm:$0xff]
  %1298 = vrot.lane.b32.xlu0 %v1279, 96
  %v1299 = vpop.permute.xlu0 %1298
  %v1300 = vsel %vm52, %v1299, 0
  %1302 = vmatprep.subr.mxu0 0.0
  %1303 = vmatpush1.msra.mxu0 %v1293
  %1304 = vmatprep.subr.mxu0 0.0
  %1305 = vmatpush1.msra.mxu0 %v1294
  %1306 = vmatprep.subr.mxu0 0.0
  %1307 = vmatpush1.msra.mxu0 %v1295
  %1308 = vmatprep.subr.mxu0 0.0
  %1309 = vmatpush1.msra.mxu0 %v1296
  %1310 = vmatprep.subr.mxu0 0.0
  %1311 = vmatpush1.msra.mxu0 0.0
  %1312 = vmatprep.subr.mxu0 0.0
  %1313 = vmatpush1.msra.mxu0 0.0
  %1314 = vmatprep.subr.mxu0 0.0
  %1315 = vmatpush1.msra.mxu0 0.0
  %1316 = vmatprep.subr.mxu0 0.0
  %1317 = vmatpush1.msra.mxu0 0.0
  %1318 = vmatprep.subr.mxu0 0.0
  %1319 = vmatpush1.msra.mxu0 0.0
  %1320 = vmatprep.subr.mxu0 0.0
  %1321 = vmatpush1.msra.mxu0 0.0
  %1322 = vmatprep.subr.mxu0 0.0
  %1323 = vmatpush1.msra.mxu0 0.0
  %1324 = vmatprep.subr.mxu0 0.0
  %1325 = vmatpush1.msra.mxu0 0.0
  %1326 = vmatprep.subr.mxu0 0.0
  %1327 = vmatpush1.msra.mxu0 0.0
  %1328 = vmatprep.subr.mxu0 0.0
  %1329 = vmatpush1.msra.mxu0 0.0
  %1330 = vmatprep.subr.mxu0 0.0
  %1331 = vmatpush1.msra.mxu0 0.0
  %1332 = vmatprep.subr.mxu0 0.0
  %1333 = vmatpush1.msra.mxu0 0.0
  %1334 = vmatprep.subr.mxu0 0.0
  %1335 = vmatpush1.msra.mxu0 0.0
  %1336 = vmatprep.subr.mxu0 0.0
  %1337 = vmatpush1.msra.mxu0 0.0
  %1338 = vmatprep.subr.mxu0 0.0
  %1339 = vmatpush1.msra.mxu0 0.0
  %1340 = vmatprep.subr.mxu0 0.0
  %1341 = vmatpush1.msra.mxu0 0.0
  %1342 = vmatprep.subr.mxu0 0.0
  %1343 = vmatpush1.msra.mxu0 0.0
  %1344 = vmatprep.subr.mxu0 0.0
  %1345 = vmatpush1.msra.mxu0 0.0
  %1346 = vmatprep.subr.mxu0 0.0
  %1347 = vmatpush1.msra.mxu0 0.0
  %1348 = vmatprep.subr.mxu0 0.0
  %1349 = vmatpush1.msra.mxu0 0.0
  %1350 = vmatprep.subr.mxu0 0.0
  %1351 = vmatpush1.msra.mxu0 0.0
  %1352 = vmatprep.subr.mxu0 0.0
  %1353 = vmatpush1.msra.mxu0 0.0
  %1354 = vmatprep.subr.mxu0 0.0
  %1355 = vmatpush1.msra.mxu0 0.0
  %1356 = vmatprep.subr.mxu0 0.0
  %1357 = vmatpush1.msra.mxu0 0.0
  %1358 = vmatprep.subr.mxu0 0.0
  %1359 = vmatpush1.msra.mxu0 0.0
  %1360 = vmatprep.subr.mxu0 0.0
  %1361 = vmatpush1.msra.mxu0 0.0
  %1362 = vmatprep.subr.mxu0 0.0
  %1363 = vmatpush1.msra.mxu0 0.0
  %1364 = vmatprep.subr.mxu0 0.0
  %1365 = vmatpush1.msra.mxu0 0.0
  %1366 = vmatprep.mubr.f32.mxu0 0.0
  %1367 = vmatmul.mubr.f32.gmra.mrb[0].mxu0 %v1300
  %v1368 = vpop.f32.mrb[0].mxu0
  %v1369 = vadd.f32 0.0, %v1368
  %v1370 = vpop.f32.mrb[0].mxu0
  %1371 = vdwg.mxu0
  %v1373 = vsel %vm52, %v1288, 0
  %1375 = vmatprep.subr.mxu0 0.0
  %1376 = vmatpush1.msra.mxu0 %v1289
  %1377 = vmatprep.subr.mxu0 0.0
  %1378 = vmatpush1.msra.mxu0 %v1290
  %1379 = vmatprep.subr.mxu0 0.0
  %1380 = vmatpush1.msra.mxu0 %v1291
  %1381 = vmatprep.subr.mxu0 0.0
  %1382 = vmatpush1.msra.mxu0 %v1292
  %1383 = vmatprep.subr.mxu0 0.0
  %1384 = vmatpush1.msra.mxu0 0.0
  %1385 = vmatprep.subr.mxu0 0.0
  %1386 = vmatpush1.msra.mxu0 0.0
  %1387 = vmatprep.subr.mxu0 0.0
  %1388 = vmatpush1.msra.mxu0 0.0
  %1389 = vmatprep.subr.mxu0 0.0
  %1390 = vmatpush1.msra.mxu0 0.0
  %1391 = vmatprep.subr.mxu0 0.0
  %1392 = vmatpush1.msra.mxu0 0.0
  %1393 = vmatprep.subr.mxu0 0.0
  %1394 = vmatpush1.msra.mxu0 0.0
  %1395 = vmatprep.subr.mxu0 0.0
  %1396 = vmatpush1.msra.mxu0 0.0
  %1397 = vmatprep.subr.mxu0 0.0
  %1398 = vmatpush1.msra.mxu0 0.0
  %1399 = vmatprep.subr.mxu0 0.0
  %1400 = vmatpush1.msra.mxu0 0.0
  %1401 = vmatprep.subr.mxu0 0.0
  %1402 = vmatpush1.msra.mxu0 0.0
  %1403 = vmatprep.subr.mxu0 0.0
  %1404 = vmatpush1.msra.mxu0 0.0
  %1405 = vmatprep.subr.mxu0 0.0
  %1406 = vmatpush1.msra.mxu0 0.0
  %1407 = vmatprep.subr.mxu0 0.0
  %1408 = vmatpush1.msra.mxu0 0.0
  %1409 = vmatprep.subr.mxu0 0.0
  %1410 = vmatpush1.msra.mxu0 0.0
  %1411 = vmatprep.subr.mxu0 0.0
  %1412 = vmatpush1.msra.mxu0 0.0
  %1413 = vmatprep.subr.mxu0 0.0
  %1414 = vmatpush1.msra.mxu0 0.0
  %1415 = vmatprep.subr.mxu0 0.0
  %1416 = vmatpush1.msra.mxu0 0.0
  %1417 = vmatprep.subr.mxu0 0.0
  %1418 = vmatpush1.msra.mxu0 0.0
  %1419 = vmatprep.subr.mxu0 0.0
  %1420 = vmatpush1.msra.mxu0 0.0
  %1421 = vmatprep.subr.mxu0 0.0
  %1422 = vmatpush1.msra.mxu0 0.0
  %1423 = vmatprep.subr.mxu0 0.0
  %1424 = vmatpush1.msra.mxu0 0.0
  %1425 = vmatprep.subr.mxu0 0.0
  %1426 = vmatpush1.msra.mxu0 0.0
  %1427 = vmatprep.subr.mxu0 0.0
  %1428 = vmatpush1.msra.mxu0 0.0
  %1429 = vmatprep.subr.mxu0 0.0
  %1430 = vmatpush1.msra.mxu0 0.0
  %1431 = vmatprep.subr.mxu0 0.0
  %1432 = vmatpush1.msra.mxu0 0.0
  %1433 = vmatprep.subr.mxu0 0.0
  %1434 = vmatpush1.msra.mxu0 0.0
  %1435 = vmatprep.subr.mxu0 0.0
  %1436 = vmatpush1.msra.mxu0 0.0
  %1437 = vmatprep.subr.mxu0 0.0
  %1438 = vmatpush1.msra.mxu0 0.0
  %1439 = vmatprep.mubr.f32.mxu0 0.0
  %1440 = vmatmul.mubr.f32.gmra.mrb[0].mxu0 %v1373
  %v1441 = vpop.f32.mrb[0].mxu0
  %v1442 = vadd.f32 %v1369, %v1441
  %v1443 = vpop.f32.mrb[0].mxu0
  %1444 = vdwg.mxu0
  %v1445 = vld [vmem:[%s5] sm:$0xff]
  %v1446 = vadd.f32 %v1442, %v1445
  %v1447 = vxor.u32 %v1446, 2147483648
  %v1448 = vmul.f32 %v1447, 1.442695
  %v1449 = vpow.pop %v1448
  %v1450 = vadd.f32 %v1449, 1.0
  %v1451 = vrcp.pop %v1450
  %v1452 = vmul.f32 1.0, %v1451
  %1454 = vrot.lane.b32.xlu0 %v1446, 32
  %v1455 = vpop.permute.xlu0 %1454
  %v1457 = vmul.f32 %v1452, %v1455
  %1459 = vrot.lane.b32.xlu0 %v1457, 64
  %v1460 = vpop.permute.xlu0 %1459
  %v1462 = vadd.f32 %v1446, %v1460
  %v1463 = vtanh.pop %v1462
  %v1464 = vsub.f32 1.0, %v1452
  %1466 = vrot.lane.b32.xlu0 %v1463, 96
  %v1467 = vpop.permute.xlu0 %1466
  %v1469 = vmul.f32 %v1464, %v1467
  %v1470 = vmul.f32 %v1452, %v1279
  %v1471 = vadd.f32 %v1469, %v1470
  %s1472 = scalar_lea.vmem %s1, 48
  %v1473 = vld [vmem:[%s1472] sm:$0xff]
  %1475 = vset.pattern.permute.xlu0 0
  %1476 = vperm.xlu0 %1475, %v1473
  %v1477 = vpop.permute.xlu0 %1476
  %v1479 = vmul.f32 %v1477, %v1471
  %v1480 = vsub.f32 1.0, %v1473
  %1482 = vset.pattern.permute.xlu0 0
  %1483 = vperm.xlu0 %1482, %v1480
  %v1484 = vpop.permute.xlu0 %1483
  %v1486 = vmul.f32 %v1484, %v1279
  %v1487 = vadd.f32 %v1479, %v1486
  %v1488 = vmul.f32 %v1487, %v1477
  %1490 = vrot.lane.b32.xlu0 %v1488, 96
  %v1491 = vpop.permute.xlu0 %1490
  %s1493 = scalar_lea.vmem [#allocation2], 48
  %1494 = vst.msk [vmem:[%s1493] sm:$0xff] %vm52, %v1491
  %s1495 = scalar_lea.vmem %s0, 56
  %v1496 = vld [vmem:[%s1495] sm:$0xff]
  %v1497 = vld [vmem:[%s3] sm:$0xff]
  %v1498 = vld [vmem:[%s3 + $0x8] sm:$0xff]
  %v1499 = vld [vmem:[%s3 + $0x10] sm:$0xff]
  %v1500 = vld [vmem:[%s3 + $0x18] sm:$0xff]
  %v1501 = vld [vmem:[%s4] sm:$0xff]
  %v1502 = vld [vmem:[%s4 + $0x8] sm:$0xff]
  %v1503 = vld [vmem:[%s4 + $0x10] sm:$0xff]
  %v1504 = vld [vmem:[%s4 + $0x18] sm:$0xff]
  %1506 = vrot.lane.b32.xlu0 %v1487, 96
  %v1507 = vpop.permute.xlu0 %1506
  %v1508 = vsel %vm52, %v1507, 0
  %1510 = vmatprep.subr.mxu0 0.0
  %1511 = vmatpush1.msra.mxu0 %v1501
  %1512 = vmatprep.subr.mxu0 0.0
  %1513 = vmatpush1.msra.mxu0 %v1502
  %1514 = vmatprep.subr.mxu0 0.0
  %1515 = vmatpush1.msra.mxu0 %v1503
  %1516 = vmatprep.subr.mxu0 0.0
  %1517 = vmatpush1.msra.mxu0 %v1504
  %1518 = vmatprep.subr.mxu0 0.0
  %1519 = vmatpush1.msra.mxu0 0.0
  %1520 = vmatprep.subr.mxu0 0.0
  %1521 = vmatpush1.msra.mxu0 0.0
  %1522 = vmatprep.subr.mxu0 0.0
  %1523 = vmatpush1.msra.mxu0 0.0
  %1524 = vmatprep.subr.mxu0 0.0
  %1525 = vmatpush1.msra.mxu0 0.0
  %1526 = vmatprep.subr.mxu0 0.0
  %1527 = vmatpush1.msra.mxu0 0.0
  %1528 = vmatprep.subr.mxu0 0.0
  %1529 = vmatpush1.msra.mxu0 0.0
  %1530 = vmatprep.subr.mxu0 0.0
  %1531 = vmatpush1.msra.mxu0 0.0
  %1532 = vmatprep.subr.mxu0 0.0
  %1533 = vmatpush1.msra.mxu0 0.0
  %1534 = vmatprep.subr.mxu0 0.0
  %1535 = vmatpush1.msra.mxu0 0.0
  %1536 = vmatprep.subr.mxu0 0.0
  %1537 = vmatpush1.msra.mxu0 0.0
  %1538 = vmatprep.subr.mxu0 0.0
  %1539 = vmatpush1.msra.mxu0 0.0
  %1540 = vmatprep.subr.mxu0 0.0
  %1541 = vmatpush1.msra.mxu0 0.0
  %1542 = vmatprep.subr.mxu0 0.0
  %1543 = vmatpush1.msra.mxu0 0.0
  %1544 = vmatprep.subr.mxu0 0.0
  %1545 = vmatpush1.msra.mxu0 0.0
  %1546 = vmatprep.subr.mxu0 0.0
  %1547 = vmatpush1.msra.mxu0 0.0
  %1548 = vmatprep.subr.mxu0 0.0
  %1549 = vmatpush1.msra.mxu0 0.0
  %1550 = vmatprep.subr.mxu0 0.0
  %1551 = vmatpush1.msra.mxu0 0.0
  %1552 = vmatprep.subr.mxu0 0.0
  %1553 = vmatpush1.msra.mxu0 0.0
  %1554 = vmatprep.subr.mxu0 0.0
  %1555 = vmatpush1.msra.mxu0 0.0
  %1556 = vmatprep.subr.mxu0 0.0
  %1557 = vmatpush1.msra.mxu0 0.0
  %1558 = vmatprep.subr.mxu0 0.0
  %1559 = vmatpush1.msra.mxu0 0.0
  %1560 = vmatprep.subr.mxu0 0.0
  %1561 = vmatpush1.msra.mxu0 0.0
  %1562 = vmatprep.subr.mxu0 0.0
  %1563 = vmatpush1.msra.mxu0 0.0
  %1564 = vmatprep.subr.mxu0 0.0
  %1565 = vmatpush1.msra.mxu0 0.0
  %1566 = vmatprep.subr.mxu0 0.0
  %1567 = vmatpush1.msra.mxu0 0.0
  %1568 = vmatprep.subr.mxu0 0.0
  %1569 = vmatpush1.msra.mxu0 0.0
  %1570 = vmatprep.subr.mxu0 0.0
  %1571 = vmatpush1.msra.mxu0 0.0
  %1572 = vmatprep.subr.mxu0 0.0
  %1573 = vmatpush1.msra.mxu0 0.0
  %1574 = vmatprep.mubr.f32.mxu0 0.0
  %1575 = vmatmul.mubr.f32.gmra.mrb[0].mxu0 %v1508
  %v1576 = vpop.f32.mrb[0].mxu0
  %v1577 = vadd.f32 0.0, %v1576
  %v1578 = vpop.f32.mrb[0].mxu0
  %1579 = vdwg.mxu0
  %v1581 = vsel %vm52, %v1496, 0
  %1583 = vmatprep.subr.mxu0 0.0
  %1584 = vmatpush1.msra.mxu0 %v1497
  %1585 = vmatprep.subr.mxu0 0.0
  %1586 = vmatpush1.msra.mxu0 %v1498
  %1587 = vmatprep.subr.mxu0 0.0
  %1588 = vmatpush1.msra.mxu0 %v1499
  %1589 = vmatprep.subr.mxu0 0.0
  %1590 = vmatpush1.msra.mxu0 %v1500
  %1591 = vmatprep.subr.mxu0 0.0
  %1592 = vmatpush1.msra.mxu0 0.0
  %1593 = vmatprep.subr.mxu0 0.0
  %1594 = vmatpush1.msra.mxu0 0.0
  %1595 = vmatprep.subr.mxu0 0.0
  %1596 = vmatpush1.msra.mxu0 0.0
  %1597 = vmatprep.subr.mxu0 0.0
  %1598 = vmatpush1.msra.mxu0 0.0
  %1599 = vmatprep.subr.mxu0 0.0
  %1600 = vmatpush1.msra.mxu0 0.0
  %1601 = vmatprep.subr.mxu0 0.0
  %1602 = vmatpush1.msra.mxu0 0.0
  %1603 = vmatprep.subr.mxu0 0.0
  %1604 = vmatpush1.msra.mxu0 0.0
  %1605 = vmatprep.subr.mxu0 0.0
  %1606 = vmatpush1.msra.mxu0 0.0
  %1607 = vmatprep.subr.mxu0 0.0
  %1608 = vmatpush1.msra.mxu0 0.0
  %1609 = vmatprep.subr.mxu0 0.0
  %1610 = vmatpush1.msra.mxu0 0.0
  %1611 = vmatprep.subr.mxu0 0.0
  %1612 = vmatpush1.msra.mxu0 0.0
  %1613 = vmatprep.subr.mxu0 0.0
  %1614 = vmatpush1.msra.mxu0 0.0
  %1615 = vmatprep.subr.mxu0 0.0
  %1616 = vmatpush1.msra.mxu0 0.0
  %1617 = vmatprep.subr.mxu0 0.0
  %1618 = vmatpush1.msra.mxu0 0.0
  %1619 = vmatprep.subr.mxu0 0.0
  %1620 = vmatpush1.msra.mxu0 0.0
  %1621 = vmatprep.subr.mxu0 0.0
  %1622 = vmatpush1.msra.mxu0 0.0
  %1623 = vmatprep.subr.mxu0 0.0
  %1624 = vmatpush1.msra.mxu0 0.0
  %1625 = vmatprep.subr.mxu0 0.0
  %1626 = vmatpush1.msra.mxu0 0.0
  %1627 = vmatprep.subr.mxu0 0.0
  %1628 = vmatpush1.msra.mxu0 0.0
  %1629 = vmatprep.subr.mxu0 0.0
  %1630 = vmatpush1.msra.mxu0 0.0
  %1631 = vmatprep.subr.mxu0 0.0
  %1632 = vmatpush1.msra.mxu0 0.0
  %1633 = vmatprep.subr.mxu0 0.0
  %1634 = vmatpush1.msra.mxu0 0.0
  %1635 = vmatprep.subr.mxu0 0.0
  %1636 = vmatpush1.msra.mxu0 0.0
  %1637 = vmatprep.subr.mxu0 0.0
  %1638 = vmatpush1.msra.mxu0 0.0
  %1639 = vmatprep.subr.mxu0 0.0
  %1640 = vmatpush1.msra.mxu0 0.0
  %1641 = vmatprep.subr.mxu0 0.0
  %1642 = vmatpush1.msra.mxu0 0.0
  %1643 = vmatprep.subr.mxu0 0.0
  %1644 = vmatpush1.msra.mxu0 0.0
  %1645 = vmatprep.subr.mxu0 0.0
  %1646 = vmatpush1.msra.mxu0 0.0
  %1647 = vmatprep.mubr.f32.mxu0 0.0
  %1648 = vmatmul.mubr.f32.gmra.mrb[0].mxu0 %v1581
  %v1649 = vpop.f32.mrb[0].mxu0
  %v1650 = vadd.f32 %v1577, %v1649
  %v1651 = vpop.f32.mrb[0].mxu0
  %1652 = vdwg.mxu0
  %v1653 = vld [vmem:[%s5] sm:$0xff]
  %v1654 = vadd.f32 %v1650, %v1653
  %v1655 = vxor.u32 %v1654, 2147483648
  %v1656 = vmul.f32 %v1655, 1.442695
  %v1657 = vpow.pop %v1656
  %v1658 = vadd.f32 %v1657, 1.0
  %v1659 = vrcp.pop %v1658
  %v1660 = vmul.f32 1.0, %v1659
  %1662 = vrot.lane.b32.xlu0 %v1654, 32
  %v1663 = vpop.permute.xlu0 %1662
  %v1665 = vmul.f32 %v1660, %v1663
  %1667 = vrot.lane.b32.xlu0 %v1665, 64
  %v1668 = vpop.permute.xlu0 %1667
  %v1670 = vadd.f32 %v1654, %v1668
  %v1671 = vtanh.pop %v1670
  %v1672 = vsub.f32 1.0, %v1660
  %1674 = vrot.lane.b32.xlu0 %v1671, 96
  %v1675 = vpop.permute.xlu0 %1674
  %v1677 = vmul.f32 %v1672, %v1675
  %v1678 = vmul.f32 %v1660, %v1487
  %v1679 = vadd.f32 %v1677, %v1678
  %s1680 = scalar_lea.vmem %s1, 56
  %v1681 = vld [vmem:[%s1680] sm:$0xff]
  %1683 = vset.pattern.permute.xlu0 0
  %1684 = vperm.xlu0 %1683, %v1681
  %v1685 = vpop.permute.xlu0 %1684
  %v1687 = vmul.f32 %v1685, %v1679
  %v1688 = vsub.f32 1.0, %v1681
  %1690 = vset.pattern.permute.xlu0 0
  %1691 = vperm.xlu0 %1690, %v1688
  %v1692 = vpop.permute.xlu0 %1691
  %v1694 = vmul.f32 %v1692, %v1487
  %v1695 = vadd.f32 %v1687, %v1694
  %v1696 = vmul.f32 %v1695, %v1685
  %1698 = vrot.lane.b32.xlu0 %v1696, 96
  %v1699 = vpop.permute.xlu0 %1698
  %s1701 = scalar_lea.vmem [#allocation2], 56
  %1702 = vst.msk [vmem:[%s1701] sm:$0xff] %vm52, %v1699
  %v1703 = vld [vmem:[#allocation2] sm:$0xff]
  %v1704 = vld [vmem:[#allocation2 + $0x8] sm:$0xff]
  %v1705 = vld [vmem:[#allocation2 + $0x10] sm:$0xff]
  %v1706 = vld [vmem:[#allocation2 + $0x18] sm:$0xff]
  %v1707 = vld [vmem:[#allocation2 + $0x20] sm:$0xff]
  %v1708 = vld [vmem:[#allocation2 + $0x28] sm:$0xff]
  %v1709 = vld [vmem:[#allocation2 + $0x30] sm:$0xff]
  %v1710 = vld [vmem:[#allocation2 + $0x38] sm:$0xff]
  %v1711 = vld [vmem:[%s1] sm:$0xff]
  %v1712 = vld [vmem:[%s1 + $0x8] sm:$0xff]
  %v1713 = vld [vmem:[%s1 + $0x10] sm:$0xff]
  %v1714 = vld [vmem:[%s1 + $0x18] sm:$0xff]
  %v1715 = vld [vmem:[%s1 + $0x20] sm:$0xff]
  %v1716 = vld [vmem:[%s1 + $0x28] sm:$0xff]
  %v1717 = vld [vmem:[%s1 + $0x30] sm:$0xff]
  %v1718 = vld [vmem:[%s1 + $0x38] sm:$0xff]
  %v1719 = vld [vmem:[%s2] sm:$0xff]
  %v1720 = vld [vmem:[%s6] sm:$0xff]
  %v1721 = vld [vmem:[%s6 + $0x8] sm:$0xff]
  %v1722 = vld [vmem:[%s6 + $0x10] sm:$0xff]
  %v1723 = vld [vmem:[%s6 + $0x18] sm:$0xff]
  %v1724 = vld [vmem:[%s7] sm:$0xff]
  %v1725 = vld [vmem:[%s7 + $0x8] sm:$0xff]
  %v1726 = vld [vmem:[%s7 + $0x10] sm:$0xff]
  %v1727 = vld [vmem:[%s7 + $0x18] sm:$0xff]
  %1729 = vrot.lane.b32.xlu0 %v1695, 96
  %v1730 = vpop.permute.xlu0 %1729
  %v1731 = vsel %vm52, %v1730, 0
  %1733 = vmatprep.subr.mxu0 0.0
  %1734 = vmatpush1.msra.mxu0 %v1724
  %1735 = vmatprep.subr.mxu0 0.0
  %1736 = vmatpush1.msra.mxu0 %v1725
  %1737 = vmatprep.subr.mxu0 0.0
  %1738 = vmatpush1.msra.mxu0 %v1726
  %1739 = vmatprep.subr.mxu0 0.0
  %1740 = vmatpush1.msra.mxu0 %v1727
  %1741 = vmatprep.subr.mxu0 0.0
  %1742 = vmatpush1.msra.mxu0 0.0
  %1743 = vmatprep.subr.mxu0 0.0
  %1744 = vmatpush1.msra.mxu0 0.0
  %1745 = vmatprep.subr.mxu0 0.0
  %1746 = vmatpush1.msra.mxu0 0.0
  %1747 = vmatprep.subr.mxu0 0.0
  %1748 = vmatpush1.msra.mxu0 0.0
  %1749 = vmatprep.subr.mxu0 0.0
  %1750 = vmatpush1.msra.mxu0 0.0
  %1751 = vmatprep.subr.mxu0 0.0
  %1752 = vmatpush1.msra.mxu0 0.0
  %1753 = vmatprep.subr.mxu0 0.0
  %1754 = vmatpush1.msra.mxu0 0.0
  %1755 = vmatprep.subr.mxu0 0.0
  %1756 = vmatpush1.msra.mxu0 0.0
  %1757 = vmatprep.subr.mxu0 0.0
  %1758 = vmatpush1.msra.mxu0 0.0
  %1759 = vmatprep.subr.mxu0 0.0
  %1760 = vmatpush1.msra.mxu0 0.0
  %1761 = vmatprep.subr.mxu0 0.0
  %1762 = vmatpush1.msra.mxu0 0.0
  %1763 = vmatprep.subr.mxu0 0.0
  %1764 = vmatpush1.msra.mxu0 0.0
  %1765 = vmatprep.subr.mxu0 0.0
  %1766 = vmatpush1.msra.mxu0 0.0
  %1767 = vmatprep.subr.mxu0 0.0
  %1768 = vmatpush1.msra.mxu0 0.0
  %1769 = vmatprep.subr.mxu0 0.0
  %1770 = vmatpush1.msra.mxu0 0.0
  %1771 = vmatprep.subr.mxu0 0.0
  %1772 = vmatpush1.msra.mxu0 0.0
  %1773 = vmatprep.subr.mxu0 0.0
  %1774 = vmatpush1.msra.mxu0 0.0
  %1775 = vmatprep.subr.mxu0 0.0
  %1776 = vmatpush1.msra.mxu0 0.0
  %1777 = vmatprep.subr.mxu0 0.0
  %1778 = vmatpush1.msra.mxu0 0.0
  %1779 = vmatprep.subr.mxu0 0.0
  %1780 = vmatpush1.msra.mxu0 0.0
  %1781 = vmatprep.subr.mxu0 0.0
  %1782 = vmatpush1.msra.mxu0 0.0
  %1783 = vmatprep.subr.mxu0 0.0
  %1784 = vmatpush1.msra.mxu0 0.0
  %1785 = vmatprep.subr.mxu0 0.0
  %1786 = vmatpush1.msra.mxu0 0.0
  %1787 = vmatprep.subr.mxu0 0.0
  %1788 = vmatpush1.msra.mxu0 0.0
  %1789 = vmatprep.subr.mxu0 0.0
  %1790 = vmatpush1.msra.mxu0 0.0
  %1791 = vmatprep.subr.mxu0 0.0
  %1792 = vmatpush1.msra.mxu0 0.0
  %1793 = vmatprep.subr.mxu0 0.0
  %1794 = vmatpush1.msra.mxu0 0.0
  %1795 = vmatprep.subr.mxu0 0.0
  %1796 = vmatpush1.msra.mxu0 0.0
  %1797 = vmatprep.mubr.f32.mxu0 0.0
  %1798 = vmatmul.mubr.f32.gmra.mrb[0].mxu0 %v1731
  %v1799 = vpop.f32.mrb[0].mxu0
  %v1800 = vadd.f32 0.0, %v1799
  %v1801 = vpop.f32.mrb[0].mxu0
  %1802 = vdwg.mxu0
  %v1804 = vsel %vm52, %v1719, 0
  %1806 = vmatprep.subr.mxu0 0.0
  %1807 = vmatpush1.msra.mxu0 %v1720
  %1808 = vmatprep.subr.mxu0 0.0
  %1809 = vmatpush1.msra.mxu0 %v1721
  %1810 = vmatprep.subr.mxu0 0.0
  %1811 = vmatpush1.msra.mxu0 %v1722
  %1812 = vmatprep.subr.mxu0 0.0
  %1813 = vmatpush1.msra.mxu0 %v1723
  %1814 = vmatprep.subr.mxu0 0.0
  %1815 = vmatpush1.msra.mxu0 0.0
  %1816 = vmatprep.subr.mxu0 0.0
  %1817 = vmatpush1.msra.mxu0 0.0
  %1818 = vmatprep.subr.mxu0 0.0
  %1819 = vmatpush1.msra.mxu0 0.0
  %1820 = vmatprep.subr.mxu0 0.0
  %1821 = vmatpush1.msra.mxu0 0.0
  %1822 = vmatprep.subr.mxu0 0.0
  %1823 = vmatpush1.msra.mxu0 0.0
  %1824 = vmatprep.subr.mxu0 0.0
  %1825 = vmatpush1.msra.mxu0 0.0
  %1826 = vmatprep.subr.mxu0 0.0
  %1827 = vmatpush1.msra.mxu0 0.0
  %1828 = vmatprep.subr.mxu0 0.0
  %1829 = vmatpush1.msra.mxu0 0.0
  %1830 = vmatprep.subr.mxu0 0.0
  %1831 = vmatpush1.msra.mxu0 0.0
  %1832 = vmatprep.subr.mxu0 0.0
  %1833 = vmatpush1.msra.mxu0 0.0
  %1834 = vmatprep.subr.mxu0 0.0
  %1835 = vmatpush1.msra.mxu0 0.0
  %1836 = vmatprep.subr.mxu0 0.0
  %1837 = vmatpush1.msra.mxu0 0.0
  %1838 = vmatprep.subr.mxu0 0.0
  %1839 = vmatpush1.msra.mxu0 0.0
  %1840 = vmatprep.subr.mxu0 0.0
  %1841 = vmatpush1.msra.mxu0 0.0
  %1842 = vmatprep.subr.mxu0 0.0
  %1843 = vmatpush1.msra.mxu0 0.0
  %1844 = vmatprep.subr.mxu0 0.0
  %1845 = vmatpush1.msra.mxu0 0.0
  %1846 = vmatprep.subr.mxu0 0.0
  %1847 = vmatpush1.msra.mxu0 0.0
  %1848 = vmatprep.subr.mxu0 0.0
  %1849 = vmatpush1.msra.mxu0 0.0
  %1850 = vmatprep.subr.mxu0 0.0
  %1851 = vmatpush1.msra.mxu0 0.0
  %1852 = vmatprep.subr.mxu0 0.0
  %1853 = vmatpush1.msra.mxu0 0.0
  %1854 = vmatprep.subr.mxu0 0.0
  %1855 = vmatpush1.msra.mxu0 0.0
  %1856 = vmatprep.subr.mxu0 0.0
  %1857 = vmatpush1.msra.mxu0 0.0
  %1858 = vmatprep.subr.mxu0 0.0
  %1859 = vmatpush1.msra.mxu0 0.0
  %1860 = vmatprep.subr.mxu0 0.0
  %1861 = vmatpush1.msra.mxu0 0.0
  %1862 = vmatprep.subr.mxu0 0.0
  %1863 = vmatpush1.msra.mxu0 0.0
  %1864 = vmatprep.subr.mxu0 0.0
  %1865 = vmatpush1.msra.mxu0 0.0
  %1866 = vmatprep.subr.mxu0 0.0
  %1867 = vmatpush1.msra.mxu0 0.0
  %1868 = vmatprep.subr.mxu0 0.0
  %1869 = vmatpush1.msra.mxu0 0.0
  %1870 = vmatprep.mubr.f32.mxu0 0.0
  %1871 = vmatmul.mubr.f32.gmra.mrb[0].mxu0 %v1804
  %v1872 = vpop.f32.mrb[0].mxu0
  %v1873 = vadd.f32 %v1800, %v1872
  %v1874 = vpop.f32.mrb[0].mxu0
  %1875 = vdwg.mxu0
  %v1876 = vld [vmem:[%s8] sm:$0xff]
  %v1877 = vadd.f32 %v1873, %v1876
  %v1878 = vxor.u32 %v1877, 2147483648
  %v1879 = vmul.f32 %v1878, 1.442695
  %v1880 = vpow.pop %v1879
  %v1881 = vadd.f32 %v1880, 1.0
  %v1882 = vrcp.pop %v1881
  %v1883 = vmul.f32 1.0, %v1882
  %1885 = vrot.lane.b32.xlu0 %v1877, 32
  %v1886 = vpop.permute.xlu0 %1885
  %v1888 = vmul.f32 %v1883, %v1886
  %1890 = vrot.lane.b32.xlu0 %v1888, 64
  %v1891 = vpop.permute.xlu0 %1890
  %v1893 = vadd.f32 %v1877, %v1891
  %v1894 = vtanh.pop %v1893
  %v1895 = vsub.f32 1.0, %v1883
  %1897 = vrot.lane.b32.xlu0 %v1894, 96
  %v1898 = vpop.permute.xlu0 %1897
  %v1900 = vmul.f32 %v1895, %v1898
  %v1901 = vmul.f32 %v1883, %v1695
  %v1902 = vadd.f32 %v1900, %v1901
  %1904 = vrot.lane.b32.xlu0 %v1902, 96
  %v1905 = vpop.permute.xlu0 %1904
  %v1907 = vmul.f32 %v1703, %v1905
  %v1908 = vmul.f32 %v1704, %v1905
  %v1909 = vmul.f32 %v1705, %v1905
  %v1910 = vmul.f32 %v1706, %v1905
  %v1911 = vmul.f32 %v1707, %v1905
  %v1912 = vmul.f32 %v1708, %v1905
  %v1913 = vmul.f32 %v1709, %v1905
  %v1914 = vmul.f32 %v1710, %v1905
  %v1915 = vsel %vm52, %v1907, 0.0
  %1916 = vadd.xlane.f32.xlu0 %v1915
  %v1917 = vpop.xlane.xlu0 %1916
  %v1918 = vsel %vm52, %v1908, 0.0
  %1919 = vadd.xlane.f32.xlu0 %v1918
  %v1920 = vpop.xlane.xlu0 %1919
  %v1921 = vsel %vm52, %v1909, 0.0
  %1922 = vadd.xlane.f32.xlu0 %v1921
  %v1923 = vpop.xlane.xlu0 %1922
  %v1924 = vsel %vm52, %v1910, 0.0
  %1925 = vadd.xlane.f32.xlu0 %v1924
  %v1926 = vpop.xlane.xlu0 %1925
  %v1927 = vsel %vm52, %v1911, 0.0
  %1928 = vadd.xlane.f32.xlu0 %v1927
  %v1929 = vpop.xlane.xlu0 %1928
  %v1930 = vsel %vm52, %v1912, 0.0
  %1931 = vadd.xlane.f32.xlu0 %v1930
  %v1932 = vpop.xlane.xlu0 %1931
  %v1933 = vsel %vm52, %v1913, 0.0
  %1934 = vadd.xlane.f32.xlu0 %v1933
  %v1935 = vpop.xlane.xlu0 %1934
  %v1936 = vsel %vm52, %v1914, 0.0
  %1937 = vadd.xlane.f32.xlu0 %v1936
  %v1938 = vpop.xlane.xlu0 %1937
  %vm1939 = vcmp.gt.f32.partialorder %v1711, 0.5
  %vm1940 = vcmp.gt.f32.partialorder %v1712, 0.5
  %vm1941 = vcmp.gt.f32.partialorder %v1713, 0.5
  %vm1942 = vcmp.gt.f32.partialorder %v1714, 0.5
  %vm1943 = vcmp.gt.f32.partialorder %v1715, 0.5
  %vm1944 = vcmp.gt.f32.partialorder %v1716, 0.5
  %vm1945 = vcmp.gt.f32.partialorder %v1717, 0.5
  %vm1946 = vcmp.gt.f32.partialorder %v1718, 0.5
  %v1947 = vsel %vm1939, %v1917, -1e+30
  %v1948 = vsel %vm1940, %v1920, -1e+30
  %v1949 = vsel %vm1941, %v1923, -1e+30
  %v1950 = vsel %vm1942, %v1926, -1e+30
  %v1951 = vsel %vm1943, %v1929, -1e+30
  %v1952 = vsel %vm1944, %v1932, -1e+30
  %v1953 = vsel %vm1945, %v1935, -1e+30
  %v1954 = vsel %vm1946, %v1938, -1e+30
  %vm1955 = vcmask 7168
  %v1956 = vsel %vm1955, %v1947, -inf
  %v1957 = vsel %vm1955, %v1948, -inf
  %v1958 = vsel %vm1955, %v1949, -inf
  %v1959 = vsel %vm1955, %v1950, -inf
  %v1960 = vsel %vm1955, %v1951, -inf
  %v1961 = vmax.f32 %v1956, %v1960
  %v1962 = vsel %vm1955, %v1952, -inf
  %v1963 = vmax.f32 %v1957, %v1962
  %v1964 = vsel %vm1955, %v1953, -inf
  %v1965 = vmax.f32 %v1958, %v1964
  %v1966 = vsel %vm1955, %v1954, -inf
  %v1967 = vmax.f32 %v1959, %v1966
  %v1968 = vmax.f32 %v1961, %v1963
  %v1969 = vmax.f32 %v1965, %v1967
  %v1970 = vmax.f32 %v1968, %v1969
  %v1971 = vsub.f32 %v1947, %v1970
  %v1972 = vsub.f32 %v1948, %v1970
  %v1973 = vsub.f32 %v1949, %v1970
  %v1974 = vsub.f32 %v1950, %v1970
  %v1975 = vsub.f32 %v1951, %v1970
  %v1976 = vsub.f32 %v1952, %v1970
  %v1977 = vsub.f32 %v1953, %v1970
  %v1978 = vsub.f32 %v1954, %v1970
  %v1979 = vmul.f32 %v1971, 1.442695
  %v1980 = vpow.pop %v1979
  %v1981 = vmul.f32 %v1972, 1.442695
  %v1982 = vpow.pop %v1981
  %v1983 = vmul.f32 %v1973, 1.442695
  %v1984 = vpow.pop %v1983
  %v1985 = vmul.f32 %v1974, 1.442695
  %v1986 = vpow.pop %v1985
  %v1987 = vmul.f32 %v1975, 1.442695
  %v1988 = vpow.pop %v1987
  %v1989 = vmul.f32 %v1976, 1.442695
  %v1990 = vpow.pop %v1989
  %v1991 = vmul.f32 %v1977, 1.442695
  %v1992 = vpow.pop %v1991
  %v1993 = vmul.f32 %v1978, 1.442695
  %v1994 = vpow.pop %v1993
  %v1995 = vsel %vm1955, %v1980, 0.0
  %v1996 = vsel %vm1955, %v1982, 0.0
  %v1997 = vadd.f32 %v1995, %v1996
  %v1998 = vsel %vm1955, %v1984, 0.0
  %v1999 = vadd.f32 %v1997, %v1998
  %v2000 = vsel %vm1955, %v1986, 0.0
  %v2001 = vadd.f32 %v1999, %v2000
  %v2002 = vsel %vm1955, %v1988, 0.0
  %v2003 = vadd.f32 %v2001, %v2002
  %v2004 = vsel %vm1955, %v1990, 0.0
  %v2005 = vadd.f32 %v2003, %v2004
  %v2006 = vsel %vm1955, %v1992, 0.0
  %v2007 = vadd.f32 %v2005, %v2006
  %v2008 = vsel %vm1955, %v1994, 0.0
  %v2009 = vadd.f32 %v2007, %v2008
  %v2010 = vrcp.pop %v2009
  %v2011 = vmul.f32 %v1980, %v2010
  %v2012 = vmul.f32 %v1982, %v2010
  %v2013 = vmul.f32 %v1984, %v2010
  %v2014 = vmul.f32 %v1986, %v2010
  %v2015 = vmul.f32 %v1988, %v2010
  %v2016 = vmul.f32 %v1990, %v2010
  %v2017 = vmul.f32 %v1992, %v2010
  %v2018 = vmul.f32 %v1994, %v2010
  %2020 = vset.pattern.permute.xlu0 0
  %2021 = vperm.xlu0 %2020, %v2011
  %v2022 = vpop.permute.xlu0 %2021
  %2025 = vset.pattern.permute.xlu0 0
  %2026 = vperm.xlu0 %2025, %v2012
  %v2027 = vpop.permute.xlu0 %2026
  %2030 = vset.pattern.permute.xlu0 0
  %2031 = vperm.xlu0 %2030, %v2013
  %v2032 = vpop.permute.xlu0 %2031
  %2035 = vset.pattern.permute.xlu0 0
  %2036 = vperm.xlu0 %2035, %v2014
  %v2037 = vpop.permute.xlu0 %2036
  %2040 = vset.pattern.permute.xlu0 0
  %2041 = vperm.xlu0 %2040, %v2015
  %v2042 = vpop.permute.xlu0 %2041
  %2045 = vset.pattern.permute.xlu0 0
  %2046 = vperm.xlu0 %2045, %v2016
  %v2047 = vpop.permute.xlu0 %2046
  %2050 = vset.pattern.permute.xlu0 0
  %2051 = vperm.xlu0 %2050, %v2017
  %v2052 = vpop.permute.xlu0 %2051
  %2055 = vset.pattern.permute.xlu0 0
  %2056 = vperm.xlu0 %2055, %v2018
  %v2057 = vpop.permute.xlu0 %2056
  %v2059 = vmul.f32 %v2022, %v1703
  %v2060 = vmul.f32 %v2027, %v1704
  %v2061 = vmul.f32 %v2032, %v1705
  %v2062 = vmul.f32 %v2037, %v1706
  %v2063 = vmul.f32 %v2042, %v1707
  %v2064 = vmul.f32 %v2047, %v1708
  %v2065 = vmul.f32 %v2052, %v1709
  %v2066 = vmul.f32 %v2057, %v1710
  %v2067 = vsel %vm52, %v2059, 0.0
  %v2068 = vsel %vm52, %v2060, 0.0
  %v2069 = vadd.f32 %v2067, %v2068
  %v2070 = vsel %vm52, %v2061, 0.0
  %v2071 = vadd.f32 %v2069, %v2070
  %v2072 = vsel %vm52, %v2062, 0.0
  %v2073 = vadd.f32 %v2071, %v2072
  %v2074 = vsel %vm52, %v2063, 0.0
  %v2075 = vadd.f32 %v2073, %v2074
  %v2076 = vsel %vm52, %v2064, 0.0
  %v2077 = vadd.f32 %v2075, %v2076
  %v2078 = vsel %vm52, %v2065, 0.0
  %v2079 = vadd.f32 %v2077, %v2078
  %v2080 = vsel %vm52, %v2066, 0.0
  %v2081 = vadd.f32 %v2079, %v2080
  %v2082 = vld [vmem:[%s9] sm:$0xff]
  %v2083 = vld [vmem:[%s9 + $0x8] sm:$0xff]
  %v2084 = vld [vmem:[%s9 + $0x10] sm:$0xff]
  %v2085 = vld [vmem:[%s9 + $0x18] sm:$0xff]
  %v2086 = vld [vmem:[%s10] sm:$0xff]
  %v2087 = vld [vmem:[%s10 + $0x8] sm:$0xff]
  %v2088 = vld [vmem:[%s10 + $0x10] sm:$0xff]
  %v2089 = vld [vmem:[%s10 + $0x18] sm:$0xff]
  %v2091 = vsel %vm52, %v2081, 0
  %2093 = vmatprep.subr.mxu0 0.0
  %2094 = vmatpush1.msra.mxu0 %v2086
  %2095 = vmatprep.subr.mxu0 0.0
  %2096 = vmatpush1.msra.mxu0 %v2087
  %2097 = vmatprep.subr.mxu0 0.0
  %2098 = vmatpush1.msra.mxu0 %v2088
  %2099 = vmatprep.subr.mxu0 0.0
  %2100 = vmatpush1.msra.mxu0 %v2089
  %2101 = vmatprep.subr.mxu0 0.0
  %2102 = vmatpush1.msra.mxu0 0.0
  %2103 = vmatprep.subr.mxu0 0.0
  %2104 = vmatpush1.msra.mxu0 0.0
  %2105 = vmatprep.subr.mxu0 0.0
  %2106 = vmatpush1.msra.mxu0 0.0
  %2107 = vmatprep.subr.mxu0 0.0
  %2108 = vmatpush1.msra.mxu0 0.0
  %2109 = vmatprep.subr.mxu0 0.0
  %2110 = vmatpush1.msra.mxu0 0.0
  %2111 = vmatprep.subr.mxu0 0.0
  %2112 = vmatpush1.msra.mxu0 0.0
  %2113 = vmatprep.subr.mxu0 0.0
  %2114 = vmatpush1.msra.mxu0 0.0
  %2115 = vmatprep.subr.mxu0 0.0
  %2116 = vmatpush1.msra.mxu0 0.0
  %2117 = vmatprep.subr.mxu0 0.0
  %2118 = vmatpush1.msra.mxu0 0.0
  %2119 = vmatprep.subr.mxu0 0.0
  %2120 = vmatpush1.msra.mxu0 0.0
  %2121 = vmatprep.subr.mxu0 0.0
  %2122 = vmatpush1.msra.mxu0 0.0
  %2123 = vmatprep.subr.mxu0 0.0
  %2124 = vmatpush1.msra.mxu0 0.0
  %2125 = vmatprep.subr.mxu0 0.0
  %2126 = vmatpush1.msra.mxu0 0.0
  %2127 = vmatprep.subr.mxu0 0.0
  %2128 = vmatpush1.msra.mxu0 0.0
  %2129 = vmatprep.subr.mxu0 0.0
  %2130 = vmatpush1.msra.mxu0 0.0
  %2131 = vmatprep.subr.mxu0 0.0
  %2132 = vmatpush1.msra.mxu0 0.0
  %2133 = vmatprep.subr.mxu0 0.0
  %2134 = vmatpush1.msra.mxu0 0.0
  %2135 = vmatprep.subr.mxu0 0.0
  %2136 = vmatpush1.msra.mxu0 0.0
  %2137 = vmatprep.subr.mxu0 0.0
  %2138 = vmatpush1.msra.mxu0 0.0
  %2139 = vmatprep.subr.mxu0 0.0
  %2140 = vmatpush1.msra.mxu0 0.0
  %2141 = vmatprep.subr.mxu0 0.0
  %2142 = vmatpush1.msra.mxu0 0.0
  %2143 = vmatprep.subr.mxu0 0.0
  %2144 = vmatpush1.msra.mxu0 0.0
  %2145 = vmatprep.subr.mxu0 0.0
  %2146 = vmatpush1.msra.mxu0 0.0
  %2147 = vmatprep.subr.mxu0 0.0
  %2148 = vmatpush1.msra.mxu0 0.0
  %2149 = vmatprep.subr.mxu0 0.0
  %2150 = vmatpush1.msra.mxu0 0.0
  %2151 = vmatprep.subr.mxu0 0.0
  %2152 = vmatpush1.msra.mxu0 0.0
  %2153 = vmatprep.subr.mxu0 0.0
  %2154 = vmatpush1.msra.mxu0 0.0
  %2155 = vmatprep.subr.mxu0 0.0
  %2156 = vmatpush1.msra.mxu0 0.0
  %2157 = vmatprep.mubr.f32.mxu0 0.0
  %2158 = vmatmul.mubr.f32.gmra.mrb[0].mxu0 %v2091
  %v2159 = vpop.f32.mrb[0].mxu0
  %v2160 = vadd.f32 0.0, %v2159
  %v2161 = vpop.f32.mrb[0].mxu0
  %2162 = vdwg.mxu0
  %v2163 = vsel %vm52, %v1905, 0
  %2165 = vmatprep.subr.mxu0 0.0
  %2166 = vmatpush1.msra.mxu0 %v2082
  %2167 = vmatprep.subr.mxu0 0.0
  %2168 = vmatpush1.msra.mxu0 %v2083
  %2169 = vmatprep.subr.mxu0 0.0
  %2170 = vmatpush1.msra.mxu0 %v2084
  %2171 = vmatprep.subr.mxu0 0.0
  %2172 = vmatpush1.msra.mxu0 %v2085
  %2173 = vmatprep.subr.mxu0 0.0
  %2174 = vmatpush1.msra.mxu0 0.0
  %2175 = vmatprep.subr.mxu0 0.0
  %2176 = vmatpush1.msra.mxu0 0.0
  %2177 = vmatprep.subr.mxu0 0.0
  %2178 = vmatpush1.msra.mxu0 0.0
  %2179 = vmatprep.subr.mxu0 0.0
  %2180 = vmatpush1.msra.mxu0 0.0
  %2181 = vmatprep.subr.mxu0 0.0
  %2182 = vmatpush1.msra.mxu0 0.0
  %2183 = vmatprep.subr.mxu0 0.0
  %2184 = vmatpush1.msra.mxu0 0.0
  %2185 = vmatprep.subr.mxu0 0.0
  %2186 = vmatpush1.msra.mxu0 0.0
  %2187 = vmatprep.subr.mxu0 0.0
  %2188 = vmatpush1.msra.mxu0 0.0
  %2189 = vmatprep.subr.mxu0 0.0
  %2190 = vmatpush1.msra.mxu0 0.0
  %2191 = vmatprep.subr.mxu0 0.0
  %2192 = vmatpush1.msra.mxu0 0.0
  %2193 = vmatprep.subr.mxu0 0.0
  %2194 = vmatpush1.msra.mxu0 0.0
  %2195 = vmatprep.subr.mxu0 0.0
  %2196 = vmatpush1.msra.mxu0 0.0
  %2197 = vmatprep.subr.mxu0 0.0
  %2198 = vmatpush1.msra.mxu0 0.0
  %2199 = vmatprep.subr.mxu0 0.0
  %2200 = vmatpush1.msra.mxu0 0.0
  %2201 = vmatprep.subr.mxu0 0.0
  %2202 = vmatpush1.msra.mxu0 0.0
  %2203 = vmatprep.subr.mxu0 0.0
  %2204 = vmatpush1.msra.mxu0 0.0
  %2205 = vmatprep.subr.mxu0 0.0
  %2206 = vmatpush1.msra.mxu0 0.0
  %2207 = vmatprep.subr.mxu0 0.0
  %2208 = vmatpush1.msra.mxu0 0.0
  %2209 = vmatprep.subr.mxu0 0.0
  %2210 = vmatpush1.msra.mxu0 0.0
  %2211 = vmatprep.subr.mxu0 0.0
  %2212 = vmatpush1.msra.mxu0 0.0
  %2213 = vmatprep.subr.mxu0 0.0
  %2214 = vmatpush1.msra.mxu0 0.0
  %2215 = vmatprep.subr.mxu0 0.0
  %2216 = vmatpush1.msra.mxu0 0.0
  %2217 = vmatprep.subr.mxu0 0.0
  %2218 = vmatpush1.msra.mxu0 0.0
  %2219 = vmatprep.subr.mxu0 0.0
  %2220 = vmatpush1.msra.mxu0 0.0
  %2221 = vmatprep.subr.mxu0 0.0
  %2222 = vmatpush1.msra.mxu0 0.0
  %2223 = vmatprep.subr.mxu0 0.0
  %2224 = vmatpush1.msra.mxu0 0.0
  %2225 = vmatprep.subr.mxu0 0.0
  %2226 = vmatpush1.msra.mxu0 0.0
  %2227 = vmatprep.subr.mxu0 0.0
  %2228 = vmatpush1.msra.mxu0 0.0
  %2229 = vmatprep.mubr.f32.mxu0 0.0
  %2230 = vmatmul.mubr.f32.gmra.mrb[0].mxu0 %v2163
  %v2231 = vpop.f32.mrb[0].mxu0
  %v2232 = vadd.f32 %v2160, %v2231
  %v2233 = vpop.f32.mrb[0].mxu0
  %2234 = vdwg.mxu0
  %v2235 = vld [vmem:[%s11] sm:$0xff]
  %v2236 = vadd.f32 %v2232, %v2235
  %v2237 = vsel %vm52, %v2236, -inf
  %2238 = vmax.xlane.f32.xlu0 %v2237
  %v2239 = vpop.xlane.xlu0 %2238
  %v2240 = vsub.f32 %v2236, %v2239
  %v2241 = vmul.f32 %v2240, 1.442695
  %v2242 = vpow.pop %v2241
  %v2243 = vsel %vm52, %v2242, 0.0
  %2244 = vadd.xlane.f32.xlu0 %v2243
  %v2245 = vpop.xlane.xlu0 %2244
  %v2246 = vlog2.pop %v2245
  %v2247 = vmul.f32 %v2246, 0.6931472
  %v2248 = vadd.f32 %v2247, %v2239
  %v2249 = vsub.f32 %v2236, %v2248
  %2250 = vst.msk [vmem:[%s12] sm:$0xff] %vm52, %v2249
  %s2251 = scalar_lea.vmem %s2, 8
  %v2252 = vld [vmem:[%s2251] sm:$0xff]
  %v2253 = vld [vmem:[%s6] sm:$0xff]
  %v2254 = vld [vmem:[%s6 + $0x8] sm:$0xff]
  %v2255 = vld [vmem:[%s6 + $0x10] sm:$0xff]
  %v2256 = vld [vmem:[%s6 + $0x18] sm:$0xff]
  %v2257 = vld [vmem:[%s7] sm:$0xff]
  %v2258 = vld [vmem:[%s7 + $0x8] sm:$0xff]
  %v2259 = vld [vmem:[%s7 + $0x10] sm:$0xff]
  %v2260 = vld [vmem:[%s7 + $0x18] sm:$0xff]
  %2261 = vmatprep.subr.mxu0 0.0
  %2262 = vmatpush1.msra.mxu0 %v2257
  %2263 = vmatprep.subr.mxu0 0.0
  %2264 = vmatpush1.msra.mxu0 %v2258
  %2265 = vmatprep.subr.mxu0 0.0
  %2266 = vmatpush1.msra.mxu0 %v2259
  %2267 = vmatprep.subr.mxu0 0.0
  %2268 = vmatpush1.msra.mxu0 %v2260
  %2269 = vmatprep.subr.mxu0 0.0
  %2270 = vmatpush1.msra.mxu0 0.0
  %2271 = vmatprep.subr.mxu0 0.0
  %2272 = vmatpush1.msra.mxu0 0.0
  %2273 = vmatprep.subr.mxu0 0.0
  %2274 = vmatpush1.msra.mxu0 0.0
  %2275 = vmatprep.subr.mxu0 0.0
  %2276 = vmatpush1.msra.mxu0 0.0
  %2277 = vmatprep.subr.mxu0 0.0
  %2278 = vmatpush1.msra.mxu0 0.0
  %2279 = vmatprep.subr.mxu0 0.0
  %2280 = vmatpush1.msra.mxu0 0.0
  %2281 = vmatprep.subr.mxu0 0.0
  %2282 = vmatpush1.msra.mxu0 0.0
  %2283 = vmatprep.subr.mxu0 0.0
  %2284 = vmatpush1.msra.mxu0 0.0
  %2285 = vmatprep.subr.mxu0 0.0
  %2286 = vmatpush1.msra.mxu0 0.0
  %2287 = vmatprep.subr.mxu0 0.0
  %2288 = vmatpush1.msra.mxu0 0.0
  %2289 = vmatprep.subr.mxu0 0.0
  %2290 = vmatpush1.msra.mxu0 0.0
  %2291 = vmatprep.subr.mxu0 0.0
  %2292 = vmatpush1.msra.mxu0 0.0
  %2293 = vmatprep.subr.mxu0 0.0
  %2294 = vmatpush1.msra.mxu0 0.0
  %2295 = vmatprep.subr.mxu0 0.0
  %2296 = vmatpush1.msra.mxu0 0.0
  %2297 = vmatprep.subr.mxu0 0.0
  %2298 = vmatpush1.msra.mxu0 0.0
  %2299 = vmatprep.subr.mxu0 0.0
  %2300 = vmatpush1.msra.mxu0 0.0
  %2301 = vmatprep.subr.mxu0 0.0
  %2302 = vmatpush1.msra.mxu0 0.0
  %2303 = vmatprep.subr.mxu0 0.0
  %2304 = vmatpush1.msra.mxu0 0.0
  %2305 = vmatprep.subr.mxu0 0.0
  %2306 = vmatpush1.msra.mxu0 0.0
  %2307 = vmatprep.subr.mxu0 0.0
  %2308 = vmatpush1.msra.mxu0 0.0
  %2309 = vmatprep.subr.mxu0 0.0
  %2310 = vmatpush1.msra.mxu0 0.0
  %2311 = vmatprep.subr.mxu0 0.0
  %2312 = vmatpush1.msra.mxu0 0.0
  %2313 = vmatprep.subr.mxu0 0.0
  %2314 = vmatpush1.msra.mxu0 0.0
  %2315 = vmatprep.subr.mxu0 0.0
  %2316 = vmatpush1.msra.mxu0 0.0
  %2317 = vmatprep.subr.mxu0 0.0
  %2318 = vmatpush1.msra.mxu0 0.0
  %2319 = vmatprep.subr.mxu0 0.0
  %2320 = vmatpush1.msra.mxu0 0.0
  %2321 = vmatprep.subr.mxu0 0.0
  %2322 = vmatpush1.msra.mxu0 0.0
  %2323 = vmatprep.subr.mxu0 0.0
  %2324 = vmatpush1.msra.mxu0 0.0
  %2325 = vmatprep.mubr.f32.mxu0 0.0
  %2326 = vmatmul.mubr.f32.gmra.mrb[0].mxu0 %v2163
  %v2327 = vpop.f32.mrb[0].mxu0
  %v2328 = vadd.f32 0.0, %v2327
  %v2329 = vpop.f32.mrb[0].mxu0
  %2330 = vdwg.mxu0
  %v2332 = vsel %vm52, %v2252, 0
  %2334 = vmatprep.subr.mxu0 0.0
  %2335 = vmatpush1.msra.mxu0 %v2253
  %2336 = vmatprep.subr.mxu0 0.0
  %2337 = vmatpush1.msra.mxu0 %v2254
  %2338 = vmatprep.subr.mxu0 0.0
  %2339 = vmatpush1.msra.mxu0 %v2255
  %2340 = vmatprep.subr.mxu0 0.0
  %2341 = vmatpush1.msra.mxu0 %v2256
  %2342 = vmatprep.subr.mxu0 0.0
  %2343 = vmatpush1.msra.mxu0 0.0
  %2344 = vmatprep.subr.mxu0 0.0
  %2345 = vmatpush1.msra.mxu0 0.0
  %2346 = vmatprep.subr.mxu0 0.0
  %2347 = vmatpush1.msra.mxu0 0.0
  %2348 = vmatprep.subr.mxu0 0.0
  %2349 = vmatpush1.msra.mxu0 0.0
  %2350 = vmatprep.subr.mxu0 0.0
  %2351 = vmatpush1.msra.mxu0 0.0
  %2352 = vmatprep.subr.mxu0 0.0
  %2353 = vmatpush1.msra.mxu0 0.0
  %2354 = vmatprep.subr.mxu0 0.0
  %2355 = vmatpush1.msra.mxu0 0.0
  %2356 = vmatprep.subr.mxu0 0.0
  %2357 = vmatpush1.msra.mxu0 0.0
  %2358 = vmatprep.subr.mxu0 0.0
  %2359 = vmatpush1.msra.mxu0 0.0
  %2360 = vmatprep.subr.mxu0 0.0
  %2361 = vmatpush1.msra.mxu0 0.0
  %2362 = vmatprep.subr.mxu0 0.0
  %2363 = vmatpush1.msra.mxu0 0.0
  %2364 = vmatprep.subr.mxu0 0.0
  %2365 = vmatpush1.msra.mxu0 0.0
  %2366 = vmatprep.subr.mxu0 0.0
  %2367 = vmatpush1.msra.mxu0 0.0
  %2368 = vmatprep.subr.mxu0 0.0
  %2369 = vmatpush1.msra.mxu0 0.0
  %2370 = vmatprep.subr.mxu0 0.0
  %2371 = vmatpush1.msra.mxu0 0.0
  %2372 = vmatprep.subr.mxu0 0.0
  %2373 = vmatpush1.msra.mxu0 0.0
  %2374 = vmatprep.subr.mxu0 0.0
  %2375 = vmatpush1.msra.mxu0 0.0
  %2376 = vmatprep.subr.mxu0 0.0
  %2377 = vmatpush1.msra.mxu0 0.0
  %2378 = vmatprep.subr.mxu0 0.0
  %2379 = vmatpush1.msra.mxu0 0.0
  %2380 = vmatprep.subr.mxu0 0.0
  %2381 = vmatpush1.msra.mxu0 0.0
  %2382 = vmatprep.subr.mxu0 0.0
  %2383 = vmatpush1.msra.mxu0 0.0
  %2384 = vmatprep.subr.mxu0 0.0
  %2385 = vmatpush1.msra.mxu0 0.0
  %2386 = vmatprep.subr.mxu0 0.0
  %2387 = vmatpush1.msra.mxu0 0.0
  %2388 = vmatprep.subr.mxu0 0.0
  %2389 = vmatpush1.msra.mxu0 0.0
  %2390 = vmatprep.subr.mxu0 0.0
  %2391 = vmatpush1.msra.mxu0 0.0
  %2392 = vmatprep.subr.mxu0 0.0
  %2393 = vmatpush1.msra.mxu0 0.0
  %2394 = vmatprep.subr.mxu0 0.0
  %2395 = vmatpush1.msra.mxu0 0.0
  %2396 = vmatprep.subr.mxu0 0.0
  %2397 = vmatpush1.msra.mxu0 0.0
  %2398 = vmatprep.mubr.f32.mxu0 0.0
  %2399 = vmatmul.mubr.f32.gmra.mrb[0].mxu0 %v2332
  %v2400 = vpop.f32.mrb[0].mxu0
  %v2401 = vadd.f32 %v2328, %v2400
  %v2402 = vpop.f32.mrb[0].mxu0
  %2403 = vdwg.mxu0
  %v2404 = vld [vmem:[%s8] sm:$0xff]
  %v2405 = vadd.f32 %v2401, %v2404
  %v2406 = vxor.u32 %v2405, 2147483648
  %v2407 = vmul.f32 %v2406, 1.442695
  %v2408 = vpow.pop %v2407
  %v2409 = vadd.f32 %v2408, 1.0
  %v2410 = vrcp.pop %v2409
  %v2411 = vmul.f32 1.0, %v2410
  %2413 = vrot.lane.b32.xlu0 %v2405, 32
  %v2414 = vpop.permute.xlu0 %2413
  %v2416 = vmul.f32 %v2411, %v2414
  %2418 = vrot.lane.b32.xlu0 %v2416, 64
  %v2419 = vpop.permute.xlu0 %2418
  %v2421 = vadd.f32 %v2405, %v2419
  %v2422 = vtanh.pop %v2421
  %v2423 = vsub.f32 1.0, %v2411
  %2425 = vrot.lane.b32.xlu0 %v2422, 96
  %v2426 = vpop.permute.xlu0 %2425
  %v2428 = vmul.f32 %v2423, %v2426
  %v2429 = vmul.f32 %v2411, %v1902
  %v2430 = vadd.f32 %v2428, %v2429
  %2432 = vrot.lane.b32.xlu0 %v2430, 96
  %v2433 = vpop.permute.xlu0 %2432
  %v2435 = vmul.f32 %v1703, %v2433
  %v2436 = vmul.f32 %v1704, %v2433
  %v2437 = vmul.f32 %v1705, %v2433
  %v2438 = vmul.f32 %v1706, %v2433
  %v2439 = vmul.f32 %v1707, %v2433
  %v2440 = vmul.f32 %v1708, %v2433
  %v2441 = vmul.f32 %v1709, %v2433
  %v2442 = vmul.f32 %v1710, %v2433
  %v2443 = vsel %vm52, %v2435, 0.0
  %2444 = vadd.xlane.f32.xlu0 %v2443
  %v2445 = vpop.xlane.xlu0 %2444
  %v2446 = vsel %vm52, %v2436, 0.0
  %2447 = vadd.xlane.f32.xlu0 %v2446
  %v2448 = vpop.xlane.xlu0 %2447
  %v2449 = vsel %vm52, %v2437, 0.0
  %2450 = vadd.xlane.f32.xlu0 %v2449
  %v2451 = vpop.xlane.xlu0 %2450
  %v2452 = vsel %vm52, %v2438, 0.0
  %2453 = vadd.xlane.f32.xlu0 %v2452
  %v2454 = vpop.xlane.xlu0 %2453
  %v2455 = vsel %vm52, %v2439, 0.0
  %2456 = vadd.xlane.f32.xlu0 %v2455
  %v2457 = vpop.xlane.xlu0 %2456
  %v2458 = vsel %vm52, %v2440, 0.0
  %2459 = vadd.xlane.f32.xlu0 %v2458
  %v2460 = vpop.xlane.xlu0 %2459
  %v2461 = vsel %vm52, %v2441, 0.0
  %2462 = vadd.xlane.f32.xlu0 %v2461
  %v2463 = vpop.xlane.xlu0 %2462
  %v2464 = vsel %vm52, %v2442, 0.0
  %2465 = vadd.xlane.f32.xlu0 %v2464
  %v2466 = vpop.xlane.xlu0 %2465
  %v2467 = vsel %vm1939, %v2445, -1e+30
  %v2468 = vsel %vm1940, %v2448, -1e+30
  %v2469 = vsel %vm1941, %v2451, -1e+30
  %v2470 = vsel %vm1942, %v2454, -1e+30
  %v2471 = vsel %vm1943, %v2457, -1e+30
  %v2472 = vsel %vm1944, %v2460, -1e+30
  %v2473 = vsel %vm1945, %v2463, -1e+30
  %v2474 = vsel %vm1946, %v2466, -1e+30
  %v2475 = vsel %vm1955, %v2467, -inf
  %v2476 = vsel %vm1955, %v2468, -inf
  %v2477 = vsel %vm1955, %v2469, -inf
  %v2478 = vsel %vm1955, %v2470, -inf
  %v2479 = vsel %vm1955, %v2471, -inf
  %v2480 = vmax.f32 %v2475, %v2479
  %v2481 = vsel %vm1955, %v2472, -inf
  %v2482 = vmax.f32 %v2476, %v2481
  %v2483 = vsel %vm1955, %v2473, -inf
  %v2484 = vmax.f32 %v2477, %v2483
  %v2485 = vsel %vm1955, %v2474, -inf
  %v2486 = vmax.f32 %v2478, %v2485
  %v2487 = vmax.f32 %v2480, %v2482
  %v2488 = vmax.f32 %v2484, %v2486
  %v2489 = vmax.f32 %v2487, %v2488
  %v2490 = vsub.f32 %v2467, %v2489
  %v2491 = vsub.f32 %v2468, %v2489
  %v2492 = vsub.f32 %v2469, %v2489
  %v2493 = vsub.f32 %v2470, %v2489
  %v2494 = vsub.f32 %v2471, %v2489
  %v2495 = vsub.f32 %v2472, %v2489
  %v2496 = vsub.f32 %v2473, %v2489
  %v2497 = vsub.f32 %v2474, %v2489
  %v2498 = vmul.f32 %v2490, 1.442695
  %v2499 = vpow.pop %v2498
  %v2500 = vmul.f32 %v2491, 1.442695
  %v2501 = vpow.pop %v2500
  %v2502 = vmul.f32 %v2492, 1.442695
  %v2503 = vpow.pop %v2502
  %v2504 = vmul.f32 %v2493, 1.442695
  %v2505 = vpow.pop %v2504
  %v2506 = vmul.f32 %v2494, 1.442695
  %v2507 = vpow.pop %v2506
  %v2508 = vmul.f32 %v2495, 1.442695
  %v2509 = vpow.pop %v2508
  %v2510 = vmul.f32 %v2496, 1.442695
  %v2511 = vpow.pop %v2510
  %v2512 = vmul.f32 %v2497, 1.442695
  %v2513 = vpow.pop %v2512
  %v2514 = vsel %vm1955, %v2499, 0.0
  %v2515 = vsel %vm1955, %v2501, 0.0
  %v2516 = vadd.f32 %v2514, %v2515
  %v2517 = vsel %vm1955, %v2503, 0.0
  %v2518 = vadd.f32 %v2516, %v2517
  %v2519 = vsel %vm1955, %v2505, 0.0
  %v2520 = vadd.f32 %v2518, %v2519
  %v2521 = vsel %vm1955, %v2507, 0.0
  %v2522 = vadd.f32 %v2520, %v2521
  %v2523 = vsel %vm1955, %v2509, 0.0
  %v2524 = vadd.f32 %v2522, %v2523
  %v2525 = vsel %vm1955, %v2511, 0.0
  %v2526 = vadd.f32 %v2524, %v2525
  %v2527 = vsel %vm1955, %v2513, 0.0
  %v2528 = vadd.f32 %v2526, %v2527
  %v2529 = vrcp.pop %v2528
  %v2530 = vmul.f32 %v2499, %v2529
  %v2531 = vmul.f32 %v2501, %v2529
  %v2532 = vmul.f32 %v2503, %v2529
  %v2533 = vmul.f32 %v2505, %v2529
  %v2534 = vmul.f32 %v2507, %v2529
  %v2535 = vmul.f32 %v2509, %v2529
  %v2536 = vmul.f32 %v2511, %v2529
  %v2537 = vmul.f32 %v2513, %v2529
  %2539 = vset.pattern.permute.xlu0 0
  %2540 = vperm.xlu0 %2539, %v2530
  %v2541 = vpop.permute.xlu0 %2540
  %2544 = vset.pattern.permute.xlu0 0
  %2545 = vperm.xlu0 %2544, %v2531
  %v2546 = vpop.permute.xlu0 %2545
  %2549 = vset.pattern.permute.xlu0 0
  %2550 = vperm.xlu0 %2549, %v2532
  %v2551 = vpop.permute.xlu0 %2550
  %2554 = vset.pattern.permute.xlu0 0
  %2555 = vperm.xlu0 %2554, %v2533
  %v2556 = vpop.permute.xlu0 %2555
  %2559 = vset.pattern.permute.xlu0 0
  %2560 = vperm.xlu0 %2559, %v2534
  %v2561 = vpop.permute.xlu0 %2560
  %2564 = vset.pattern.permute.xlu0 0
  %2565 = vperm.xlu0 %2564, %v2535
  %v2566 = vpop.permute.xlu0 %2565
  %2569 = vset.pattern.permute.xlu0 0
  %2570 = vperm.xlu0 %2569, %v2536
  %v2571 = vpop.permute.xlu0 %2570
  %2574 = vset.pattern.permute.xlu0 0
  %2575 = vperm.xlu0 %2574, %v2537
  %v2576 = vpop.permute.xlu0 %2575
  %v2578 = vmul.f32 %v2541, %v1703
  %v2579 = vmul.f32 %v2546, %v1704
  %v2580 = vmul.f32 %v2551, %v1705
  %v2581 = vmul.f32 %v2556, %v1706
  %v2582 = vmul.f32 %v2561, %v1707
  %v2583 = vmul.f32 %v2566, %v1708
  %v2584 = vmul.f32 %v2571, %v1709
  %v2585 = vmul.f32 %v2576, %v1710
  %v2586 = vsel %vm52, %v2578, 0.0
  %v2587 = vsel %vm52, %v2579, 0.0
  %v2588 = vadd.f32 %v2586, %v2587
  %v2589 = vsel %vm52, %v2580, 0.0
  %v2590 = vadd.f32 %v2588, %v2589
  %v2591 = vsel %vm52, %v2581, 0.0
  %v2592 = vadd.f32 %v2590, %v2591
  %v2593 = vsel %vm52, %v2582, 0.0
  %v2594 = vadd.f32 %v2592, %v2593
  %v2595 = vsel %vm52, %v2583, 0.0
  %v2596 = vadd.f32 %v2594, %v2595
  %v2597 = vsel %vm52, %v2584, 0.0
  %v2598 = vadd.f32 %v2596, %v2597
  %v2599 = vsel %vm52, %v2585, 0.0
  %v2600 = vadd.f32 %v2598, %v2599
  %v2601 = vld [vmem:[%s9] sm:$0xff]
  %v2602 = vld [vmem:[%s9 + $0x8] sm:$0xff]
  %v2603 = vld [vmem:[%s9 + $0x10] sm:$0xff]
  %v2604 = vld [vmem:[%s9 + $0x18] sm:$0xff]
  %v2605 = vld [vmem:[%s10] sm:$0xff]
  %v2606 = vld [vmem:[%s10 + $0x8] sm:$0xff]
  %v2607 = vld [vmem:[%s10 + $0x10] sm:$0xff]
  %v2608 = vld [vmem:[%s10 + $0x18] sm:$0xff]
  %v2610 = vsel %vm52, %v2600, 0
  %2612 = vmatprep.subr.mxu0 0.0
  %2613 = vmatpush1.msra.mxu0 %v2605
  %2614 = vmatprep.subr.mxu0 0.0
  %2615 = vmatpush1.msra.mxu0 %v2606
  %2616 = vmatprep.subr.mxu0 0.0
  %2617 = vmatpush1.msra.mxu0 %v2607
  %2618 = vmatprep.subr.mxu0 0.0
  %2619 = vmatpush1.msra.mxu0 %v2608
  %2620 = vmatprep.subr.mxu0 0.0
  %2621 = vmatpush1.msra.mxu0 0.0
  %2622 = vmatprep.subr.mxu0 0.0
  %2623 = vmatpush1.msra.mxu0 0.0
  %2624 = vmatprep.subr.mxu0 0.0
  %2625 = vmatpush1.msra.mxu0 0.0
  %2626 = vmatprep.subr.mxu0 0.0
  %2627 = vmatpush1.msra.mxu0 0.0
  %2628 = vmatprep.subr.mxu0 0.0
  %2629 = vmatpush1.msra.mxu0 0.0
  %2630 = vmatprep.subr.mxu0 0.0
  %2631 = vmatpush1.msra.mxu0 0.0
  %2632 = vmatprep.subr.mxu0 0.0
  %2633 = vmatpush1.msra.mxu0 0.0
  %2634 = vmatprep.subr.mxu0 0.0
  %2635 = vmatpush1.msra.mxu0 0.0
  %2636 = vmatprep.subr.mxu0 0.0
  %2637 = vmatpush1.msra.mxu0 0.0
  %2638 = vmatprep.subr.mxu0 0.0
  %2639 = vmatpush1.msra.mxu0 0.0
  %2640 = vmatprep.subr.mxu0 0.0
  %2641 = vmatpush1.msra.mxu0 0.0
  %2642 = vmatprep.subr.mxu0 0.0
  %2643 = vmatpush1.msra.mxu0 0.0
  %2644 = vmatprep.subr.mxu0 0.0
  %2645 = vmatpush1.msra.mxu0 0.0
  %2646 = vmatprep.subr.mxu0 0.0
  %2647 = vmatpush1.msra.mxu0 0.0
  %2648 = vmatprep.subr.mxu0 0.0
  %2649 = vmatpush1.msra.mxu0 0.0
  %2650 = vmatprep.subr.mxu0 0.0
  %2651 = vmatpush1.msra.mxu0 0.0
  %2652 = vmatprep.subr.mxu0 0.0
  %2653 = vmatpush1.msra.mxu0 0.0
  %2654 = vmatprep.subr.mxu0 0.0
  %2655 = vmatpush1.msra.mxu0 0.0
  %2656 = vmatprep.subr.mxu0 0.0
  %2657 = vmatpush1.msra.mxu0 0.0
  %2658 = vmatprep.subr.mxu0 0.0
  %2659 = vmatpush1.msra.mxu0 0.0
  %2660 = vmatprep.subr.mxu0 0.0
  %2661 = vmatpush1.msra.mxu0 0.0
  %2662 = vmatprep.subr.mxu0 0.0
  %2663 = vmatpush1.msra.mxu0 0.0
  %2664 = vmatprep.subr.mxu0 0.0
  %2665 = vmatpush1.msra.mxu0 0.0
  %2666 = vmatprep.subr.mxu0 0.0
  %2667 = vmatpush1.msra.mxu0 0.0
  %2668 = vmatprep.subr.mxu0 0.0
  %2669 = vmatpush1.msra.mxu0 0.0
  %2670 = vmatprep.subr.mxu0 0.0
  %2671 = vmatpush1.msra.mxu0 0.0
  %2672 = vmatprep.subr.mxu0 0.0
  %2673 = vmatpush1.msra.mxu0 0.0
  %2674 = vmatprep.subr.mxu0 0.0
  %2675 = vmatpush1.msra.mxu0 0.0
  %2676 = vmatprep.mubr.f32.mxu0 0.0
  %2677 = vmatmul.mubr.f32.gmra.mrb[0].mxu0 %v2610
  %v2678 = vpop.f32.mrb[0].mxu0
  %v2679 = vadd.f32 0.0, %v2678
  %v2680 = vpop.f32.mrb[0].mxu0
  %2681 = vdwg.mxu0
  %v2682 = vsel %vm52, %v2433, 0
  %2684 = vmatprep.subr.mxu0 0.0
  %2685 = vmatpush1.msra.mxu0 %v2601
  %2686 = vmatprep.subr.mxu0 0.0
  %2687 = vmatpush1.msra.mxu0 %v2602
  %2688 = vmatprep.subr.mxu0 0.0
  %2689 = vmatpush1.msra.mxu0 %v2603
  %2690 = vmatprep.subr.mxu0 0.0
  %2691 = vmatpush1.msra.mxu0 %v2604
  %2692 = vmatprep.subr.mxu0 0.0
  %2693 = vmatpush1.msra.mxu0 0.0
  %2694 = vmatprep.subr.mxu0 0.0
  %2695 = vmatpush1.msra.mxu0 0.0
  %2696 = vmatprep.subr.mxu0 0.0
  %2697 = vmatpush1.msra.mxu0 0.0
  %2698 = vmatprep.subr.mxu0 0.0
  %2699 = vmatpush1.msra.mxu0 0.0
  %2700 = vmatprep.subr.mxu0 0.0
  %2701 = vmatpush1.msra.mxu0 0.0
  %2702 = vmatprep.subr.mxu0 0.0
  %2703 = vmatpush1.msra.mxu0 0.0
  %2704 = vmatprep.subr.mxu0 0.0
  %2705 = vmatpush1.msra.mxu0 0.0
  %2706 = vmatprep.subr.mxu0 0.0
  %2707 = vmatpush1.msra.mxu0 0.0
  %2708 = vmatprep.subr.mxu0 0.0
  %2709 = vmatpush1.msra.mxu0 0.0
  %2710 = vmatprep.subr.mxu0 0.0
  %2711 = vmatpush1.msra.mxu0 0.0
  %2712 = vmatprep.subr.mxu0 0.0
  %2713 = vmatpush1.msra.mxu0 0.0
  %2714 = vmatprep.subr.mxu0 0.0
  %2715 = vmatpush1.msra.mxu0 0.0
  %2716 = vmatprep.subr.mxu0 0.0
  %2717 = vmatpush1.msra.mxu0 0.0
  %2718 = vmatprep.subr.mxu0 0.0
  %2719 = vmatpush1.msra.mxu0 0.0
  %2720 = vmatprep.subr.mxu0 0.0
  %2721 = vmatpush1.msra.mxu0 0.0
  %2722 = vmatprep.subr.mxu0 0.0
  %2723 = vmatpush1.msra.mxu0 0.0
  %2724 = vmatprep.subr.mxu0 0.0
  %2725 = vmatpush1.msra.mxu0 0.0
  %2726 = vmatprep.subr.mxu0 0.0
  %2727 = vmatpush1.msra.mxu0 0.0
  %2728 = vmatprep.subr.mxu0 0.0
  %2729 = vmatpush1.msra.mxu0 0.0
  %2730 = vmatprep.subr.mxu0 0.0
  %2731 = vmatpush1.msra.mxu0 0.0
  %2732 = vmatprep.subr.mxu0 0.0
  %2733 = vmatpush1.msra.mxu0 0.0
  %2734 = vmatprep.subr.mxu0 0.0
  %2735 = vmatpush1.msra.mxu0 0.0
  %2736 = vmatprep.subr.mxu0 0.0
  %2737 = vmatpush1.msra.mxu0 0.0
  %2738 = vmatprep.subr.mxu0 0.0
  %2739 = vmatpush1.msra.mxu0 0.0
  %2740 = vmatprep.subr.mxu0 0.0
  %2741 = vmatpush1.msra.mxu0 0.0
  %2742 = vmatprep.subr.mxu0 0.0
  %2743 = vmatpush1.msra.mxu0 0.0
  %2744 = vmatprep.subr.mxu0 0.0
  %2745 = vmatpush1.msra.mxu0 0.0
  %2746 = vmatprep.subr.mxu0 0.0
  %2747 = vmatpush1.msra.mxu0 0.0
  %2748 = vmatprep.mubr.f32.mxu0 0.0
  %2749 = vmatmul.mubr.f32.gmra.mrb[0].mxu0 %v2682
  %v2750 = vpop.f32.mrb[0].mxu0
  %v2751 = vadd.f32 %v2679, %v2750
  %v2752 = vpop.f32.mrb[0].mxu0
  %2753 = vdwg.mxu0
  %v2754 = vld [vmem:[%s11] sm:$0xff]
  %v2755 = vadd.f32 %v2751, %v2754
  %v2756 = vsel %vm52, %v2755, -inf
  %2757 = vmax.xlane.f32.xlu0 %v2756
  %v2758 = vpop.xlane.xlu0 %2757
  %v2759 = vsub.f32 %v2755, %v2758
  %v2760 = vmul.f32 %v2759, 1.442695
  %v2761 = vpow.pop %v2760
  %v2762 = vsel %vm52, %v2761, 0.0
  %2763 = vadd.xlane.f32.xlu0 %v2762
  %v2764 = vpop.xlane.xlu0 %2763
  %v2765 = vlog2.pop %v2764
  %v2766 = vmul.f32 %v2765, 0.6931472
  %v2767 = vadd.f32 %v2766, %v2758
  %v2768 = vsub.f32 %v2755, %v2767
  %2770 = vrot.lane.b32.xlu0 %v2768, 32
  %v2771 = vpop.permute.xlu0 %2770
  %vm2773 = vcmask 523520
  %2774 = vst.msk [vmem:[%s12] sm:$0xff] %vm2773, %v2771
  %s2775 = scalar_lea.vmem %s2, 16
  %v2776 = vld [vmem:[%s2775] sm:$0xff]
  %v2777 = vld [vmem:[%s6] sm:$0xff]
  %v2778 = vld [vmem:[%s6 + $0x8] sm:$0xff]
  %v2779 = vld [vmem:[%s6 + $0x10] sm:$0xff]
  %v2780 = vld [vmem:[%s6 + $0x18] sm:$0xff]
  %v2781 = vld [vmem:[%s7] sm:$0xff]
  %v2782 = vld [vmem:[%s7 + $0x8] sm:$0xff]
  %v2783 = vld [vmem:[%s7 + $0x10] sm:$0xff]
  %v2784 = vld [vmem:[%s7 + $0x18] sm:$0xff]
  %2785 = vmatprep.subr.mxu0 0.0
  %2786 = vmatpush1.msra.mxu0 %v2781
  %2787 = vmatprep.subr.mxu0 0.0
  %2788 = vmatpush1.msra.mxu0 %v2782
  %2789 = vmatprep.subr.mxu0 0.0
  %2790 = vmatpush1.msra.mxu0 %v2783
  %2791 = vmatprep.subr.mxu0 0.0
  %2792 = vmatpush1.msra.mxu0 %v2784
  %2793 = vmatprep.subr.mxu0 0.0
  %2794 = vmatpush1.msra.mxu0 0.0
  %2795 = vmatprep.subr.mxu0 0.0
  %2796 = vmatpush1.msra.mxu0 0.0
  %2797 = vmatprep.subr.mxu0 0.0
  %2798 = vmatpush1.msra.mxu0 0.0
  %2799 = vmatprep.subr.mxu0 0.0
  %2800 = vmatpush1.msra.mxu0 0.0
  %2801 = vmatprep.subr.mxu0 0.0
  %2802 = vmatpush1.msra.mxu0 0.0
  %2803 = vmatprep.subr.mxu0 0.0
  %2804 = vmatpush1.msra.mxu0 0.0
  %2805 = vmatprep.subr.mxu0 0.0
  %2806 = vmatpush1.msra.mxu0 0.0
  %2807 = vmatprep.subr.mxu0 0.0
  %2808 = vmatpush1.msra.mxu0 0.0
  %2809 = vmatprep.subr.mxu0 0.0
  %2810 = vmatpush1.msra.mxu0 0.0
  %2811 = vmatprep.subr.mxu0 0.0
  %2812 = vmatpush1.msra.mxu0 0.0
  %2813 = vmatprep.subr.mxu0 0.0
  %2814 = vmatpush1.msra.mxu0 0.0
  %2815 = vmatprep.subr.mxu0 0.0
  %2816 = vmatpush1.msra.mxu0 0.0
  %2817 = vmatprep.subr.mxu0 0.0
  %2818 = vmatpush1.msra.mxu0 0.0
  %2819 = vmatprep.subr.mxu0 0.0
  %2820 = vmatpush1.msra.mxu0 0.0
  %2821 = vmatprep.subr.mxu0 0.0
  %2822 = vmatpush1.msra.mxu0 0.0
  %2823 = vmatprep.subr.mxu0 0.0
  %2824 = vmatpush1.msra.mxu0 0.0
  %2825 = vmatprep.subr.mxu0 0.0
  %2826 = vmatpush1.msra.mxu0 0.0
  %2827 = vmatprep.subr.mxu0 0.0
  %2828 = vmatpush1.msra.mxu0 0.0
  %2829 = vmatprep.subr.mxu0 0.0
  %2830 = vmatpush1.msra.mxu0 0.0
  %2831 = vmatprep.subr.mxu0 0.0
  %2832 = vmatpush1.msra.mxu0 0.0
  %2833 = vmatprep.subr.mxu0 0.0
  %2834 = vmatpush1.msra.mxu0 0.0
  %2835 = vmatprep.subr.mxu0 0.0
  %2836 = vmatpush1.msra.mxu0 0.0
  %2837 = vmatprep.subr.mxu0 0.0
  %2838 = vmatpush1.msra.mxu0 0.0
  %2839 = vmatprep.subr.mxu0 0.0
  %2840 = vmatpush1.msra.mxu0 0.0
  %2841 = vmatprep.subr.mxu0 0.0
  %2842 = vmatpush1.msra.mxu0 0.0
  %2843 = vmatprep.subr.mxu0 0.0
  %2844 = vmatpush1.msra.mxu0 0.0
  %2845 = vmatprep.subr.mxu0 0.0
  %2846 = vmatpush1.msra.mxu0 0.0
  %2847 = vmatprep.subr.mxu0 0.0
  %2848 = vmatpush1.msra.mxu0 0.0
  %2849 = vmatprep.mubr.f32.mxu0 0.0
  %2850 = vmatmul.mubr.f32.gmra.mrb[0].mxu0 %v2682
  %v2851 = vpop.f32.mrb[0].mxu0
  %v2852 = vadd.f32 0.0, %v2851
  %v2853 = vpop.f32.mrb[0].mxu0
  %2854 = vdwg.mxu0
  %v2856 = vsel %vm52, %v2776, 0
  %2858 = vmatprep.subr.mxu0 0.0
  %2859 = vmatpush1.msra.mxu0 %v2777
  %2860 = vmatprep.subr.mxu0 0.0
  %2861 = vmatpush1.msra.mxu0 %v2778
  %2862 = vmatprep.subr.mxu0 0.0
  %2863 = vmatpush1.msra.mxu0 %v2779
  %2864 = vmatprep.subr.mxu0 0.0
  %2865 = vmatpush1.msra.mxu0 %v2780
  %2866 = vmatprep.subr.mxu0 0.0
  %2867 = vmatpush1.msra.mxu0 0.0
  %2868 = vmatprep.subr.mxu0 0.0
  %2869 = vmatpush1.msra.mxu0 0.0
  %2870 = vmatprep.subr.mxu0 0.0
  %2871 = vmatpush1.msra.mxu0 0.0
  %2872 = vmatprep.subr.mxu0 0.0
  %2873 = vmatpush1.msra.mxu0 0.0
  %2874 = vmatprep.subr.mxu0 0.0
  %2875 = vmatpush1.msra.mxu0 0.0
  %2876 = vmatprep.subr.mxu0 0.0
  %2877 = vmatpush1.msra.mxu0 0.0
  %2878 = vmatprep.subr.mxu0 0.0
  %2879 = vmatpush1.msra.mxu0 0.0
  %2880 = vmatprep.subr.mxu0 0.0
  %2881 = vmatpush1.msra.mxu0 0.0
  %2882 = vmatprep.subr.mxu0 0.0
  %2883 = vmatpush1.msra.mxu0 0.0
  %2884 = vmatprep.subr.mxu0 0.0
  %2885 = vmatpush1.msra.mxu0 0.0
  %2886 = vmatprep.subr.mxu0 0.0
  %2887 = vmatpush1.msra.mxu0 0.0
  %2888 = vmatprep.subr.mxu0 0.0
  %2889 = vmatpush1.msra.mxu0 0.0
  %2890 = vmatprep.subr.mxu0 0.0
  %2891 = vmatpush1.msra.mxu0 0.0
  %2892 = vmatprep.subr.mxu0 0.0
  %2893 = vmatpush1.msra.mxu0 0.0
  %2894 = vmatprep.subr.mxu0 0.0
  %2895 = vmatpush1.msra.mxu0 0.0
  %2896 = vmatprep.subr.mxu0 0.0
  %2897 = vmatpush1.msra.mxu0 0.0
  %2898 = vmatprep.subr.mxu0 0.0
  %2899 = vmatpush1.msra.mxu0 0.0
  %2900 = vmatprep.subr.mxu0 0.0
  %2901 = vmatpush1.msra.mxu0 0.0
  %2902 = vmatprep.subr.mxu0 0.0
  %2903 = vmatpush1.msra.mxu0 0.0
  %2904 = vmatprep.subr.mxu0 0.0
  %2905 = vmatpush1.msra.mxu0 0.0
  %2906 = vmatprep.subr.mxu0 0.0
  %2907 = vmatpush1.msra.mxu0 0.0
  %2908 = vmatprep.subr.mxu0 0.0
  %2909 = vmatpush1.msra.mxu0 0.0
  %2910 = vmatprep.subr.mxu0 0.0
  %2911 = vmatpush1.msra.mxu0 0.0
  %2912 = vmatprep.subr.mxu0 0.0
  %2913 = vmatpush1.msra.mxu0 0.0
  %2914 = vmatprep.subr.mxu0 0.0
  %2915 = vmatpush1.msra.mxu0 0.0
  %2916 = vmatprep.subr.mxu0 0.0
  %2917 = vmatpush1.msra.mxu0 0.0
  %2918 = vmatprep.subr.mxu0 0.0
  %2919 = vmatpush1.msra.mxu0 0.0
  %2920 = vmatprep.subr.mxu0 0.0
  %2921 = vmatpush1.msra.mxu0 0.0
  %2922 = vmatprep.mubr.f32.mxu0 0.0
  %2923 = vmatmul.mubr.f32.gmra.mrb[0].mxu0 %v2856
  %v2924 = vpop.f32.mrb[0].mxu0
  %v2925 = vadd.f32 %v2852, %v2924
  %v2926 = vpop.f32.mrb[0].mxu0
  %2927 = vdwg.mxu0
  %v2928 = vld [vmem:[%s8] sm:$0xff]
  %v2929 = vadd.f32 %v2925, %v2928
  %v2930 = vxor.u32 %v2929, 2147483648
  %v2931 = vmul.f32 %v2930, 1.442695
  %v2932 = vpow.pop %v2931
  %v2933 = vadd.f32 %v2932, 1.0
  %v2934 = vrcp.pop %v2933
  %v2935 = vmul.f32 1.0, %v2934
  %2937 = vrot.lane.b32.xlu0 %v2929, 32
  %v2938 = vpop.permute.xlu0 %2937
  %v2940 = vmul.f32 %v2935, %v2938
  %2942 = vrot.lane.b32.xlu0 %v2940, 64
  %v2943 = vpop.permute.xlu0 %2942
  %v2945 = vadd.f32 %v2929, %v2943
  %v2946 = vtanh.pop %v2945
  %v2947 = vsub.f32 1.0, %v2935
  %2949 = vrot.lane.b32.xlu0 %v2946, 96
  %v2950 = vpop.permute.xlu0 %2949
  %v2952 = vmul.f32 %v2947, %v2950
  %v2953 = vmul.f32 %v2935, %v2430
  %v2954 = vadd.f32 %v2952, %v2953
  %2956 = vrot.lane.b32.xlu0 %v2954, 96
  %v2957 = vpop.permute.xlu0 %2956
  %v2959 = vmul.f32 %v1703, %v2957
  %v2960 = vmul.f32 %v1704, %v2957
  %v2961 = vmul.f32 %v1705, %v2957
  %v2962 = vmul.f32 %v1706, %v2957
  %v2963 = vmul.f32 %v1707, %v2957
  %v2964 = vmul.f32 %v1708, %v2957
  %v2965 = vmul.f32 %v1709, %v2957
  %v2966 = vmul.f32 %v1710, %v2957
  %v2967 = vsel %vm52, %v2959, 0.0
  %2968 = vadd.xlane.f32.xlu0 %v2967
  %v2969 = vpop.xlane.xlu0 %2968
  %v2970 = vsel %vm52, %v2960, 0.0
  %2971 = vadd.xlane.f32.xlu0 %v2970
  %v2972 = vpop.xlane.xlu0 %2971
  %v2973 = vsel %vm52, %v2961, 0.0
  %2974 = vadd.xlane.f32.xlu0 %v2973
  %v2975 = vpop.xlane.xlu0 %2974
  %v2976 = vsel %vm52, %v2962, 0.0
  %2977 = vadd.xlane.f32.xlu0 %v2976
  %v2978 = vpop.xlane.xlu0 %2977
  %v2979 = vsel %vm52, %v2963, 0.0
  %2980 = vadd.xlane.f32.xlu0 %v2979
  %v2981 = vpop.xlane.xlu0 %2980
  %v2982 = vsel %vm52, %v2964, 0.0
  %2983 = vadd.xlane.f32.xlu0 %v2982
  %v2984 = vpop.xlane.xlu0 %2983
  %v2985 = vsel %vm52, %v2965, 0.0
  %2986 = vadd.xlane.f32.xlu0 %v2985
  %v2987 = vpop.xlane.xlu0 %2986
  %v2988 = vsel %vm52, %v2966, 0.0
  %2989 = vadd.xlane.f32.xlu0 %v2988
  %v2990 = vpop.xlane.xlu0 %2989
  %v2991 = vsel %vm1939, %v2969, -1e+30
  %v2992 = vsel %vm1940, %v2972, -1e+30
  %v2993 = vsel %vm1941, %v2975, -1e+30
  %v2994 = vsel %vm1942, %v2978, -1e+30
  %v2995 = vsel %vm1943, %v2981, -1e+30
  %v2996 = vsel %vm1944, %v2984, -1e+30
  %v2997 = vsel %vm1945, %v2987, -1e+30
  %v2998 = vsel %vm1946, %v2990, -1e+30
  %v2999 = vsel %vm1955, %v2991, -inf
  %v3000 = vsel %vm1955, %v2992, -inf
  %v3001 = vsel %vm1955, %v2993, -inf
  %v3002 = vsel %vm1955, %v2994, -inf
  %v3003 = vsel %vm1955, %v2995, -inf
  %v3004 = vmax.f32 %v2999, %v3003
  %v3005 = vsel %vm1955, %v2996, -inf
  %v3006 = vmax.f32 %v3000, %v3005
  %v3007 = vsel %vm1955, %v2997, -inf
  %v3008 = vmax.f32 %v3001, %v3007
  %v3009 = vsel %vm1955, %v2998, -inf
  %v3010 = vmax.f32 %v3002, %v3009
  %v3011 = vmax.f32 %v3004, %v3006
  %v3012 = vmax.f32 %v3008, %v3010
  %v3013 = vmax.f32 %v3011, %v3012
  %v3014 = vsub.f32 %v2991, %v3013
  %v3015 = vsub.f32 %v2992, %v3013
  %v3016 = vsub.f32 %v2993, %v3013
  %v3017 = vsub.f32 %v2994, %v3013
  %v3018 = vsub.f32 %v2995, %v3013
  %v3019 = vsub.f32 %v2996, %v3013
  %v3020 = vsub.f32 %v2997, %v3013
  %v3021 = vsub.f32 %v2998, %v3013
  %v3022 = vmul.f32 %v3014, 1.442695
  %v3023 = vpow.pop %v3022
  %v3024 = vmul.f32 %v3015, 1.442695
  %v3025 = vpow.pop %v3024
  %v3026 = vmul.f32 %v3016, 1.442695
  %v3027 = vpow.pop %v3026
  %v3028 = vmul.f32 %v3017, 1.442695
  %v3029 = vpow.pop %v3028
  %v3030 = vmul.f32 %v3018, 1.442695
  %v3031 = vpow.pop %v3030
  %v3032 = vmul.f32 %v3019, 1.442695
  %v3033 = vpow.pop %v3032
  %v3034 = vmul.f32 %v3020, 1.442695
  %v3035 = vpow.pop %v3034
  %v3036 = vmul.f32 %v3021, 1.442695
  %v3037 = vpow.pop %v3036
  %v3038 = vsel %vm1955, %v3023, 0.0
  %v3039 = vsel %vm1955, %v3025, 0.0
  %v3040 = vadd.f32 %v3038, %v3039
  %v3041 = vsel %vm1955, %v3027, 0.0
  %v3042 = vadd.f32 %v3040, %v3041
  %v3043 = vsel %vm1955, %v3029, 0.0
  %v3044 = vadd.f32 %v3042, %v3043
  %v3045 = vsel %vm1955, %v3031, 0.0
  %v3046 = vadd.f32 %v3044, %v3045
  %v3047 = vsel %vm1955, %v3033, 0.0
  %v3048 = vadd.f32 %v3046, %v3047
  %v3049 = vsel %vm1955, %v3035, 0.0
  %v3050 = vadd.f32 %v3048, %v3049
  %v3051 = vsel %vm1955, %v3037, 0.0
  %v3052 = vadd.f32 %v3050, %v3051
  %v3053 = vrcp.pop %v3052
  %v3054 = vmul.f32 %v3023, %v3053
  %v3055 = vmul.f32 %v3025, %v3053
  %v3056 = vmul.f32 %v3027, %v3053
  %v3057 = vmul.f32 %v3029, %v3053
  %v3058 = vmul.f32 %v3031, %v3053
  %v3059 = vmul.f32 %v3033, %v3053
  %v3060 = vmul.f32 %v3035, %v3053
  %v3061 = vmul.f32 %v3037, %v3053
  %3063 = vset.pattern.permute.xlu0 0
  %3064 = vperm.xlu0 %3063, %v3054
  %v3065 = vpop.permute.xlu0 %3064
  %3068 = vset.pattern.permute.xlu0 0
  %3069 = vperm.xlu0 %3068, %v3055
  %v3070 = vpop.permute.xlu0 %3069
  %3073 = vset.pattern.permute.xlu0 0
  %3074 = vperm.xlu0 %3073, %v3056
  %v3075 = vpop.permute.xlu0 %3074
  %3078 = vset.pattern.permute.xlu0 0
  %3079 = vperm.xlu0 %3078, %v3057
  %v3080 = vpop.permute.xlu0 %3079
  %3083 = vset.pattern.permute.xlu0 0
  %3084 = vperm.xlu0 %3083, %v3058
  %v3085 = vpop.permute.xlu0 %3084
  %3088 = vset.pattern.permute.xlu0 0
  %3089 = vperm.xlu0 %3088, %v3059
  %v3090 = vpop.permute.xlu0 %3089
  %3093 = vset.pattern.permute.xlu0 0
  %3094 = vperm.xlu0 %3093, %v3060
  %v3095 = vpop.permute.xlu0 %3094
  %3098 = vset.pattern.permute.xlu0 0
  %3099 = vperm.xlu0 %3098, %v3061
  %v3100 = vpop.permute.xlu0 %3099
  %v3102 = vmul.f32 %v3065, %v1703
  %v3103 = vmul.f32 %v3070, %v1704
  %v3104 = vmul.f32 %v3075, %v1705
  %v3105 = vmul.f32 %v3080, %v1706
  %v3106 = vmul.f32 %v3085, %v1707
  %v3107 = vmul.f32 %v3090, %v1708
  %v3108 = vmul.f32 %v3095, %v1709
  %v3109 = vmul.f32 %v3100, %v1710
  %v3110 = vsel %vm52, %v3102, 0.0
  %v3111 = vsel %vm52, %v3103, 0.0
  %v3112 = vadd.f32 %v3110, %v3111
  %v3113 = vsel %vm52, %v3104, 0.0
  %v3114 = vadd.f32 %v3112, %v3113
  %v3115 = vsel %vm52, %v3105, 0.0
  %v3116 = vadd.f32 %v3114, %v3115
  %v3117 = vsel %vm52, %v3106, 0.0
  %v3118 = vadd.f32 %v3116, %v3117
  %v3119 = vsel %vm52, %v3107, 0.0
  %v3120 = vadd.f32 %v3118, %v3119
  %v3121 = vsel %vm52, %v3108, 0.0
  %v3122 = vadd.f32 %v3120, %v3121
  %v3123 = vsel %vm52, %v3109, 0.0
  %v3124 = vadd.f32 %v3122, %v3123
  %v3125 = vld [vmem:[%s9] sm:$0xff]
  %v3126 = vld [vmem:[%s9 + $0x8] sm:$0xff]
  %v3127 = vld [vmem:[%s9 + $0x10] sm:$0xff]
  %v3128 = vld [vmem:[%s9 + $0x18] sm:$0xff]
  %v3129 = vld [vmem:[%s10] sm:$0xff]
  %v3130 = vld [vmem:[%s10 + $0x8] sm:$0xff]
  %v3131 = vld [vmem:[%s10 + $0x10] sm:$0xff]
  %v3132 = vld [vmem:[%s10 + $0x18] sm:$0xff]
  %v3134 = vsel %vm52, %v3124, 0
  %3136 = vmatprep.subr.mxu0 0.0
  %3137 = vmatpush1.msra.mxu0 %v3129
  %3138 = vmatprep.subr.mxu0 0.0
  %3139 = vmatpush1.msra.mxu0 %v3130
  %3140 = vmatprep.subr.mxu0 0.0
  %3141 = vmatpush1.msra.mxu0 %v3131
  %3142 = vmatprep.subr.mxu0 0.0
  %3143 = vmatpush1.msra.mxu0 %v3132
  %3144 = vmatprep.subr.mxu0 0.0
  %3145 = vmatpush1.msra.mxu0 0.0
  %3146 = vmatprep.subr.mxu0 0.0
  %3147 = vmatpush1.msra.mxu0 0.0
  %3148 = vmatprep.subr.mxu0 0.0
  %3149 = vmatpush1.msra.mxu0 0.0
  %3150 = vmatprep.subr.mxu0 0.0
  %3151 = vmatpush1.msra.mxu0 0.0
  %3152 = vmatprep.subr.mxu0 0.0
  %3153 = vmatpush1.msra.mxu0 0.0
  %3154 = vmatprep.subr.mxu0 0.0
  %3155 = vmatpush1.msra.mxu0 0.0
  %3156 = vmatprep.subr.mxu0 0.0
  %3157 = vmatpush1.msra.mxu0 0.0
  %3158 = vmatprep.subr.mxu0 0.0
  %3159 = vmatpush1.msra.mxu0 0.0
  %3160 = vmatprep.subr.mxu0 0.0
  %3161 = vmatpush1.msra.mxu0 0.0
  %3162 = vmatprep.subr.mxu0 0.0
  %3163 = vmatpush1.msra.mxu0 0.0
  %3164 = vmatprep.subr.mxu0 0.0
  %3165 = vmatpush1.msra.mxu0 0.0
  %3166 = vmatprep.subr.mxu0 0.0
  %3167 = vmatpush1.msra.mxu0 0.0
  %3168 = vmatprep.subr.mxu0 0.0
  %3169 = vmatpush1.msra.mxu0 0.0
  %3170 = vmatprep.subr.mxu0 0.0
  %3171 = vmatpush1.msra.mxu0 0.0
  %3172 = vmatprep.subr.mxu0 0.0
  %3173 = vmatpush1.msra.mxu0 0.0
  %3174 = vmatprep.subr.mxu0 0.0
  %3175 = vmatpush1.msra.mxu0 0.0
  %3176 = vmatprep.subr.mxu0 0.0
  %3177 = vmatpush1.msra.mxu0 0.0
  %3178 = vmatprep.subr.mxu0 0.0
  %3179 = vmatpush1.msra.mxu0 0.0
  %3180 = vmatprep.subr.mxu0 0.0
  %3181 = vmatpush1.msra.mxu0 0.0
  %3182 = vmatprep.subr.mxu0 0.0
  %3183 = vmatpush1.msra.mxu0 0.0
  %3184 = vmatprep.subr.mxu0 0.0
  %3185 = vmatpush1.msra.mxu0 0.0
  %3186 = vmatprep.subr.mxu0 0.0
  %3187 = vmatpush1.msra.mxu0 0.0
  %3188 = vmatprep.subr.mxu0 0.0
  %3189 = vmatpush1.msra.mxu0 0.0
  %3190 = vmatprep.subr.mxu0 0.0
  %3191 = vmatpush1.msra.mxu0 0.0
  %3192 = vmatprep.subr.mxu0 0.0
  %3193 = vmatpush1.msra.mxu0 0.0
  %3194 = vmatprep.subr.mxu0 0.0
  %3195 = vmatpush1.msra.mxu0 0.0
  %3196 = vmatprep.subr.mxu0 0.0
  %3197 = vmatpush1.msra.mxu0 0.0
  %3198 = vmatprep.subr.mxu0 0.0
  %3199 = vmatpush1.msra.mxu0 0.0
  %3200 = vmatprep.mubr.f32.mxu0 0.0
  %3201 = vmatmul.mubr.f32.gmra.mrb[0].mxu0 %v3134
  %v3202 = vpop.f32.mrb[0].mxu0
  %v3203 = vadd.f32 0.0, %v3202
  %v3204 = vpop.f32.mrb[0].mxu0
  %3205 = vdwg.mxu0
  %v3206 = vsel %vm52, %v2957, 0
  %3208 = vmatprep.subr.mxu0 0.0
  %3209 = vmatpush1.msra.mxu0 %v3125
  %3210 = vmatprep.subr.mxu0 0.0
  %3211 = vmatpush1.msra.mxu0 %v3126
  %3212 = vmatprep.subr.mxu0 0.0
  %3213 = vmatpush1.msra.mxu0 %v3127
  %3214 = vmatprep.subr.mxu0 0.0
  %3215 = vmatpush1.msra.mxu0 %v3128
  %3216 = vmatprep.subr.mxu0 0.0
  %3217 = vmatpush1.msra.mxu0 0.0
  %3218 = vmatprep.subr.mxu0 0.0
  %3219 = vmatpush1.msra.mxu0 0.0
  %3220 = vmatprep.subr.mxu0 0.0
  %3221 = vmatpush1.msra.mxu0 0.0
  %3222 = vmatprep.subr.mxu0 0.0
  %3223 = vmatpush1.msra.mxu0 0.0
  %3224 = vmatprep.subr.mxu0 0.0
  %3225 = vmatpush1.msra.mxu0 0.0
  %3226 = vmatprep.subr.mxu0 0.0
  %3227 = vmatpush1.msra.mxu0 0.0
  %3228 = vmatprep.subr.mxu0 0.0
  %3229 = vmatpush1.msra.mxu0 0.0
  %3230 = vmatprep.subr.mxu0 0.0
  %3231 = vmatpush1.msra.mxu0 0.0
  %3232 = vmatprep.subr.mxu0 0.0
  %3233 = vmatpush1.msra.mxu0 0.0
  %3234 = vmatprep.subr.mxu0 0.0
  %3235 = vmatpush1.msra.mxu0 0.0
  %3236 = vmatprep.subr.mxu0 0.0
  %3237 = vmatpush1.msra.mxu0 0.0
  %3238 = vmatprep.subr.mxu0 0.0
  %3239 = vmatpush1.msra.mxu0 0.0
  %3240 = vmatprep.subr.mxu0 0.0
  %3241 = vmatpush1.msra.mxu0 0.0
  %3242 = vmatprep.subr.mxu0 0.0
  %3243 = vmatpush1.msra.mxu0 0.0
  %3244 = vmatprep.subr.mxu0 0.0
  %3245 = vmatpush1.msra.mxu0 0.0
  %3246 = vmatprep.subr.mxu0 0.0
  %3247 = vmatpush1.msra.mxu0 0.0
  %3248 = vmatprep.subr.mxu0 0.0
  %3249 = vmatpush1.msra.mxu0 0.0
  %3250 = vmatprep.subr.mxu0 0.0
  %3251 = vmatpush1.msra.mxu0 0.0
  %3252 = vmatprep.subr.mxu0 0.0
  %3253 = vmatpush1.msra.mxu0 0.0
  %3254 = vmatprep.subr.mxu0 0.0
  %3255 = vmatpush1.msra.mxu0 0.0
  %3256 = vmatprep.subr.mxu0 0.0
  %3257 = vmatpush1.msra.mxu0 0.0
  %3258 = vmatprep.subr.mxu0 0.0
  %3259 = vmatpush1.msra.mxu0 0.0
  %3260 = vmatprep.subr.mxu0 0.0
  %3261 = vmatpush1.msra.mxu0 0.0
  %3262 = vmatprep.subr.mxu0 0.0
  %3263 = vmatpush1.msra.mxu0 0.0
  %3264 = vmatprep.subr.mxu0 0.0
  %3265 = vmatpush1.msra.mxu0 0.0
  %3266 = vmatprep.subr.mxu0 0.0
  %3267 = vmatpush1.msra.mxu0 0.0
  %3268 = vmatprep.subr.mxu0 0.0
  %3269 = vmatpush1.msra.mxu0 0.0
  %3270 = vmatprep.subr.mxu0 0.0
  %3271 = vmatpush1.msra.mxu0 0.0
  %3272 = vmatprep.mubr.f32.mxu0 0.0
  %3273 = vmatmul.mubr.f32.gmra.mrb[0].mxu0 %v3206
  %v3274 = vpop.f32.mrb[0].mxu0
  %v3275 = vadd.f32 %v3203, %v3274
  %v3276 = vpop.f32.mrb[0].mxu0
  %3277 = vdwg.mxu0
  %v3278 = vld [vmem:[%s11] sm:$0xff]
  %v3279 = vadd.f32 %v3275, %v3278
  %v3280 = vsel %vm52, %v3279, -inf
  %3281 = vmax.xlane.f32.xlu0 %v3280
  %v3282 = vpop.xlane.xlu0 %3281
  %v3283 = vsub.f32 %v3279, %v3282
  %v3284 = vmul.f32 %v3283, 1.442695
  %v3285 = vpow.pop %v3284
  %v3286 = vsel %vm52, %v3285, 0.0
  %3287 = vadd.xlane.f32.xlu0 %v3286
  %v3288 = vpop.xlane.xlu0 %3287
  %v3289 = vlog2.pop %v3288
  %v3290 = vmul.f32 %v3289, 0.6931472
  %v3291 = vadd.f32 %v3290, %v3282
  %v3292 = vsub.f32 %v3279, %v3291
  %3294 = vrot.lane.b32.xlu0 %v3292, 64
  %v3295 = vpop.permute.xlu0 %3294
  %vm3297 = vcmask 785920
  %3298 = vst.msk [vmem:[%s12] sm:$0xff] %vm3297, %v3295
  %s3299 = scalar_lea.vmem %s2, 24
  %v3300 = vld [vmem:[%s3299] sm:$0xff]
  %v3301 = vld [vmem:[%s6] sm:$0xff]
  %v3302 = vld [vmem:[%s6 + $0x8] sm:$0xff]
  %v3303 = vld [vmem:[%s6 + $0x10] sm:$0xff]
  %v3304 = vld [vmem:[%s6 + $0x18] sm:$0xff]
  %v3305 = vld [vmem:[%s7] sm:$0xff]
  %v3306 = vld [vmem:[%s7 + $0x8] sm:$0xff]
  %v3307 = vld [vmem:[%s7 + $0x10] sm:$0xff]
  %v3308 = vld [vmem:[%s7 + $0x18] sm:$0xff]
  %3309 = vmatprep.subr.mxu0 0.0
  %3310 = vmatpush1.msra.mxu0 %v3305
  %3311 = vmatprep.subr.mxu0 0.0
  %3312 = vmatpush1.msra.mxu0 %v3306
  %3313 = vmatprep.subr.mxu0 0.0
  %3314 = vmatpush1.msra.mxu0 %v3307
  %3315 = vmatprep.subr.mxu0 0.0
  %3316 = vmatpush1.msra.mxu0 %v3308
  %3317 = vmatprep.subr.mxu0 0.0
  %3318 = vmatpush1.msra.mxu0 0.0
  %3319 = vmatprep.subr.mxu0 0.0
  %3320 = vmatpush1.msra.mxu0 0.0
  %3321 = vmatprep.subr.mxu0 0.0
  %3322 = vmatpush1.msra.mxu0 0.0
  %3323 = vmatprep.subr.mxu0 0.0
  %3324 = vmatpush1.msra.mxu0 0.0
  %3325 = vmatprep.subr.mxu0 0.0
  %3326 = vmatpush1.msra.mxu0 0.0
  %3327 = vmatprep.subr.mxu0 0.0
  %3328 = vmatpush1.msra.mxu0 0.0
  %3329 = vmatprep.subr.mxu0 0.0
  %3330 = vmatpush1.msra.mxu0 0.0
  %3331 = vmatprep.subr.mxu0 0.0
  %3332 = vmatpush1.msra.mxu0 0.0
  %3333 = vmatprep.subr.mxu0 0.0
  %3334 = vmatpush1.msra.mxu0 0.0
  %3335 = vmatprep.subr.mxu0 0.0
  %3336 = vmatpush1.msra.mxu0 0.0
  %3337 = vmatprep.subr.mxu0 0.0
  %3338 = vmatpush1.msra.mxu0 0.0
  %3339 = vmatprep.subr.mxu0 0.0
  %3340 = vmatpush1.msra.mxu0 0.0
  %3341 = vmatprep.subr.mxu0 0.0
  %3342 = vmatpush1.msra.mxu0 0.0
  %3343 = vmatprep.subr.mxu0 0.0
  %3344 = vmatpush1.msra.mxu0 0.0
  %3345 = vmatprep.subr.mxu0 0.0
  %3346 = vmatpush1.msra.mxu0 0.0
  %3347 = vmatprep.subr.mxu0 0.0
  %3348 = vmatpush1.msra.mxu0 0.0
  %3349 = vmatprep.subr.mxu0 0.0
  %3350 = vmatpush1.msra.mxu0 0.0
  %3351 = vmatprep.subr.mxu0 0.0
  %3352 = vmatpush1.msra.mxu0 0.0
  %3353 = vmatprep.subr.mxu0 0.0
  %3354 = vmatpush1.msra.mxu0 0.0
  %3355 = vmatprep.subr.mxu0 0.0
  %3356 = vmatpush1.msra.mxu0 0.0
  %3357 = vmatprep.subr.mxu0 0.0
  %3358 = vmatpush1.msra.mxu0 0.0
  %3359 = vmatprep.subr.mxu0 0.0
  %3360 = vmatpush1.msra.mxu0 0.0
  %3361 = vmatprep.subr.mxu0 0.0
  %3362 = vmatpush1.msra.mxu0 0.0
  %3363 = vmatprep.subr.mxu0 0.0
  %3364 = vmatpush1.msra.mxu0 0.0
  %3365 = vmatprep.subr.mxu0 0.0
  %3366 = vmatpush1.msra.mxu0 0.0
  %3367 = vmatprep.subr.mxu0 0.0
  %3368 = vmatpush1.msra.mxu0 0.0
  %3369 = vmatprep.subr.mxu0 0.0
  %3370 = vmatpush1.msra.mxu0 0.0
  %3371 = vmatprep.subr.mxu0 0.0
  %3372 = vmatpush1.msra.mxu0 0.0
  %3373 = vmatprep.mubr.f32.mxu0 0.0
  %3374 = vmatmul.mubr.f32.gmra.mrb[0].mxu0 %v3206
  %v3375 = vpop.f32.mrb[0].mxu0
  %v3376 = vadd.f32 0.0, %v3375
  %v3377 = vpop.f32.mrb[0].mxu0
  %3378 = vdwg.mxu0
  %v3380 = vsel %vm52, %v3300, 0
  %3382 = vmatprep.subr.mxu0 0.0
  %3383 = vmatpush1.msra.mxu0 %v3301
  %3384 = vmatprep.subr.mxu0 0.0
  %3385 = vmatpush1.msra.mxu0 %v3302
  %3386 = vmatprep.subr.mxu0 0.0
  %3387 = vmatpush1.msra.mxu0 %v3303
  %3388 = vmatprep.subr.mxu0 0.0
  %3389 = vmatpush1.msra.mxu0 %v3304
  %3390 = vmatprep.subr.mxu0 0.0
  %3391 = vmatpush1.msra.mxu0 0.0
  %3392 = vmatprep.subr.mxu0 0.0
  %3393 = vmatpush1.msra.mxu0 0.0
  %3394 = vmatprep.subr.mxu0 0.0
  %3395 = vmatpush1.msra.mxu0 0.0
  %3396 = vmatprep.subr.mxu0 0.0
  %3397 = vmatpush1.msra.mxu0 0.0
  %3398 = vmatprep.subr.mxu0 0.0
  %3399 = vmatpush1.msra.mxu0 0.0
  %3400 = vmatprep.subr.mxu0 0.0
  %3401 = vmatpush1.msra.mxu0 0.0
  %3402 = vmatprep.subr.mxu0 0.0
  %3403 = vmatpush1.msra.mxu0 0.0
  %3404 = vmatprep.subr.mxu0 0.0
  %3405 = vmatpush1.msra.mxu0 0.0
  %3406 = vmatprep.subr.mxu0 0.0
  %3407 = vmatpush1.msra.mxu0 0.0
  %3408 = vmatprep.subr.mxu0 0.0
  %3409 = vmatpush1.msra.mxu0 0.0
  %3410 = vmatprep.subr.mxu0 0.0
  %3411 = vmatpush1.msra.mxu0 0.0
  %3412 = vmatprep.subr.mxu0 0.0
  %3413 = vmatpush1.msra.mxu0 0.0
  %3414 = vmatprep.subr.mxu0 0.0
  %3415 = vmatpush1.msra.mxu0 0.0
  %3416 = vmatprep.subr.mxu0 0.0
  %3417 = vmatpush1.msra.mxu0 0.0
  %3418 = vmatprep.subr.mxu0 0.0
  %3419 = vmatpush1.msra.mxu0 0.0
  %3420 = vmatprep.subr.mxu0 0.0
  %3421 = vmatpush1.msra.mxu0 0.0
  %3422 = vmatprep.subr.mxu0 0.0
  %3423 = vmatpush1.msra.mxu0 0.0
  %3424 = vmatprep.subr.mxu0 0.0
  %3425 = vmatpush1.msra.mxu0 0.0
  %3426 = vmatprep.subr.mxu0 0.0
  %3427 = vmatpush1.msra.mxu0 0.0
  %3428 = vmatprep.subr.mxu0 0.0
  %3429 = vmatpush1.msra.mxu0 0.0
  %3430 = vmatprep.subr.mxu0 0.0
  %3431 = vmatpush1.msra.mxu0 0.0
  %3432 = vmatprep.subr.mxu0 0.0
  %3433 = vmatpush1.msra.mxu0 0.0
  %3434 = vmatprep.subr.mxu0 0.0
  %3435 = vmatpush1.msra.mxu0 0.0
  %3436 = vmatprep.subr.mxu0 0.0
  %3437 = vmatpush1.msra.mxu0 0.0
  %3438 = vmatprep.subr.mxu0 0.0
  %3439 = vmatpush1.msra.mxu0 0.0
  %3440 = vmatprep.subr.mxu0 0.0
  %3441 = vmatpush1.msra.mxu0 0.0
  %3442 = vmatprep.subr.mxu0 0.0
  %3443 = vmatpush1.msra.mxu0 0.0
  %3444 = vmatprep.subr.mxu0 0.0
  %3445 = vmatpush1.msra.mxu0 0.0
  %3446 = vmatprep.mubr.f32.mxu0 0.0
  %3447 = vmatmul.mubr.f32.gmra.mrb[0].mxu0 %v3380
  %v3448 = vpop.f32.mrb[0].mxu0
  %v3449 = vadd.f32 %v3376, %v3448
  %v3450 = vpop.f32.mrb[0].mxu0
  %3451 = vdwg.mxu0
  %v3452 = vld [vmem:[%s8] sm:$0xff]
  %v3453 = vadd.f32 %v3449, %v3452
  %v3454 = vxor.u32 %v3453, 2147483648
  %v3455 = vmul.f32 %v3454, 1.442695
  %v3456 = vpow.pop %v3455
  %v3457 = vadd.f32 %v3456, 1.0
  %v3458 = vrcp.pop %v3457
  %v3459 = vmul.f32 1.0, %v3458
  %3461 = vrot.lane.b32.xlu0 %v3453, 32
  %v3462 = vpop.permute.xlu0 %3461
  %v3464 = vmul.f32 %v3459, %v3462
  %3466 = vrot.lane.b32.xlu0 %v3464, 64
  %v3467 = vpop.permute.xlu0 %3466
  %v3469 = vadd.f32 %v3453, %v3467
  %v3470 = vtanh.pop %v3469
  %v3471 = vsub.f32 1.0, %v3459
  %3473 = vrot.lane.b32.xlu0 %v3470, 96
  %v3474 = vpop.permute.xlu0 %3473
  %v3476 = vmul.f32 %v3471, %v3474
  %v3477 = vmul.f32 %v3459, %v2954
  %v3478 = vadd.f32 %v3476, %v3477
  %3480 = vrot.lane.b32.xlu0 %v3478, 96
  %v3481 = vpop.permute.xlu0 %3480
  %v3483 = vmul.f32 %v1703, %v3481
  %v3484 = vmul.f32 %v1704, %v3481
  %v3485 = vmul.f32 %v1705, %v3481
  %v3486 = vmul.f32 %v1706, %v3481
  %v3487 = vmul.f32 %v1707, %v3481
  %v3488 = vmul.f32 %v1708, %v3481
  %v3489 = vmul.f32 %v1709, %v3481
  %v3490 = vmul.f32 %v1710, %v3481
  %v3491 = vsel %vm52, %v3483, 0.0
  %3492 = vadd.xlane.f32.xlu0 %v3491
  %v3493 = vpop.xlane.xlu0 %3492
  %v3494 = vsel %vm52, %v3484, 0.0
  %3495 = vadd.xlane.f32.xlu0 %v3494
  %v3496 = vpop.xlane.xlu0 %3495
  %v3497 = vsel %vm52, %v3485, 0.0
  %3498 = vadd.xlane.f32.xlu0 %v3497
  %v3499 = vpop.xlane.xlu0 %3498
  %v3500 = vsel %vm52, %v3486, 0.0
  %3501 = vadd.xlane.f32.xlu0 %v3500
  %v3502 = vpop.xlane.xlu0 %3501
  %v3503 = vsel %vm52, %v3487, 0.0
  %3504 = vadd.xlane.f32.xlu0 %v3503
  %v3505 = vpop.xlane.xlu0 %3504
  %v3506 = vsel %vm52, %v3488, 0.0
  %3507 = vadd.xlane.f32.xlu0 %v3506
  %v3508 = vpop.xlane.xlu0 %3507
  %v3509 = vsel %vm52, %v3489, 0.0
  %3510 = vadd.xlane.f32.xlu0 %v3509
  %v3511 = vpop.xlane.xlu0 %3510
  %v3512 = vsel %vm52, %v3490, 0.0
  %3513 = vadd.xlane.f32.xlu0 %v3512
  %v3514 = vpop.xlane.xlu0 %3513
  %v3515 = vsel %vm1939, %v3493, -1e+30
  %v3516 = vsel %vm1940, %v3496, -1e+30
  %v3517 = vsel %vm1941, %v3499, -1e+30
  %v3518 = vsel %vm1942, %v3502, -1e+30
  %v3519 = vsel %vm1943, %v3505, -1e+30
  %v3520 = vsel %vm1944, %v3508, -1e+30
  %v3521 = vsel %vm1945, %v3511, -1e+30
  %v3522 = vsel %vm1946, %v3514, -1e+30
  %v3523 = vsel %vm1955, %v3515, -inf
  %v3524 = vsel %vm1955, %v3516, -inf
  %v3525 = vsel %vm1955, %v3517, -inf
  %v3526 = vsel %vm1955, %v3518, -inf
  %v3527 = vsel %vm1955, %v3519, -inf
  %v3528 = vmax.f32 %v3523, %v3527
  %v3529 = vsel %vm1955, %v3520, -inf
  %v3530 = vmax.f32 %v3524, %v3529
  %v3531 = vsel %vm1955, %v3521, -inf
  %v3532 = vmax.f32 %v3525, %v3531
  %v3533 = vsel %vm1955, %v3522, -inf
  %v3534 = vmax.f32 %v3526, %v3533
  %v3535 = vmax.f32 %v3528, %v3530
  %v3536 = vmax.f32 %v3532, %v3534
  %v3537 = vmax.f32 %v3535, %v3536
  %v3538 = vsub.f32 %v3515, %v3537
  %v3539 = vsub.f32 %v3516, %v3537
  %v3540 = vsub.f32 %v3517, %v3537
  %v3541 = vsub.f32 %v3518, %v3537
  %v3542 = vsub.f32 %v3519, %v3537
  %v3543 = vsub.f32 %v3520, %v3537
  %v3544 = vsub.f32 %v3521, %v3537
  %v3545 = vsub.f32 %v3522, %v3537
  %v3546 = vmul.f32 %v3538, 1.442695
  %v3547 = vpow.pop %v3546
  %v3548 = vmul.f32 %v3539, 1.442695
  %v3549 = vpow.pop %v3548
  %v3550 = vmul.f32 %v3540, 1.442695
  %v3551 = vpow.pop %v3550
  %v3552 = vmul.f32 %v3541, 1.442695
  %v3553 = vpow.pop %v3552
  %v3554 = vmul.f32 %v3542, 1.442695
  %v3555 = vpow.pop %v3554
  %v3556 = vmul.f32 %v3543, 1.442695
  %v3557 = vpow.pop %v3556
  %v3558 = vmul.f32 %v3544, 1.442695
  %v3559 = vpow.pop %v3558
  %v3560 = vmul.f32 %v3545, 1.442695
  %v3561 = vpow.pop %v3560
  %v3562 = vsel %vm1955, %v3547, 0.0
  %v3563 = vsel %vm1955, %v3549, 0.0
  %v3564 = vadd.f32 %v3562, %v3563
  %v3565 = vsel %vm1955, %v3551, 0.0
  %v3566 = vadd.f32 %v3564, %v3565
  %v3567 = vsel %vm1955, %v3553, 0.0
  %v3568 = vadd.f32 %v3566, %v3567
  %v3569 = vsel %vm1955, %v3555, 0.0
  %v3570 = vadd.f32 %v3568, %v3569
  %v3571 = vsel %vm1955, %v3557, 0.0
  %v3572 = vadd.f32 %v3570, %v3571
  %v3573 = vsel %vm1955, %v3559, 0.0
  %v3574 = vadd.f32 %v3572, %v3573
  %v3575 = vsel %vm1955, %v3561, 0.0
  %v3576 = vadd.f32 %v3574, %v3575
  %v3577 = vrcp.pop %v3576
  %v3578 = vmul.f32 %v3547, %v3577
  %v3579 = vmul.f32 %v3549, %v3577
  %v3580 = vmul.f32 %v3551, %v3577
  %v3581 = vmul.f32 %v3553, %v3577
  %v3582 = vmul.f32 %v3555, %v3577
  %v3583 = vmul.f32 %v3557, %v3577
  %v3584 = vmul.f32 %v3559, %v3577
  %v3585 = vmul.f32 %v3561, %v3577
  %3587 = vset.pattern.permute.xlu0 0
  %3588 = vperm.xlu0 %3587, %v3578
  %v3589 = vpop.permute.xlu0 %3588
  %3592 = vset.pattern.permute.xlu0 0
  %3593 = vperm.xlu0 %3592, %v3579
  %v3594 = vpop.permute.xlu0 %3593
  %3597 = vset.pattern.permute.xlu0 0
  %3598 = vperm.xlu0 %3597, %v3580
  %v3599 = vpop.permute.xlu0 %3598
  %3602 = vset.pattern.permute.xlu0 0
  %3603 = vperm.xlu0 %3602, %v3581
  %v3604 = vpop.permute.xlu0 %3603
  %3607 = vset.pattern.permute.xlu0 0
  %3608 = vperm.xlu0 %3607, %v3582
  %v3609 = vpop.permute.xlu0 %3608
  %3612 = vset.pattern.permute.xlu0 0
  %3613 = vperm.xlu0 %3612, %v3583
  %v3614 = vpop.permute.xlu0 %3613
  %3617 = vset.pattern.permute.xlu0 0
  %3618 = vperm.xlu0 %3617, %v3584
  %v3619 = vpop.permute.xlu0 %3618
  %3622 = vset.pattern.permute.xlu0 0
  %3623 = vperm.xlu0 %3622, %v3585
  %v3624 = vpop.permute.xlu0 %3623
  %v3626 = vmul.f32 %v3589, %v1703
  %v3627 = vmul.f32 %v3594, %v1704
  %v3628 = vmul.f32 %v3599, %v1705
  %v3629 = vmul.f32 %v3604, %v1706
  %v3630 = vmul.f32 %v3609, %v1707
  %v3631 = vmul.f32 %v3614, %v1708
  %v3632 = vmul.f32 %v3619, %v1709
  %v3633 = vmul.f32 %v3624, %v1710
  %v3634 = vsel %vm52, %v3626, 0.0
  %v3635 = vsel %vm52, %v3627, 0.0
  %v3636 = vadd.f32 %v3634, %v3635
  %v3637 = vsel %vm52, %v3628, 0.0
  %v3638 = vadd.f32 %v3636, %v3637
  %v3639 = vsel %vm52, %v3629, 0.0
  %v3640 = vadd.f32 %v3638, %v3639
  %v3641 = vsel %vm52, %v3630, 0.0
  %v3642 = vadd.f32 %v3640, %v3641
  %v3643 = vsel %vm52, %v3631, 0.0
  %v3644 = vadd.f32 %v3642, %v3643
  %v3645 = vsel %vm52, %v3632, 0.0
  %v3646 = vadd.f32 %v3644, %v3645
  %v3647 = vsel %vm52, %v3633, 0.0
  %v3648 = vadd.f32 %v3646, %v3647
  %v3649 = vld [vmem:[%s9] sm:$0xff]
  %v3650 = vld [vmem:[%s9 + $0x8] sm:$0xff]
  %v3651 = vld [vmem:[%s9 + $0x10] sm:$0xff]
  %v3652 = vld [vmem:[%s9 + $0x18] sm:$0xff]
  %v3653 = vld [vmem:[%s10] sm:$0xff]
  %v3654 = vld [vmem:[%s10 + $0x8] sm:$0xff]
  %v3655 = vld [vmem:[%s10 + $0x10] sm:$0xff]
  %v3656 = vld [vmem:[%s10 + $0x18] sm:$0xff]
  %v3658 = vsel %vm52, %v3648, 0
  %3660 = vmatprep.subr.mxu0 0.0
  %3661 = vmatpush1.msra.mxu0 %v3653
  %3662 = vmatprep.subr.mxu0 0.0
  %3663 = vmatpush1.msra.mxu0 %v3654
  %3664 = vmatprep.subr.mxu0 0.0
  %3665 = vmatpush1.msra.mxu0 %v3655
  %3666 = vmatprep.subr.mxu0 0.0
  %3667 = vmatpush1.msra.mxu0 %v3656
  %3668 = vmatprep.subr.mxu0 0.0
  %3669 = vmatpush1.msra.mxu0 0.0
  %3670 = vmatprep.subr.mxu0 0.0
  %3671 = vmatpush1.msra.mxu0 0.0
  %3672 = vmatprep.subr.mxu0 0.0
  %3673 = vmatpush1.msra.mxu0 0.0
  %3674 = vmatprep.subr.mxu0 0.0
  %3675 = vmatpush1.msra.mxu0 0.0
  %3676 = vmatprep.subr.mxu0 0.0
  %3677 = vmatpush1.msra.mxu0 0.0
  %3678 = vmatprep.subr.mxu0 0.0
  %3679 = vmatpush1.msra.mxu0 0.0
  %3680 = vmatprep.subr.mxu0 0.0
  %3681 = vmatpush1.msra.mxu0 0.0
  %3682 = vmatprep.subr.mxu0 0.0
  %3683 = vmatpush1.msra.mxu0 0.0
  %3684 = vmatprep.subr.mxu0 0.0
  %3685 = vmatpush1.msra.mxu0 0.0
  %3686 = vmatprep.subr.mxu0 0.0
  %3687 = vmatpush1.msra.mxu0 0.0
  %3688 = vmatprep.subr.mxu0 0.0
  %3689 = vmatpush1.msra.mxu0 0.0
  %3690 = vmatprep.subr.mxu0 0.0
  %3691 = vmatpush1.msra.mxu0 0.0
  %3692 = vmatprep.subr.mxu0 0.0
  %3693 = vmatpush1.msra.mxu0 0.0
  %3694 = vmatprep.subr.mxu0 0.0
  %3695 = vmatpush1.msra.mxu0 0.0
  %3696 = vmatprep.subr.mxu0 0.0
  %3697 = vmatpush1.msra.mxu0 0.0
  %3698 = vmatprep.subr.mxu0 0.0
  %3699 = vmatpush1.msra.mxu0 0.0
  %3700 = vmatprep.subr.mxu0 0.0
  %3701 = vmatpush1.msra.mxu0 0.0
  %3702 = vmatprep.subr.mxu0 0.0
  %3703 = vmatpush1.msra.mxu0 0.0
  %3704 = vmatprep.subr.mxu0 0.0
  %3705 = vmatpush1.msra.mxu0 0.0
  %3706 = vmatprep.subr.mxu0 0.0
  %3707 = vmatpush1.msra.mxu0 0.0
  %3708 = vmatprep.subr.mxu0 0.0
  %3709 = vmatpush1.msra.mxu0 0.0
  %3710 = vmatprep.subr.mxu0 0.0
  %3711 = vmatpush1.msra.mxu0 0.0
  %3712 = vmatprep.subr.mxu0 0.0
  %3713 = vmatpush1.msra.mxu0 0.0
  %3714 = vmatprep.subr.mxu0 0.0
  %3715 = vmatpush1.msra.mxu0 0.0
  %3716 = vmatprep.subr.mxu0 0.0
  %3717 = vmatpush1.msra.mxu0 0.0
  %3718 = vmatprep.subr.mxu0 0.0
  %3719 = vmatpush1.msra.mxu0 0.0
  %3720 = vmatprep.subr.mxu0 0.0
  %3721 = vmatpush1.msra.mxu0 0.0
  %3722 = vmatprep.subr.mxu0 0.0
  %3723 = vmatpush1.msra.mxu0 0.0
  %3724 = vmatprep.mubr.f32.mxu0 0.0
  %3725 = vmatmul.mubr.f32.gmra.mrb[0].mxu0 %v3658
  %v3726 = vpop.f32.mrb[0].mxu0
  %v3727 = vadd.f32 0.0, %v3726
  %v3728 = vpop.f32.mrb[0].mxu0
  %3729 = vdwg.mxu0
  %v3730 = vsel %vm52, %v3481, 0
  %3732 = vmatprep.subr.mxu0 0.0
  %3733 = vmatpush1.msra.mxu0 %v3649
  %3734 = vmatprep.subr.mxu0 0.0
  %3735 = vmatpush1.msra.mxu0 %v3650
  %3736 = vmatprep.subr.mxu0 0.0
  %3737 = vmatpush1.msra.mxu0 %v3651
  %3738 = vmatprep.subr.mxu0 0.0
  %3739 = vmatpush1.msra.mxu0 %v3652
  %3740 = vmatprep.subr.mxu0 0.0
  %3741 = vmatpush1.msra.mxu0 0.0
  %3742 = vmatprep.subr.mxu0 0.0
  %3743 = vmatpush1.msra.mxu0 0.0
  %3744 = vmatprep.subr.mxu0 0.0
  %3745 = vmatpush1.msra.mxu0 0.0
  %3746 = vmatprep.subr.mxu0 0.0
  %3747 = vmatpush1.msra.mxu0 0.0
  %3748 = vmatprep.subr.mxu0 0.0
  %3749 = vmatpush1.msra.mxu0 0.0
  %3750 = vmatprep.subr.mxu0 0.0
  %3751 = vmatpush1.msra.mxu0 0.0
  %3752 = vmatprep.subr.mxu0 0.0
  %3753 = vmatpush1.msra.mxu0 0.0
  %3754 = vmatprep.subr.mxu0 0.0
  %3755 = vmatpush1.msra.mxu0 0.0
  %3756 = vmatprep.subr.mxu0 0.0
  %3757 = vmatpush1.msra.mxu0 0.0
  %3758 = vmatprep.subr.mxu0 0.0
  %3759 = vmatpush1.msra.mxu0 0.0
  %3760 = vmatprep.subr.mxu0 0.0
  %3761 = vmatpush1.msra.mxu0 0.0
  %3762 = vmatprep.subr.mxu0 0.0
  %3763 = vmatpush1.msra.mxu0 0.0
  %3764 = vmatprep.subr.mxu0 0.0
  %3765 = vmatpush1.msra.mxu0 0.0
  %3766 = vmatprep.subr.mxu0 0.0
  %3767 = vmatpush1.msra.mxu0 0.0
  %3768 = vmatprep.subr.mxu0 0.0
  %3769 = vmatpush1.msra.mxu0 0.0
  %3770 = vmatprep.subr.mxu0 0.0
  %3771 = vmatpush1.msra.mxu0 0.0
  %3772 = vmatprep.subr.mxu0 0.0
  %3773 = vmatpush1.msra.mxu0 0.0
  %3774 = vmatprep.subr.mxu0 0.0
  %3775 = vmatpush1.msra.mxu0 0.0
  %3776 = vmatprep.subr.mxu0 0.0
  %3777 = vmatpush1.msra.mxu0 0.0
  %3778 = vmatprep.subr.mxu0 0.0
  %3779 = vmatpush1.msra.mxu0 0.0
  %3780 = vmatprep.subr.mxu0 0.0
  %3781 = vmatpush1.msra.mxu0 0.0
  %3782 = vmatprep.subr.mxu0 0.0
  %3783 = vmatpush1.msra.mxu0 0.0
  %3784 = vmatprep.subr.mxu0 0.0
  %3785 = vmatpush1.msra.mxu0 0.0
  %3786 = vmatprep.subr.mxu0 0.0
  %3787 = vmatpush1.msra.mxu0 0.0
  %3788 = vmatprep.subr.mxu0 0.0
  %3789 = vmatpush1.msra.mxu0 0.0
  %3790 = vmatprep.subr.mxu0 0.0
  %3791 = vmatpush1.msra.mxu0 0.0
  %3792 = vmatprep.subr.mxu0 0.0
  %3793 = vmatpush1.msra.mxu0 0.0
  %3794 = vmatprep.subr.mxu0 0.0
  %3795 = vmatpush1.msra.mxu0 0.0
  %3796 = vmatprep.mubr.f32.mxu0 0.0
  %3797 = vmatmul.mubr.f32.gmra.mrb[0].mxu0 %v3730
  %v3798 = vpop.f32.mrb[0].mxu0
  %v3799 = vadd.f32 %v3727, %v3798
  %v3800 = vpop.f32.mrb[0].mxu0
  %3801 = vdwg.mxu0
  %v3802 = vld [vmem:[%s11] sm:$0xff]
  %v3803 = vadd.f32 %v3799, %v3802
  %v3804 = vsel %vm52, %v3803, -inf
  %3805 = vmax.xlane.f32.xlu0 %v3804
  %v3806 = vpop.xlane.xlu0 %3805
  %v3807 = vsub.f32 %v3803, %v3806
  %v3808 = vmul.f32 %v3807, 1.442695
  %v3809 = vpow.pop %v3808
  %v3810 = vsel %vm52, %v3809, 0.0
  %3811 = vadd.xlane.f32.xlu0 %v3810
  %v3812 = vpop.xlane.xlu0 %3811
  %v3813 = vlog2.pop %v3812
  %v3814 = vmul.f32 %v3813, 0.6931472
  %v3815 = vadd.f32 %v3814, %v3806
  %v3816 = vsub.f32 %v3803, %v3815
  %3818 = vrot.lane.b32.xlu0 %v3816, 96
  %v3819 = vpop.permute.xlu0 %3818
  %vm3821 = vcmask 1048320
  %3822 = vst.msk [vmem:[%s12] sm:$0xff] %vm3821, %v3819
  %s3823 = scalar_lea.vmem %s2, 32
  %v3824 = vld [vmem:[%s3823] sm:$0xff]
  %v3825 = vld [vmem:[%s6] sm:$0xff]
  %v3826 = vld [vmem:[%s6 + $0x8] sm:$0xff]
  %v3827 = vld [vmem:[%s6 + $0x10] sm:$0xff]
  %v3828 = vld [vmem:[%s6 + $0x18] sm:$0xff]
  %v3829 = vld [vmem:[%s7] sm:$0xff]
  %v3830 = vld [vmem:[%s7 + $0x8] sm:$0xff]
  %v3831 = vld [vmem:[%s7 + $0x10] sm:$0xff]
  %v3832 = vld [vmem:[%s7 + $0x18] sm:$0xff]
  %3833 = vmatprep.subr.mxu0 0.0
  %3834 = vmatpush1.msra.mxu0 %v3829
  %3835 = vmatprep.subr.mxu0 0.0
  %3836 = vmatpush1.msra.mxu0 %v3830
  %3837 = vmatprep.subr.mxu0 0.0
  %3838 = vmatpush1.msra.mxu0 %v3831
  %3839 = vmatprep.subr.mxu0 0.0
  %3840 = vmatpush1.msra.mxu0 %v3832
  %3841 = vmatprep.subr.mxu0 0.0
  %3842 = vmatpush1.msra.mxu0 0.0
  %3843 = vmatprep.subr.mxu0 0.0
  %3844 = vmatpush1.msra.mxu0 0.0
  %3845 = vmatprep.subr.mxu0 0.0
  %3846 = vmatpush1.msra.mxu0 0.0
  %3847 = vmatprep.subr.mxu0 0.0
  %3848 = vmatpush1.msra.mxu0 0.0
  %3849 = vmatprep.subr.mxu0 0.0
  %3850 = vmatpush1.msra.mxu0 0.0
  %3851 = vmatprep.subr.mxu0 0.0
  %3852 = vmatpush1.msra.mxu0 0.0
  %3853 = vmatprep.subr.mxu0 0.0
  %3854 = vmatpush1.msra.mxu0 0.0
  %3855 = vmatprep.subr.mxu0 0.0
  %3856 = vmatpush1.msra.mxu0 0.0
  %3857 = vmatprep.subr.mxu0 0.0
  %3858 = vmatpush1.msra.mxu0 0.0
  %3859 = vmatprep.subr.mxu0 0.0
  %3860 = vmatpush1.msra.mxu0 0.0
  %3861 = vmatprep.subr.mxu0 0.0
  %3862 = vmatpush1.msra.mxu0 0.0
  %3863 = vmatprep.subr.mxu0 0.0
  %3864 = vmatpush1.msra.mxu0 0.0
  %3865 = vmatprep.subr.mxu0 0.0
  %3866 = vmatpush1.msra.mxu0 0.0
  %3867 = vmatprep.subr.mxu0 0.0
  %3868 = vmatpush1.msra.mxu0 0.0
  %3869 = vmatprep.subr.mxu0 0.0
  %3870 = vmatpush1.msra.mxu0 0.0
  %3871 = vmatprep.subr.mxu0 0.0
  %3872 = vmatpush1.msra.mxu0 0.0
  %3873 = vmatprep.subr.mxu0 0.0
  %3874 = vmatpush1.msra.mxu0 0.0
  %3875 = vmatprep.subr.mxu0 0.0
  %3876 = vmatpush1.msra.mxu0 0.0
  %3877 = vmatprep.subr.mxu0 0.0
  %3878 = vmatpush1.msra.mxu0 0.0
  %3879 = vmatprep.subr.mxu0 0.0
  %3880 = vmatpush1.msra.mxu0 0.0
  %3881 = vmatprep.subr.mxu0 0.0
  %3882 = vmatpush1.msra.mxu0 0.0
  %3883 = vmatprep.subr.mxu0 0.0
  %3884 = vmatpush1.msra.mxu0 0.0
  %3885 = vmatprep.subr.mxu0 0.0
  %3886 = vmatpush1.msra.mxu0 0.0
  %3887 = vmatprep.subr.mxu0 0.0
  %3888 = vmatpush1.msra.mxu0 0.0
  %3889 = vmatprep.subr.mxu0 0.0
  %3890 = vmatpush1.msra.mxu0 0.0
  %3891 = vmatprep.subr.mxu0 0.0
  %3892 = vmatpush1.msra.mxu0 0.0
  %3893 = vmatprep.subr.mxu0 0.0
  %3894 = vmatpush1.msra.mxu0 0.0
  %3895 = vmatprep.subr.mxu0 0.0
  %3896 = vmatpush1.msra.mxu0 0.0
  %3897 = vmatprep.mubr.f32.mxu0 0.0
  %3898 = vmatmul.mubr.f32.gmra.mrb[0].mxu0 %v3730
  %v3899 = vpop.f32.mrb[0].mxu0
  %v3900 = vadd.f32 0.0, %v3899
  %v3901 = vpop.f32.mrb[0].mxu0
  %3902 = vdwg.mxu0
  %v3904 = vsel %vm52, %v3824, 0
  %3906 = vmatprep.subr.mxu0 0.0
  %3907 = vmatpush1.msra.mxu0 %v3825
  %3908 = vmatprep.subr.mxu0 0.0
  %3909 = vmatpush1.msra.mxu0 %v3826
  %3910 = vmatprep.subr.mxu0 0.0
  %3911 = vmatpush1.msra.mxu0 %v3827
  %3912 = vmatprep.subr.mxu0 0.0
  %3913 = vmatpush1.msra.mxu0 %v3828
  %3914 = vmatprep.subr.mxu0 0.0
  %3915 = vmatpush1.msra.mxu0 0.0
  %3916 = vmatprep.subr.mxu0 0.0
  %3917 = vmatpush1.msra.mxu0 0.0
  %3918 = vmatprep.subr.mxu0 0.0
  %3919 = vmatpush1.msra.mxu0 0.0
  %3920 = vmatprep.subr.mxu0 0.0
  %3921 = vmatpush1.msra.mxu0 0.0
  %3922 = vmatprep.subr.mxu0 0.0
  %3923 = vmatpush1.msra.mxu0 0.0
  %3924 = vmatprep.subr.mxu0 0.0
  %3925 = vmatpush1.msra.mxu0 0.0
  %3926 = vmatprep.subr.mxu0 0.0
  %3927 = vmatpush1.msra.mxu0 0.0
  %3928 = vmatprep.subr.mxu0 0.0
  %3929 = vmatpush1.msra.mxu0 0.0
  %3930 = vmatprep.subr.mxu0 0.0
  %3931 = vmatpush1.msra.mxu0 0.0
  %3932 = vmatprep.subr.mxu0 0.0
  %3933 = vmatpush1.msra.mxu0 0.0
  %3934 = vmatprep.subr.mxu0 0.0
  %3935 = vmatpush1.msra.mxu0 0.0
  %3936 = vmatprep.subr.mxu0 0.0
  %3937 = vmatpush1.msra.mxu0 0.0
  %3938 = vmatprep.subr.mxu0 0.0
  %3939 = vmatpush1.msra.mxu0 0.0
  %3940 = vmatprep.subr.mxu0 0.0
  %3941 = vmatpush1.msra.mxu0 0.0
  %3942 = vmatprep.subr.mxu0 0.0
  %3943 = vmatpush1.msra.mxu0 0.0
  %3944 = vmatprep.subr.mxu0 0.0
  %3945 = vmatpush1.msra.mxu0 0.0
  %3946 = vmatprep.subr.mxu0 0.0
  %3947 = vmatpush1.msra.mxu0 0.0
  %3948 = vmatprep.subr.mxu0 0.0
  %3949 = vmatpush1.msra.mxu0 0.0
  %3950 = vmatprep.subr.mxu0 0.0
  %3951 = vmatpush1.msra.mxu0 0.0
  %3952 = vmatprep.subr.mxu0 0.0
  %3953 = vmatpush1.msra.mxu0 0.0
  %3954 = vmatprep.subr.mxu0 0.0
  %3955 = vmatpush1.msra.mxu0 0.0
  %3956 = vmatprep.subr.mxu0 0.0
  %3957 = vmatpush1.msra.mxu0 0.0
  %3958 = vmatprep.subr.mxu0 0.0
  %3959 = vmatpush1.msra.mxu0 0.0
  %3960 = vmatprep.subr.mxu0 0.0
  %3961 = vmatpush1.msra.mxu0 0.0
  %3962 = vmatprep.subr.mxu0 0.0
  %3963 = vmatpush1.msra.mxu0 0.0
  %3964 = vmatprep.subr.mxu0 0.0
  %3965 = vmatpush1.msra.mxu0 0.0
  %3966 = vmatprep.subr.mxu0 0.0
  %3967 = vmatpush1.msra.mxu0 0.0
  %3968 = vmatprep.subr.mxu0 0.0
  %3969 = vmatpush1.msra.mxu0 0.0
  %3970 = vmatprep.mubr.f32.mxu0 0.0
  %3971 = vmatmul.mubr.f32.gmra.mrb[0].mxu0 %v3904
  %v3972 = vpop.f32.mrb[0].mxu0
  %v3973 = vadd.f32 %v3900, %v3972
  %v3974 = vpop.f32.mrb[0].mxu0
  %3975 = vdwg.mxu0
  %v3976 = vld [vmem:[%s8] sm:$0xff]
  %v3977 = vadd.f32 %v3973, %v3976
  %v3978 = vxor.u32 %v3977, 2147483648
  %v3979 = vmul.f32 %v3978, 1.442695
  %v3980 = vpow.pop %v3979
  %v3981 = vadd.f32 %v3980, 1.0
  %v3982 = vrcp.pop %v3981
  %v3983 = vmul.f32 1.0, %v3982
  %3985 = vrot.lane.b32.xlu0 %v3977, 32
  %v3986 = vpop.permute.xlu0 %3985
  %v3988 = vmul.f32 %v3983, %v3986
  %3990 = vrot.lane.b32.xlu0 %v3988, 64
  %v3991 = vpop.permute.xlu0 %3990
  %v3993 = vadd.f32 %v3977, %v3991
  %v3994 = vtanh.pop %v3993
  %v3995 = vsub.f32 1.0, %v3983
  %3997 = vrot.lane.b32.xlu0 %v3994, 96
  %v3998 = vpop.permute.xlu0 %3997
  %v4000 = vmul.f32 %v3995, %v3998
  %v4001 = vmul.f32 %v3983, %v3478
  %v4002 = vadd.f32 %v4000, %v4001
  %4004 = vrot.lane.b32.xlu0 %v4002, 96
  %v4005 = vpop.permute.xlu0 %4004
  %v4007 = vmul.f32 %v1703, %v4005
  %v4008 = vmul.f32 %v1704, %v4005
  %v4009 = vmul.f32 %v1705, %v4005
  %v4010 = vmul.f32 %v1706, %v4005
  %v4011 = vmul.f32 %v1707, %v4005
  %v4012 = vmul.f32 %v1708, %v4005
  %v4013 = vmul.f32 %v1709, %v4005
  %v4014 = vmul.f32 %v1710, %v4005
  %v4015 = vsel %vm52, %v4007, 0.0
  %4016 = vadd.xlane.f32.xlu0 %v4015
  %v4017 = vpop.xlane.xlu0 %4016
  %v4018 = vsel %vm52, %v4008, 0.0
  %4019 = vadd.xlane.f32.xlu0 %v4018
  %v4020 = vpop.xlane.xlu0 %4019
  %v4021 = vsel %vm52, %v4009, 0.0
  %4022 = vadd.xlane.f32.xlu0 %v4021
  %v4023 = vpop.xlane.xlu0 %4022
  %v4024 = vsel %vm52, %v4010, 0.0
  %4025 = vadd.xlane.f32.xlu0 %v4024
  %v4026 = vpop.xlane.xlu0 %4025
  %v4027 = vsel %vm52, %v4011, 0.0
  %4028 = vadd.xlane.f32.xlu0 %v4027
  %v4029 = vpop.xlane.xlu0 %4028
  %v4030 = vsel %vm52, %v4012, 0.0
  %4031 = vadd.xlane.f32.xlu0 %v4030
  %v4032 = vpop.xlane.xlu0 %4031
  %v4033 = vsel %vm52, %v4013, 0.0
  %4034 = vadd.xlane.f32.xlu0 %v4033
  %v4035 = vpop.xlane.xlu0 %4034
  %v4036 = vsel %vm52, %v4014, 0.0
  %4037 = vadd.xlane.f32.xlu0 %v4036
  %v4038 = vpop.xlane.xlu0 %4037
  %v4039 = vsel %vm1939, %v4017, -1e+30
  %v4040 = vsel %vm1940, %v4020, -1e+30
  %v4041 = vsel %vm1941, %v4023, -1e+30
  %v4042 = vsel %vm1942, %v4026, -1e+30
  %v4043 = vsel %vm1943, %v4029, -1e+30
  %v4044 = vsel %vm1944, %v4032, -1e+30
  %v4045 = vsel %vm1945, %v4035, -1e+30
  %v4046 = vsel %vm1946, %v4038, -1e+30
  %v4047 = vsel %vm1955, %v4039, -inf
  %v4048 = vsel %vm1955, %v4040, -inf
  %v4049 = vsel %vm1955, %v4041, -inf
  %v4050 = vsel %vm1955, %v4042, -inf
  %v4051 = vsel %vm1955, %v4043, -inf
  %v4052 = vmax.f32 %v4047, %v4051
  %v4053 = vsel %vm1955, %v4044, -inf
  %v4054 = vmax.f32 %v4048, %v4053
  %v4055 = vsel %vm1955, %v4045, -inf
  %v4056 = vmax.f32 %v4049, %v4055
  %v4057 = vsel %vm1955, %v4046, -inf
  %v4058 = vmax.f32 %v4050, %v4057
  %v4059 = vmax.f32 %v4052, %v4054
  %v4060 = vmax.f32 %v4056, %v4058
  %v4061 = vmax.f32 %v4059, %v4060
  %v4062 = vsub.f32 %v4039, %v4061
  %v4063 = vsub.f32 %v4040, %v4061
  %v4064 = vsub.f32 %v4041, %v4061
  %v4065 = vsub.f32 %v4042, %v4061
  %v4066 = vsub.f32 %v4043, %v4061
  %v4067 = vsub.f32 %v4044, %v4061
  %v4068 = vsub.f32 %v4045, %v4061
  %v4069 = vsub.f32 %v4046, %v4061
  %v4070 = vmul.f32 %v4062, 1.442695
  %v4071 = vpow.pop %v4070
  %v4072 = vmul.f32 %v4063, 1.442695
  %v4073 = vpow.pop %v4072
  %v4074 = vmul.f32 %v4064, 1.442695
  %v4075 = vpow.pop %v4074
  %v4076 = vmul.f32 %v4065, 1.442695
  %v4077 = vpow.pop %v4076
  %v4078 = vmul.f32 %v4066, 1.442695
  %v4079 = vpow.pop %v4078
  %v4080 = vmul.f32 %v4067, 1.442695
  %v4081 = vpow.pop %v4080
  %v4082 = vmul.f32 %v4068, 1.442695
  %v4083 = vpow.pop %v4082
  %v4084 = vmul.f32 %v4069, 1.442695
  %v4085 = vpow.pop %v4084
  %v4086 = vsel %vm1955, %v4071, 0.0
  %v4087 = vsel %vm1955, %v4073, 0.0
  %v4088 = vadd.f32 %v4086, %v4087
  %v4089 = vsel %vm1955, %v4075, 0.0
  %v4090 = vadd.f32 %v4088, %v4089
  %v4091 = vsel %vm1955, %v4077, 0.0
  %v4092 = vadd.f32 %v4090, %v4091
  %v4093 = vsel %vm1955, %v4079, 0.0
  %v4094 = vadd.f32 %v4092, %v4093
  %v4095 = vsel %vm1955, %v4081, 0.0
  %v4096 = vadd.f32 %v4094, %v4095
  %v4097 = vsel %vm1955, %v4083, 0.0
  %v4098 = vadd.f32 %v4096, %v4097
  %v4099 = vsel %vm1955, %v4085, 0.0
  %v4100 = vadd.f32 %v4098, %v4099
  %v4101 = vrcp.pop %v4100
  %v4102 = vmul.f32 %v4071, %v4101
  %v4103 = vmul.f32 %v4073, %v4101
  %v4104 = vmul.f32 %v4075, %v4101
  %v4105 = vmul.f32 %v4077, %v4101
  %v4106 = vmul.f32 %v4079, %v4101
  %v4107 = vmul.f32 %v4081, %v4101
  %v4108 = vmul.f32 %v4083, %v4101
  %v4109 = vmul.f32 %v4085, %v4101
  %4111 = vset.pattern.permute.xlu0 0
  %4112 = vperm.xlu0 %4111, %v4102
  %v4113 = vpop.permute.xlu0 %4112
  %4116 = vset.pattern.permute.xlu0 0
  %4117 = vperm.xlu0 %4116, %v4103
  %v4118 = vpop.permute.xlu0 %4117
  %4121 = vset.pattern.permute.xlu0 0
  %4122 = vperm.xlu0 %4121, %v4104
  %v4123 = vpop.permute.xlu0 %4122
  %4126 = vset.pattern.permute.xlu0 0
  %4127 = vperm.xlu0 %4126, %v4105
  %v4128 = vpop.permute.xlu0 %4127
  %4131 = vset.pattern.permute.xlu0 0
  %4132 = vperm.xlu0 %4131, %v4106
  %v4133 = vpop.permute.xlu0 %4132
  %4136 = vset.pattern.permute.xlu0 0
  %4137 = vperm.xlu0 %4136, %v4107
  %v4138 = vpop.permute.xlu0 %4137
  %4141 = vset.pattern.permute.xlu0 0
  %4142 = vperm.xlu0 %4141, %v4108
  %v4143 = vpop.permute.xlu0 %4142
  %4146 = vset.pattern.permute.xlu0 0
  %4147 = vperm.xlu0 %4146, %v4109
  %v4148 = vpop.permute.xlu0 %4147
  %v4150 = vmul.f32 %v4113, %v1703
  %v4151 = vmul.f32 %v4118, %v1704
  %v4152 = vmul.f32 %v4123, %v1705
  %v4153 = vmul.f32 %v4128, %v1706
  %v4154 = vmul.f32 %v4133, %v1707
  %v4155 = vmul.f32 %v4138, %v1708
  %v4156 = vmul.f32 %v4143, %v1709
  %v4157 = vmul.f32 %v4148, %v1710
  %v4158 = vsel %vm52, %v4150, 0.0
  %v4159 = vsel %vm52, %v4151, 0.0
  %v4160 = vadd.f32 %v4158, %v4159
  %v4161 = vsel %vm52, %v4152, 0.0
  %v4162 = vadd.f32 %v4160, %v4161
  %v4163 = vsel %vm52, %v4153, 0.0
  %v4164 = vadd.f32 %v4162, %v4163
  %v4165 = vsel %vm52, %v4154, 0.0
  %v4166 = vadd.f32 %v4164, %v4165
  %v4167 = vsel %vm52, %v4155, 0.0
  %v4168 = vadd.f32 %v4166, %v4167
  %v4169 = vsel %vm52, %v4156, 0.0
  %v4170 = vadd.f32 %v4168, %v4169
  %v4171 = vsel %vm52, %v4157, 0.0
  %v4172 = vadd.f32 %v4170, %v4171
  %v4173 = vld [vmem:[%s9] sm:$0xff]
  %v4174 = vld [vmem:[%s9 + $0x8] sm:$0xff]
  %v4175 = vld [vmem:[%s9 + $0x10] sm:$0xff]
  %v4176 = vld [vmem:[%s9 + $0x18] sm:$0xff]
  %v4177 = vld [vmem:[%s10] sm:$0xff]
  %v4178 = vld [vmem:[%s10 + $0x8] sm:$0xff]
  %v4179 = vld [vmem:[%s10 + $0x10] sm:$0xff]
  %v4180 = vld [vmem:[%s10 + $0x18] sm:$0xff]
  %v4182 = vsel %vm52, %v4172, 0
  %4184 = vmatprep.subr.mxu0 0.0
  %4185 = vmatpush1.msra.mxu0 %v4177
  %4186 = vmatprep.subr.mxu0 0.0
  %4187 = vmatpush1.msra.mxu0 %v4178
  %4188 = vmatprep.subr.mxu0 0.0
  %4189 = vmatpush1.msra.mxu0 %v4179
  %4190 = vmatprep.subr.mxu0 0.0
  %4191 = vmatpush1.msra.mxu0 %v4180
  %4192 = vmatprep.subr.mxu0 0.0
  %4193 = vmatpush1.msra.mxu0 0.0
  %4194 = vmatprep.subr.mxu0 0.0
  %4195 = vmatpush1.msra.mxu0 0.0
  %4196 = vmatprep.subr.mxu0 0.0
  %4197 = vmatpush1.msra.mxu0 0.0
  %4198 = vmatprep.subr.mxu0 0.0
  %4199 = vmatpush1.msra.mxu0 0.0
  %4200 = vmatprep.subr.mxu0 0.0
  %4201 = vmatpush1.msra.mxu0 0.0
  %4202 = vmatprep.subr.mxu0 0.0
  %4203 = vmatpush1.msra.mxu0 0.0
  %4204 = vmatprep.subr.mxu0 0.0
  %4205 = vmatpush1.msra.mxu0 0.0
  %4206 = vmatprep.subr.mxu0 0.0
  %4207 = vmatpush1.msra.mxu0 0.0
  %4208 = vmatprep.subr.mxu0 0.0
  %4209 = vmatpush1.msra.mxu0 0.0
  %4210 = vmatprep.subr.mxu0 0.0
  %4211 = vmatpush1.msra.mxu0 0.0
  %4212 = vmatprep.subr.mxu0 0.0
  %4213 = vmatpush1.msra.mxu0 0.0
  %4214 = vmatprep.subr.mxu0 0.0
  %4215 = vmatpush1.msra.mxu0 0.0
  %4216 = vmatprep.subr.mxu0 0.0
  %4217 = vmatpush1.msra.mxu0 0.0
  %4218 = vmatprep.subr.mxu0 0.0
  %4219 = vmatpush1.msra.mxu0 0.0
  %4220 = vmatprep.subr.mxu0 0.0
  %4221 = vmatpush1.msra.mxu0 0.0
  %4222 = vmatprep.subr.mxu0 0.0
  %4223 = vmatpush1.msra.mxu0 0.0
  %4224 = vmatprep.subr.mxu0 0.0
  %4225 = vmatpush1.msra.mxu0 0.0
  %4226 = vmatprep.subr.mxu0 0.0
  %4227 = vmatpush1.msra.mxu0 0.0
  %4228 = vmatprep.subr.mxu0 0.0
  %4229 = vmatpush1.msra.mxu0 0.0
  %4230 = vmatprep.subr.mxu0 0.0
  %4231 = vmatpush1.msra.mxu0 0.0
  %4232 = vmatprep.subr.mxu0 0.0
  %4233 = vmatpush1.msra.mxu0 0.0
  %4234 = vmatprep.subr.mxu0 0.0
  %4235 = vmatpush1.msra.mxu0 0.0
  %4236 = vmatprep.subr.mxu0 0.0
  %4237 = vmatpush1.msra.mxu0 0.0
  %4238 = vmatprep.subr.mxu0 0.0
  %4239 = vmatpush1.msra.mxu0 0.0
  %4240 = vmatprep.subr.mxu0 0.0
  %4241 = vmatpush1.msra.mxu0 0.0
  %4242 = vmatprep.subr.mxu0 0.0
  %4243 = vmatpush1.msra.mxu0 0.0
  %4244 = vmatprep.subr.mxu0 0.0
  %4245 = vmatpush1.msra.mxu0 0.0
  %4246 = vmatprep.subr.mxu0 0.0
  %4247 = vmatpush1.msra.mxu0 0.0
  %4248 = vmatprep.mubr.f32.mxu0 0.0
  %4249 = vmatmul.mubr.f32.gmra.mrb[0].mxu0 %v4182
  %v4250 = vpop.f32.mrb[0].mxu0
  %v4251 = vadd.f32 0.0, %v4250
  %v4252 = vpop.f32.mrb[0].mxu0
  %4253 = vdwg.mxu0
  %v4254 = vsel %vm52, %v4005, 0
  %4256 = vmatprep.subr.mxu0 0.0
  %4257 = vmatpush1.msra.mxu0 %v4173
  %4258 = vmatprep.subr.mxu0 0.0
  %4259 = vmatpush1.msra.mxu0 %v4174
  %4260 = vmatprep.subr.mxu0 0.0
  %4261 = vmatpush1.msra.mxu0 %v4175
  %4262 = vmatprep.subr.mxu0 0.0
  %4263 = vmatpush1.msra.mxu0 %v4176
  %4264 = vmatprep.subr.mxu0 0.0
  %4265 = vmatpush1.msra.mxu0 0.0
  %4266 = vmatprep.subr.mxu0 0.0
  %4267 = vmatpush1.msra.mxu0 0.0
  %4268 = vmatprep.subr.mxu0 0.0
  %4269 = vmatpush1.msra.mxu0 0.0
  %4270 = vmatprep.subr.mxu0 0.0
  %4271 = vmatpush1.msra.mxu0 0.0
  %4272 = vmatprep.subr.mxu0 0.0
  %4273 = vmatpush1.msra.mxu0 0.0
  %4274 = vmatprep.subr.mxu0 0.0
  %4275 = vmatpush1.msra.mxu0 0.0
  %4276 = vmatprep.subr.mxu0 0.0
  %4277 = vmatpush1.msra.mxu0 0.0
  %4278 = vmatprep.subr.mxu0 0.0
  %4279 = vmatpush1.msra.mxu0 0.0
  %4280 = vmatprep.subr.mxu0 0.0
  %4281 = vmatpush1.msra.mxu0 0.0
  %4282 = vmatprep.subr.mxu0 0.0
  %4283 = vmatpush1.msra.mxu0 0.0
  %4284 = vmatprep.subr.mxu0 0.0
  %4285 = vmatpush1.msra.mxu0 0.0
  %4286 = vmatprep.subr.mxu0 0.0
  %4287 = vmatpush1.msra.mxu0 0.0
  %4288 = vmatprep.subr.mxu0 0.0
  %4289 = vmatpush1.msra.mxu0 0.0
  %4290 = vmatprep.subr.mxu0 0.0
  %4291 = vmatpush1.msra.mxu0 0.0
  %4292 = vmatprep.subr.mxu0 0.0
  %4293 = vmatpush1.msra.mxu0 0.0
  %4294 = vmatprep.subr.mxu0 0.0
  %4295 = vmatpush1.msra.mxu0 0.0
  %4296 = vmatprep.subr.mxu0 0.0
  %4297 = vmatpush1.msra.mxu0 0.0
  %4298 = vmatprep.subr.mxu0 0.0
  %4299 = vmatpush1.msra.mxu0 0.0
  %4300 = vmatprep.subr.mxu0 0.0
  %4301 = vmatpush1.msra.mxu0 0.0
  %4302 = vmatprep.subr.mxu0 0.0
  %4303 = vmatpush1.msra.mxu0 0.0
  %4304 = vmatprep.subr.mxu0 0.0
  %4305 = vmatpush1.msra.mxu0 0.0
  %4306 = vmatprep.subr.mxu0 0.0
  %4307 = vmatpush1.msra.mxu0 0.0
  %4308 = vmatprep.subr.mxu0 0.0
  %4309 = vmatpush1.msra.mxu0 0.0
  %4310 = vmatprep.subr.mxu0 0.0
  %4311 = vmatpush1.msra.mxu0 0.0
  %4312 = vmatprep.subr.mxu0 0.0
  %4313 = vmatpush1.msra.mxu0 0.0
  %4314 = vmatprep.subr.mxu0 0.0
  %4315 = vmatpush1.msra.mxu0 0.0
  %4316 = vmatprep.subr.mxu0 0.0
  %4317 = vmatpush1.msra.mxu0 0.0
  %4318 = vmatprep.subr.mxu0 0.0
  %4319 = vmatpush1.msra.mxu0 0.0
  %4320 = vmatprep.mubr.f32.mxu0 0.0
  %4321 = vmatmul.mubr.f32.gmra.mrb[0].mxu0 %v4254
  %v4322 = vpop.f32.mrb[0].mxu0
  %v4323 = vadd.f32 %v4251, %v4322
  %v4324 = vpop.f32.mrb[0].mxu0
  %4325 = vdwg.mxu0
  %v4326 = vld [vmem:[%s11] sm:$0xff]
  %v4327 = vadd.f32 %v4323, %v4326
  %v4328 = vsel %vm52, %v4327, -inf
  %4329 = vmax.xlane.f32.xlu0 %v4328
  %v4330 = vpop.xlane.xlu0 %4329
  %v4331 = vsub.f32 %v4327, %v4330
  %v4332 = vmul.f32 %v4331, 1.442695
  %v4333 = vpow.pop %v4332
  %v4334 = vsel %vm52, %v4333, 0.0
  %4335 = vadd.xlane.f32.xlu0 %v4334
  %v4336 = vpop.xlane.xlu0 %4335
  %v4337 = vlog2.pop %v4336
  %v4338 = vmul.f32 %v4337, 0.6931472
  %v4339 = vadd.f32 %v4338, %v4330
  %v4340 = vsub.f32 %v4327, %v4339
  %4341 = vst.msk [vmem:[%s12 + $0x8] sm:$0xff] %vm52, %v4340
  %s4342 = scalar_lea.vmem %s2, 40
  %v4343 = vld [vmem:[%s4342] sm:$0xff]
  %v4344 = vld [vmem:[%s6] sm:$0xff]
  %v4345 = vld [vmem:[%s6 + $0x8] sm:$0xff]
  %v4346 = vld [vmem:[%s6 + $0x10] sm:$0xff]
  %v4347 = vld [vmem:[%s6 + $0x18] sm:$0xff]
  %v4348 = vld [vmem:[%s7] sm:$0xff]
  %v4349 = vld [vmem:[%s7 + $0x8] sm:$0xff]
  %v4350 = vld [vmem:[%s7 + $0x10] sm:$0xff]
  %v4351 = vld [vmem:[%s7 + $0x18] sm:$0xff]
  %4352 = vmatprep.subr.mxu0 0.0
  %4353 = vmatpush1.msra.mxu0 %v4348
  %4354 = vmatprep.subr.mxu0 0.0
  %4355 = vmatpush1.msra.mxu0 %v4349
  %4356 = vmatprep.subr.mxu0 0.0
  %4357 = vmatpush1.msra.mxu0 %v4350
  %4358 = vmatprep.subr.mxu0 0.0
  %4359 = vmatpush1.msra.mxu0 %v4351
  %4360 = vmatprep.subr.mxu0 0.0
  %4361 = vmatpush1.msra.mxu0 0.0
  %4362 = vmatprep.subr.mxu0 0.0
  %4363 = vmatpush1.msra.mxu0 0.0
  %4364 = vmatprep.subr.mxu0 0.0
  %4365 = vmatpush1.msra.mxu0 0.0
  %4366 = vmatprep.subr.mxu0 0.0
  %4367 = vmatpush1.msra.mxu0 0.0
  %4368 = vmatprep.subr.mxu0 0.0
  %4369 = vmatpush1.msra.mxu0 0.0
  %4370 = vmatprep.subr.mxu0 0.0
  %4371 = vmatpush1.msra.mxu0 0.0
  %4372 = vmatprep.subr.mxu0 0.0
  %4373 = vmatpush1.msra.mxu0 0.0
  %4374 = vmatprep.subr.mxu0 0.0
  %4375 = vmatpush1.msra.mxu0 0.0
  %4376 = vmatprep.subr.mxu0 0.0
  %4377 = vmatpush1.msra.mxu0 0.0
  %4378 = vmatprep.subr.mxu0 0.0
  %4379 = vmatpush1.msra.mxu0 0.0
  %4380 = vmatprep.subr.mxu0 0.0
  %4381 = vmatpush1.msra.mxu0 0.0
  %4382 = vmatprep.subr.mxu0 0.0
  %4383 = vmatpush1.msra.mxu0 0.0
  %4384 = vmatprep.subr.mxu0 0.0
  %4385 = vmatpush1.msra.mxu0 0.0
  %4386 = vmatprep.subr.mxu0 0.0
  %4387 = vmatpush1.msra.mxu0 0.0
  %4388 = vmatprep.subr.mxu0 0.0
  %4389 = vmatpush1.msra.mxu0 0.0
  %4390 = vmatprep.subr.mxu0 0.0
  %4391 = vmatpush1.msra.mxu0 0.0
  %4392 = vmatprep.subr.mxu0 0.0
  %4393 = vmatpush1.msra.mxu0 0.0
  %4394 = vmatprep.subr.mxu0 0.0
  %4395 = vmatpush1.msra.mxu0 0.0
  %4396 = vmatprep.subr.mxu0 0.0
  %4397 = vmatpush1.msra.mxu0 0.0
  %4398 = vmatprep.subr.mxu0 0.0
  %4399 = vmatpush1.msra.mxu0 0.0
  %4400 = vmatprep.subr.mxu0 0.0
  %4401 = vmatpush1.msra.mxu0 0.0
  %4402 = vmatprep.subr.mxu0 0.0
  %4403 = vmatpush1.msra.mxu0 0.0
  %4404 = vmatprep.subr.mxu0 0.0
  %4405 = vmatpush1.msra.mxu0 0.0
  %4406 = vmatprep.subr.mxu0 0.0
  %4407 = vmatpush1.msra.mxu0 0.0
  %4408 = vmatprep.subr.mxu0 0.0
  %4409 = vmatpush1.msra.mxu0 0.0
  %4410 = vmatprep.subr.mxu0 0.0
  %4411 = vmatpush1.msra.mxu0 0.0
  %4412 = vmatprep.subr.mxu0 0.0
  %4413 = vmatpush1.msra.mxu0 0.0
  %4414 = vmatprep.subr.mxu0 0.0
  %4415 = vmatpush1.msra.mxu0 0.0
  %4416 = vmatprep.mubr.f32.mxu0 0.0
  %4417 = vmatmul.mubr.f32.gmra.mrb[0].mxu0 %v4254
  %v4418 = vpop.f32.mrb[0].mxu0
  %v4419 = vadd.f32 0.0, %v4418
  %v4420 = vpop.f32.mrb[0].mxu0
  %4421 = vdwg.mxu0
  %v4423 = vsel %vm52, %v4343, 0
  %4425 = vmatprep.subr.mxu0 0.0
  %4426 = vmatpush1.msra.mxu0 %v4344
  %4427 = vmatprep.subr.mxu0 0.0
  %4428 = vmatpush1.msra.mxu0 %v4345
  %4429 = vmatprep.subr.mxu0 0.0
  %4430 = vmatpush1.msra.mxu0 %v4346
  %4431 = vmatprep.subr.mxu0 0.0
  %4432 = vmatpush1.msra.mxu0 %v4347
  %4433 = vmatprep.subr.mxu0 0.0
  %4434 = vmatpush1.msra.mxu0 0.0
  %4435 = vmatprep.subr.mxu0 0.0
  %4436 = vmatpush1.msra.mxu0 0.0
  %4437 = vmatprep.subr.mxu0 0.0
  %4438 = vmatpush1.msra.mxu0 0.0
  %4439 = vmatprep.subr.mxu0 0.0
  %4440 = vmatpush1.msra.mxu0 0.0
  %4441 = vmatprep.subr.mxu0 0.0
  %4442 = vmatpush1.msra.mxu0 0.0
  %4443 = vmatprep.subr.mxu0 0.0
  %4444 = vmatpush1.msra.mxu0 0.0
  %4445 = vmatprep.subr.mxu0 0.0
  %4446 = vmatpush1.msra.mxu0 0.0
  %4447 = vmatprep.subr.mxu0 0.0
  %4448 = vmatpush1.msra.mxu0 0.0
  %4449 = vmatprep.subr.mxu0 0.0
  %4450 = vmatpush1.msra.mxu0 0.0
  %4451 = vmatprep.subr.mxu0 0.0
  %4452 = vmatpush1.msra.mxu0 0.0
  %4453 = vmatprep.subr.mxu0 0.0
  %4454 = vmatpush1.msra.mxu0 0.0
  %4455 = vmatprep.subr.mxu0 0.0
  %4456 = vmatpush1.msra.mxu0 0.0
  %4457 = vmatprep.subr.mxu0 0.0
  %4458 = vmatpush1.msra.mxu0 0.0
  %4459 = vmatprep.subr.mxu0 0.0
  %4460 = vmatpush1.msra.mxu0 0.0
  %4461 = vmatprep.subr.mxu0 0.0
  %4462 = vmatpush1.msra.mxu0 0.0
  %4463 = vmatprep.subr.mxu0 0.0
  %4464 = vmatpush1.msra.mxu0 0.0
  %4465 = vmatprep.subr.mxu0 0.0
  %4466 = vmatpush1.msra.mxu0 0.0
  %4467 = vmatprep.subr.mxu0 0.0
  %4468 = vmatpush1.msra.mxu0 0.0
  %4469 = vmatprep.subr.mxu0 0.0
  %4470 = vmatpush1.msra.mxu0 0.0
  %4471 = vmatprep.subr.mxu0 0.0
  %4472 = vmatpush1.msra.mxu0 0.0
  %4473 = vmatprep.subr.mxu0 0.0
  %4474 = vmatpush1.msra.mxu0 0.0
  %4475 = vmatprep.subr.mxu0 0.0
  %4476 = vmatpush1.msra.mxu0 0.0
  %4477 = vmatprep.subr.mxu0 0.0
  %4478 = vmatpush1.msra.mxu0 0.0
  %4479 = vmatprep.subr.mxu0 0.0
  %4480 = vmatpush1.msra.mxu0 0.0
  %4481 = vmatprep.subr.mxu0 0.0
  %4482 = vmatpush1.msra.mxu0 0.0
  %4483 = vmatprep.subr.mxu0 0.0
  %4484 = vmatpush1.msra.mxu0 0.0
  %4485 = vmatprep.subr.mxu0 0.0
  %4486 = vmatpush1.msra.mxu0 0.0
  %4487 = vmatprep.subr.mxu0 0.0
  %4488 = vmatpush1.msra.mxu0 0.0
  %4489 = vmatprep.mubr.f32.mxu0 0.0
  %4490 = vmatmul.mubr.f32.gmra.mrb[0].mxu0 %v4423
  %v4491 = vpop.f32.mrb[0].mxu0
  %v4492 = vadd.f32 %v4419, %v4491
  %v4493 = vpop.f32.mrb[0].mxu0
  %4494 = vdwg.mxu0
  %v4495 = vld [vmem:[%s8] sm:$0xff]
  %v4496 = vadd.f32 %v4492, %v4495
  %v4497 = vxor.u32 %v4496, 2147483648
  %v4498 = vmul.f32 %v4497, 1.442695
  %v4499 = vpow.pop %v4498
  %v4500 = vadd.f32 %v4499, 1.0
  %v4501 = vrcp.pop %v4500
  %v4502 = vmul.f32 1.0, %v4501
  %4504 = vrot.lane.b32.xlu0 %v4496, 32
  %v4505 = vpop.permute.xlu0 %4504
  %v4507 = vmul.f32 %v4502, %v4505
  %4509 = vrot.lane.b32.xlu0 %v4507, 64
  %v4510 = vpop.permute.xlu0 %4509
  %v4512 = vadd.f32 %v4496, %v4510
  %v4513 = vtanh.pop %v4512
  %v4514 = vsub.f32 1.0, %v4502
  %4516 = vrot.lane.b32.xlu0 %v4513, 96
  %v4517 = vpop.permute.xlu0 %4516
  %v4519 = vmul.f32 %v4514, %v4517
  %v4520 = vmul.f32 %v4502, %v4002
  %v4521 = vadd.f32 %v4519, %v4520
  %4523 = vrot.lane.b32.xlu0 %v4521, 96
  %v4524 = vpop.permute.xlu0 %4523
  %v4526 = vmul.f32 %v1703, %v4524
  %v4527 = vmul.f32 %v1704, %v4524
  %v4528 = vmul.f32 %v1705, %v4524
  %v4529 = vmul.f32 %v1706, %v4524
  %v4530 = vmul.f32 %v1707, %v4524
  %v4531 = vmul.f32 %v1708, %v4524
  %v4532 = vmul.f32 %v1709, %v4524
  %v4533 = vmul.f32 %v1710, %v4524
  %v4534 = vsel %vm52, %v4526, 0.0
  %4535 = vadd.xlane.f32.xlu0 %v4534
  %v4536 = vpop.xlane.xlu0 %4535
  %v4537 = vsel %vm52, %v4527, 0.0
  %4538 = vadd.xlane.f32.xlu0 %v4537
  %v4539 = vpop.xlane.xlu0 %4538
  %v4540 = vsel %vm52, %v4528, 0.0
  %4541 = vadd.xlane.f32.xlu0 %v4540
  %v4542 = vpop.xlane.xlu0 %4541
  %v4543 = vsel %vm52, %v4529, 0.0
  %4544 = vadd.xlane.f32.xlu0 %v4543
  %v4545 = vpop.xlane.xlu0 %4544
  %v4546 = vsel %vm52, %v4530, 0.0
  %4547 = vadd.xlane.f32.xlu0 %v4546
  %v4548 = vpop.xlane.xlu0 %4547
  %v4549 = vsel %vm52, %v4531, 0.0
  %4550 = vadd.xlane.f32.xlu0 %v4549
  %v4551 = vpop.xlane.xlu0 %4550
  %v4552 = vsel %vm52, %v4532, 0.0
  %4553 = vadd.xlane.f32.xlu0 %v4552
  %v4554 = vpop.xlane.xlu0 %4553
  %v4555 = vsel %vm52, %v4533, 0.0
  %4556 = vadd.xlane.f32.xlu0 %v4555
  %v4557 = vpop.xlane.xlu0 %4556
  %v4558 = vsel %vm1939, %v4536, -1e+30
  %v4559 = vsel %vm1940, %v4539, -1e+30
  %v4560 = vsel %vm1941, %v4542, -1e+30
  %v4561 = vsel %vm1942, %v4545, -1e+30
  %v4562 = vsel %vm1943, %v4548, -1e+30
  %v4563 = vsel %vm1944, %v4551, -1e+30
  %v4564 = vsel %vm1945, %v4554, -1e+30
  %v4565 = vsel %vm1946, %v4557, -1e+30
  %v4566 = vsel %vm1955, %v4558, -inf
  %v4567 = vsel %vm1955, %v4559, -inf
  %v4568 = vsel %vm1955, %v4560, -inf
  %v4569 = vsel %vm1955, %v4561, -inf
  %v4570 = vsel %vm1955, %v4562, -inf
  %v4571 = vmax.f32 %v4566, %v4570
  %v4572 = vsel %vm1955, %v4563, -inf
  %v4573 = vmax.f32 %v4567, %v4572
  %v4574 = vsel %vm1955, %v4564, -inf
  %v4575 = vmax.f32 %v4568, %v4574
  %v4576 = vsel %vm1955, %v4565, -inf
  %v4577 = vmax.f32 %v4569, %v4576
  %v4578 = vmax.f32 %v4571, %v4573
  %v4579 = vmax.f32 %v4575, %v4577
  %v4580 = vmax.f32 %v4578, %v4579
  %v4581 = vsub.f32 %v4558, %v4580
  %v4582 = vsub.f32 %v4559, %v4580
  %v4583 = vsub.f32 %v4560, %v4580
  %v4584 = vsub.f32 %v4561, %v4580
  %v4585 = vsub.f32 %v4562, %v4580
  %v4586 = vsub.f32 %v4563, %v4580
  %v4587 = vsub.f32 %v4564, %v4580
  %v4588 = vsub.f32 %v4565, %v4580
  %v4589 = vmul.f32 %v4581, 1.442695
  %v4590 = vpow.pop %v4589
  %v4591 = vmul.f32 %v4582, 1.442695
  %v4592 = vpow.pop %v4591
  %v4593 = vmul.f32 %v4583, 1.442695
  %v4594 = vpow.pop %v4593
  %v4595 = vmul.f32 %v4584, 1.442695
  %v4596 = vpow.pop %v4595
  %v4597 = vmul.f32 %v4585, 1.442695
  %v4598 = vpow.pop %v4597
  %v4599 = vmul.f32 %v4586, 1.442695
  %v4600 = vpow.pop %v4599
  %v4601 = vmul.f32 %v4587, 1.442695
  %v4602 = vpow.pop %v4601
  %v4603 = vmul.f32 %v4588, 1.442695
  %v4604 = vpow.pop %v4603
  %v4605 = vsel %vm1955, %v4590, 0.0
  %v4606 = vsel %vm1955, %v4592, 0.0
  %v4607 = vadd.f32 %v4605, %v4606
  %v4608 = vsel %vm1955, %v4594, 0.0
  %v4609 = vadd.f32 %v4607, %v4608
  %v4610 = vsel %vm1955, %v4596, 0.0
  %v4611 = vadd.f32 %v4609, %v4610
  %v4612 = vsel %vm1955, %v4598, 0.0
  %v4613 = vadd.f32 %v4611, %v4612
  %v4614 = vsel %vm1955, %v4600, 0.0
  %v4615 = vadd.f32 %v4613, %v4614
  %v4616 = vsel %vm1955, %v4602, 0.0
  %v4617 = vadd.f32 %v4615, %v4616
  %v4618 = vsel %vm1955, %v4604, 0.0
  %v4619 = vadd.f32 %v4617, %v4618
  %v4620 = vrcp.pop %v4619
  %v4621 = vmul.f32 %v4590, %v4620
  %v4622 = vmul.f32 %v4592, %v4620
  %v4623 = vmul.f32 %v4594, %v4620
  %v4624 = vmul.f32 %v4596, %v4620
  %v4625 = vmul.f32 %v4598, %v4620
  %v4626 = vmul.f32 %v4600, %v4620
  %v4627 = vmul.f32 %v4602, %v4620
  %v4628 = vmul.f32 %v4604, %v4620
  %4630 = vset.pattern.permute.xlu0 0
  %4631 = vperm.xlu0 %4630, %v4621
  %v4632 = vpop.permute.xlu0 %4631
  %4635 = vset.pattern.permute.xlu0 0
  %4636 = vperm.xlu0 %4635, %v4622
  %v4637 = vpop.permute.xlu0 %4636
  %4640 = vset.pattern.permute.xlu0 0
  %4641 = vperm.xlu0 %4640, %v4623
  %v4642 = vpop.permute.xlu0 %4641
  %4645 = vset.pattern.permute.xlu0 0
  %4646 = vperm.xlu0 %4645, %v4624
  %v4647 = vpop.permute.xlu0 %4646
  %4650 = vset.pattern.permute.xlu0 0
  %4651 = vperm.xlu0 %4650, %v4625
  %v4652 = vpop.permute.xlu0 %4651
  %4655 = vset.pattern.permute.xlu0 0
  %4656 = vperm.xlu0 %4655, %v4626
  %v4657 = vpop.permute.xlu0 %4656
  %4660 = vset.pattern.permute.xlu0 0
  %4661 = vperm.xlu0 %4660, %v4627
  %v4662 = vpop.permute.xlu0 %4661
  %4665 = vset.pattern.permute.xlu0 0
  %4666 = vperm.xlu0 %4665, %v4628
  %v4667 = vpop.permute.xlu0 %4666
  %v4669 = vmul.f32 %v4632, %v1703
  %v4670 = vmul.f32 %v4637, %v1704
  %v4671 = vmul.f32 %v4642, %v1705
  %v4672 = vmul.f32 %v4647, %v1706
  %v4673 = vmul.f32 %v4652, %v1707
  %v4674 = vmul.f32 %v4657, %v1708
  %v4675 = vmul.f32 %v4662, %v1709
  %v4676 = vmul.f32 %v4667, %v1710
  %v4677 = vsel %vm52, %v4669, 0.0
  %v4678 = vsel %vm52, %v4670, 0.0
  %v4679 = vadd.f32 %v4677, %v4678
  %v4680 = vsel %vm52, %v4671, 0.0
  %v4681 = vadd.f32 %v4679, %v4680
  %v4682 = vsel %vm52, %v4672, 0.0
  %v4683 = vadd.f32 %v4681, %v4682
  %v4684 = vsel %vm52, %v4673, 0.0
  %v4685 = vadd.f32 %v4683, %v4684
  %v4686 = vsel %vm52, %v4674, 0.0
  %v4687 = vadd.f32 %v4685, %v4686
  %v4688 = vsel %vm52, %v4675, 0.0
  %v4689 = vadd.f32 %v4687, %v4688
  %v4690 = vsel %vm52, %v4676, 0.0
  %v4691 = vadd.f32 %v4689, %v4690
  %v4692 = vld [vmem:[%s9] sm:$0xff]
  %v4693 = vld [vmem:[%s9 + $0x8] sm:$0xff]
  %v4694 = vld [vmem:[%s9 + $0x10] sm:$0xff]
  %v4695 = vld [vmem:[%s9 + $0x18] sm:$0xff]
  %v4696 = vld [vmem:[%s10] sm:$0xff]
  %v4697 = vld [vmem:[%s10 + $0x8] sm:$0xff]
  %v4698 = vld [vmem:[%s10 + $0x10] sm:$0xff]
  %v4699 = vld [vmem:[%s10 + $0x18] sm:$0xff]
  %v4701 = vsel %vm52, %v4691, 0
  %4703 = vmatprep.subr.mxu0 0.0
  %4704 = vmatpush1.msra.mxu0 %v4696
  %4705 = vmatprep.subr.mxu0 0.0
  %4706 = vmatpush1.msra.mxu0 %v4697
  %4707 = vmatprep.subr.mxu0 0.0
  %4708 = vmatpush1.msra.mxu0 %v4698
  %4709 = vmatprep.subr.mxu0 0.0
  %4710 = vmatpush1.msra.mxu0 %v4699
  %4711 = vmatprep.subr.mxu0 0.0
  %4712 = vmatpush1.msra.mxu0 0.0
  %4713 = vmatprep.subr.mxu0 0.0
  %4714 = vmatpush1.msra.mxu0 0.0
  %4715 = vmatprep.subr.mxu0 0.0
  %4716 = vmatpush1.msra.mxu0 0.0
  %4717 = vmatprep.subr.mxu0 0.0
  %4718 = vmatpush1.msra.mxu0 0.0
  %4719 = vmatprep.subr.mxu0 0.0
  %4720 = vmatpush1.msra.mxu0 0.0
  %4721 = vmatprep.subr.mxu0 0.0
  %4722 = vmatpush1.msra.mxu0 0.0
  %4723 = vmatprep.subr.mxu0 0.0
  %4724 = vmatpush1.msra.mxu0 0.0
  %4725 = vmatprep.subr.mxu0 0.0
  %4726 = vmatpush1.msra.mxu0 0.0
  %4727 = vmatprep.subr.mxu0 0.0
  %4728 = vmatpush1.msra.mxu0 0.0
  %4729 = vmatprep.subr.mxu0 0.0
  %4730 = vmatpush1.msra.mxu0 0.0
  %4731 = vmatprep.subr.mxu0 0.0
  %4732 = vmatpush1.msra.mxu0 0.0
  %4733 = vmatprep.subr.mxu0 0.0
  %4734 = vmatpush1.msra.mxu0 0.0
  %4735 = vmatprep.subr.mxu0 0.0
  %4736 = vmatpush1.msra.mxu0 0.0
  %4737 = vmatprep.subr.mxu0 0.0
  %4738 = vmatpush1.msra.mxu0 0.0
  %4739 = vmatprep.subr.mxu0 0.0
  %4740 = vmatpush1.msra.mxu0 0.0
  %4741 = vmatprep.subr.mxu0 0.0
  %4742 = vmatpush1.msra.mxu0 0.0
  %4743 = vmatprep.subr.mxu0 0.0
  %4744 = vmatpush1.msra.mxu0 0.0
  %4745 = vmatprep.subr.mxu0 0.0
  %4746 = vmatpush1.msra.mxu0 0.0
  %4747 = vmatprep.subr.mxu0 0.0
  %4748 = vmatpush1.msra.mxu0 0.0
  %4749 = vmatprep.subr.mxu0 0.0
  %4750 = vmatpush1.msra.mxu0 0.0
  %4751 = vmatprep.subr.mxu0 0.0
  %4752 = vmatpush1.msra.mxu0 0.0
  %4753 = vmatprep.subr.mxu0 0.0
  %4754 = vmatpush1.msra.mxu0 0.0
  %4755 = vmatprep.subr.mxu0 0.0
  %4756 = vmatpush1.msra.mxu0 0.0
  %4757 = vmatprep.subr.mxu0 0.0
  %4758 = vmatpush1.msra.mxu0 0.0
  %4759 = vmatprep.subr.mxu0 0.0
  %4760 = vmatpush1.msra.mxu0 0.0
  %4761 = vmatprep.subr.mxu0 0.0
  %4762 = vmatpush1.msra.mxu0 0.0
  %4763 = vmatprep.subr.mxu0 0.0
  %4764 = vmatpush1.msra.mxu0 0.0
  %4765 = vmatprep.subr.mxu0 0.0
  %4766 = vmatpush1.msra.mxu0 0.0
  %4767 = vmatprep.mubr.f32.mxu0 0.0
  %4768 = vmatmul.mubr.f32.gmra.mrb[0].mxu0 %v4701
  %v4769 = vpop.f32.mrb[0].mxu0
  %v4770 = vadd.f32 0.0, %v4769
  %v4771 = vpop.f32.mrb[0].mxu0
  %4772 = vdwg.mxu0
  %v4773 = vsel %vm52, %v4524, 0
  %4775 = vmatprep.subr.mxu0 0.0
  %4776 = vmatpush1.msra.mxu0 %v4692
  %4777 = vmatprep.subr.mxu0 0.0
  %4778 = vmatpush1.msra.mxu0 %v4693
  %4779 = vmatprep.subr.mxu0 0.0
  %4780 = vmatpush1.msra.mxu0 %v4694
  %4781 = vmatprep.subr.mxu0 0.0
  %4782 = vmatpush1.msra.mxu0 %v4695
  %4783 = vmatprep.subr.mxu0 0.0
  %4784 = vmatpush1.msra.mxu0 0.0
  %4785 = vmatprep.subr.mxu0 0.0
  %4786 = vmatpush1.msra.mxu0 0.0
  %4787 = vmatprep.subr.mxu0 0.0
  %4788 = vmatpush1.msra.mxu0 0.0
  %4789 = vmatprep.subr.mxu0 0.0
  %4790 = vmatpush1.msra.mxu0 0.0
  %4791 = vmatprep.subr.mxu0 0.0
  %4792 = vmatpush1.msra.mxu0 0.0
  %4793 = vmatprep.subr.mxu0 0.0
  %4794 = vmatpush1.msra.mxu0 0.0
  %4795 = vmatprep.subr.mxu0 0.0
  %4796 = vmatpush1.msra.mxu0 0.0
  %4797 = vmatprep.subr.mxu0 0.0
  %4798 = vmatpush1.msra.mxu0 0.0
  %4799 = vmatprep.subr.mxu0 0.0
  %4800 = vmatpush1.msra.mxu0 0.0
  %4801 = vmatprep.subr.mxu0 0.0
  %4802 = vmatpush1.msra.mxu0 0.0
  %4803 = vmatprep.subr.mxu0 0.0
  %4804 = vmatpush1.msra.mxu0 0.0
  %4805 = vmatprep.subr.mxu0 0.0
  %4806 = vmatpush1.msra.mxu0 0.0
  %4807 = vmatprep.subr.mxu0 0.0
  %4808 = vmatpush1.msra.mxu0 0.0
  %4809 = vmatprep.subr.mxu0 0.0
  %4810 = vmatpush1.msra.mxu0 0.0
  %4811 = vmatprep.subr.mxu0 0.0
  %4812 = vmatpush1.msra.mxu0 0.0
  %4813 = vmatprep.subr.mxu0 0.0
  %4814 = vmatpush1.msra.mxu0 0.0
  %4815 = vmatprep.subr.mxu0 0.0
  %4816 = vmatpush1.msra.mxu0 0.0
  %4817 = vmatprep.subr.mxu0 0.0
  %4818 = vmatpush1.msra.mxu0 0.0
  %4819 = vmatprep.subr.mxu0 0.0
  %4820 = vmatpush1.msra.mxu0 0.0
  %4821 = vmatprep.subr.mxu0 0.0
  %4822 = vmatpush1.msra.mxu0 0.0
  %4823 = vmatprep.subr.mxu0 0.0
  %4824 = vmatpush1.msra.mxu0 0.0
  %4825 = vmatprep.subr.mxu0 0.0
  %4826 = vmatpush1.msra.mxu0 0.0
  %4827 = vmatprep.subr.mxu0 0.0
  %4828 = vmatpush1.msra.mxu0 0.0
  %4829 = vmatprep.subr.mxu0 0.0
  %4830 = vmatpush1.msra.mxu0 0.0
  %4831 = vmatprep.subr.mxu0 0.0
  %4832 = vmatpush1.msra.mxu0 0.0
  %4833 = vmatprep.subr.mxu0 0.0
  %4834 = vmatpush1.msra.mxu0 0.0
  %4835 = vmatprep.subr.mxu0 0.0
  %4836 = vmatpush1.msra.mxu0 0.0
  %4837 = vmatprep.subr.mxu0 0.0
  %4838 = vmatpush1.msra.mxu0 0.0
  %4839 = vmatprep.mubr.f32.mxu0 0.0
  %4840 = vmatmul.mubr.f32.gmra.mrb[0].mxu0 %v4773
  %v4841 = vpop.f32.mrb[0].mxu0
  %v4842 = vadd.f32 %v4770, %v4841
  %v4843 = vpop.f32.mrb[0].mxu0
  %4844 = vdwg.mxu0
  %v4845 = vld [vmem:[%s11] sm:$0xff]
  %v4846 = vadd.f32 %v4842, %v4845
  %v4847 = vsel %vm52, %v4846, -inf
  %4848 = vmax.xlane.f32.xlu0 %v4847
  %v4849 = vpop.xlane.xlu0 %4848
  %v4850 = vsub.f32 %v4846, %v4849
  %v4851 = vmul.f32 %v4850, 1.442695
  %v4852 = vpow.pop %v4851
  %v4853 = vsel %vm52, %v4852, 0.0
  %4854 = vadd.xlane.f32.xlu0 %v4853
  %v4855 = vpop.xlane.xlu0 %4854
  %v4856 = vlog2.pop %v4855
  %v4857 = vmul.f32 %v4856, 0.6931472
  %v4858 = vadd.f32 %v4857, %v4849
  %v4859 = vsub.f32 %v4846, %v4858
  %4861 = vrot.lane.b32.xlu0 %v4859, 32
  %v4862 = vpop.permute.xlu0 %4861
  %4864 = vst.msk [vmem:[%s12 + $0x8] sm:$0xff] %vm2773, %v4862
  %s4865 = scalar_lea.vmem %s2, 48
  %v4866 = vld [vmem:[%s4865] sm:$0xff]
  %v4867 = vld [vmem:[%s6] sm:$0xff]
  %v4868 = vld [vmem:[%s6 + $0x8] sm:$0xff]
  %v4869 = vld [vmem:[%s6 + $0x10] sm:$0xff]
  %v4870 = vld [vmem:[%s6 + $0x18] sm:$0xff]
  %v4871 = vld [vmem:[%s7] sm:$0xff]
  %v4872 = vld [vmem:[%s7 + $0x8] sm:$0xff]
  %v4873 = vld [vmem:[%s7 + $0x10] sm:$0xff]
  %v4874 = vld [vmem:[%s7 + $0x18] sm:$0xff]
  %4875 = vmatprep.subr.mxu0 0.0
  %4876 = vmatpush1.msra.mxu0 %v4871
  %4877 = vmatprep.subr.mxu0 0.0
  %4878 = vmatpush1.msra.mxu0 %v4872
  %4879 = vmatprep.subr.mxu0 0.0
  %4880 = vmatpush1.msra.mxu0 %v4873
  %4881 = vmatprep.subr.mxu0 0.0
  %4882 = vmatpush1.msra.mxu0 %v4874
  %4883 = vmatprep.subr.mxu0 0.0
  %4884 = vmatpush1.msra.mxu0 0.0
  %4885 = vmatprep.subr.mxu0 0.0
  %4886 = vmatpush1.msra.mxu0 0.0
  %4887 = vmatprep.subr.mxu0 0.0
  %4888 = vmatpush1.msra.mxu0 0.0
  %4889 = vmatprep.subr.mxu0 0.0
  %4890 = vmatpush1.msra.mxu0 0.0
  %4891 = vmatprep.subr.mxu0 0.0
  %4892 = vmatpush1.msra.mxu0 0.0
  %4893 = vmatprep.subr.mxu0 0.0
  %4894 = vmatpush1.msra.mxu0 0.0
  %4895 = vmatprep.subr.mxu0 0.0
  %4896 = vmatpush1.msra.mxu0 0.0
  %4897 = vmatprep.subr.mxu0 0.0
  %4898 = vmatpush1.msra.mxu0 0.0
  %4899 = vmatprep.subr.mxu0 0.0
  %4900 = vmatpush1.msra.mxu0 0.0
  %4901 = vmatprep.subr.mxu0 0.0
  %4902 = vmatpush1.msra.mxu0 0.0
  %4903 = vmatprep.subr.mxu0 0.0
  %4904 = vmatpush1.msra.mxu0 0.0
  %4905 = vmatprep.subr.mxu0 0.0
  %4906 = vmatpush1.msra.mxu0 0.0
  %4907 = vmatprep.subr.mxu0 0.0
  %4908 = vmatpush1.msra.mxu0 0.0
  %4909 = vmatprep.subr.mxu0 0.0
  %4910 = vmatpush1.msra.mxu0 0.0
  %4911 = vmatprep.subr.mxu0 0.0
  %4912 = vmatpush1.msra.mxu0 0.0
  %4913 = vmatprep.subr.mxu0 0.0
  %4914 = vmatpush1.msra.mxu0 0.0
  %4915 = vmatprep.subr.mxu0 0.0
  %4916 = vmatpush1.msra.mxu0 0.0
  %4917 = vmatprep.subr.mxu0 0.0
  %4918 = vmatpush1.msra.mxu0 0.0
  %4919 = vmatprep.subr.mxu0 0.0
  %4920 = vmatpush1.msra.mxu0 0.0
  %4921 = vmatprep.subr.mxu0 0.0
  %4922 = vmatpush1.msra.mxu0 0.0
  %4923 = vmatprep.subr.mxu0 0.0
  %4924 = vmatpush1.msra.mxu0 0.0
  %4925 = vmatprep.subr.mxu0 0.0
  %4926 = vmatpush1.msra.mxu0 0.0
  %4927 = vmatprep.subr.mxu0 0.0
  %4928 = vmatpush1.msra.mxu0 0.0
  %4929 = vmatprep.subr.mxu0 0.0
  %4930 = vmatpush1.msra.mxu0 0.0
  %4931 = vmatprep.subr.mxu0 0.0
  %4932 = vmatpush1.msra.mxu0 0.0
  %4933 = vmatprep.subr.mxu0 0.0
  %4934 = vmatpush1.msra.mxu0 0.0
  %4935 = vmatprep.subr.mxu0 0.0
  %4936 = vmatpush1.msra.mxu0 0.0
  %4937 = vmatprep.subr.mxu0 0.0
  %4938 = vmatpush1.msra.mxu0 0.0
  %4939 = vmatprep.mubr.f32.mxu0 0.0
  %4940 = vmatmul.mubr.f32.gmra.mrb[0].mxu0 %v4773
  %v4941 = vpop.f32.mrb[0].mxu0
  %v4942 = vadd.f32 0.0, %v4941
  %v4943 = vpop.f32.mrb[0].mxu0
  %4944 = vdwg.mxu0
  %v4946 = vsel %vm52, %v4866, 0
  %4948 = vmatprep.subr.mxu0 0.0
  %4949 = vmatpush1.msra.mxu0 %v4867
  %4950 = vmatprep.subr.mxu0 0.0
  %4951 = vmatpush1.msra.mxu0 %v4868
  %4952 = vmatprep.subr.mxu0 0.0
  %4953 = vmatpush1.msra.mxu0 %v4869
  %4954 = vmatprep.subr.mxu0 0.0
  %4955 = vmatpush1.msra.mxu0 %v4870
  %4956 = vmatprep.subr.mxu0 0.0
  %4957 = vmatpush1.msra.mxu0 0.0
  %4958 = vmatprep.subr.mxu0 0.0
  %4959 = vmatpush1.msra.mxu0 0.0
  %4960 = vmatprep.subr.mxu0 0.0
  %4961 = vmatpush1.msra.mxu0 0.0
  %4962 = vmatprep.subr.mxu0 0.0
  %4963 = vmatpush1.msra.mxu0 0.0
  %4964 = vmatprep.subr.mxu0 0.0
  %4965 = vmatpush1.msra.mxu0 0.0
  %4966 = vmatprep.subr.mxu0 0.0
  %4967 = vmatpush1.msra.mxu0 0.0
  %4968 = vmatprep.subr.mxu0 0.0
  %4969 = vmatpush1.msra.mxu0 0.0
  %4970 = vmatprep.subr.mxu0 0.0
  %4971 = vmatpush1.msra.mxu0 0.0
  %4972 = vmatprep.subr.mxu0 0.0
  %4973 = vmatpush1.msra.mxu0 0.0
  %4974 = vmatprep.subr.mxu0 0.0
  %4975 = vmatpush1.msra.mxu0 0.0
  %4976 = vmatprep.subr.mxu0 0.0
  %4977 = vmatpush1.msra.mxu0 0.0
  %4978 = vmatprep.subr.mxu0 0.0
  %4979 = vmatpush1.msra.mxu0 0.0
  %4980 = vmatprep.subr.mxu0 0.0
  %4981 = vmatpush1.msra.mxu0 0.0
  %4982 = vmatprep.subr.mxu0 0.0
  %4983 = vmatpush1.msra.mxu0 0.0
  %4984 = vmatprep.subr.mxu0 0.0
  %4985 = vmatpush1.msra.mxu0 0.0
  %4986 = vmatprep.subr.mxu0 0.0
  %4987 = vmatpush1.msra.mxu0 0.0
  %4988 = vmatprep.subr.mxu0 0.0
  %4989 = vmatpush1.msra.mxu0 0.0
  %4990 = vmatprep.subr.mxu0 0.0
  %4991 = vmatpush1.msra.mxu0 0.0
  %4992 = vmatprep.subr.mxu0 0.0
  %4993 = vmatpush1.msra.mxu0 0.0
  %4994 = vmatprep.subr.mxu0 0.0
  %4995 = vmatpush1.msra.mxu0 0.0
  %4996 = vmatprep.subr.mxu0 0.0
  %4997 = vmatpush1.msra.mxu0 0.0
  %4998 = vmatprep.subr.mxu0 0.0
  %4999 = vmatpush1.msra.mxu0 0.0
  %5000 = vmatprep.subr.mxu0 0.0
  %5001 = vmatpush1.msra.mxu0 0.0
  %5002 = vmatprep.subr.mxu0 0.0
  %5003 = vmatpush1.msra.mxu0 0.0
  %5004 = vmatprep.subr.mxu0 0.0
  %5005 = vmatpush1.msra.mxu0 0.0
  %5006 = vmatprep.subr.mxu0 0.0
  %5007 = vmatpush1.msra.mxu0 0.0
  %5008 = vmatprep.subr.mxu0 0.0
  %5009 = vmatpush1.msra.mxu0 0.0
  %5010 = vmatprep.subr.mxu0 0.0
  %5011 = vmatpush1.msra.mxu0 0.0
  %5012 = vmatprep.mubr.f32.mxu0 0.0
  %5013 = vmatmul.mubr.f32.gmra.mrb[0].mxu0 %v4946
  %v5014 = vpop.f32.mrb[0].mxu0
  %v5015 = vadd.f32 %v4942, %v5014
  %v5016 = vpop.f32.mrb[0].mxu0
  %5017 = vdwg.mxu0
  %v5018 = vld [vmem:[%s8] sm:$0xff]
  %v5019 = vadd.f32 %v5015, %v5018
  %v5020 = vxor.u32 %v5019, 2147483648
  %v5021 = vmul.f32 %v5020, 1.442695
  %v5022 = vpow.pop %v5021
  %v5023 = vadd.f32 %v5022, 1.0
  %v5024 = vrcp.pop %v5023
  %v5025 = vmul.f32 1.0, %v5024
  %5027 = vrot.lane.b32.xlu0 %v5019, 32
  %v5028 = vpop.permute.xlu0 %5027
  %v5030 = vmul.f32 %v5025, %v5028
  %5032 = vrot.lane.b32.xlu0 %v5030, 64
  %v5033 = vpop.permute.xlu0 %5032
  %v5035 = vadd.f32 %v5019, %v5033
  %v5036 = vtanh.pop %v5035
  %v5037 = vsub.f32 1.0, %v5025
  %5039 = vrot.lane.b32.xlu0 %v5036, 96
  %v5040 = vpop.permute.xlu0 %5039
  %v5042 = vmul.f32 %v5037, %v5040
  %v5043 = vmul.f32 %v5025, %v4521
  %v5044 = vadd.f32 %v5042, %v5043
  %5046 = vrot.lane.b32.xlu0 %v5044, 96
  %v5047 = vpop.permute.xlu0 %5046
  %v5049 = vmul.f32 %v1703, %v5047
  %v5050 = vmul.f32 %v1704, %v5047
  %v5051 = vmul.f32 %v1705, %v5047
  %v5052 = vmul.f32 %v1706, %v5047
  %v5053 = vmul.f32 %v1707, %v5047
  %v5054 = vmul.f32 %v1708, %v5047
  %v5055 = vmul.f32 %v1709, %v5047
  %v5056 = vmul.f32 %v1710, %v5047
  %v5057 = vsel %vm52, %v5049, 0.0
  %5058 = vadd.xlane.f32.xlu0 %v5057
  %v5059 = vpop.xlane.xlu0 %5058
  %v5060 = vsel %vm52, %v5050, 0.0
  %5061 = vadd.xlane.f32.xlu0 %v5060
  %v5062 = vpop.xlane.xlu0 %5061
  %v5063 = vsel %vm52, %v5051, 0.0
  %5064 = vadd.xlane.f32.xlu0 %v5063
  %v5065 = vpop.xlane.xlu0 %5064
  %v5066 = vsel %vm52, %v5052, 0.0
  %5067 = vadd.xlane.f32.xlu0 %v5066
  %v5068 = vpop.xlane.xlu0 %5067
  %v5069 = vsel %vm52, %v5053, 0.0
  %5070 = vadd.xlane.f32.xlu0 %v5069
  %v5071 = vpop.xlane.xlu0 %5070
  %v5072 = vsel %vm52, %v5054, 0.0
  %5073 = vadd.xlane.f32.xlu0 %v5072
  %v5074 = vpop.xlane.xlu0 %5073
  %v5075 = vsel %vm52, %v5055, 0.0
  %5076 = vadd.xlane.f32.xlu0 %v5075
  %v5077 = vpop.xlane.xlu0 %5076
  %v5078 = vsel %vm52, %v5056, 0.0
  %5079 = vadd.xlane.f32.xlu0 %v5078
  %v5080 = vpop.xlane.xlu0 %5079
  %v5081 = vsel %vm1939, %v5059, -1e+30
  %v5082 = vsel %vm1940, %v5062, -1e+30
  %v5083 = vsel %vm1941, %v5065, -1e+30
  %v5084 = vsel %vm1942, %v5068, -1e+30
  %v5085 = vsel %vm1943, %v5071, -1e+30
  %v5086 = vsel %vm1944, %v5074, -1e+30
  %v5087 = vsel %vm1945, %v5077, -1e+30
  %v5088 = vsel %vm1946, %v5080, -1e+30
  %v5089 = vsel %vm1955, %v5081, -inf
  %v5090 = vsel %vm1955, %v5082, -inf
  %v5091 = vsel %vm1955, %v5083, -inf
  %v5092 = vsel %vm1955, %v5084, -inf
  %v5093 = vsel %vm1955, %v5085, -inf
  %v5094 = vmax.f32 %v5089, %v5093
  %v5095 = vsel %vm1955, %v5086, -inf
  %v5096 = vmax.f32 %v5090, %v5095
  %v5097 = vsel %vm1955, %v5087, -inf
  %v5098 = vmax.f32 %v5091, %v5097
  %v5099 = vsel %vm1955, %v5088, -inf
  %v5100 = vmax.f32 %v5092, %v5099
  %v5101 = vmax.f32 %v5094, %v5096
  %v5102 = vmax.f32 %v5098, %v5100
  %v5103 = vmax.f32 %v5101, %v5102
  %v5104 = vsub.f32 %v5081, %v5103
  %v5105 = vsub.f32 %v5082, %v5103
  %v5106 = vsub.f32 %v5083, %v5103
  %v5107 = vsub.f32 %v5084, %v5103
  %v5108 = vsub.f32 %v5085, %v5103
  %v5109 = vsub.f32 %v5086, %v5103
  %v5110 = vsub.f32 %v5087, %v5103
  %v5111 = vsub.f32 %v5088, %v5103
  %v5112 = vmul.f32 %v5104, 1.442695
  %v5113 = vpow.pop %v5112
  %v5114 = vmul.f32 %v5105, 1.442695
  %v5115 = vpow.pop %v5114
  %v5116 = vmul.f32 %v5106, 1.442695
  %v5117 = vpow.pop %v5116
  %v5118 = vmul.f32 %v5107, 1.442695
  %v5119 = vpow.pop %v5118
  %v5120 = vmul.f32 %v5108, 1.442695
  %v5121 = vpow.pop %v5120
  %v5122 = vmul.f32 %v5109, 1.442695
  %v5123 = vpow.pop %v5122
  %v5124 = vmul.f32 %v5110, 1.442695
  %v5125 = vpow.pop %v5124
  %v5126 = vmul.f32 %v5111, 1.442695
  %v5127 = vpow.pop %v5126
  %v5128 = vsel %vm1955, %v5113, 0.0
  %v5129 = vsel %vm1955, %v5115, 0.0
  %v5130 = vadd.f32 %v5128, %v5129
  %v5131 = vsel %vm1955, %v5117, 0.0
  %v5132 = vadd.f32 %v5130, %v5131
  %v5133 = vsel %vm1955, %v5119, 0.0
  %v5134 = vadd.f32 %v5132, %v5133
  %v5135 = vsel %vm1955, %v5121, 0.0
  %v5136 = vadd.f32 %v5134, %v5135
  %v5137 = vsel %vm1955, %v5123, 0.0
  %v5138 = vadd.f32 %v5136, %v5137
  %v5139 = vsel %vm1955, %v5125, 0.0
  %v5140 = vadd.f32 %v5138, %v5139
  %v5141 = vsel %vm1955, %v5127, 0.0
  %v5142 = vadd.f32 %v5140, %v5141
  %v5143 = vrcp.pop %v5142
  %v5144 = vmul.f32 %v5113, %v5143
  %v5145 = vmul.f32 %v5115, %v5143
  %v5146 = vmul.f32 %v5117, %v5143
  %v5147 = vmul.f32 %v5119, %v5143
  %v5148 = vmul.f32 %v5121, %v5143
  %v5149 = vmul.f32 %v5123, %v5143
  %v5150 = vmul.f32 %v5125, %v5143
  %v5151 = vmul.f32 %v5127, %v5143
  %5153 = vset.pattern.permute.xlu0 0
  %5154 = vperm.xlu0 %5153, %v5144
  %v5155 = vpop.permute.xlu0 %5154
  %5158 = vset.pattern.permute.xlu0 0
  %5159 = vperm.xlu0 %5158, %v5145
  %v5160 = vpop.permute.xlu0 %5159
  %5163 = vset.pattern.permute.xlu0 0
  %5164 = vperm.xlu0 %5163, %v5146
  %v5165 = vpop.permute.xlu0 %5164
  %5168 = vset.pattern.permute.xlu0 0
  %5169 = vperm.xlu0 %5168, %v5147
  %v5170 = vpop.permute.xlu0 %5169
  %5173 = vset.pattern.permute.xlu0 0
  %5174 = vperm.xlu0 %5173, %v5148
  %v5175 = vpop.permute.xlu0 %5174
  %5178 = vset.pattern.permute.xlu0 0
  %5179 = vperm.xlu0 %5178, %v5149
  %v5180 = vpop.permute.xlu0 %5179
  %5183 = vset.pattern.permute.xlu0 0
  %5184 = vperm.xlu0 %5183, %v5150
  %v5185 = vpop.permute.xlu0 %5184
  %5188 = vset.pattern.permute.xlu0 0
  %5189 = vperm.xlu0 %5188, %v5151
  %v5190 = vpop.permute.xlu0 %5189
  %v5192 = vmul.f32 %v5155, %v1703
  %v5193 = vmul.f32 %v5160, %v1704
  %v5194 = vmul.f32 %v5165, %v1705
  %v5195 = vmul.f32 %v5170, %v1706
  %v5196 = vmul.f32 %v5175, %v1707
  %v5197 = vmul.f32 %v5180, %v1708
  %v5198 = vmul.f32 %v5185, %v1709
  %v5199 = vmul.f32 %v5190, %v1710
  %v5200 = vsel %vm52, %v5192, 0.0
  %v5201 = vsel %vm52, %v5193, 0.0
  %v5202 = vadd.f32 %v5200, %v5201
  %v5203 = vsel %vm52, %v5194, 0.0
  %v5204 = vadd.f32 %v5202, %v5203
  %v5205 = vsel %vm52, %v5195, 0.0
  %v5206 = vadd.f32 %v5204, %v5205
  %v5207 = vsel %vm52, %v5196, 0.0
  %v5208 = vadd.f32 %v5206, %v5207
  %v5209 = vsel %vm52, %v5197, 0.0
  %v5210 = vadd.f32 %v5208, %v5209
  %v5211 = vsel %vm52, %v5198, 0.0
  %v5212 = vadd.f32 %v5210, %v5211
  %v5213 = vsel %vm52, %v5199, 0.0
  %v5214 = vadd.f32 %v5212, %v5213
  %v5215 = vld [vmem:[%s9] sm:$0xff]
  %v5216 = vld [vmem:[%s9 + $0x8] sm:$0xff]
  %v5217 = vld [vmem:[%s9 + $0x10] sm:$0xff]
  %v5218 = vld [vmem:[%s9 + $0x18] sm:$0xff]
  %v5219 = vld [vmem:[%s10] sm:$0xff]
  %v5220 = vld [vmem:[%s10 + $0x8] sm:$0xff]
  %v5221 = vld [vmem:[%s10 + $0x10] sm:$0xff]
  %v5222 = vld [vmem:[%s10 + $0x18] sm:$0xff]
  %v5224 = vsel %vm52, %v5214, 0
  %5226 = vmatprep.subr.mxu0 0.0
  %5227 = vmatpush1.msra.mxu0 %v5219
  %5228 = vmatprep.subr.mxu0 0.0
  %5229 = vmatpush1.msra.mxu0 %v5220
  %5230 = vmatprep.subr.mxu0 0.0
  %5231 = vmatpush1.msra.mxu0 %v5221
  %5232 = vmatprep.subr.mxu0 0.0
  %5233 = vmatpush1.msra.mxu0 %v5222
  %5234 = vmatprep.subr.mxu0 0.0
  %5235 = vmatpush1.msra.mxu0 0.0
  %5236 = vmatprep.subr.mxu0 0.0
  %5237 = vmatpush1.msra.mxu0 0.0
  %5238 = vmatprep.subr.mxu0 0.0
  %5239 = vmatpush1.msra.mxu0 0.0
  %5240 = vmatprep.subr.mxu0 0.0
  %5241 = vmatpush1.msra.mxu0 0.0
  %5242 = vmatprep.subr.mxu0 0.0
  %5243 = vmatpush1.msra.mxu0 0.0
  %5244 = vmatprep.subr.mxu0 0.0
  %5245 = vmatpush1.msra.mxu0 0.0
  %5246 = vmatprep.subr.mxu0 0.0
  %5247 = vmatpush1.msra.mxu0 0.0
  %5248 = vmatprep.subr.mxu0 0.0
  %5249 = vmatpush1.msra.mxu0 0.0
  %5250 = vmatprep.subr.mxu0 0.0
  %5251 = vmatpush1.msra.mxu0 0.0
  %5252 = vmatprep.subr.mxu0 0.0
  %5253 = vmatpush1.msra.mxu0 0.0
  %5254 = vmatprep.subr.mxu0 0.0
  %5255 = vmatpush1.msra.mxu0 0.0
  %5256 = vmatprep.subr.mxu0 0.0
  %5257 = vmatpush1.msra.mxu0 0.0
  %5258 = vmatprep.subr.mxu0 0.0
  %5259 = vmatpush1.msra.mxu0 0.0
  %5260 = vmatprep.subr.mxu0 0.0
  %5261 = vmatpush1.msra.mxu0 0.0
  %5262 = vmatprep.subr.mxu0 0.0
  %5263 = vmatpush1.msra.mxu0 0.0
  %5264 = vmatprep.subr.mxu0 0.0
  %5265 = vmatpush1.msra.mxu0 0.0
  %5266 = vmatprep.subr.mxu0 0.0
  %5267 = vmatpush1.msra.mxu0 0.0
  %5268 = vmatprep.subr.mxu0 0.0
  %5269 = vmatpush1.msra.mxu0 0.0
  %5270 = vmatprep.subr.mxu0 0.0
  %5271 = vmatpush1.msra.mxu0 0.0
  %5272 = vmatprep.subr.mxu0 0.0
  %5273 = vmatpush1.msra.mxu0 0.0
  %5274 = vmatprep.subr.mxu0 0.0
  %5275 = vmatpush1.msra.mxu0 0.0
  %5276 = vmatprep.subr.mxu0 0.0
  %5277 = vmatpush1.msra.mxu0 0.0
  %5278 = vmatprep.subr.mxu0 0.0
  %5279 = vmatpush1.msra.mxu0 0.0
  %5280 = vmatprep.subr.mxu0 0.0
  %5281 = vmatpush1.msra.mxu0 0.0
  %5282 = vmatprep.subr.mxu0 0.0
  %5283 = vmatpush1.msra.mxu0 0.0
  %5284 = vmatprep.subr.mxu0 0.0
  %5285 = vmatpush1.msra.mxu0 0.0
  %5286 = vmatprep.subr.mxu0 0.0
  %5287 = vmatpush1.msra.mxu0 0.0
  %5288 = vmatprep.subr.mxu0 0.0
  %5289 = vmatpush1.msra.mxu0 0.0
  %5290 = vmatprep.mubr.f32.mxu0 0.0
  %5291 = vmatmul.mubr.f32.gmra.mrb[0].mxu0 %v5224
  %v5292 = vpop.f32.mrb[0].mxu0
  %v5293 = vadd.f32 0.0, %v5292
  %v5294 = vpop.f32.mrb[0].mxu0
  %5295 = vdwg.mxu0
  %v5296 = vsel %vm52, %v5047, 0
  %5298 = vmatprep.subr.mxu0 0.0
  %5299 = vmatpush1.msra.mxu0 %v5215
  %5300 = vmatprep.subr.mxu0 0.0
  %5301 = vmatpush1.msra.mxu0 %v5216
  %5302 = vmatprep.subr.mxu0 0.0
  %5303 = vmatpush1.msra.mxu0 %v5217
  %5304 = vmatprep.subr.mxu0 0.0
  %5305 = vmatpush1.msra.mxu0 %v5218
  %5306 = vmatprep.subr.mxu0 0.0
  %5307 = vmatpush1.msra.mxu0 0.0
  %5308 = vmatprep.subr.mxu0 0.0
  %5309 = vmatpush1.msra.mxu0 0.0
  %5310 = vmatprep.subr.mxu0 0.0
  %5311 = vmatpush1.msra.mxu0 0.0
  %5312 = vmatprep.subr.mxu0 0.0
  %5313 = vmatpush1.msra.mxu0 0.0
  %5314 = vmatprep.subr.mxu0 0.0
  %5315 = vmatpush1.msra.mxu0 0.0
  %5316 = vmatprep.subr.mxu0 0.0
  %5317 = vmatpush1.msra.mxu0 0.0
  %5318 = vmatprep.subr.mxu0 0.0
  %5319 = vmatpush1.msra.mxu0 0.0
  %5320 = vmatprep.subr.mxu0 0.0
  %5321 = vmatpush1.msra.mxu0 0.0
  %5322 = vmatprep.subr.mxu0 0.0
  %5323 = vmatpush1.msra.mxu0 0.0
  %5324 = vmatprep.subr.mxu0 0.0
  %5325 = vmatpush1.msra.mxu0 0.0
  %5326 = vmatprep.subr.mxu0 0.0
  %5327 = vmatpush1.msra.mxu0 0.0
  %5328 = vmatprep.subr.mxu0 0.0
  %5329 = vmatpush1.msra.mxu0 0.0
  %5330 = vmatprep.subr.mxu0 0.0
  %5331 = vmatpush1.msra.mxu0 0.0
  %5332 = vmatprep.subr.mxu0 0.0
  %5333 = vmatpush1.msra.mxu0 0.0
  %5334 = vmatprep.subr.mxu0 0.0
  %5335 = vmatpush1.msra.mxu0 0.0
  %5336 = vmatprep.subr.mxu0 0.0
  %5337 = vmatpush1.msra.mxu0 0.0
  %5338 = vmatprep.subr.mxu0 0.0
  %5339 = vmatpush1.msra.mxu0 0.0
  %5340 = vmatprep.subr.mxu0 0.0
  %5341 = vmatpush1.msra.mxu0 0.0
  %5342 = vmatprep.subr.mxu0 0.0
  %5343 = vmatpush1.msra.mxu0 0.0
  %5344 = vmatprep.subr.mxu0 0.0
  %5345 = vmatpush1.msra.mxu0 0.0
  %5346 = vmatprep.subr.mxu0 0.0
  %5347 = vmatpush1.msra.mxu0 0.0
  %5348 = vmatprep.subr.mxu0 0.0
  %5349 = vmatpush1.msra.mxu0 0.0
  %5350 = vmatprep.subr.mxu0 0.0
  %5351 = vmatpush1.msra.mxu0 0.0
  %5352 = vmatprep.subr.mxu0 0.0
  %5353 = vmatpush1.msra.mxu0 0.0
  %5354 = vmatprep.subr.mxu0 0.0
  %5355 = vmatpush1.msra.mxu0 0.0
  %5356 = vmatprep.subr.mxu0 0.0
  %5357 = vmatpush1.msra.mxu0 0.0
  %5358 = vmatprep.subr.mxu0 0.0
  %5359 = vmatpush1.msra.mxu0 0.0
  %5360 = vmatprep.subr.mxu0 0.0
  %5361 = vmatpush1.msra.mxu0 0.0
  %5362 = vmatprep.mubr.f32.mxu0 0.0
  %5363 = vmatmul.mubr.f32.gmra.mrb[0].mxu0 %v5296
  %v5364 = vpop.f32.mrb[0].mxu0
  %v5365 = vadd.f32 %v5293, %v5364
  %v5366 = vpop.f32.mrb[0].mxu0
  %5367 = vdwg.mxu0
  %v5368 = vld [vmem:[%s11] sm:$0xff]
  %v5369 = vadd.f32 %v5365, %v5368
  %v5370 = vsel %vm52, %v5369, -inf
  %5371 = vmax.xlane.f32.xlu0 %v5370
  %v5372 = vpop.xlane.xlu0 %5371
  %v5373 = vsub.f32 %v5369, %v5372
  %v5374 = vmul.f32 %v5373, 1.442695
  %v5375 = vpow.pop %v5374
  %v5376 = vsel %vm52, %v5375, 0.0
  %5377 = vadd.xlane.f32.xlu0 %v5376
  %v5378 = vpop.xlane.xlu0 %5377
  %v5379 = vlog2.pop %v5378
  %v5380 = vmul.f32 %v5379, 0.6931472
  %v5381 = vadd.f32 %v5380, %v5372
  %v5382 = vsub.f32 %v5369, %v5381
  %5384 = vrot.lane.b32.xlu0 %v5382, 64
  %v5385 = vpop.permute.xlu0 %5384
  %5387 = vst.msk [vmem:[%s12 + $0x8] sm:$0xff] %vm3297, %v5385
  %s5388 = scalar_lea.vmem %s2, 56
  %v5389 = vld [vmem:[%s5388] sm:$0xff]
  %v5390 = vld [vmem:[%s6] sm:$0xff]
  %v5391 = vld [vmem:[%s6 + $0x8] sm:$0xff]
  %v5392 = vld [vmem:[%s6 + $0x10] sm:$0xff]
  %v5393 = vld [vmem:[%s6 + $0x18] sm:$0xff]
  %v5394 = vld [vmem:[%s7] sm:$0xff]
  %v5395 = vld [vmem:[%s7 + $0x8] sm:$0xff]
  %v5396 = vld [vmem:[%s7 + $0x10] sm:$0xff]
  %v5397 = vld [vmem:[%s7 + $0x18] sm:$0xff]
  %5398 = vmatprep.subr.mxu0 0.0
  %5399 = vmatpush1.msra.mxu0 %v5394
  %5400 = vmatprep.subr.mxu0 0.0
  %5401 = vmatpush1.msra.mxu0 %v5395
  %5402 = vmatprep.subr.mxu0 0.0
  %5403 = vmatpush1.msra.mxu0 %v5396
  %5404 = vmatprep.subr.mxu0 0.0
  %5405 = vmatpush1.msra.mxu0 %v5397
  %5406 = vmatprep.subr.mxu0 0.0
  %5407 = vmatpush1.msra.mxu0 0.0
  %5408 = vmatprep.subr.mxu0 0.0
  %5409 = vmatpush1.msra.mxu0 0.0
  %5410 = vmatprep.subr.mxu0 0.0
  %5411 = vmatpush1.msra.mxu0 0.0
  %5412 = vmatprep.subr.mxu0 0.0
  %5413 = vmatpush1.msra.mxu0 0.0
  %5414 = vmatprep.subr.mxu0 0.0
  %5415 = vmatpush1.msra.mxu0 0.0
  %5416 = vmatprep.subr.mxu0 0.0
  %5417 = vmatpush1.msra.mxu0 0.0
  %5418 = vmatprep.subr.mxu0 0.0
  %5419 = vmatpush1.msra.mxu0 0.0
  %5420 = vmatprep.subr.mxu0 0.0
  %5421 = vmatpush1.msra.mxu0 0.0
  %5422 = vmatprep.subr.mxu0 0.0
  %5423 = vmatpush1.msra.mxu0 0.0
  %5424 = vmatprep.subr.mxu0 0.0
  %5425 = vmatpush1.msra.mxu0 0.0
  %5426 = vmatprep.subr.mxu0 0.0
  %5427 = vmatpush1.msra.mxu0 0.0
  %5428 = vmatprep.subr.mxu0 0.0
  %5429 = vmatpush1.msra.mxu0 0.0
  %5430 = vmatprep.subr.mxu0 0.0
  %5431 = vmatpush1.msra.mxu0 0.0
  %5432 = vmatprep.subr.mxu0 0.0
  %5433 = vmatpush1.msra.mxu0 0.0
  %5434 = vmatprep.subr.mxu0 0.0
  %5435 = vmatpush1.msra.mxu0 0.0
  %5436 = vmatprep.subr.mxu0 0.0
  %5437 = vmatpush1.msra.mxu0 0.0
  %5438 = vmatprep.subr.mxu0 0.0
  %5439 = vmatpush1.msra.mxu0 0.0
  %5440 = vmatprep.subr.mxu0 0.0
  %5441 = vmatpush1.msra.mxu0 0.0
  %5442 = vmatprep.subr.mxu0 0.0
  %5443 = vmatpush1.msra.mxu0 0.0
  %5444 = vmatprep.subr.mxu0 0.0
  %5445 = vmatpush1.msra.mxu0 0.0
  %5446 = vmatprep.subr.mxu0 0.0
  %5447 = vmatpush1.msra.mxu0 0.0
  %5448 = vmatprep.subr.mxu0 0.0
  %5449 = vmatpush1.msra.mxu0 0.0
  %5450 = vmatprep.subr.mxu0 0.0
  %5451 = vmatpush1.msra.mxu0 0.0
  %5452 = vmatprep.subr.mxu0 0.0
  %5453 = vmatpush1.msra.mxu0 0.0
  %5454 = vmatprep.subr.mxu0 0.0
  %5455 = vmatpush1.msra.mxu0 0.0
  %5456 = vmatprep.subr.mxu0 0.0
  %5457 = vmatpush1.msra.mxu0 0.0
  %5458 = vmatprep.subr.mxu0 0.0
  %5459 = vmatpush1.msra.mxu0 0.0
  %5460 = vmatprep.subr.mxu0 0.0
  %5461 = vmatpush1.msra.mxu0 0.0
  %5462 = vmatprep.mubr.f32.mxu0 0.0
  %5463 = vmatmul.mubr.f32.gmra.mrb[0].mxu0 %v5296
  %v5464 = vpop.f32.mrb[0].mxu0
  %v5465 = vadd.f32 0.0, %v5464
  %v5466 = vpop.f32.mrb[0].mxu0
  %5467 = vdwg.mxu0
  %v5469 = vsel %vm52, %v5389, 0
  %5471 = vmatprep.subr.mxu0 0.0
  %5472 = vmatpush1.msra.mxu0 %v5390
  %5473 = vmatprep.subr.mxu0 0.0
  %5474 = vmatpush1.msra.mxu0 %v5391
  %5475 = vmatprep.subr.mxu0 0.0
  %5476 = vmatpush1.msra.mxu0 %v5392
  %5477 = vmatprep.subr.mxu0 0.0
  %5478 = vmatpush1.msra.mxu0 %v5393
  %5479 = vmatprep.subr.mxu0 0.0
  %5480 = vmatpush1.msra.mxu0 0.0
  %5481 = vmatprep.subr.mxu0 0.0
  %5482 = vmatpush1.msra.mxu0 0.0
  %5483 = vmatprep.subr.mxu0 0.0
  %5484 = vmatpush1.msra.mxu0 0.0
  %5485 = vmatprep.subr.mxu0 0.0
  %5486 = vmatpush1.msra.mxu0 0.0
  %5487 = vmatprep.subr.mxu0 0.0
  %5488 = vmatpush1.msra.mxu0 0.0
  %5489 = vmatprep.subr.mxu0 0.0
  %5490 = vmatpush1.msra.mxu0 0.0
  %5491 = vmatprep.subr.mxu0 0.0
  %5492 = vmatpush1.msra.mxu0 0.0
  %5493 = vmatprep.subr.mxu0 0.0
  %5494 = vmatpush1.msra.mxu0 0.0
  %5495 = vmatprep.subr.mxu0 0.0
  %5496 = vmatpush1.msra.mxu0 0.0
  %5497 = vmatprep.subr.mxu0 0.0
  %5498 = vmatpush1.msra.mxu0 0.0
  %5499 = vmatprep.subr.mxu0 0.0
  %5500 = vmatpush1.msra.mxu0 0.0
  %5501 = vmatprep.subr.mxu0 0.0
  %5502 = vmatpush1.msra.mxu0 0.0
  %5503 = vmatprep.subr.mxu0 0.0
  %5504 = vmatpush1.msra.mxu0 0.0
  %5505 = vmatprep.subr.mxu0 0.0
  %5506 = vmatpush1.msra.mxu0 0.0
  %5507 = vmatprep.subr.mxu0 0.0
  %5508 = vmatpush1.msra.mxu0 0.0
  %5509 = vmatprep.subr.mxu0 0.0
  %5510 = vmatpush1.msra.mxu0 0.0
  %5511 = vmatprep.subr.mxu0 0.0
  %5512 = vmatpush1.msra.mxu0 0.0
  %5513 = vmatprep.subr.mxu0 0.0
  %5514 = vmatpush1.msra.mxu0 0.0
  %5515 = vmatprep.subr.mxu0 0.0
  %5516 = vmatpush1.msra.mxu0 0.0
  %5517 = vmatprep.subr.mxu0 0.0
  %5518 = vmatpush1.msra.mxu0 0.0
  %5519 = vmatprep.subr.mxu0 0.0
  %5520 = vmatpush1.msra.mxu0 0.0
  %5521 = vmatprep.subr.mxu0 0.0
  %5522 = vmatpush1.msra.mxu0 0.0
  %5523 = vmatprep.subr.mxu0 0.0
  %5524 = vmatpush1.msra.mxu0 0.0
  %5525 = vmatprep.subr.mxu0 0.0
  %5526 = vmatpush1.msra.mxu0 0.0
  %5527 = vmatprep.subr.mxu0 0.0
  %5528 = vmatpush1.msra.mxu0 0.0
  %5529 = vmatprep.subr.mxu0 0.0
  %5530 = vmatpush1.msra.mxu0 0.0
  %5531 = vmatprep.subr.mxu0 0.0
  %5532 = vmatpush1.msra.mxu0 0.0
  %5533 = vmatprep.subr.mxu0 0.0
  %5534 = vmatpush1.msra.mxu0 0.0
  %5535 = vmatprep.mubr.f32.mxu0 0.0
  %5536 = vmatmul.mubr.f32.gmra.mrb[0].mxu0 %v5469
  %v5537 = vpop.f32.mrb[0].mxu0
  %v5538 = vadd.f32 %v5465, %v5537
  %v5539 = vpop.f32.mrb[0].mxu0
  %5540 = vdwg.mxu0
  %v5541 = vld [vmem:[%s8] sm:$0xff]
  %v5542 = vadd.f32 %v5538, %v5541
  %v5543 = vxor.u32 %v5542, 2147483648
  %v5544 = vmul.f32 %v5543, 1.442695
  %v5545 = vpow.pop %v5544
  %v5546 = vadd.f32 %v5545, 1.0
  %v5547 = vrcp.pop %v5546
  %v5548 = vmul.f32 1.0, %v5547
  %5550 = vrot.lane.b32.xlu0 %v5542, 32
  %v5551 = vpop.permute.xlu0 %5550
  %v5553 = vmul.f32 %v5548, %v5551
  %5555 = vrot.lane.b32.xlu0 %v5553, 64
  %v5556 = vpop.permute.xlu0 %5555
  %v5558 = vadd.f32 %v5542, %v5556
  %v5559 = vtanh.pop %v5558
  %v5560 = vsub.f32 1.0, %v5548
  %5562 = vrot.lane.b32.xlu0 %v5559, 96
  %v5563 = vpop.permute.xlu0 %5562
  %v5565 = vmul.f32 %v5560, %v5563
  %v5566 = vmul.f32 %v5548, %v5044
  %v5567 = vadd.f32 %v5565, %v5566
  %5569 = vrot.lane.b32.xlu0 %v5567, 96
  %v5570 = vpop.permute.xlu0 %5569
  %v5572 = vmul.f32 %v1703, %v5570
  %v5573 = vmul.f32 %v1704, %v5570
  %v5574 = vmul.f32 %v1705, %v5570
  %v5575 = vmul.f32 %v1706, %v5570
  %v5576 = vmul.f32 %v1707, %v5570
  %v5577 = vmul.f32 %v1708, %v5570
  %v5578 = vmul.f32 %v1709, %v5570
  %v5579 = vmul.f32 %v1710, %v5570
  %v5580 = vsel %vm52, %v5572, 0.0
  %5581 = vadd.xlane.f32.xlu0 %v5580
  %v5582 = vpop.xlane.xlu0 %5581
  %v5583 = vsel %vm52, %v5573, 0.0
  %5584 = vadd.xlane.f32.xlu0 %v5583
  %v5585 = vpop.xlane.xlu0 %5584
  %v5586 = vsel %vm52, %v5574, 0.0
  %5587 = vadd.xlane.f32.xlu0 %v5586
  %v5588 = vpop.xlane.xlu0 %5587
  %v5589 = vsel %vm52, %v5575, 0.0
  %5590 = vadd.xlane.f32.xlu0 %v5589
  %v5591 = vpop.xlane.xlu0 %5590
  %v5592 = vsel %vm52, %v5576, 0.0
  %5593 = vadd.xlane.f32.xlu0 %v5592
  %v5594 = vpop.xlane.xlu0 %5593
  %v5595 = vsel %vm52, %v5577, 0.0
  %5596 = vadd.xlane.f32.xlu0 %v5595
  %v5597 = vpop.xlane.xlu0 %5596
  %v5598 = vsel %vm52, %v5578, 0.0
  %5599 = vadd.xlane.f32.xlu0 %v5598
  %v5600 = vpop.xlane.xlu0 %5599
  %v5601 = vsel %vm52, %v5579, 0.0
  %5602 = vadd.xlane.f32.xlu0 %v5601
  %v5603 = vpop.xlane.xlu0 %5602
  %v5604 = vsel %vm1939, %v5582, -1e+30
  %v5605 = vsel %vm1940, %v5585, -1e+30
  %v5606 = vsel %vm1941, %v5588, -1e+30
  %v5607 = vsel %vm1942, %v5591, -1e+30
  %v5608 = vsel %vm1943, %v5594, -1e+30
  %v5609 = vsel %vm1944, %v5597, -1e+30
  %v5610 = vsel %vm1945, %v5600, -1e+30
  %v5611 = vsel %vm1946, %v5603, -1e+30
  %v5612 = vsel %vm1955, %v5604, -inf
  %v5613 = vsel %vm1955, %v5605, -inf
  %v5614 = vsel %vm1955, %v5606, -inf
  %v5615 = vsel %vm1955, %v5607, -inf
  %v5616 = vsel %vm1955, %v5608, -inf
  %v5617 = vmax.f32 %v5612, %v5616
  %v5618 = vsel %vm1955, %v5609, -inf
  %v5619 = vmax.f32 %v5613, %v5618
  %v5620 = vsel %vm1955, %v5610, -inf
  %v5621 = vmax.f32 %v5614, %v5620
  %v5622 = vsel %vm1955, %v5611, -inf
  %v5623 = vmax.f32 %v5615, %v5622
  %v5624 = vmax.f32 %v5617, %v5619
  %v5625 = vmax.f32 %v5621, %v5623
  %v5626 = vmax.f32 %v5624, %v5625
  %v5627 = vsub.f32 %v5604, %v5626
  %v5628 = vsub.f32 %v5605, %v5626
  %v5629 = vsub.f32 %v5606, %v5626
  %v5630 = vsub.f32 %v5607, %v5626
  %v5631 = vsub.f32 %v5608, %v5626
  %v5632 = vsub.f32 %v5609, %v5626
  %v5633 = vsub.f32 %v5610, %v5626
  %v5634 = vsub.f32 %v5611, %v5626
  %v5635 = vmul.f32 %v5627, 1.442695
  %v5636 = vpow.pop %v5635
  %v5637 = vmul.f32 %v5628, 1.442695
  %v5638 = vpow.pop %v5637
  %v5639 = vmul.f32 %v5629, 1.442695
  %v5640 = vpow.pop %v5639
  %v5641 = vmul.f32 %v5630, 1.442695
  %v5642 = vpow.pop %v5641
  %v5643 = vmul.f32 %v5631, 1.442695
  %v5644 = vpow.pop %v5643
  %v5645 = vmul.f32 %v5632, 1.442695
  %v5646 = vpow.pop %v5645
  %v5647 = vmul.f32 %v5633, 1.442695
  %v5648 = vpow.pop %v5647
  %v5649 = vmul.f32 %v5634, 1.442695
  %v5650 = vpow.pop %v5649
  %v5651 = vsel %vm1955, %v5636, 0.0
  %v5652 = vsel %vm1955, %v5638, 0.0
  %v5653 = vadd.f32 %v5651, %v5652
  %v5654 = vsel %vm1955, %v5640, 0.0
  %v5655 = vadd.f32 %v5653, %v5654
  %v5656 = vsel %vm1955, %v5642, 0.0
  %v5657 = vadd.f32 %v5655, %v5656
  %v5658 = vsel %vm1955, %v5644, 0.0
  %v5659 = vadd.f32 %v5657, %v5658
  %v5660 = vsel %vm1955, %v5646, 0.0
  %v5661 = vadd.f32 %v5659, %v5660
  %v5662 = vsel %vm1955, %v5648, 0.0
  %v5663 = vadd.f32 %v5661, %v5662
  %v5664 = vsel %vm1955, %v5650, 0.0
  %v5665 = vadd.f32 %v5663, %v5664
  %v5666 = vrcp.pop %v5665
  %v5667 = vmul.f32 %v5636, %v5666
  %v5668 = vmul.f32 %v5638, %v5666
  %v5669 = vmul.f32 %v5640, %v5666
  %v5670 = vmul.f32 %v5642, %v5666
  %v5671 = vmul.f32 %v5644, %v5666
  %v5672 = vmul.f32 %v5646, %v5666
  %v5673 = vmul.f32 %v5648, %v5666
  %v5674 = vmul.f32 %v5650, %v5666
  %5676 = vset.pattern.permute.xlu0 0
  %5677 = vperm.xlu0 %5676, %v5667
  %v5678 = vpop.permute.xlu0 %5677
  %5681 = vset.pattern.permute.xlu0 0
  %5682 = vperm.xlu0 %5681, %v5668
  %v5683 = vpop.permute.xlu0 %5682
  %5686 = vset.pattern.permute.xlu0 0
  %5687 = vperm.xlu0 %5686, %v5669
  %v5688 = vpop.permute.xlu0 %5687
  %5691 = vset.pattern.permute.xlu0 0
  %5692 = vperm.xlu0 %5691, %v5670
  %v5693 = vpop.permute.xlu0 %5692
  %5696 = vset.pattern.permute.xlu0 0
  %5697 = vperm.xlu0 %5696, %v5671
  %v5698 = vpop.permute.xlu0 %5697
  %5701 = vset.pattern.permute.xlu0 0
  %5702 = vperm.xlu0 %5701, %v5672
  %v5703 = vpop.permute.xlu0 %5702
  %5706 = vset.pattern.permute.xlu0 0
  %5707 = vperm.xlu0 %5706, %v5673
  %v5708 = vpop.permute.xlu0 %5707
  %5711 = vset.pattern.permute.xlu0 0
  %5712 = vperm.xlu0 %5711, %v5674
  %v5713 = vpop.permute.xlu0 %5712
  %v5715 = vmul.f32 %v5678, %v1703
  %v5716 = vmul.f32 %v5683, %v1704
  %v5717 = vmul.f32 %v5688, %v1705
  %v5718 = vmul.f32 %v5693, %v1706
  %v5719 = vmul.f32 %v5698, %v1707
  %v5720 = vmul.f32 %v5703, %v1708
  %v5721 = vmul.f32 %v5708, %v1709
  %v5722 = vmul.f32 %v5713, %v1710
  %v5723 = vsel %vm52, %v5715, 0.0
  %v5724 = vsel %vm52, %v5716, 0.0
  %v5725 = vadd.f32 %v5723, %v5724
  %v5726 = vsel %vm52, %v5717, 0.0
  %v5727 = vadd.f32 %v5725, %v5726
  %v5728 = vsel %vm52, %v5718, 0.0
  %v5729 = vadd.f32 %v5727, %v5728
  %v5730 = vsel %vm52, %v5719, 0.0
  %v5731 = vadd.f32 %v5729, %v5730
  %v5732 = vsel %vm52, %v5720, 0.0
  %v5733 = vadd.f32 %v5731, %v5732
  %v5734 = vsel %vm52, %v5721, 0.0
  %v5735 = vadd.f32 %v5733, %v5734
  %v5736 = vsel %vm52, %v5722, 0.0
  %v5737 = vadd.f32 %v5735, %v5736
  %v5738 = vld [vmem:[%s9] sm:$0xff]
  %v5739 = vld [vmem:[%s9 + $0x8] sm:$0xff]
  %v5740 = vld [vmem:[%s9 + $0x10] sm:$0xff]
  %v5741 = vld [vmem:[%s9 + $0x18] sm:$0xff]
  %v5742 = vld [vmem:[%s10] sm:$0xff]
  %v5743 = vld [vmem:[%s10 + $0x8] sm:$0xff]
  %v5744 = vld [vmem:[%s10 + $0x10] sm:$0xff]
  %v5745 = vld [vmem:[%s10 + $0x18] sm:$0xff]
  %v5747 = vsel %vm52, %v5737, 0
  %5749 = vmatprep.subr.mxu0 0.0
  %5750 = vmatpush1.msra.mxu0 %v5742
  %5751 = vmatprep.subr.mxu0 0.0
  %5752 = vmatpush1.msra.mxu0 %v5743
  %5753 = vmatprep.subr.mxu0 0.0
  %5754 = vmatpush1.msra.mxu0 %v5744
  %5755 = vmatprep.subr.mxu0 0.0
  %5756 = vmatpush1.msra.mxu0 %v5745
  %5757 = vmatprep.subr.mxu0 0.0
  %5758 = vmatpush1.msra.mxu0 0.0
  %5759 = vmatprep.subr.mxu0 0.0
  %5760 = vmatpush1.msra.mxu0 0.0
  %5761 = vmatprep.subr.mxu0 0.0
  %5762 = vmatpush1.msra.mxu0 0.0
  %5763 = vmatprep.subr.mxu0 0.0
  %5764 = vmatpush1.msra.mxu0 0.0
  %5765 = vmatprep.subr.mxu0 0.0
  %5766 = vmatpush1.msra.mxu0 0.0
  %5767 = vmatprep.subr.mxu0 0.0
  %5768 = vmatpush1.msra.mxu0 0.0
  %5769 = vmatprep.subr.mxu0 0.0
  %5770 = vmatpush1.msra.mxu0 0.0
  %5771 = vmatprep.subr.mxu0 0.0
  %5772 = vmatpush1.msra.mxu0 0.0
  %5773 = vmatprep.subr.mxu0 0.0
  %5774 = vmatpush1.msra.mxu0 0.0
  %5775 = vmatprep.subr.mxu0 0.0
  %5776 = vmatpush1.msra.mxu0 0.0
  %5777 = vmatprep.subr.mxu0 0.0
  %5778 = vmatpush1.msra.mxu0 0.0
  %5779 = vmatprep.subr.mxu0 0.0
  %5780 = vmatpush1.msra.mxu0 0.0
  %5781 = vmatprep.subr.mxu0 0.0
  %5782 = vmatpush1.msra.mxu0 0.0
  %5783 = vmatprep.subr.mxu0 0.0
  %5784 = vmatpush1.msra.mxu0 0.0
  %5785 = vmatprep.subr.mxu0 0.0
  %5786 = vmatpush1.msra.mxu0 0.0
  %5787 = vmatprep.subr.mxu0 0.0
  %5788 = vmatpush1.msra.mxu0 0.0
  %5789 = vmatprep.subr.mxu0 0.0
  %5790 = vmatpush1.msra.mxu0 0.0
  %5791 = vmatprep.subr.mxu0 0.0
  %5792 = vmatpush1.msra.mxu0 0.0
  %5793 = vmatprep.subr.mxu0 0.0
  %5794 = vmatpush1.msra.mxu0 0.0
  %5795 = vmatprep.subr.mxu0 0.0
  %5796 = vmatpush1.msra.mxu0 0.0
  %5797 = vmatprep.subr.mxu0 0.0
  %5798 = vmatpush1.msra.mxu0 0.0
  %5799 = vmatprep.subr.mxu0 0.0
  %5800 = vmatpush1.msra.mxu0 0.0
  %5801 = vmatprep.subr.mxu0 0.0
  %5802 = vmatpush1.msra.mxu0 0.0
  %5803 = vmatprep.subr.mxu0 0.0
  %5804 = vmatpush1.msra.mxu0 0.0
  %5805 = vmatprep.subr.mxu0 0.0
  %5806 = vmatpush1.msra.mxu0 0.0
  %5807 = vmatprep.subr.mxu0 0.0
  %5808 = vmatpush1.msra.mxu0 0.0
  %5809 = vmatprep.subr.mxu0 0.0
  %5810 = vmatpush1.msra.mxu0 0.0
  %5811 = vmatprep.subr.mxu0 0.0
  %5812 = vmatpush1.msra.mxu0 0.0
  %5813 = vmatprep.mubr.f32.mxu0 0.0
  %5814 = vmatmul.mubr.f32.gmra.mrb[0].mxu0 %v5747
  %v5815 = vpop.f32.mrb[0].mxu0
  %v5816 = vadd.f32 0.0, %v5815
  %v5817 = vpop.f32.mrb[0].mxu0
  %5818 = vdwg.mxu0
  %v5819 = vsel %vm52, %v5570, 0
  %5821 = vmatprep.subr.mxu0 0.0
  %5822 = vmatpush1.msra.mxu0 %v5738
  %5823 = vmatprep.subr.mxu0 0.0
  %5824 = vmatpush1.msra.mxu0 %v5739
  %5825 = vmatprep.subr.mxu0 0.0
  %5826 = vmatpush1.msra.mxu0 %v5740
  %5827 = vmatprep.subr.mxu0 0.0
  %5828 = vmatpush1.msra.mxu0 %v5741
  %5829 = vmatprep.subr.mxu0 0.0
  %5830 = vmatpush1.msra.mxu0 0.0
  %5831 = vmatprep.subr.mxu0 0.0
  %5832 = vmatpush1.msra.mxu0 0.0
  %5833 = vmatprep.subr.mxu0 0.0
  %5834 = vmatpush1.msra.mxu0 0.0
  %5835 = vmatprep.subr.mxu0 0.0
  %5836 = vmatpush1.msra.mxu0 0.0
  %5837 = vmatprep.subr.mxu0 0.0
  %5838 = vmatpush1.msra.mxu0 0.0
  %5839 = vmatprep.subr.mxu0 0.0
  %5840 = vmatpush1.msra.mxu0 0.0
  %5841 = vmatprep.subr.mxu0 0.0
  %5842 = vmatpush1.msra.mxu0 0.0
  %5843 = vmatprep.subr.mxu0 0.0
  %5844 = vmatpush1.msra.mxu0 0.0
  %5845 = vmatprep.subr.mxu0 0.0
  %5846 = vmatpush1.msra.mxu0 0.0
  %5847 = vmatprep.subr.mxu0 0.0
  %5848 = vmatpush1.msra.mxu0 0.0
  %5849 = vmatprep.subr.mxu0 0.0
  %5850 = vmatpush1.msra.mxu0 0.0
  %5851 = vmatprep.subr.mxu0 0.0
  %5852 = vmatpush1.msra.mxu0 0.0
  %5853 = vmatprep.subr.mxu0 0.0
  %5854 = vmatpush1.msra.mxu0 0.0
  %5855 = vmatprep.subr.mxu0 0.0
  %5856 = vmatpush1.msra.mxu0 0.0
  %5857 = vmatprep.subr.mxu0 0.0
  %5858 = vmatpush1.msra.mxu0 0.0
  %5859 = vmatprep.subr.mxu0 0.0
  %5860 = vmatpush1.msra.mxu0 0.0
  %5861 = vmatprep.subr.mxu0 0.0
  %5862 = vmatpush1.msra.mxu0 0.0
  %5863 = vmatprep.subr.mxu0 0.0
  %5864 = vmatpush1.msra.mxu0 0.0
  %5865 = vmatprep.subr.mxu0 0.0
  %5866 = vmatpush1.msra.mxu0 0.0
  %5867 = vmatprep.subr.mxu0 0.0
  %5868 = vmatpush1.msra.mxu0 0.0
  %5869 = vmatprep.subr.mxu0 0.0
  %5870 = vmatpush1.msra.mxu0 0.0
  %5871 = vmatprep.subr.mxu0 0.0
  %5872 = vmatpush1.msra.mxu0 0.0
  %5873 = vmatprep.subr.mxu0 0.0
  %5874 = vmatpush1.msra.mxu0 0.0
  %5875 = vmatprep.subr.mxu0 0.0
  %5876 = vmatpush1.msra.mxu0 0.0
  %5877 = vmatprep.subr.mxu0 0.0
  %5878 = vmatpush1.msra.mxu0 0.0
  %5879 = vmatprep.subr.mxu0 0.0
  %5880 = vmatpush1.msra.mxu0 0.0
  %5881 = vmatprep.subr.mxu0 0.0
  %5882 = vmatpush1.msra.mxu0 0.0
  %5883 = vmatprep.subr.mxu0 0.0
  %5884 = vmatpush1.msra.mxu0 0.0
  %5885 = vmatprep.mubr.f32.mxu0 0.0
  %5886 = vmatmul.mubr.f32.gmra.mrb[0].mxu0 %v5819
  %v5887 = vpop.f32.mrb[0].mxu0
  %v5888 = vadd.f32 %v5816, %v5887
  %v5889 = vpop.f32.mrb[0].mxu0
  %5890 = vdwg.mxu0
  %v5891 = vld [vmem:[%s11] sm:$0xff]
  %v5892 = vadd.f32 %v5888, %v5891
  %v5893 = vsel %vm52, %v5892, -inf
  %5894 = vmax.xlane.f32.xlu0 %v5893
  %v5895 = vpop.xlane.xlu0 %5894
  %v5896 = vsub.f32 %v5892, %v5895
  %v5897 = vmul.f32 %v5896, 1.442695
  %v5898 = vpow.pop %v5897
  %v5899 = vsel %vm52, %v5898, 0.0
  %5900 = vadd.xlane.f32.xlu0 %v5899
  %v5901 = vpop.xlane.xlu0 %5900
  %v5902 = vlog2.pop %v5901
  %v5903 = vmul.f32 %v5902, 0.6931472
  %v5904 = vadd.f32 %v5903, %v5895
  %v5905 = vsub.f32 %v5892, %v5904
  %5907 = vrot.lane.b32.xlu0 %v5905, 96
  %v5908 = vpop.permute.xlu0 %5907
  %5910 = vst.msk [vmem:[%s12 + $0x8] sm:$0xff] %vm3821, %v5908
  %5911 = vst.msk [vmem:[%s13] sm:$0xff] %vm52, %v5570
  // Predicated region
  $region50: #{seq2seq_forward.1} parent=0 // pred_check
    _
  $region51: #{seq2seq_forward.1} parent=0 // pred_check_branch
    %5913 = sbr.rel (0) target = $region53
  $region52: #{seq2seq_forward.1} parent=0 // pred_region
    _
  $region53: #{seq2seq_forward.1} parent=0 // pred_fallthru
    _
  // Predicated region
  $region54: #{seq2seq_forward.1} parent=0 // pred_check
    _
  $region55: #{seq2seq_forward.1} parent=0 // pred_check_branch
    %5915 = sbr.rel (0) target = $region57
  $region56: #{seq2seq_forward.1} parent=0 // pred_region
    _
  $region57: #{seq2seq_forward.1} parent=0 // pred_fallthru
    _
  // Predicated region
  $region58: #{seq2seq_forward.1} parent=0 // pred_check
    _
  $region59: #{seq2seq_forward.1} parent=0 // pred_check_branch
    %5917 = sbr.rel (0) target = $region61
  $region60: #{seq2seq_forward.1} parent=0 // pred_region
    _
  $region61: #{seq2seq_forward.1} parent=0 // pred_fallthru
    _
  // Predicated region
  $region62: #{seq2seq_forward.1} parent=0 // pred_check
    _
  $region63: #{seq2seq_forward.1} parent=0 // pred_check_branch
    %5919 = sbr.rel (0) target = $region65
  $region64: #{seq2seq_forward.1} parent=0 // pred_region
    _
  $region65: #{seq2seq_forward.1} parent=0 // pred_fallthru
    _

</llo_original>
